<compile_context>
chip_gen: v5e
topology: v5e:2x2
jax: 0.10.0
libtpu: 0.0.40
codegen_flags: <defaults>
</compile_context>

<pallas_src>
import functools

import numpy as np

import jax
import jax.numpy as jnp
from jax.experimental import pallas as pl
from jax.experimental.pallas import tpu as pltpu

BN_EPS = 1e-5
LANE = 128

# taps kept by the type-'B' 3x3 mask, (ky, kx); the last entry is the center.
TAPS_B = ((0, 0), (0, 1), (0, 2), (1, 0), (1, 1))
OFFS_B = tuple((ky - 1, kx - 1) for (ky, kx) in TAPS_B)


# ----------------------------------------------------------------------------
# Small helpers
# ----------------------------------------------------------------------------
def _ru(x, m):
    return ((x + m - 1) // m) * m


def _pad2(m, rows, cols):
    return jnp.pad(m, ((0, rows - m.shape[0]), (0, cols - m.shape[1])))


def _vmem_limit_bytes():
    """Generation-aware scoped-VMEM budget (48 MiB safe fallback)."""
    try:
        cap = int(pltpu.get_tpu_info().vmem_capacity_bytes)
        return int(max(48 << 20, min(cap * 3 // 4, 100 << 20)))
    except Exception:
        return 48 << 20


def _batch_tile(batch):
    """Images per grid step; always keep >= 2 parallel steps when B >= 2."""
    for bt in (4, 2):
        if batch % bt == 0 and batch // bt >= 2:
            return bt
    return 1


@functools.lru_cache(maxsize=None)
def _row_roll_mode():
    """Probe pltpu.roll's sublane (axis=0) support and rotation convention.

    Returns 'jnp' (matches jnp.roll), 'neg' (opposite sign), or 'slices'
    (fall back to an explicit slice-rotate).  Must be called outside jit.
    """
    n, c = 256, LANE

    def kern(x_ref, o_ref):
        o_ref[...] = pltpu.roll(x_ref[...], 1, axis=0)

    try:
        x = jnp.arange(n * c, dtype=jnp.float32).reshape(n, c)
        o = pl.pallas_call(
            kern, out_shape=jax.ShapeDtypeStruct((n, c), jnp.float32))(x)
        o = np.asarray(jax.block_until_ready(o))
        xn = np.asarray(x)
        if np.array_equal(o, np.roll(xn, 1, axis=0)):
            return "jnp"
        if np.array_equal(o, np.roll(xn, -1, axis=0)):
            return "neg"
    except Exception:
        pass
    return "slices"


def _shift_rows(x, dx, mode):
    """out[p] = x[(p + dx) % n] along axis 0 (static dx)."""
    n = x.shape[0]
    if mode == "jnp":
        return pltpu.roll(x, (-dx) % n, axis=0)
    if mode == "neg":
        return pltpu.roll(x, dx % n, axis=0)
    s = dx % n
    return jnp.concatenate([x[s:], x[:s]], axis=0)


# ----------------------------------------------------------------------------
# Autoregressive masks (used for weight construction & the JAX reference)
# ----------------------------------------------------------------------------
def _mask_taps(k, mask_type):
    c = k // 2
    taps = []
    for ky in range(k):
        for kx in range(k):
            if ky < c or (ky == c and (kx < c or (mask_type == "B" and kx == c))):
                taps.append((ky, kx))
    return taps


def _mask_array(k, mask_type):
    m = np.zeros((k, k), np.float32)
    for ky, kx in _mask_taps(k, mask_type):
        m[ky, kx] = 1.0
    return jnp.asarray(m)


# ----------------------------------------------------------------------------
# The fused PixelCNN kernel (one grid step = `bt` images)
# ----------------------------------------------------------------------------
def _pixelcnn_kernel(x_ref, wa_ref, sa_ref, ba_ref,
                     w1_ref, s1_ref, b1_ref,
                     w2_ref, s2_ref, b2_ref,
                     w3_ref, s3_ref, b3_ref,
                     wh1_ref, sh1_ref, bh1_ref, wh2_ref, bh2_ref,
                     out_ref, *, H, W, C1, roll_mode):
    f32, bf16 = jnp.float32, jnp.bfloat16
    HW = H * W
    bt = out_ref.shape[0]
    n_channel = out_ref.shape[1]
    DP = out_ref.shape[-1]
    n_blocks = w1_ref.shape[0]
    KA = x_ref.shape[-1]            # 7 * C_in
    KPAT = wa_ref.shape[0]          # round_up(4 * KA, 128)
    C1P = w1_ref.shape[-1]

    # Per-step constants, hoisted out of the image / block loops.
    col = jax.lax.broadcasted_iota(jnp.int32, (HW, C1P), 0) % W
    mask_l = col > 0                # source column x-1 is in range (dx = -1)
    mask_r = col < (W - 1)          # source column x+1 is in range (dx = +1)
    halo_b = jnp.zeros((W, C1P), f32)
    pat_pad = (jnp.zeros((HW, KPAT - 4 * KA), bf16) if KPAT > 4 * KA else None)

    for i in range(bt):
        # ---- MaskAConv (type-A 7x7): in-VMEM im2col + one matmul + folded BN
        xin = x_ref[i]                                       # (3W + HW, KA) bf16
        pieces = [xin[r * W:r * W + HW, :] for r in range(4)]  # 8-aligned slices
        if pat_pad is not None:
            pieces.append(pat_pad)
        pat = jnp.concatenate(pieces, axis=-1)               # (HW, KPAT) bf16
        y = jnp.dot(pat, wa_ref[...], preferred_element_type=f32)
        y = y * sa_ref[...] + ba_ref[...]                    # f32 residual stream

        # ---- 3 residual MaskB blocks, activations never leave VMEM
        for blk in range(n_blocks):
            a = jnp.maximum(y, 0.0).astype(bf16)
            t = jnp.dot(a, w1_ref[blk], preferred_element_type=f32)
            t = jnp.maximum(t * s1_ref[blk] + b1_ref[blk], 0.0)   # (HW, C1P) f32

            # masked 3x3 (type B): 5 taps packed into ONE matmul
            padded = jnp.concatenate([halo_b, t], axis=0)    # zero halo for y-1 < 0
            parts = []
            for (dy, dx) in OFFS_B[:-1]:                     # 4 non-center taps
                src = padded[(1 + dy) * W:(1 + dy) * W + HW, :]
                if dx != 0:
                    src = _shift_rows(src, dx, roll_mode)
                    src = jnp.where(mask_l if dx < 0 else mask_r, src, 0.0)
                parts.append(src[:, :C1].astype(bf16))
            parts.append(t.astype(bf16))                     # center tap, full C1P
            packed = jnp.concatenate(parts, axis=-1)         # (HW, 4*C1 + C1P)
            t = jnp.dot(packed, w2_ref[blk], preferred_element_type=f32)
            t = jnp.maximum(t * s2_ref[blk] + b2_ref[blk], 0.0).astype(bf16)

            t = jnp.dot(t, w3_ref[blk], preferred_element_type=f32)
            y = y + t * s3_ref[blk] + b3_ref[blk]            # f32 residual add

        # ---- output head: ReLU -> 1x1 (2h->625) -> BN -> ReLU -> 1x1 (625->c*d)
        a = jnp.maximum(y, 0.0).astype(bf16)
        t = jnp.dot(a, wh1_ref[...], preferred_element_type=f32)
        t = jnp.maximum(t * sh1_ref[...] + bh1_ref[...], 0.0).astype(bf16)
        o = jnp.dot(t, wh2_ref[...], preferred_element_type=f32) + bh2_ref[...]

        # write logits directly in the module's (b, c, h, w, d) output layout
        for c in range(n_channel):
            out_ref[i, c] = o[:, c * DP:(c + 1) * DP].reshape(H, W, DP)


# ----------------------------------------------------------------------------
# BatchNorm folding + parameter init
# ----------------------------------------------------------------------------
def fold_bn(bias, bn):
    gamma, beta, mean, var = bn
    scale = gamma / jnp.sqrt(var + BN_EPS)
    b = bias if bias is not None else jnp.zeros_like(mean)
    shift = beta + (b - mean) * scale
    return scale.reshape(1, -1), shift.reshape(1, -1)


class KeyGen:
    def __init__(self, key):
        self.key = key

    def __call__(self):
        self.key, sub = jax.random.split(self.key)
        return sub


def init_bn(kg, c):
    gamma = 1.0 + 0.1 * jax.random.normal(kg(), (c,), jnp.float32)
    beta = 0.1 * jax.random.normal(kg(), (c,), jnp.float32)
    mean = 0.1 * jax.random.normal(kg(), (c,), jnp.float32)
    var = jax.random.uniform(kg(), (c,), jnp.float32, 0.5, 1.5)
    return (gamma, beta, mean, var)


def init_params(key, n_channel, h, discrete_channel, imagesize):
    kg = KeyGen(key)
    w = lambda shape: 0.05 * jax.random.normal(kg(), shape, jnp.float32)
    p = {}
    p["A_w"] = w((2 * h, n_channel, 7, 7))         # MaskedConv2d('A'), no bias
    p["A_bn"] = init_bn(kg, 2 * h)
    blocks = []
    for _ in range(3):
        blocks.append({
            "c1_w": w((2 * h, h)), "c1_b": w((h,)), "bn1": init_bn(kg, h),
            "mb_w": w((h, h, 3, 3)), "bn2": init_bn(kg, h),
            "c3_w": w((h, 2 * h)), "c3_b": w((2 * h,)), "bn3": init_bn(kg, 2 * h),
        })
    p["blocks"] = blocks
    p["o1_w"] = w((2 * h, imagesize))
    p["o1_b"] = w((imagesize,))
    p["o_bn"] = init_bn(kg, imagesize)
    p["o2_w"] = w((imagesize, n_channel * discrete_channel))
    p["o2_b"] = w((n_channel * discrete_channel,))
    return p


# ----------------------------------------------------------------------------
# PixelCNN forward (Pallas path)
# ----------------------------------------------------------------------------
def pixelcnn_forward(params, x_nchw, *, n_channel, h, discrete_channel,
                     roll_mode="slices"):
    B, C_in, H, W = x_nchw.shape
    assert C_in == n_channel
    HW = H * W
    C1, C2 = h, 2 * h
    C1P, C2P = _ru(C1, LANE), _ru(C2, LANE)
    KA = 7 * C_in
    KPAT = _ru(4 * KA, LANE)
    DP = _ru(discrete_channel, LANE)
    imagesize = params["o1_w"].shape[1]
    IMGP = _ru(imagesize, LANE)
    bt = _batch_tile(B)
    bf16 = jnp.bfloat16

    # ---- tiny XLA-side prep of the input: only the 7 horizontal taps are
    #      expanded here (N x 7*C_in bf16, ~3.5x the raw input); the vertical
    #      taps are gathered in-kernel from a 3W-row zero halo.
    x = jnp.transpose(x_nchw, (0, 2, 3, 1))                         # NHWC
    xp = jnp.pad(x, ((0, 0), (0, 0), (3, 3), (0, 0)))
    xcols = jnp.concatenate([xp[:, :, kx:kx + W, :] for kx in range(7)], axis=-1)
    xcols = xcols.reshape(B, HW, KA)
    halo = jnp.zeros((B, 3 * W, KA), xcols.dtype)
    xin = jnp.concatenate([halo, xcols], axis=1).astype(bf16)       # (B, 3W+HW, KA)
    rows_a = 3 * W + HW

    # ---- MaskA weights (mask applied, (ky, kx, c_in) row order) + folded BN
    wa = params["A_w"]                                              # (2h, C_in, 7, 7)
    rows = []
    for ky in range(4):
        for kx in range(7):
            if ky < 3 or kx < 3:                                    # type-'A' mask
                rows.append(wa[:, :, ky, kx].T)
            else:
                rows.append(jnp.zeros((C_in, C2), wa.dtype))
    wA = _pad2(jnp.concatenate(rows, axis=0), KPAT, C2P).astype(bf16)
    sc, sh = fold_bn(None, params["A_bn"])
    sA, bA = _pad2(sc, 1, C2P), _pad2(sh, 1, C2P)

    # ---- residual block weights (packed 3x3 taps, folded BN)
    w1_l, s1_l, b1_l = [], [], []
    w2_l, s2_l, b2_l = [], [], []
    w3_l, s3_l, b3_l = [], [], []
    K2 = 4 * C1 + C1P
    for blk in params["blocks"]:
        w1_l.append(_pad2(blk["c1_w"], C2P, C1P))
        sc, sh = fold_bn(blk["c1_b"], blk["bn1"])
        s1_l.append(_pad2(sc, 1, C1P)); b1_l.append(_pad2(sh, 1, C1P))

        taps = [blk["mb_w"][:, :, ky, kx].T for (ky, kx) in TAPS_B[:-1]]  # (C1,C1)
        center = _pad2(blk["mb_w"][:, :, 1, 1].T, C1P, C1)                # (C1P,C1)
        w2 = jnp.concatenate(taps + [center], axis=0)                     # (K2, C1)
        w2_l.append(_pad2(w2, K2, C1P))
        sc, sh = fold_bn(None, blk["bn2"])
        s2_l.append(_pad2(sc, 1, C1P)); b2_l.append(_pad2(sh, 1, C1P))

        w3_l.append(_pad2(blk["c3_w"], C1P, C2P))
        sc, sh = fold_bn(blk["c3_b"], blk["bn3"])
        s3_l.append(_pad2(sc, 1, C2P)); b3_l.append(_pad2(sh, 1, C2P))

    bstack = lambda xs: jnp.stack(xs).astype(bf16)
    fstack = lambda xs: jnp.stack(xs).astype(jnp.float32)

    # ---- head weights; second matmul columns grouped per image-channel so the
    #      kernel writes logits directly in (b, c, h, w, d) order
    wh1 = _pad2(params["o1_w"], C2P, IMGP).astype(bf16)
    sc, sh = fold_bn(params["o1_b"], params["o_bn"])
    sh1, bh1 = _pad2(sc, 1, IMGP), _pad2(sh, 1, IMGP)

    d = discrete_channel
    wcols, bcols = [], []
    for c in range(n_channel):
        wcols.append(_pad2(params["o2_w"][:, c * d:(c + 1) * d], imagesize, DP))
        bcols.append(_pad2(params["o2_b"][c * d:(c + 1) * d].reshape(1, -1), 1, DP))
    wh2 = _pad2(jnp.concatenate(wcols, axis=1), IMGP, n_channel * DP).astype(bf16)
    bh2 = jnp.concatenate(bcols, axis=1).astype(jnp.float32)

    args = (xin, wA, sA.astype(jnp.float32), bA.astype(jnp.float32),
            bstack(w1_l), fstack(s1_l), fstack(b1_l),
            bstack(w2_l), fstack(s2_l), fstack(b2_l),
            bstack(w3_l), fstack(s3_l), fstack(b3_l),
            wh1, sh1.astype(jnp.float32), bh1.astype(jnp.float32),
            wh2, bh2)

    def _const_spec(a):
        nd = a.ndim
        return pl.BlockSpec(a.shape, lambda g, _nd=nd: (0,) * _nd)

    in_specs = [pl.BlockSpec((bt, rows_a, KA), lambda g: (g, 0, 0))]
    in_specs += [_const_spec(a) for a in args[1:]]

    kernel = functools.partial(_pixelcnn_kernel, H=H, W=W, C1=C1,
                               roll_mode=roll_mode)

    out = pl.pallas_call(
        kernel,
        out_shape=jax.ShapeDtypeStruct((B, n_channel, H, W, DP), jnp.float32),
        grid=(B // bt,),
        in_specs=in_specs,
        out_specs=pl.BlockSpec((bt, n_channel, H, W, DP),
                               lambda g: (g, 0, 0, 0, 0)),
        compiler_params=pltpu.CompilerParams(
            dimension_semantics=("parallel",),
            vmem_limit_bytes=_vmem_limit_bytes()),
    )(*args)

    # only lane padding of the discrete axis is sliced off (a no-op when
    # discrete_channel is a multiple of 128, e.g. 256 in the real model)
    return out[..., :discrete_channel]


# ----------------------------------------------------------------------------
# Pure-JAX f32 reference (lax.conv) of the PyTorch forward, for validation
# ----------------------------------------------------------------------------
def _ref_forward(params, x_nchw, *, n_channel, h, discrete_channel):
    def conv(x, w_oihw, bias, pad):
        y = jax.lax.conv_general_dilated(
            x, w_oihw, window_strides=(1, 1),
            padding=[(pad, pad), (pad, pad)],
            dimension_numbers=("NCHW", "OIHW", "NCHW"))
        if bias is not None:
            y = y + bias[None, :, None, None]
        return y

    def bnorm(x, bn):
        gamma, beta, mean, var = bn
        inv = gamma / jnp.sqrt(var + BN_EPS)
        return (x - mean[None, :, None, None]) * inv[None, :, None, None] \
            + beta[None, :, None, None]

    relu = jax.nn.relu
    x = x_nchw.astype(jnp.float32)
    mA = _mask_array(7, "A")
    mB = _mask_array(3, "B")

    y = bnorm(conv(x, params["A_w"] * mA[None, None], None, 3), params["A_bn"])
    for blk in params["blocks"]:
        t = relu(y)
        t = bnorm(conv(t, blk["c1_w"].T[:, :, None, None], blk["c1_b"], 0), blk["bn1"])
        t = relu(t)
        t = bnorm(conv(t, blk["mb_w"] * mB[None, None], None, 1), blk["bn2"])
        t = relu(t)
        t = bnorm(conv(t, blk["c3_w"].T[:, :, None, None], blk["c3_b"], 0), blk["bn3"])
        y = t + y
    t = relu(y)
    t = bnorm(conv(t, params["o1_w"].T[:, :, None, None], params["o1_b"], 0),
              params["o_bn"])
    t = relu(t)
    t = conv(t, params["o2_w"].T[:, :, None, None], params["o2_b"], 0)
    B, _, H, W = x_nchw.shape
    t = t.reshape(B, n_channel, discrete_channel, H, W)
    return jnp.transpose(t, (0, 1, 3, 4, 2))


# ----------------------------------------------------------------------------
if __name__ == "__main__":
    n_channel = 3
    h = 32                 # reduced from 128 for a small, fast test
    discrete_channel = 32  # reduced from 256
    imagesize = 625        # hardcoded in the PyTorch module
    B, H, W = 2, 16, 16

    key = jax.random.PRNGKey(0)
    k_param, k_x = jax.random.split(key)
    params = init_params(k_param, n_channel, h, discrete_channel, imagesize)
    x = jax.random.normal(k_x, (B, n_channel, H, W), jnp.float32)

    # probe pltpu.roll once, eagerly (outside jit), then build the forward fn
    roll_mode = _row_roll_mode()
    fwd = jax.jit(functools.partial(
        pixelcnn_forward,
        n_channel=n_channel, h=h, discrete_channel=discrete_channel,
        roll_mode=roll_mode))
    out = fwd(params, x)
    jax.block_until_ready(out)

    assert out.shape == (B, n_channel, H, W, discrete_channel), out.shape
    assert out.dtype == jnp.float32

    ref = jax.jit(functools.partial(
        _ref_forward,
        n_channel=n_channel, h=h, discrete_channel=discrete_channel))(params, x)
    err = float(jnp.max(jnp.abs(out - ref)))
    assert err < 0.3, f"kernel/reference mismatch: max abs err = {err}"

    print("KERNEL_OK")
</pallas_src>

<mosaic_0001>
module attributes {stable_mosaic.version = 11 : i64} {
  func.func @kern(%arg0: memref<256x128xf32, #tpu.memory_space<vmem>>, %arg1: memref<256x128xf32, #tpu.memory_space<vmem>>) attributes {dimension_semantics = [], scalar_prefetch = 0 : i64, scratch_operands = 0 : i64, tpu.core_type = #tpu.core_type<tc>} {
    %c0 = arith.constant 0 : index
    %c0_0 = arith.constant 0 : index
    %0 = vector.load %arg0[%c0, %c0_0] : memref<256x128xf32, #tpu.memory_space<vmem>>, vector<256x128xf32>
    %c1_i32 = arith.constant 1 : i32
    %1 = tpu.dynamic_rotate %0 by %c1_i32 dim 0 : vector<256x128xf32>, i32 -> vector<256x128xf32>
    %c0_1 = arith.constant 0 : index
    %c0_2 = arith.constant 0 : index
    %2 = vector.load %arg1[%c0_1, %c0_2] : memref<256x128xf32, #tpu.memory_space<vmem>>, vector<256x128xf32>
    tpu.vector_store %arg1[%c0_1, %c0_2], %1 {strides = array<i32>} : memref<256x128xf32, #tpu.memory_space<vmem>>, vector<256x128xf32>,
    return
  }
}

module attributes {stable_mosaic.version = 11 : i64} {
  func.func @_pixelcnn_kernel(%arg0: i32, %arg1: memref<1x304x21xbf16, #tpu.memory_space<vmem>>, %arg2: memref<128x128xbf16, #tpu.memory_space<vmem>>, %arg3: memref<1x128xf32, #tpu.memory_space<vmem>>, %arg4: memref<1x128xf32, #tpu.memory_space<vmem>>, %arg5: memref<3x128x128xbf16, #tpu.memory_space<vmem>>, %arg6: memref<3x1x128xf32, #tpu.memory_space<vmem>>, %arg7: memref<3x1x128xf32, #tpu.memory_space<vmem>>, %arg8: memref<3x256x128xbf16, #tpu.memory_space<vmem>>, %arg9: memref<3x1x128xf32, #tpu.memory_space<vmem>>, %arg10: memref<3x1x128xf32, #tpu.memory_space<vmem>>, %arg11: memref<3x128x128xbf16, #tpu.memory_space<vmem>>, %arg12: memref<3x1x128xf32, #tpu.memory_space<vmem>>, %arg13: memref<3x1x128xf32, #tpu.memory_space<vmem>>, %arg14: memref<128x640xbf16, #tpu.memory_space<vmem>>, %arg15: memref<1x640xf32, #tpu.memory_space<vmem>>, %arg16: memref<1x640xf32, #tpu.memory_space<vmem>>, %arg17: memref<640x384xbf16, #tpu.memory_space<vmem>>, %arg18: memref<1x384xf32, #tpu.memory_space<vmem>>, %arg19: memref<1x3x16x16x128xf32, #tpu.memory_space<vmem>>) attributes {dimension_semantics = [#tpu.dimension_semantics<parallel>], iteration_bounds = array<i64: 2>, scalar_prefetch = 0 : i64, scratch_operands = 0 : i64, tpu.core_type = #tpu.core_type<tc>, window_params = [{transform_indices = @transform_0, window_bounds = array<i64: 1, 304, 21>}, {pipeline_mode = #tpu.pipeline_mode<synchronous>, transform_indices = @transform_1, window_bounds = array<i64: 128, 128>}, {pipeline_mode = #tpu.pipeline_mode<synchronous>, transform_indices = @transform_2, window_bounds = array<i64: 1, 128>}, {pipeline_mode = #tpu.pipeline_mode<synchronous>, transform_indices = @transform_3, window_bounds = array<i64: 1, 128>}, {pipeline_mode = #tpu.pipeline_mode<synchronous>, transform_indices = @transform_4, window_bounds = array<i64: 3, 128, 128>}, {pipeline_mode = #tpu.pipeline_mode<synchronous>, transform_indices = @transform_5, window_bounds = array<i64: 3, 1, 128>}, {pipeline_mode = #tpu.pipeline_mode<synchronous>, transform_indices = @transform_6, window_bounds = array<i64: 3, 1, 128>}, {pipeline_mode = #tpu.pipeline_mode<synchronous>, transform_indices = @transform_7, window_bounds = array<i64: 3, 256, 128>}, {pipeline_mode = #tpu.pipeline_mode<synchronous>, transform_indices = @transform_8, window_bounds = array<i64: 3, 1, 128>}, {pipeline_mode = #tpu.pipeline_mode<synchronous>, transform_indices = @transform_9, window_bounds = array<i64: 3, 1, 128>}, {pipeline_mode = #tpu.pipeline_mode<synchronous>, transform_indices = @transform_10, window_bounds = array<i64: 3, 128, 128>}, {pipeline_mode = #tpu.pipeline_mode<synchronous>, transform_indices = @transform_11, window_bounds = array<i64: 3, 1, 128>}, {pipeline_mode = #tpu.pipeline_mode<synchronous>, transform_indices = @transform_12, window_bounds = array<i64: 3, 1, 128>}, {pipeline_mode = #tpu.pipeline_mode<synchronous>, transform_indices = @transform_13, window_bounds = array<i64: 128, 640>}, {pipeline_mode = #tpu.pipeline_mode<synchronous>, transform_indices = @transform_14, window_bounds = array<i64: 1, 640>}, {pipeline_mode = #tpu.pipeline_mode<synchronous>, transform_indices = @transform_15, window_bounds = array<i64: 1, 640>}, {pipeline_mode = #tpu.pipeline_mode<synchronous>, transform_indices = @transform_16, window_bounds = array<i64: 640, 384>}, {pipeline_mode = #tpu.pipeline_mode<synchronous>, transform_indices = @transform_17, window_bounds = array<i64: 1, 384>}, {transform_indices = @transform_18, window_bounds = array<i64: 1, 3, 16, 16, 128>}]} {
    %0 = tpu.iota {dimensions = array<i32: 0>} : vector<256x128xi32>
    %c16_i32 = arith.constant 16 : i32
    %c0_i32 = arith.constant 0 : i32
    %1 = arith.cmpi eq, %c16_i32, %c0_i32 : i32
    %c1_i32 = arith.constant 1 : i32
    %2 = arith.select %1, %c1_i32, %c16_i32 : i32
    %3 = vector.broadcast %2 : i32 to vector<256x128xi32>
    %4 = arith.remsi %0, %3 : vector<256x128xi32>
    %c0_i32_0 = arith.constant 0 : i32
    %5 = vector.broadcast %c0_i32_0 : i32 to vector<256x128xi32>
    %6 = arith.cmpi ne, %4, %5 : vector<256x128xi32>
    %c0_i32_1 = arith.constant 0 : i32
    %7 = vector.broadcast %c0_i32_1 : i32 to vector<256x128xi32>
    %8 = arith.cmpi slt, %4, %7 : vector<256x128xi32>
    %c0_i32_2 = arith.constant 0 : i32
    %9 = arith.cmpi slt, %2, %c0_i32_2 : i32
    %10 = vector.broadcast %9 : i1 to vector<256x128xi1>
    %11 = vector.broadcast %10 : vector<256x128xi1> to vector<256x128xi1>
    %12 = arith.xori %8, %11 : vector<256x128xi1>
    %13 = arith.andi %12, %6 : vector<256x128xi1>
    %14 = vector.broadcast %2 : i32 to vector<256x128xi32>
    %15 = arith.addi %4, %14 : vector<256x128xi32>
    %16 = arith.select %13, %15, %4 : vector<256x128xi1>, vector<256x128xi32>
    %c0_i32_3 = arith.constant 0 : i32
    %17 = vector.broadcast %c0_i32_3 : i32 to vector<256x128xi32>
    %18 = arith.cmpi sgt, %16, %17 : vector<256x128xi32>
    %c15_i32 = arith.constant 15 : i32
    %19 = vector.broadcast %c15_i32 : i32 to vector<256x128xi32>
    %20 = arith.cmpi slt, %16, %19 : vector<256x128xi32>
    %cst = arith.constant 0.000000e+00 : f32
    %21 = vector.broadcast %cst : f32 to vector<16x128xf32>
    %cst_4 = arith.constant 0.000000e+00 : bf16
    %22 = vector.broadcast %cst_4 : bf16 to vector<256x44xbf16>
    %c0 = arith.constant 0 : index
    %c0_5 = arith.constant 0 : index
    %c0_6 = arith.constant 0 : index
    %23 = vector.load %arg1[%c0, %c0_5, %c0_6] : memref<1x304x21xbf16, #tpu.memory_space<vmem>>, vector<1x304x21xbf16>
    %24 = vector.shape_cast %23 : vector<1x304x21xbf16> to vector<304x21xbf16>
    %25 = vector.extract_strided_slice %24 {offsets = [0, 0], sizes = [256, 21], strides = [1, 1]} : vector<304x21xbf16> to vector<256x21xbf16>
    %26 = vector.extract_strided_slice %24 {offsets = [16, 0], sizes = [256, 21], strides = [1, 1]} : vector<304x21xbf16> to vector<256x21xbf16>
    %27 = vector.extract_strided_slice %24 {offsets = [32, 0], sizes = [256, 21], strides = [1, 1]} : vector<304x21xbf16> to vector<256x21xbf16>
    %28 = vector.extract_strided_slice %24 {offsets = [48, 0], sizes = [256, 21], strides = [1, 1]} : vector<304x21xbf16> to vector<256x21xbf16>
    %29 = tpu.concatenate %25, %26, %27, %28, %22 in 1 : vector<256x21xbf16>, vector<256x21xbf16>, vector<256x21xbf16>, vector<256x21xbf16>, vector<256x44xbf16> -> vector<256x128xbf16>
    %c0_7 = arith.constant 0 : index
    %c0_8 = arith.constant 0 : index
    %30 = vector.load %arg2[%c0_7, %c0_8] : memref<128x128xbf16, #tpu.memory_space<vmem>>, vector<128x128xbf16>
    %cst_9 = arith.constant dense<0.000000e+00> : vector<256x128xf32>
    %31 = tpu.matmul %29, %30, %cst_9 {dimension_numbers = #tpu.dot_dimension_numbers<[1], [0], [0], [1], [0, 0, 1, 1], [], []>} : vector<256x128xbf16>, vector<128x128xbf16>, vector<256x128xf32> -> vector<256x128xf32>
    %c0_10 = arith.constant 0 : index
    %c0_11 = arith.constant 0 : index
    %32 = vector.load %arg3[%c0_10, %c0_11] : memref<1x128xf32, #tpu.memory_space<vmem>>, vector<1x128xf32>
    %33 = vector.broadcast %32 : vector<1x128xf32> to vector<256x128xf32>
    %34 = arith.mulf %31, %33 : vector<256x128xf32>
    %c0_12 = arith.constant 0 : index
    %c0_13 = arith.constant 0 : index
    %35 = vector.load %arg4[%c0_12, %c0_13] : memref<1x128xf32, #tpu.memory_space<vmem>>, vector<1x128xf32>
    %36 = vector.broadcast %35 : vector<1x128xf32> to vector<256x128xf32>
    %37 = arith.addf %34, %36 : vector<256x128xf32>
    %cst_14 = arith.constant 0.000000e+00 : f32
    %38 = vector.broadcast %cst_14 : f32 to vector<256x128xf32>
    %39 = arith.maximumf %37, %38 : vector<256x128xf32>
    %40 = arith.truncf %39 : vector<256x128xf32> to vector<256x128xbf16>
    %c0_15 = arith.constant 0 : index
    %c0_16 = arith.constant 0 : index
    %c0_17 = arith.constant 0 : index
    %41 = vector.load %arg5[%c0_15, %c0_16, %c0_17] : memref<3x128x128xbf16, #tpu.memory_space<vmem>>, vector<1x128x128xbf16>
    %42 = vector.shape_cast %41 : vector<1x128x128xbf16> to vector<128x128xbf16>
    %cst_18 = arith.constant dense<0.000000e+00> : vector<256x128xf32>
    %43 = tpu.matmul %40, %42, %cst_18 {dimension_numbers = #tpu.dot_dimension_numbers<[1], [0], [0], [1], [0, 0, 1, 1], [], []>} : vector<256x128xbf16>, vector<128x128xbf16>, vector<256x128xf32> -> vector<256x128xf32>
    %c0_19 = arith.constant 0 : index
    %c0_20 = arith.constant 0 : index
    %c0_21 = arith.constant 0 : index
    %44 = vector.load %arg6[%c0_19, %c0_20, %c0_21] : memref<3x1x128xf32, #tpu.memory_space<vmem>>, vector<1x1x128xf32>
    %45 = vector.shape_cast %44 : vector<1x1x128xf32> to vector<1x128xf32>
    %46 = vector.broadcast %45 : vector<1x128xf32> to vector<256x128xf32>
    %47 = arith.mulf %43, %46 : vector<256x128xf32>
    %c0_22 = arith.constant 0 : index
    %c0_23 = arith.constant 0 : index
    %c0_24 = arith.constant 0 : index
    %48 = vector.load %arg7[%c0_22, %c0_23, %c0_24] : memref<3x1x128xf32, #tpu.memory_space<vmem>>, vector<1x1x128xf32>
    %49 = vector.shape_cast %48 : vector<1x1x128xf32> to vector<1x128xf32>
    %50 = vector.broadcast %49 : vector<1x128xf32> to vector<256x128xf32>
    %51 = arith.addf %47, %50 : vector<256x128xf32>
    %cst_25 = arith.constant 0.000000e+00 : f32
    %52 = vector.broadcast %cst_25 : f32 to vector<256x128xf32>
    %53 = arith.maximumf %51, %52 : vector<256x128xf32>
    %54 = tpu.concatenate %21, %53 in 0 : vector<16x128xf32>, vector<256x128xf32> -> vector<272x128xf32>
    %55 = vector.extract_strided_slice %54 {offsets = [0, 0], sizes = [256, 128], strides = [1, 1]} : vector<272x128xf32> to vector<256x128xf32>
    %56 = vector.extract_strided_slice %55 {offsets = [255, 0], sizes = [1, 128], strides = [1, 1]} : vector<256x128xf32> to vector<1x128xf32>
    %57 = vector.extract_strided_slice %55 {offsets = [0, 0], sizes = [255, 128], strides = [1, 1]} : vector<256x128xf32> to vector<255x128xf32>
    %58 = tpu.concatenate %56, %57 in 0 : vector<1x128xf32>, vector<255x128xf32> -> vector<256x128xf32>
    %cst_26 = arith.constant 0.000000e+00 : f32
    %59 = vector.broadcast %cst_26 : f32 to vector<256x128xf32>
    %60 = arith.select %18, %58, %59 : vector<256x128xi1>, vector<256x128xf32>
    %61 = vector.extract_strided_slice %60 {offsets = [0, 0], sizes = [256, 32], strides = [1, 1]} : vector<256x128xf32> to vector<256x32xf32>
    %62 = arith.truncf %61 : vector<256x32xf32> to vector<256x32xbf16>
    %63 = vector.extract_strided_slice %54 {offsets = [0, 0], sizes = [256, 128], strides = [1, 1]} : vector<272x128xf32> to vector<256x128xf32>
    %64 = vector.extract_strided_slice %63 {offsets = [0, 0], sizes = [256, 32], strides = [1, 1]} : vector<256x128xf32> to vector<256x32xf32>
    %65 = arith.truncf %64 : vector<256x32xf32> to vector<256x32xbf16>
    %66 = vector.extract_strided_slice %54 {offsets = [0, 0], sizes = [256, 128], strides = [1, 1]} : vector<272x128xf32> to vector<256x128xf32>
    %67 = vector.extract_strided_slice %66 {offsets = [1, 0], sizes = [255, 128], strides = [1, 1]} : vector<256x128xf32> to vector<255x128xf32>
    %68 = vector.extract_strided_slice %66 {offsets = [0, 0], sizes = [1, 128], strides = [1, 1]} : vector<256x128xf32> to vector<1x128xf32>
    %69 = tpu.concatenate %67, %68 in 0 : vector<255x128xf32>, vector<1x128xf32> -> vector<256x128xf32>
    %cst_27 = arith.constant 0.000000e+00 : f32
    %70 = vector.broadcast %cst_27 : f32 to vector<256x128xf32>
    %71 = arith.select %20, %69, %70 : vector<256x128xi1>, vector<256x128xf32>
    %72 = vector.extract_strided_slice %71 {offsets = [0, 0], sizes = [256, 32], strides = [1, 1]} : vector<256x128xf32> to vector<256x32xf32>
    %73 = arith.truncf %72 : vector<256x32xf32> to vector<256x32xbf16>
    %74 = vector.extract_strided_slice %54 {offsets = [16, 0], sizes = [256, 128], strides = [1, 1]} : vector<272x128xf32> to vector<256x128xf32>
    %75 = vector.extract_strided_slice %74 {offsets = [255, 0], sizes = [1, 128], strides = [1, 1]} : vector<256x128xf32> to vector<1x128xf32>
    %76 = vector.extract_strided_slice %74 {offsets = [0, 0], sizes = [255, 128], strides = [1, 1]} : vector<256x128xf32> to vector<255x128xf32>
    %77 = tpu.concatenate %75, %76 in 0 : vector<1x128xf32>, vector<255x128xf32> -> vector<256x128xf32>
    %cst_28 = arith.constant 0.000000e+00 : f32
    %78 = vector.broadcast %cst_28 : f32 to vector<256x128xf32>
    %79 = arith.select %18, %77, %78 : vector<256x128xi1>, vector<256x128xf32>
    %80 = vector.extract_strided_slice %79 {offsets = [0, 0], sizes = [256, 32], strides = [1, 1]} : vector<256x128xf32> to vector<256x32xf32>
    %81 = arith.truncf %80 : vector<256x32xf32> to vector<256x32xbf16>
    %82 = arith.truncf %53 : vector<256x128xf32> to vector<256x128xbf16>
    %83 = tpu.concatenate %62, %65, %73, %81, %82 in 1 : vector<256x32xbf16>, vector<256x32xbf16>, vector<256x32xbf16>, vector<256x32xbf16>, vector<256x128xbf16> -> vector<256x256xbf16>
    %c0_29 = arith.constant 0 : index
    %c0_30 = arith.constant 0 : index
    %c0_31 = arith.constant 0 : index
    %84 = vector.load %arg8[%c0_29, %c0_30, %c0_31] : memref<3x256x128xbf16, #tpu.memory_space<vmem>>, vector<1x256x128xbf16>
    %85 = vector.shape_cast %84 : vector<1x256x128xbf16> to vector<256x128xbf16>
    %cst_32 = arith.constant dense<0.000000e+00> : vector<256x128xf32>
    %86 = tpu.matmul %83, %85, %cst_32 {dimension_numbers = #tpu.dot_dimension_numbers<[1], [0], [0], [1], [0, 0, 1, 1], [], []>} : vector<256x256xbf16>, vector<256x128xbf16>, vector<256x128xf32> -> vector<256x128xf32>
    %c0_33 = arith.constant 0 : index
    %c0_34 = arith.constant 0 : index
    %c0_35 = arith.constant 0 : index
    %87 = vector.load %arg9[%c0_33, %c0_34, %c0_35] : memref<3x1x128xf32, #tpu.memory_space<vmem>>, vector<1x1x128xf32>
    %88 = vector.shape_cast %87 : vector<1x1x128xf32> to vector<1x128xf32>
    %89 = vector.broadcast %88 : vector<1x128xf32> to vector<256x128xf32>
    %90 = arith.mulf %86, %89 : vector<256x128xf32>
    %c0_36 = arith.constant 0 : index
    %c0_37 = arith.constant 0 : index
    %c0_38 = arith.constant 0 : index
    %91 = vector.load %arg10[%c0_36, %c0_37, %c0_38] : memref<3x1x128xf32, #tpu.memory_space<vmem>>, vector<1x1x128xf32>
    %92 = vector.shape_cast %91 : vector<1x1x128xf32> to vector<1x128xf32>
    %93 = vector.broadcast %92 : vector<1x128xf32> to vector<256x128xf32>
    %94 = arith.addf %90, %93 : vector<256x128xf32>
    %cst_39 = arith.constant 0.000000e+00 : f32
    %95 = vector.broadcast %cst_39 : f32 to vector<256x128xf32>
    %96 = arith.maximumf %94, %95 : vector<256x128xf32>
    %97 = arith.truncf %96 : vector<256x128xf32> to vector<256x128xbf16>
    %c0_40 = arith.constant 0 : index
    %c0_41 = arith.constant 0 : index
    %c0_42 = arith.constant 0 : index
    %98 = vector.load %arg11[%c0_40, %c0_41, %c0_42] : memref<3x128x128xbf16, #tpu.memory_space<vmem>>, vector<1x128x128xbf16>
    %99 = vector.shape_cast %98 : vector<1x128x128xbf16> to vector<128x128xbf16>
    %cst_43 = arith.constant dense<0.000000e+00> : vector<256x128xf32>
    %100 = tpu.matmul %97, %99, %cst_43 {dimension_numbers = #tpu.dot_dimension_numbers<[1], [0], [0], [1], [0, 0, 1, 1], [], []>} : vector<256x128xbf16>, vector<128x128xbf16>, vector<256x128xf32> -> vector<256x128xf32>
    %c0_44 = arith.constant 0 : index
    %c0_45 = arith.constant 0 : index
    %c0_46 = arith.constant 0 : index
    %101 = vector.load %arg12[%c0_44, %c0_45, %c0_46] : memref<3x1x128xf32, #tpu.memory_space<vmem>>, vector<1x1x128xf32>
    %102 = vector.shape_cast %101 : vector<1x1x128xf32> to vector<1x128xf32>
    %103 = vector.broadcast %102 : vector<1x128xf32> to vector<256x128xf32>
    %104 = arith.mulf %100, %103 : vector<256x128xf32>
    %105 = arith.addf %37, %104 : vector<256x128xf32>
    %c0_47 = arith.constant 0 : index
    %c0_48 = arith.constant 0 : index
    %c0_49 = arith.constant 0 : index
    %106 = vector.load %arg13[%c0_47, %c0_48, %c0_49] : memref<3x1x128xf32, #tpu.memory_space<vmem>>, vector<1x1x128xf32>
    %107 = vector.shape_cast %106 : vector<1x1x128xf32> to vector<1x128xf32>
    %108 = vector.broadcast %107 : vector<1x128xf32> to vector<256x128xf32>
    %109 = arith.addf %105, %108 : vector<256x128xf32>
    %cst_50 = arith.constant 0.000000e+00 : f32
    %110 = vector.broadcast %cst_50 : f32 to vector<256x128xf32>
    %111 = arith.maximumf %109, %110 : vector<256x128xf32>
    %112 = arith.truncf %111 : vector<256x128xf32> to vector<256x128xbf16>
    %c1 = arith.constant 1 : index
    %c0_51 = arith.constant 0 : index
    %c0_52 = arith.constant 0 : index
    %113 = vector.load %arg5[%c1, %c0_51, %c0_52] : memref<3x128x128xbf16, #tpu.memory_space<vmem>>, vector<1x128x128xbf16>
    %114 = vector.shape_cast %113 : vector<1x128x128xbf16> to vector<128x128xbf16>
    %cst_53 = arith.constant dense<0.000000e+00> : vector<256x128xf32>
    %115 = tpu.matmul %112, %114, %cst_53 {dimension_numbers = #tpu.dot_dimension_numbers<[1], [0], [0], [1], [0, 0, 1, 1], [], []>} : vector<256x128xbf16>, vector<128x128xbf16>, vector<256x128xf32> -> vector<256x128xf32>
    %c1_54 = arith.constant 1 : index
    %c0_55 = arith.constant 0 : index
    %c0_56 = arith.constant 0 : index
    %116 = vector.load %arg6[%c1_54, %c0_55, %c0_56] : memref<3x1x128xf32, #tpu.memory_space<vmem>>, vector<1x1x128xf32>
    %117 = vector.shape_cast %116 : vector<1x1x128xf32> to vector<1x128xf32>
    %118 = vector.broadcast %117 : vector<1x128xf32> to vector<256x128xf32>
    %119 = arith.mulf %115, %118 : vector<256x128xf32>
    %c1_57 = arith.constant 1 : index
    %c0_58 = arith.constant 0 : index
    %c0_59 = arith.constant 0 : index
    %120 = vector.load %arg7[%c1_57, %c0_58, %c0_59] : memref<3x1x128xf32, #tpu.memory_space<vmem>>, vector<1x1x128xf32>
    %121 = vector.shape_cast %120 : vector<1x1x128xf32> to vector<1x128xf32>
    %122 = vector.broadcast %121 : vector<1x128xf32> to vector<256x128xf32>
    %123 = arith.addf %119, %122 : vector<256x128xf32>
    %cst_60 = arith.constant 0.000000e+00 : f32
    %124 = vector.broadcast %cst_60 : f32 to vector<256x128xf32>
    %125 = arith.maximumf %123, %124 : vector<256x128xf32>
    %126 = tpu.concatenate %21, %125 in 0 : vector<16x128xf32>, vector<256x128xf32> -> vector<272x128xf32>
    %127 = vector.extract_strided_slice %126 {offsets = [0, 0], sizes = [256, 128], strides = [1, 1]} : vector<272x128xf32> to vector<256x128xf32>
    %128 = vector.extract_strided_slice %127 {offsets = [255, 0], sizes = [1, 128], strides = [1, 1]} : vector<256x128xf32> to vector<1x128xf32>
    %129 = vector.extract_strided_slice %127 {offsets = [0, 0], sizes = [255, 128], strides = [1, 1]} : vector<256x128xf32> to vector<255x128xf32>
    %130 = tpu.concatenate %128, %129 in 0 : vector<1x128xf32>, vector<255x128xf32> -> vector<256x128xf32>
    %cst_61 = arith.constant 0.000000e+00 : f32
    %131 = vector.broadcast %cst_61 : f32 to vector<256x128xf32>
    %132 = arith.select %18, %130, %131 : vector<256x128xi1>, vector<256x128xf32>
    %133 = vector.extract_strided_slice %132 {offsets = [0, 0], sizes = [256, 32], strides = [1, 1]} : vector<256x128xf32> to vector<256x32xf32>
    %134 = arith.truncf %133 : vector<256x32xf32> to vector<256x32xbf16>
    %135 = vector.extract_strided_slice %126 {offsets = [0, 0], sizes = [256, 128], strides = [1, 1]} : vector<272x128xf32> to vector<256x128xf32>
    %136 = vector.extract_strided_slice %135 {offsets = [0, 0], sizes = [256, 32], strides = [1, 1]} : vector<256x128xf32> to vector<256x32xf32>
    %137 = arith.truncf %136 : vector<256x32xf32> to vector<256x32xbf16>
    %138 = vector.extract_strided_slice %126 {offsets = [0, 0], sizes = [256, 128], strides = [1, 1]} : vector<272x128xf32> to vector<256x128xf32>
    %139 = vector.extract_strided_slice %138 {offsets = [1, 0], sizes = [255, 128], strides = [1, 1]} : vector<256x128xf32> to vector<255x128xf32>
    %140 = vector.extract_strided_slice %138 {offsets = [0, 0], sizes = [1, 128], strides = [1, 1]} : vector<256x128xf32> to vector<1x128xf32>
    %141 = tpu.concatenate %139, %140 in 0 : vector<255x128xf32>, vector<1x128xf32> -> vector<256x128xf32>
    %cst_62 = arith.constant 0.000000e+00 : f32
    %142 = vector.broadcast %cst_62 : f32 to vector<256x128xf32>
    %143 = arith.select %20, %141, %142 : vector<256x128xi1>, vector<256x128xf32>
    %144 = vector.extract_strided_slice %143 {offsets = [0, 0], sizes = [256, 32], strides = [1, 1]} : vector<256x128xf32> to vector<256x32xf32>
    %145 = arith.truncf %144 : vector<256x32xf32> to vector<256x32xbf16>
    %146 = vector.extract_strided_slice %126 {offsets = [16, 0], sizes = [256, 128], strides = [1, 1]} : vector<272x128xf32> to vector<256x128xf32>
    %147 = vector.extract_strided_slice %146 {offsets = [255, 0], sizes = [1, 128], strides = [1, 1]} : vector<256x128xf32> to vector<1x128xf32>
    %148 = vector.extract_strided_slice %146 {offsets = [0, 0], sizes = [255, 128], strides = [1, 1]} : vector<256x128xf32> to vector<255x128xf32>
    %149 = tpu.concatenate %147, %148 in 0 : vector<1x128xf32>, vector<255x128xf32> -> vector<256x128xf32>
    %cst_63 = arith.constant 0.000000e+00 : f32
    %150 = vector.broadcast %cst_63 : f32 to vector<256x128xf32>
    %151 = arith.select %18, %149, %150 : vector<256x128xi1>, vector<256x128xf32>
    %152 = vector.extract_strided_slice %151 {offsets = [0, 0], sizes = [256, 32], strides = [1, 1]} : vector<256x128xf32> to vector<256x32xf32>
    %153 = arith.truncf %152 : vector<256x32xf32> to vector<256x32xbf16>
    %154 = arith.truncf %125 : vector<256x128xf32> to vector<256x128xbf16>
    %155 = tpu.concatenate %134, %137, %145, %153, %154 in 1 : vector<256x32xbf16>, vector<256x32xbf16>, vector<256x32xbf16>, vector<256x32xbf16>, vector<256x128xbf16> -> vector<256x256xbf16>
    %c1_64 = arith.constant 1 : index
    %c0_65 = arith.constant 0 : index
    %c0_66 = arith.constant 0 : index
    %156 = vector.load %arg8[%c1_64, %c0_65, %c0_66] : memref<3x256x128xbf16, #tpu.memory_space<vmem>>, vector<1x256x128xbf16>
    %157 = vector.shape_cast %156 : vector<1x256x128xbf16> to vector<256x128xbf16>
    %cst_67 = arith.constant dense<0.000000e+00> : vector<256x128xf32>
    %158 = tpu.matmul %155, %157, %cst_67 {dimension_numbers = #tpu.dot_dimension_numbers<[1], [0], [0], [1], [0, 0, 1, 1], [], []>} : vector<256x256xbf16>, vector<256x128xbf16>, vector<256x128xf32> -> vector<256x128xf32>
    %c1_68 = arith.constant 1 : index
    %c0_69 = arith.constant 0 : index
    %c0_70 = arith.constant 0 : index
    %159 = vector.load %arg9[%c1_68, %c0_69, %c0_70] : memref<3x1x128xf32, #tpu.memory_space<vmem>>, vector<1x1x128xf32>
    %160 = vector.shape_cast %159 : vector<1x1x128xf32> to vector<1x128xf32>
    %161 = vector.broadcast %160 : vector<1x128xf32> to vector<256x128xf32>
    %162 = arith.mulf %158, %161 : vector<256x128xf32>
    %c1_71 = arith.constant 1 : index
    %c0_72 = arith.constant 0 : index
    %c0_73 = arith.constant 0 : index
    %163 = vector.load %arg10[%c1_71, %c0_72, %c0_73] : memref<3x1x128xf32, #tpu.memory_space<vmem>>, vector<1x1x128xf32>
    %164 = vector.shape_cast %163 : vector<1x1x128xf32> to vector<1x128xf32>
    %165 = vector.broadcast %164 : vector<1x128xf32> to vector<256x128xf32>
    %166 = arith.addf %162, %165 : vector<256x128xf32>
    %cst_74 = arith.constant 0.000000e+00 : f32
    %167 = vector.broadcast %cst_74 : f32 to vector<256x128xf32>
    %168 = arith.maximumf %166, %167 : vector<256x128xf32>
    %169 = arith.truncf %168 : vector<256x128xf32> to vector<256x128xbf16>
    %c1_75 = arith.constant 1 : index
    %c0_76 = arith.constant 0 : index
    %c0_77 = arith.constant 0 : index
    %170 = vector.load %arg11[%c1_75, %c0_76, %c0_77] : memref<3x128x128xbf16, #tpu.memory_space<vmem>>, vector<1x128x128xbf16>
    %171 = vector.shape_cast %170 : vector<1x128x128xbf16> to vector<128x128xbf16>
    %cst_78 = arith.constant dense<0.000000e+00> : vector<256x128xf32>
    %172 = tpu.matmul %169, %171, %cst_78 {dimension_numbers = #tpu.dot_dimension_numbers<[1], [0], [0], [1], [0, 0, 1, 1], [], []>} : vector<256x128xbf16>, vector<128x128xbf16>, vector<256x128xf32> -> vector<256x128xf32>
    %c1_79 = arith.constant 1 : index
    %c0_80 = arith.constant 0 : index
    %c0_81 = arith.constant 0 : index
    %173 = vector.load %arg12[%c1_79, %c0_80, %c0_81] : memref<3x1x128xf32, #tpu.memory_space<vmem>>, vector<1x1x128xf32>
    %174 = vector.shape_cast %173 : vector<1x1x128xf32> to vector<1x128xf32>
    %175 = vector.broadcast %174 : vector<1x128xf32> to vector<256x128xf32>
    %176 = arith.mulf %172, %175 : vector<256x128xf32>
    %177 = arith.addf %109, %176 : vector<256x128xf32>
    %c1_82 = arith.constant 1 : index
    %c0_83 = arith.constant 0 : index
    %c0_84 = arith.constant 0 : index
    %178 = vector.load %arg13[%c1_82, %c0_83, %c0_84] : memref<3x1x128xf32, #tpu.memory_space<vmem>>, vector<1x1x128xf32>
    %179 = vector.shape_cast %178 : vector<1x1x128xf32> to vector<1x128xf32>
    %180 = vector.broadcast %179 : vector<1x128xf32> to vector<256x128xf32>
    %181 = arith.addf %177, %180 : vector<256x128xf32>
    %cst_85 = arith.constant 0.000000e+00 : f32
    %182 = vector.broadcast %cst_85 : f32 to vector<256x128xf32>
    %183 = arith.maximumf %181, %182 : vector<256x128xf32>
    %184 = arith.truncf %183 : vector<256x128xf32> to vector<256x128xbf16>
    %c2 = arith.constant 2 : index
    %c0_86 = arith.constant 0 : index
    %c0_87 = arith.constant 0 : index
    %185 = vector.load %arg5[%c2, %c0_86, %c0_87] : memref<3x128x128xbf16, #tpu.memory_space<vmem>>, vector<1x128x128xbf16>
    %186 = vector.shape_cast %185 : vector<1x128x128xbf16> to vector<128x128xbf16>
    %cst_88 = arith.constant dense<0.000000e+00> : vector<256x128xf32>
    %187 = tpu.matmul %184, %186, %cst_88 {dimension_numbers = #tpu.dot_dimension_numbers<[1], [0], [0], [1], [0, 0, 1, 1], [], []>} : vector<256x128xbf16>, vector<128x128xbf16>, vector<256x128xf32> -> vector<256x128xf32>
    %c2_89 = arith.constant 2 : index
    %c0_90 = arith.constant 0 : index
    %c0_91 = arith.constant 0 : index
    %188 = vector.load %arg6[%c2_89, %c0_90, %c0_91] : memref<3x1x128xf32, #tpu.memory_space<vmem>>, vector<1x1x128xf32>
    %189 = vector.shape_cast %188 : vector<1x1x128xf32> to vector<1x128xf32>
    %190 = vector.broadcast %189 : vector<1x128xf32> to vector<256x128xf32>
    %191 = arith.mulf %187, %190 : vector<256x128xf32>
    %c2_92 = arith.constant 2 : index
    %c0_93 = arith.constant 0 : index
    %c0_94 = arith.constant 0 : index
    %192 = vector.load %arg7[%c2_92, %c0_93, %c0_94] : memref<3x1x128xf32, #tpu.memory_space<vmem>>, vector<1x1x128xf32>
    %193 = vector.shape_cast %192 : vector<1x1x128xf32> to vector<1x128xf32>
    %194 = vector.broadcast %193 : vector<1x128xf32> to vector<256x128xf32>
    %195 = arith.addf %191, %194 : vector<256x128xf32>
    %cst_95 = arith.constant 0.000000e+00 : f32
    %196 = vector.broadcast %cst_95 : f32 to vector<256x128xf32>
    %197 = arith.maximumf %195, %196 : vector<256x128xf32>
    %198 = tpu.concatenate %21, %197 in 0 : vector<16x128xf32>, vector<256x128xf32> -> vector<272x128xf32>
    %199 = vector.extract_strided_slice %198 {offsets = [0, 0], sizes = [256, 128], strides = [1, 1]} : vector<272x128xf32> to vector<256x128xf32>
    %200 = vector.extract_strided_slice %199 {offsets = [255, 0], sizes = [1, 128], strides = [1, 1]} : vector<256x128xf32> to vector<1x128xf32>
    %201 = vector.extract_strided_slice %199 {offsets = [0, 0], sizes = [255, 128], strides = [1, 1]} : vector<256x128xf32> to vector<255x128xf32>
    %202 = tpu.concatenate %200, %201 in 0 : vector<1x128xf32>, vector<255x128xf32> -> vector<256x128xf32>
    %cst_96 = arith.constant 0.000000e+00 : f32
    %203 = vector.broadcast %cst_96 : f32 to vector<256x128xf32>
    %204 = arith.select %18, %202, %203 : vector<256x128xi1>, vector<256x128xf32>
    %205 = vector.extract_strided_slice %204 {offsets = [0, 0], sizes = [256, 32], strides = [1, 1]} : vector<256x128xf32> to vector<256x32xf32>
    %206 = arith.truncf %205 : vector<256x32xf32> to vector<256x32xbf16>
    %207 = vector.extract_strided_slice %198 {offsets = [0, 0], sizes = [256, 128], strides = [1, 1]} : vector<272x128xf32> to vector<256x128xf32>
    %208 = vector.extract_strided_slice %207 {offsets = [0, 0], sizes = [256, 32], strides = [1, 1]} : vector<256x128xf32> to vector<256x32xf32>
    %209 = arith.truncf %208 : vector<256x32xf32> to vector<256x32xbf16>
    %210 = vector.extract_strided_slice %198 {offsets = [0, 0], sizes = [256, 128], strides = [1, 1]} : vector<272x128xf32> to vector<256x128xf32>
    %211 = vector.extract_strided_slice %210 {offsets = [1, 0], sizes = [255, 128], strides = [1, 1]} : vector<256x128xf32> to vector<255x128xf32>
    %212 = vector.extract_strided_slice %210 {offsets = [0, 0], sizes = [1, 128], strides = [1, 1]} : vector<256x128xf32> to vector<1x128xf32>
    %213 = tpu.concatenate %211, %212 in 0 : vector<255x128xf32>, vector<1x128xf32> -> vector<256x128xf32>
    %cst_97 = arith.constant 0.000000e+00 : f32
    %214 = vector.broadcast %cst_97 : f32 to vector<256x128xf32>
    %215 = arith.select %20, %213, %214 : vector<256x128xi1>, vector<256x128xf32>
    %216 = vector.extract_strided_slice %215 {offsets = [0, 0], sizes = [256, 32], strides = [1, 1]} : vector<256x128xf32> to vector<256x32xf32>
    %217 = arith.truncf %216 : vector<256x32xf32> to vector<256x32xbf16>
    %218 = vector.extract_strided_slice %198 {offsets = [16, 0], sizes = [256, 128], strides = [1, 1]} : vector<272x128xf32> to vector<256x128xf32>
    %219 = vector.extract_strided_slice %218 {offsets = [255, 0], sizes = [1, 128], strides = [1, 1]} : vector<256x128xf32> to vector<1x128xf32>
    %220 = vector.extract_strided_slice %218 {offsets = [0, 0], sizes = [255, 128], strides = [1, 1]} : vector<256x128xf32> to vector<255x128xf32>
    %221 = tpu.concatenate %219, %220 in 0 : vector<1x128xf32>, vector<255x128xf32> -> vector<256x128xf32>
    %cst_98 = arith.constant 0.000000e+00 : f32
    %222 = vector.broadcast %cst_98 : f32 to vector<256x128xf32>
    %223 = arith.select %18, %221, %222 : vector<256x128xi1>, vector<256x128xf32>
    %224 = vector.extract_strided_slice %223 {offsets = [0, 0], sizes = [256, 32], strides = [1, 1]} : vector<256x128xf32> to vector<256x32xf32>
    %225 = arith.truncf %224 : vector<256x32xf32> to vector<256x32xbf16>
    %226 = arith.truncf %197 : vector<256x128xf32> to vector<256x128xbf16>
    %227 = tpu.concatenate %206, %209, %217, %225, %226 in 1 : vector<256x32xbf16>, vector<256x32xbf16>, vector<256x32xbf16>, vector<256x32xbf16>, vector<256x128xbf16> -> vector<256x256xbf16>
    %c2_99 = arith.constant 2 : index
    %c0_100 = arith.constant 0 : index
    %c0_101 = arith.constant 0 : index
    %228 = vector.load %arg8[%c2_99, %c0_100, %c0_101] : memref<3x256x128xbf16, #tpu.memory_space<vmem>>, vector<1x256x128xbf16>
    %229 = vector.shape_cast %228 : vector<1x256x128xbf16> to vector<256x128xbf16>
    %cst_102 = arith.constant dense<0.000000e+00> : vector<256x128xf32>
    %230 = tpu.matmul %227, %229, %cst_102 {dimension_numbers = #tpu.dot_dimension_numbers<[1], [0], [0], [1], [0, 0, 1, 1], [], []>} : vector<256x256xbf16>, vector<256x128xbf16>, vector<256x128xf32> -> vector<256x128xf32>
    %c2_103 = arith.constant 2 : index
    %c0_104 = arith.constant 0 : index
    %c0_105 = arith.constant 0 : index
    %231 = vector.load %arg9[%c2_103, %c0_104, %c0_105] : memref<3x1x128xf32, #tpu.memory_space<vmem>>, vector<1x1x128xf32>
    %232 = vector.shape_cast %231 : vector<1x1x128xf32> to vector<1x128xf32>
    %233 = vector.broadcast %232 : vector<1x128xf32> to vector<256x128xf32>
    %234 = arith.mulf %230, %233 : vector<256x128xf32>
    %c2_106 = arith.constant 2 : index
    %c0_107 = arith.constant 0 : index
    %c0_108 = arith.constant 0 : index
    %235 = vector.load %arg10[%c2_106, %c0_107, %c0_108] : memref<3x1x128xf32, #tpu.memory_space<vmem>>, vector<1x1x128xf32>
    %236 = vector.shape_cast %235 : vector<1x1x128xf32> to vector<1x128xf32>
    %237 = vector.broadcast %236 : vector<1x128xf32> to vector<256x128xf32>
    %238 = arith.addf %234, %237 : vector<256x128xf32>
    %cst_109 = arith.constant 0.000000e+00 : f32
    %239 = vector.broadcast %cst_109 : f32 to vector<256x128xf32>
    %240 = arith.maximumf %238, %239 : vector<256x128xf32>
    %241 = arith.truncf %240 : vector<256x128xf32> to vector<256x128xbf16>
    %c2_110 = arith.constant 2 : index
    %c0_111 = arith.constant 0 : index
    %c0_112 = arith.constant 0 : index
    %242 = vector.load %arg11[%c2_110, %c0_111, %c0_112] : memref<3x128x128xbf16, #tpu.memory_space<vmem>>, vector<1x128x128xbf16>
    %243 = vector.shape_cast %242 : vector<1x128x128xbf16> to vector<128x128xbf16>
    %cst_113 = arith.constant dense<0.000000e+00> : vector<256x128xf32>
    %244 = tpu.matmul %241, %243, %cst_113 {dimension_numbers = #tpu.dot_dimension_numbers<[1], [0], [0], [1], [0, 0, 1, 1], [], []>} : vector<256x128xbf16>, vector<128x128xbf16>, vector<256x128xf32> -> vector<256x128xf32>
    %c2_114 = arith.constant 2 : index
    %c0_115 = arith.constant 0 : index
    %c0_116 = arith.constant 0 : index
    %245 = vector.load %arg12[%c2_114, %c0_115, %c0_116] : memref<3x1x128xf32, #tpu.memory_space<vmem>>, vector<1x1x128xf32>
    %246 = vector.shape_cast %245 : vector<1x1x128xf32> to vector<1x128xf32>
    %247 = vector.broadcast %246 : vector<1x128xf32> to vector<256x128xf32>
    %248 = arith.mulf %244, %247 : vector<256x128xf32>
    %249 = arith.addf %181, %248 : vector<256x128xf32>
    %c2_117 = arith.constant 2 : index
    %c0_118 = arith.constant 0 : index
    %c0_119 = arith.constant 0 : index
    %250 = vector.load %arg13[%c2_117, %c0_118, %c0_119] : memref<3x1x128xf32, #tpu.memory_space<vmem>>, vector<1x1x128xf32>
    %251 = vector.shape_cast %250 : vector<1x1x128xf32> to vector<1x128xf32>
    %252 = vector.broadcast %251 : vector<1x128xf32> to vector<256x128xf32>
    %253 = arith.addf %249, %252 : vector<256x128xf32>
    %cst_120 = arith.constant 0.000000e+00 : f32
    %254 = vector.broadcast %cst_120 : f32 to vector<256x128xf32>
    %255 = arith.maximumf %253, %254 : vector<256x128xf32>
    %256 = arith.truncf %255 : vector<256x128xf32> to vector<256x128xbf16>
    %c0_121 = arith.constant 0 : index
    %c0_122 = arith.constant 0 : index
    %257 = vector.load %arg14[%c0_121, %c0_122] : memref<128x640xbf16, #tpu.memory_space<vmem>>, vector<128x640xbf16>
    %cst_123 = arith.constant dense<0.000000e+00> : vector<256x640xf32>
    %258 = tpu.matmul %256, %257, %cst_123 {dimension_numbers = #tpu.dot_dimension_numbers<[1], [0], [0], [1], [0, 0, 1, 1], [], []>} : vector<256x128xbf16>, vector<128x640xbf16>, vector<256x640xf32> -> vector<256x640xf32>
    %c0_124 = arith.constant 0 : index
    %c0_125 = arith.constant 0 : index
    %259 = vector.load %arg15[%c0_124, %c0_125] : memref<1x640xf32, #tpu.memory_space<vmem>>, vector<1x640xf32>
    %260 = vector.broadcast %259 : vector<1x640xf32> to vector<256x640xf32>
    %261 = arith.mulf %258, %260 : vector<256x640xf32>
    %c0_126 = arith.constant 0 : index
    %c0_127 = arith.constant 0 : index
    %262 = vector.load %arg16[%c0_126, %c0_127] : memref<1x640xf32, #tpu.memory_space<vmem>>, vector<1x640xf32>
    %263 = vector.broadcast %262 : vector<1x640xf32> to vector<256x640xf32>
    %264 = arith.addf %261, %263 : vector<256x640xf32>
    %cst_128 = arith.constant 0.000000e+00 : f32
    %265 = vector.broadcast %cst_128 : f32 to vector<256x640xf32>
    %266 = arith.maximumf %264, %265 : vector<256x640xf32>
    %267 = arith.truncf %266 : vector<256x640xf32> to vector<256x640xbf16>
    %c0_129 = arith.constant 0 : index
    %c0_130 = arith.constant 0 : index
    %268 = vector.load %arg17[%c0_129, %c0_130] : memref<640x384xbf16, #tpu.memory_space<vmem>>, vector<640x384xbf16>
    %cst_131 = arith.constant dense<0.000000e+00> : vector<256x384xf32>
    %269 = tpu.matmul %267, %268, %cst_131 {dimension_numbers = #tpu.dot_dimension_numbers<[1], [0], [0], [1], [0, 0, 1, 1], [], []>} : vector<256x640xbf16>, vector<640x384xbf16>, vector<256x384xf32> -> vector<256x384xf32>
    %c0_132 = arith.constant 0 : index
    %c0_133 = arith.constant 0 : index
    %270 = vector.load %arg18[%c0_132, %c0_133] : memref<1x384xf32, #tpu.memory_space<vmem>>, vector<1x384xf32>
    %271 = vector.broadcast %270 : vector<1x384xf32> to vector<256x384xf32>
    %272 = arith.addf %269, %271 : vector<256x384xf32>
    %273 = vector.extract_strided_slice %272 {offsets = [0, 0], sizes = [256, 128], strides = [1, 1]} : vector<256x384xf32> to vector<256x128xf32>
    %274 = vector.shape_cast %273 : vector<256x128xf32> to vector<16x16x128xf32>
    %c0_134 = arith.constant 0 : index
    %c0_135 = arith.constant 0 : index
    %c0_136 = arith.constant 0 : index
    %c0_137 = arith.constant 0 : index
    %c0_138 = arith.constant 0 : index
    %275 = vector.load %arg19[%c0_134, %c0_135, %c0_136, %c0_137, %c0_138] : memref<1x3x16x16x128xf32, #tpu.memory_space<vmem>>, vector<1x1x16x16x128xf32>
    %276 = vector.shape_cast %275 : vector<1x1x16x16x128xf32> to vector<16x16x128xf32>
    %277 = vector.shape_cast %274 : vector<16x16x128xf32> to vector<1x1x16x16x128xf32>
    tpu.vector_store %arg19[%c0_134, %c0_135, %c0_136, %c0_137, %c0_138], %277 {strides = array<i32>} : memref<1x3x16x16x128xf32, #tpu.memory_space<vmem>>, vector<1x1x16x16x128xf32>,
    %278 = vector.extract_strided_slice %272 {offsets = [0, 128], sizes = [256, 128], strides = [1, 1]} : vector<256x384xf32> to vector<256x128xf32>
    %279 = vector.shape_cast %278 : vector<256x128xf32> to vector<16x16x128xf32>
    %c0_139 = arith.constant 0 : index
    %c1_140 = arith.constant 1 : index
    %c0_141 = arith.constant 0 : index
    %c0_142 = arith.constant 0 : index
    %c0_143 = arith.constant 0 : index
    %280 = vector.load %arg19[%c0_139, %c1_140, %c0_141, %c0_142, %c0_143] : memref<1x3x16x16x128xf32, #tpu.memory_space<vmem>>, vector<1x1x16x16x128xf32>
    %281 = vector.shape_cast %280 : vector<1x1x16x16x128xf32> to vector<16x16x128xf32>
    %282 = vector.shape_cast %279 : vector<16x16x128xf32> to vector<1x1x16x16x128xf32>
    tpu.vector_store %arg19[%c0_139, %c1_140, %c0_141, %c0_142, %c0_143], %282 {strides = array<i32>} : memref<1x3x16x16x128xf32, #tpu.memory_space<vmem>>, vector<1x1x16x16x128xf32>,
    %283 = vector.extract_strided_slice %272 {offsets = [0, 256], sizes = [256, 128], strides = [1, 1]} : vector<256x384xf32> to vector<256x128xf32>
    %284 = vector.shape_cast %283 : vector<256x128xf32> to vector<16x16x128xf32>
    %c0_144 = arith.constant 0 : index
    %c2_145 = arith.constant 2 : index
    %c0_146 = arith.constant 0 : index
    %c0_147 = arith.constant 0 : index
    %c0_148 = arith.constant 0 : index
    %285 = vector.load %arg19[%c0_144, %c2_145, %c0_146, %c0_147, %c0_148] : memref<1x3x16x16x128xf32, #tpu.memory_space<vmem>>, vector<1x1x16x16x128xf32>
    %286 = vector.shape_cast %285 : vector<1x1x16x16x128xf32> to vector<16x16x128xf32>
    %287 = vector.shape_cast %284 : vector<16x16x128xf32> to vector<1x1x16x16x128xf32>
    tpu.vector_store %arg19[%c0_144, %c2_145, %c0_146, %c0_147, %c0_148], %287 {strides = array<i32>} : memref<1x3x16x16x128xf32, #tpu.memory_space<vmem>>, vector<1x1x16x16x128xf32>,
    return
  }
  func.func @transform_0(%arg0: i32) -> (i32, i32, i32) {
    %c0_i32 = arith.constant 0 : i32
    %c0_i32_0 = arith.constant 0 : i32
    %c0_i32_1 = arith.constant 0 : i32
    return %arg0, %c0_i32, %c0_i32_0 : i32, i32, i32
  }
  func.func @transform_1(%arg0: i32) -> (i32, i32) {
    %c0_i32 = arith.constant 0 : i32
    %c0_i32_0 = arith.constant 0 : i32
    %c0_i32_1 = arith.constant 0 : i32
    return %c0_i32, %c0_i32_0 : i32, i32
  }
  func.func @transform_2(%arg0: i32) -> (i32, i32) {
    %c0_i32 = arith.constant 0 : i32
    %c0_i32_0 = arith.constant 0 : i32
    %c0_i32_1 = arith.constant 0 : i32
    return %c0_i32, %c0_i32_0 : i32, i32
  }
  func.func @transform_3(%arg0: i32) -> (i32, i32) {
    %c0_i32 = arith.constant 0 : i32
    %c0_i32_0 = arith.constant 0 : i32
    %c0_i32_1 = arith.constant 0 : i32
    return %c0_i32, %c0_i32_0 : i32, i32
  }
  func.func @transform_4(%arg0: i32) -> (i32, i32, i32) {
    %c0_i32 = arith.constant 0 : i32
    %c0_i32_0 = arith.constant 0 : i32
    %c0_i32_1 = arith.constant 0 : i32
    %c0_i32_2 = arith.constant 0 : i32
    return %c0_i32, %c0_i32_0, %c0_i32_1 : i32, i32, i32
  }
  func.func @transform_5(%arg0: i32) -> (i32, i32, i32) {
    %c0_i32 = arith.constant 0 : i32
    %c0_i32_0 = arith.constant 0 : i32
    %c0_i32_1 = arith.constant 0 : i32
    %c0_i32_2 = arith.constant 0 : i32
    return %c0_i32, %c0_i32_0, %c0_i32_1 : i32, i32, i32
  }
  func.func @transform_6(%arg0: i32) -> (i32, i32, i32) {
    %c0_i32 = arith.constant 0 : i32
    %c0_i32_0 = arith.constant 0 : i32
    %c0_i32_1 = arith.constant 0 : i32
    %c0_i32_2 = arith.constant 0 : i32
    return %c0_i32, %c0_i32_0, %c0_i32_1 : i32, i32, i32
  }
  func.func @transform_7(%arg0: i32) -> (i32, i32, i32) {
    %c0_i32 = arith.constant 0 : i32
    %c0_i32_0 = arith.constant 0 : i32
    %c0_i32_1 = arith.constant 0 : i32
    %c0_i32_2 = arith.constant 0 : i32
    return %c0_i32, %c0_i32_0, %c0_i32_1 : i32, i32, i32
  }
  func.func @transform_8(%arg0: i32) -> (i32, i32, i32) {
    %c0_i32 = arith.constant 0 : i32
    %c0_i32_0 = arith.constant 0 : i32
    %c0_i32_1 = arith.constant 0 : i32
    %c0_i32_2 = arith.constant 0 : i32
    return %c0_i32, %c0_i32_0, %c0_i32_1 : i32, i32, i32
  }
  func.func @transform_9(%arg0: i32) -> (i32, i32, i32) {
    %c0_i32 = arith.constant 0 : i32
    %c0_i32_0 = arith.constant 0 : i32
    %c0_i32_1 = arith.constant 0 : i32
    %c0_i32_2 = arith.constant 0 : i32
    return %c0_i32, %c0_i32_0, %c0_i32_1 : i32, i32, i32
  }
  func.func @transform_10(%arg0: i32) -> (i32, i32, i32) {
    %c0_i32 = arith.constant 0 : i32
    %c0_i32_0 = arith.constant 0 : i32
    %c0_i32_1 = arith.constant 0 : i32
    %c0_i32_2 = arith.constant 0 : i32
    return %c0_i32, %c0_i32_0, %c0_i32_1 : i32, i32, i32
  }
  func.func @transform_11(%arg0: i32) -> (i32, i32, i32) {
    %c0_i32 = arith.constant 0 : i32
    %c0_i32_0 = arith.constant 0 : i32
    %c0_i32_1 = arith.constant 0 : i32
    %c0_i32_2 = arith.constant 0 : i32
    return %c0_i32, %c0_i32_0, %c0_i32_1 : i32, i32, i32
  }
  func.func @transform_12(%arg0: i32) -> (i32, i32, i32) {
    %c0_i32 = arith.constant 0 : i32
    %c0_i32_0 = arith.constant 0 : i32
    %c0_i32_1 = arith.constant 0 : i32
    %c0_i32_2 = arith.constant 0 : i32
    return %c0_i32, %c0_i32_0, %c0_i32_1 : i32, i32, i32
  }
  func.func @transform_13(%arg0: i32) -> (i32, i32) {
    %c0_i32 = arith.constant 0 : i32
    %c0_i32_0 = arith.constant 0 : i32
    %c0_i32_1 = arith.constant 0 : i32
    return %c0_i32, %c0_i32_0 : i32, i32
  }
  func.func @transform_14(%arg0: i32) -> (i32, i32) {
    %c0_i32 = arith.constant 0 : i32
    %c0_i32_0 = arith.constant 0 : i32
    %c0_i32_1 = arith.constant 0 : i32
    return %c0_i32, %c0_i32_0 : i32, i32
  }
  func.func @transform_15(%arg0: i32) -> (i32, i32) {
    %c0_i32 = arith.constant 0 : i32
    %c0_i32_0 = arith.constant 0 : i32
    %c0_i32_1 = arith.constant 0 : i32
    return %c0_i32, %c0_i32_0 : i32, i32
  }
  func.func @transform_16(%arg0: i32) -> (i32, i32) {
    %c0_i32 = arith.constant 0 : i32
    %c0_i32_0 = arith.constant 0 : i32
    %c0_i32_1 = arith.constant 0 : i32
    return %c0_i32, %c0_i32_0 : i32, i32
  }
  func.func @transform_17(%arg0: i32) -> (i32, i32) {
    %c0_i32 = arith.constant 0 : i32
    %c0_i32_0 = arith.constant 0 : i32
    %c0_i32_1 = arith.constant 0 : i32
    return %c0_i32, %c0_i32_0 : i32, i32
  }
  func.func @transform_18(%arg0: i32) -> (i32, i32, i32, i32, i32) {
    %c0_i32 = arith.constant 0 : i32
    %c0_i32_0 = arith.constant 0 : i32
    %c0_i32_1 = arith.constant 0 : i32
    %c0_i32_2 = arith.constant 0 : i32
    %c0_i32_3 = arith.constant 0 : i32
    return %arg0, %c0_i32, %c0_i32_0, %c0_i32_1, %c0_i32_2 : i32, i32, i32, i32, i32
  }
}

</mosaic_0001>

<llo_original>
// kernel: tpu_custom_call.1
$region0: #{tpu_custom_call.1}
  #allocation0 [shape = 'u32[]', space=smem, size = 0x4, offset = 0x4, fixed_abs, tag = 'smem constant byte address 0x4 - core index']
  #allocation1 [shape = 'u32[72,128]{1,0:T(1,128)}', space=vmem, size = 0x9000, scoped, tag = 'internal scratch']
  %s0 = inlined_call_operand.hbm [shape: f32[256,128], index: 0, kind: input, shape index: {}]
  %s1 = inlined_call_operand.hbm [shape: f32[256,128], index: 1, kind: output, shape index: {}]
  %s2 = sld [smem:[#allocation0]]
  $region18: #{tpu_custom_call.1} parent=0
    _
  %s4 = ssub.s32 1, %s2
  %s5 = scalar_select 0, %s4, %s2
  $region1: #{tpu_custom_call.1} parent=0
    #allocation2 [shape = 'u8[131072]{0}', space=vmem, size = 0x20000, scoped, tag = 'input window, operand 0, single buffered']
    #allocation3 [shape = 's32[1]{0}', space=sflag, size = 0x4, scoped, tag = 'scoped memory for tpu_custom_call.1']
    #allocation4 [shape = 's32[1]{0}', space=sflag, size = 0x4, scoped, tag = 'scoped memory for tpu_custom_call.1']
    #allocation5 [shape = 'u8[131072]{0}', space=vmem, size = 0x20000, scoped, tag = 'output window, operand 0, single buffered']
    %6 = vsyncpa [#allocation3], 0
    %7 = vsyncpa [#allocation4], 0
    // Predicated region
    $region2: #{tpu_custom_call.1} parent=1 // pred_check
      _
    $region3: #{tpu_custom_call.1} parent=1 // pred_check_branch
      %9 = sbr.rel (0) target = $region5
    $region4: #{tpu_custom_call.1} parent=1 // pred_region
      %11 = vsyncadd [#allocation3], 0
      %s12 = sshll.u32 %s0, 4
      %s13 = int_to_ptr.hbm [resolvable:$true] %s12
      %s14 = sshll.u32 [#allocation2], 4
      %s15 = int_to_ptr.vmem [resolvable:$true] %s14
      %20 = dma.hbm_to_vmem [thread:$0]  %s13, 4096, %s15, [#allocation3], 128, 128, 8
    $region5: #{tpu_custom_call.1} parent=1 // pred_fallthru
      _
    // Predicated region
    $region6: #{tpu_custom_call.1} parent=1 // pred_check
      _
    $region7: #{tpu_custom_call.1} parent=1 // pred_check_branch
      %22 = sbr.rel (0) target = $region9
    $region8: #{tpu_custom_call.1} parent=1 // pred_region
      %24 = dma.done [#allocation3], 4096
    $region9: #{tpu_custom_call.1} parent=1 // pred_fallthru
      _
    %v25 = vld [vmem:[#allocation2] sm:$0xff]
    %v26 = vld [vmem:[#allocation2 + $0x8] sm:$0xff]
    %v27 = vld [vmem:[#allocation2 + $0x10] sm:$0xff]
    %v28 = vld [vmem:[#allocation2 + $0x18] sm:$0xff]
    %v29 = vld [vmem:[#allocation2 + $0x20] sm:$0xff]
    %v30 = vld [vmem:[#allocation2 + $0x28] sm:$0xff]
    %v31 = vld [vmem:[#allocation2 + $0x30] sm:$0xff]
    %v32 = vld [vmem:[#allocation2 + $0x38] sm:$0xff]
    %v33 = vld [vmem:[#allocation2 + $0x40] sm:$0xff]
    %v34 = vld [vmem:[#allocation2 + $0x48] sm:$0xff]
    %v35 = vld [vmem:[#allocation2 + $0x50] sm:$0xff]
    %v36 = vld [vmem:[#allocation2 + $0x58] sm:$0xff]
    %v37 = vld [vmem:[#allocation2 + $0x60] sm:$0xff]
    %v38 = vld [vmem:[#allocation2 + $0x68] sm:$0xff]
    %v39 = vld [vmem:[#allocation2 + $0x70] sm:$0xff]
    %v40 = vld [vmem:[#allocation2 + $0x78] sm:$0xff]
    %v41 = vld [vmem:[#allocation2 + $0x80] sm:$0xff]
    %v42 = vld [vmem:[#allocation2 + $0x88] sm:$0xff]
    %v43 = vld [vmem:[#allocation2 + $0x90] sm:$0xff]
    %v44 = vld [vmem:[#allocation2 + $0x98] sm:$0xff]
    %v45 = vld [vmem:[#allocation2 + $0xa0] sm:$0xff]
    %v46 = vld [vmem:[#allocation2 + $0xa8] sm:$0xff]
    %v47 = vld [vmem:[#allocation2 + $0xb0] sm:$0xff]
    %v48 = vld [vmem:[#allocation2 + $0xb8] sm:$0xff]
    %v49 = vld [vmem:[#allocation2 + $0xc0] sm:$0xff]
    %v50 = vld [vmem:[#allocation2 + $0xc8] sm:$0xff]
    %v51 = vld [vmem:[#allocation2 + $0xd0] sm:$0xff]
    %v52 = vld [vmem:[#allocation2 + $0xd8] sm:$0xff]
    %v53 = vld [vmem:[#allocation2 + $0xe0] sm:$0xff]
    %v54 = vld [vmem:[#allocation2 + $0xe8] sm:$0xff]
    %v55 = vld [vmem:[#allocation2 + $0xf0] sm:$0xff]
    %v56 = vld [vmem:[#allocation2 + $0xf8] sm:$0xff]
    %v57 = vrot.slane %v25, 7
    %v58 = vrot.slane %v26, 7
    %v59 = vrot.slane %v27, 7
    %v60 = vrot.slane %v28, 7
    %v61 = vrot.slane %v29, 7
    %v62 = vrot.slane %v30, 7
    %v63 = vrot.slane %v31, 7
    %v64 = vrot.slane %v32, 7
    %v65 = vrot.slane %v33, 7
    %v66 = vrot.slane %v34, 7
    %v67 = vrot.slane %v35, 7
    %v68 = vrot.slane %v36, 7
    %v69 = vrot.slane %v37, 7
    %v70 = vrot.slane %v38, 7
    %v71 = vrot.slane %v39, 7
    %v72 = vrot.slane %v40, 7
    %v73 = vrot.slane %v41, 7
    %v74 = vrot.slane %v42, 7
    %v75 = vrot.slane %v43, 7
    %v76 = vrot.slane %v44, 7
    %v77 = vrot.slane %v45, 7
    %v78 = vrot.slane %v46, 7
    %v79 = vrot.slane %v47, 7
    %v80 = vrot.slane %v48, 7
    %v81 = vrot.slane %v49, 7
    %v82 = vrot.slane %v50, 7
    %v83 = vrot.slane %v51, 7
    %v84 = vrot.slane %v52, 7
    %v85 = vrot.slane %v53, 7
    %v86 = vrot.slane %v54, 7
    %v87 = vrot.slane %v55, 7
    %v88 = vrot.slane %v56, 7
    %v89 = vlaneseq
    %v90 = vshrl.u32 %v89, 7
    %vm91 = vcmp.lt.s32.totalorder %v90, 1
    %v92 = vsel %vm91, %v87, %v88
    %v93 = vsel %vm91, %v86, %v87
    %v94 = vsel %vm91, %v85, %v86
    %v95 = vsel %vm91, %v84, %v85
    %v96 = vsel %vm91, %v83, %v84
    %v97 = vsel %vm91, %v82, %v83
    %v98 = vsel %vm91, %v81, %v82
    %v99 = vsel %vm91, %v80, %v81
    %v100 = vsel %vm91, %v79, %v80
    %v101 = vsel %vm91, %v78, %v79
    %v102 = vsel %vm91, %v77, %v78
    %v103 = vsel %vm91, %v76, %v77
    %v104 = vsel %vm91, %v75, %v76
    %v105 = vsel %vm91, %v74, %v75
    %v106 = vsel %vm91, %v73, %v74
    %v107 = vsel %vm91, %v72, %v73
    %v108 = vsel %vm91, %v71, %v72
    %v109 = vsel %vm91, %v70, %v71
    %v110 = vsel %vm91, %v69, %v70
    %v111 = vsel %vm91, %v68, %v69
    %v112 = vsel %vm91, %v67, %v68
    %v113 = vsel %vm91, %v66, %v67
    %v114 = vsel %vm91, %v65, %v66
    %v115 = vsel %vm91, %v64, %v65
    %v116 = vsel %vm91, %v63, %v64
    %v117 = vsel %vm91, %v62, %v63
    %v118 = vsel %vm91, %v61, %v62
    %v119 = vsel %vm91, %v60, %v61
    %v120 = vsel %vm91, %v59, %v60
    %v121 = vsel %vm91, %v58, %v59
    %v122 = vsel %vm91, %v57, %v58
    %v123 = vsel %vm91, %v88, %v57
    %124 = vst [vmem:[#allocation5] sm:$0xff] %v123
    %125 = vst [vmem:[#allocation5 + $0x8] sm:$0xff] %v122
    %126 = vst [vmem:[#allocation5 + $0x10] sm:$0xff] %v121
    %127 = vst [vmem:[#allocation5 + $0x18] sm:$0xff] %v120
    %128 = vst [vmem:[#allocation5 + $0x20] sm:$0xff] %v119
    %129 = vst [vmem:[#allocation5 + $0x28] sm:$0xff] %v118
    %130 = vst [vmem:[#allocation5 + $0x30] sm:$0xff] %v117
    %131 = vst [vmem:[#allocation5 + $0x38] sm:$0xff] %v116
    %132 = vst [vmem:[#allocation5 + $0x40] sm:$0xff] %v115
    %133 = vst [vmem:[#allocation5 + $0x48] sm:$0xff] %v114
    %134 = vst [vmem:[#allocation5 + $0x50] sm:$0xff] %v113
    %135 = vst [vmem:[#allocation5 + $0x58] sm:$0xff] %v112
    %136 = vst [vmem:[#allocation5 + $0x60] sm:$0xff] %v111
    %137 = vst [vmem:[#allocation5 + $0x68] sm:$0xff] %v110
    %138 = vst [vmem:[#allocation5 + $0x70] sm:$0xff] %v109
    %139 = vst [vmem:[#allocation5 + $0x78] sm:$0xff] %v108
    %140 = vst [vmem:[#allocation5 + $0x80] sm:$0xff] %v107
    %141 = vst [vmem:[#allocation5 + $0x88] sm:$0xff] %v106
    %142 = vst [vmem:[#allocation5 + $0x90] sm:$0xff] %v105
    %143 = vst [vmem:[#allocation5 + $0x98] sm:$0xff] %v104
    %144 = vst [vmem:[#allocation5 + $0xa0] sm:$0xff] %v103
    %145 = vst [vmem:[#allocation5 + $0xa8] sm:$0xff] %v102
    %146 = vst [vmem:[#allocation5 + $0xb0] sm:$0xff] %v101
    %147 = vst [vmem:[#allocation5 + $0xb8] sm:$0xff] %v100
    %148 = vst [vmem:[#allocation5 + $0xc0] sm:$0xff] %v99
    %149 = vst [vmem:[#allocation5 + $0xc8] sm:$0xff] %v98
    %150 = vst [vmem:[#allocation5 + $0xd0] sm:$0xff] %v97
    %151 = vst [vmem:[#allocation5 + $0xd8] sm:$0xff] %v96
    %152 = vst [vmem:[#allocation5 + $0xe0] sm:$0xff] %v95
    %153 = vst [vmem:[#allocation5 + $0xe8] sm:$0xff] %v94
    %154 = vst [vmem:[#allocation5 + $0xf0] sm:$0xff] %v93
    %155 = vst [vmem:[#allocation5 + $0xf8] sm:$0xff] %v92
    // Predicated region
    $region10: #{tpu_custom_call.1} parent=1 // pred_check
      _
    $region11: #{tpu_custom_call.1} parent=1 // pred_check_branch
      %157 = sbr.rel (0) target = $region13
    $region12: #{tpu_custom_call.1} parent=1 // pred_region
      %159 = vsyncadd [#allocation4], 0
      %s160 = sshll.u32 [#allocation5], 4
      %s161 = int_to_ptr.vmem [resolvable:$true] %s160
      %s162 = sshll.u32 %s1, 4
      %s163 = int_to_ptr.hbm [resolvable:$true] %s162
      %168 = dma.vmem_to_hbm [thread:$0]  %s161, 4096, %s163, [#allocation4], 128, 128, 8
    $region13: #{tpu_custom_call.1} parent=1 // pred_fallthru
      _
    // Predicated region
    $region14: #{tpu_custom_call.1} parent=1 // pred_check
      _
    $region15: #{tpu_custom_call.1} parent=1 // pred_check_branch
      %170 = sbr.rel (0) target = $region17
    $region16: #{tpu_custom_call.1} parent=1 // pred_region
      %172 = dma.done [#allocation4], 4096
    $region17: #{tpu_custom_call.1} parent=1 // pred_fallthru
      _
    %173 = vsyncpa [#allocation3], 1
    %174 = vsyncpa [#allocation4], 1

// kernel: pixelcnn_forward.1
$region0: #{pixelcnn_forward.1}
  #allocation0 [shape = 'u32[]', space=smem, size = 0x4, offset = 0x4, fixed_abs, tag = 'smem constant byte address 0x4 - core index']
  #allocation1 [shape = 'u32[72,128]{1,0:T(1,128)}', space=vmem, size = 0x9000, scoped, tag = 'internal scratch']
  %s0 = inlined_call_operand.vmem [shape: bf16[2,304,21], index: 0, kind: input, shape index: {}]
  %s1 = inlined_call_operand.vmem [shape: bf16[128,128], index: 1, kind: input, shape index: {}]
  %s2 = inlined_call_operand.vmem [shape: f32[1,128], index: 2, kind: input, shape index: {}]
  %s3 = inlined_call_operand.vmem [shape: f32[1,128], index: 3, kind: input, shape index: {}]
  %s4 = inlined_call_operand.vmem [shape: bf16[3,128,128], index: 4, kind: input, shape index: {}]
  %s5 = inlined_call_operand.vmem [shape: f32[3,1,128], index: 5, kind: input, shape index: {}]
  %s6 = inlined_call_operand.vmem [shape: f32[3,1,128], index: 6, kind: input, shape index: {}]
  %s7 = inlined_call_operand.vmem [shape: bf16[3,256,128], index: 7, kind: input, shape index: {}]
  %s8 = inlined_call_operand.vmem [shape: f32[3,1,128], index: 8, kind: input, shape index: {}]
  %s9 = inlined_call_operand.vmem [shape: f32[3,1,128], index: 9, kind: input, shape index: {}]
  %s10 = inlined_call_operand.vmem [shape: bf16[3,128,128], index: 10, kind: input, shape index: {}]
  %s11 = inlined_call_operand.vmem [shape: f32[3,1,128], index: 11, kind: input, shape index: {}]
  %s12 = inlined_call_operand.vmem [shape: f32[3,1,128], index: 12, kind: input, shape index: {}]
  %s13 = inlined_call_operand.vmem [shape: bf16[128,640], index: 13, kind: input, shape index: {}]
  %s14 = inlined_call_operand.vmem [shape: f32[1,640], index: 14, kind: input, shape index: {}]
  %s15 = inlined_call_operand.vmem [shape: f32[1,640], index: 15, kind: input, shape index: {}]
  %s16 = inlined_call_operand.vmem [shape: bf16[640,384], index: 16, kind: input, shape index: {}]
  %s17 = inlined_call_operand.vmem [shape: f32[1,384], index: 17, kind: input, shape index: {}]
  %s18 = inlined_call_operand.hbm [shape: f32[2,3,16,16,128], index: 18, kind: output, shape index: {}]
  %s19 = sld [smem:[#allocation0]]
  $region105: #{pixelcnn_forward.1} parent=0
    _
  %s21 = ssub.s32 1, %s19
  %s22 = scalar_select 0, %s21, %s19
  $region1: #{pixelcnn_forward.1} parent=0
    #allocation2 [shape = 'u8[786432]{0}', space=vmem, size = 0xc0000, scoped, tag = 'output window, operand 0']
    #allocation3 [shape = 's32[2]{0}', space=sflag, size = 0x8, scoped, tag = 'scoped memory for pixelcnn_forward.1']
    %23 = vsyncpa [#allocation3], 0
    %s24 = scalar_lea.sflag [#allocation3], 1
    %25 = vsyncpa %s24, 0
    loop: start=0, step=1, limit=4
    $region2: #{pixelcnn_forward.1} parent=1 // loop_pre_header
      _
    $region3: #{pixelcnn_forward.1} parent=1 // loop_header
      %s27 = sphi 0, %s31
      %p28 = scmp.ge.s32.totalorder %s27, 4
      %s37 = sphi 0, %s39
      %s40 = sphi 0, %s37
      %s41 = sphi 0, %s40
      %s57 = sphi 0, %s41
      %s61 = sphi 0, %s61
      %s63 = sphi 0, %s61
      %s64 = sphi 0, %s63
      %s78 = sphi 0, %s64
      %s82 = sphi 0, %s82
      %s84 = sphi 0, %s82
      %s85 = sphi 0, %s84
      %s99 = sphi 0, %s85
      %s103 = sphi 0, %s103
      %s105 = sphi 0, %s103
      %s106 = sphi 0, %s105
      %s120 = sphi 0, %s106
      %s124 = sphi 0, %s124
      %s126 = sphi 0, %s124
      %s127 = sphi 0, %s126
      %s141 = sphi 0, %s127
      %s145 = sphi 0, %s145
      %s147 = sphi 0, %s145
      %s148 = sphi 0, %s147
      %s162 = sphi 0, %s148
      %s166 = sphi 0, %s166
      %s168 = sphi 0, %s166
      %s169 = sphi 0, %s168
      %s183 = sphi 0, %s169
      %s187 = sphi 0, %s187
      %s189 = sphi 0, %s187
      %s190 = sphi 0, %s189
      %s204 = sphi 0, %s190
      %s208 = sphi 0, %s208
      %s210 = sphi 0, %s208
      %s211 = sphi 0, %s210
      %s225 = sphi 0, %s211
      %s229 = sphi 0, %s229
      %s231 = sphi 0, %s229
      %s232 = sphi 0, %s231
      %s246 = sphi 0, %s232
      %s250 = sphi 0, %s250
      %s252 = sphi 0, %s250
      %s253 = sphi 0, %s252
      %s267 = sphi 0, %s253
      %s271 = sphi 0, %s271
      %s273 = sphi 0, %s271
      %s274 = sphi 0, %s273
      %s288 = sphi 0, %s274
      %s292 = sphi 0, %s292
      %s294 = sphi 0, %s292
      %s295 = sphi 0, %s294
      %s309 = sphi 0, %s295
      %s313 = sphi 0, %s313
      %s315 = sphi 0, %s313
      %s316 = sphi 0, %s315
      %s330 = sphi 0, %s316
      %s334 = sphi 0, %s334
      %s336 = sphi 0, %s334
      %s337 = sphi 0, %s336
      %s351 = sphi 0, %s337
      %s355 = sphi 0, %s355
      %s357 = sphi 0, %s355
      %s358 = sphi 0, %s357
      %s372 = sphi 0, %s358
      %s376 = sphi 0, %s376
      %s378 = sphi 0, %s376
      %s379 = sphi 0, %s378
      %s393 = sphi 0, %s379
      %s397 = sphi 0, %s397
      %s399 = sphi 0, %s397
      %s400 = sphi 0, %s399
      %s414 = sphi 0, %s400
      %s420 = sphi 0, %s422
      %s423 = sphi 0, %s420
      %s424 = sphi 0, %s423
      %s440 = sphi 0, %s424
    $region4: #{pixelcnn_forward.1} parent=1 // loop_header_branch
      %30 = sbr.rel (%p28) target = $region8
    $region5: #{pixelcnn_forward.1} parent=1 // loop_body
      %s32 = ssub.s32 %s27, 1
      %s33 = ssub.s32 %s27, 2
      %s34 = sadd.s32 %s27, 1
      %s35 = ssub.s32 %s27, %s34
      %p36 = scmp.eq.s32.totalorder %s35, 0
      %s38 = sadd.s32 %s37, 1
      %s39 = scalar_select %p36, %s37, %s38
      %p42 = pneg %p36
      %p43 = scmp.eq.s32.totalorder %s27, 1
      %p44 = por %p42, %p43
      %p45 = scmp.ne.s32.totalorder %s37, %s40
      %p46 = scmp.eq.s32.totalorder %s27, 0
      %p47 = por %p45, %p46
      %p48 = scmp.ne.s32.totalorder %s37, %s40
      %p49 = scmp.eq.s32.totalorder %s32, 1
      %p50 = por %p48, %p49
      %p51 = scmp.ne.s32.totalorder %s40, %s41
      %p52 = scmp.eq.s32.totalorder %s32, 0
      %p53 = por %p51, %p52
      %p54 = scmp.ne.s32.totalorder %s40, %s41
      %p55 = scmp.eq.s32.totalorder %s33, 1
      %p56 = por %p54, %p55
      %p58 = scmp.ne.s32.totalorder %s41, %s57
      %p59 = scmp.eq.s32.totalorder %s33, 0
      %p60 = por %p58, %p59
      %s62 = sadd.s32 %s61, 1
      %p65 = scmp.eq.s32.totalorder %s27, 1
      %p66 = scmp.ne.s32.totalorder %s61, %s63
      %p67 = scmp.eq.s32.totalorder %s27, 0
      %p68 = por %p66, %p67
      %p69 = scmp.ne.s32.totalorder %s61, %s63
      %p70 = scmp.eq.s32.totalorder %s32, 1
      %p71 = por %p69, %p70
      %p72 = scmp.ne.s32.totalorder %s63, %s64
      %p73 = scmp.eq.s32.totalorder %s32, 0
      %p74 = por %p72, %p73
      %p75 = scmp.ne.s32.totalorder %s63, %s64
      %p76 = scmp.eq.s32.totalorder %s33, 1
      %p77 = por %p75, %p76
      %p79 = scmp.ne.s32.totalorder %s64, %s78
      %p80 = scmp.eq.s32.totalorder %s33, 0
      %p81 = por %p79, %p80
      %s83 = sadd.s32 %s82, 1
      %p86 = scmp.eq.s32.totalorder %s27, 1
      %p87 = scmp.ne.s32.totalorder %s82, %s84
      %p88 = scmp.eq.s32.totalorder %s27, 0
      %p89 = por %p87, %p88
      %p90 = scmp.ne.s32.totalorder %s82, %s84
      %p91 = scmp.eq.s32.totalorder %s32, 1
      %p92 = por %p90, %p91
      %p93 = scmp.ne.s32.totalorder %s84, %s85
      %p94 = scmp.eq.s32.totalorder %s32, 0
      %p95 = por %p93, %p94
      %p96 = scmp.ne.s32.totalorder %s84, %s85
      %p97 = scmp.eq.s32.totalorder %s33, 1
      %p98 = por %p96, %p97
      %p100 = scmp.ne.s32.totalorder %s85, %s99
      %p101 = scmp.eq.s32.totalorder %s33, 0
      %p102 = por %p100, %p101
      %s104 = sadd.s32 %s103, 1
      %p107 = scmp.eq.s32.totalorder %s27, 1
      %p108 = scmp.ne.s32.totalorder %s103, %s105
      %p109 = scmp.eq.s32.totalorder %s27, 0
      %p110 = por %p108, %p109
      %p111 = scmp.ne.s32.totalorder %s103, %s105
      %p112 = scmp.eq.s32.totalorder %s32, 1
      %p113 = por %p111, %p112
      %p114 = scmp.ne.s32.totalorder %s105, %s106
      %p115 = scmp.eq.s32.totalorder %s32, 0
      %p116 = por %p114, %p115
      %p117 = scmp.ne.s32.totalorder %s105, %s106
      %p118 = scmp.eq.s32.totalorder %s33, 1
      %p119 = por %p117, %p118
      %p121 = scmp.ne.s32.totalorder %s106, %s120
      %p122 = scmp.eq.s32.totalorder %s33, 0
      %p123 = por %p121, %p122
      %s125 = sadd.s32 %s124, 1
      %p128 = scmp.eq.s32.totalorder %s27, 1
      %p129 = scmp.ne.s32.totalorder %s124, %s126
      %p130 = scmp.eq.s32.totalorder %s27, 0
      %p131 = por %p129, %p130
      %p132 = scmp.ne.s32.totalorder %s124, %s126
      %p133 = scmp.eq.s32.totalorder %s32, 1
      %p134 = por %p132, %p133
      %p135 = scmp.ne.s32.totalorder %s126, %s127
      %p136 = scmp.eq.s32.totalorder %s32, 0
      %p137 = por %p135, %p136
      %p138 = scmp.ne.s32.totalorder %s126, %s127
      %p139 = scmp.eq.s32.totalorder %s33, 1
      %p140 = por %p138, %p139
      %p142 = scmp.ne.s32.totalorder %s127, %s141
      %p143 = scmp.eq.s32.totalorder %s33, 0
      %p144 = por %p142, %p143
      %s146 = sadd.s32 %s145, 1
      %p149 = scmp.eq.s32.totalorder %s27, 1
      %p150 = scmp.ne.s32.totalorder %s145, %s147
      %p151 = scmp.eq.s32.totalorder %s27, 0
      %p152 = por %p150, %p151
      %p153 = scmp.ne.s32.totalorder %s145, %s147
      %p154 = scmp.eq.s32.totalorder %s32, 1
      %p155 = por %p153, %p154
      %p156 = scmp.ne.s32.totalorder %s147, %s148
      %p157 = scmp.eq.s32.totalorder %s32, 0
      %p158 = por %p156, %p157
      %p159 = scmp.ne.s32.totalorder %s147, %s148
      %p160 = scmp.eq.s32.totalorder %s33, 1
      %p161 = por %p159, %p160
      %p163 = scmp.ne.s32.totalorder %s148, %s162
      %p164 = scmp.eq.s32.totalorder %s33, 0
      %p165 = por %p163, %p164
      %s167 = sadd.s32 %s166, 1
      %p170 = scmp.eq.s32.totalorder %s27, 1
      %p171 = scmp.ne.s32.totalorder %s166, %s168
      %p172 = scmp.eq.s32.totalorder %s27, 0
      %p173 = por %p171, %p172
      %p174 = scmp.ne.s32.totalorder %s166, %s168
      %p175 = scmp.eq.s32.totalorder %s32, 1
      %p176 = por %p174, %p175
      %p177 = scmp.ne.s32.totalorder %s168, %s169
      %p178 = scmp.eq.s32.totalorder %s32, 0
      %p179 = por %p177, %p178
      %p180 = scmp.ne.s32.totalorder %s168, %s169
      %p181 = scmp.eq.s32.totalorder %s33, 1
      %p182 = por %p180, %p181
      %p184 = scmp.ne.s32.totalorder %s169, %s183
      %p185 = scmp.eq.s32.totalorder %s33, 0
      %p186 = por %p184, %p185
      %s188 = sadd.s32 %s187, 1
      %p191 = scmp.eq.s32.totalorder %s27, 1
      %p192 = scmp.ne.s32.totalorder %s187, %s189
      %p193 = scmp.eq.s32.totalorder %s27, 0
      %p194 = por %p192, %p193
      %p195 = scmp.ne.s32.totalorder %s187, %s189
      %p196 = scmp.eq.s32.totalorder %s32, 1
      %p197 = por %p195, %p196
      %p198 = scmp.ne.s32.totalorder %s189, %s190
      %p199 = scmp.eq.s32.totalorder %s32, 0
      %p200 = por %p198, %p199
      %p201 = scmp.ne.s32.totalorder %s189, %s190
      %p202 = scmp.eq.s32.totalorder %s33, 1
      %p203 = por %p201, %p202
      %p205 = scmp.ne.s32.totalorder %s190, %s204
      %p206 = scmp.eq.s32.totalorder %s33, 0
      %p207 = por %p205, %p206
      %s209 = sadd.s32 %s208, 1
      %p212 = scmp.eq.s32.totalorder %s27, 1
      %p213 = scmp.ne.s32.totalorder %s208, %s210
      %p214 = scmp.eq.s32.totalorder %s27, 0
      %p215 = por %p213, %p214
      %p216 = scmp.ne.s32.totalorder %s208, %s210
      %p217 = scmp.eq.s32.totalorder %s32, 1
      %p218 = por %p216, %p217
      %p219 = scmp.ne.s32.totalorder %s210, %s211
      %p220 = scmp.eq.s32.totalorder %s32, 0
      %p221 = por %p219, %p220
      %p222 = scmp.ne.s32.totalorder %s210, %s211
      %p223 = scmp.eq.s32.totalorder %s33, 1
      %p224 = por %p222, %p223
      %p226 = scmp.ne.s32.totalorder %s211, %s225
      %p227 = scmp.eq.s32.totalorder %s33, 0
      %p228 = por %p226, %p227
      %s230 = sadd.s32 %s229, 1
      %p233 = scmp.eq.s32.totalorder %s27, 1
      %p234 = scmp.ne.s32.totalorder %s229, %s231
      %p235 = scmp.eq.s32.totalorder %s27, 0
      %p236 = por %p234, %p235
      %p237 = scmp.ne.s32.totalorder %s229, %s231
      %p238 = scmp.eq.s32.totalorder %s32, 1
      %p239 = por %p237, %p238
      %p240 = scmp.ne.s32.totalorder %s231, %s232
      %p241 = scmp.eq.s32.totalorder %s32, 0
      %p242 = por %p240, %p241
      %p243 = scmp.ne.s32.totalorder %s231, %s232
      %p244 = scmp.eq.s32.totalorder %s33, 1
      %p245 = por %p243, %p244
      %p247 = scmp.ne.s32.totalorder %s232, %s246
      %p248 = scmp.eq.s32.totalorder %s33, 0
      %p249 = por %p247, %p248
      %s251 = sadd.s32 %s250, 1
      %p254 = scmp.eq.s32.totalorder %s27, 1
      %p255 = scmp.ne.s32.totalorder %s250, %s252
      %p256 = scmp.eq.s32.totalorder %s27, 0
      %p257 = por %p255, %p256
      %p258 = scmp.ne.s32.totalorder %s250, %s252
      %p259 = scmp.eq.s32.totalorder %s32, 1
      %p260 = por %p258, %p259
      %p261 = scmp.ne.s32.totalorder %s252, %s253
      %p262 = scmp.eq.s32.totalorder %s32, 0
      %p263 = por %p261, %p262
      %p264 = scmp.ne.s32.totalorder %s252, %s253
      %p265 = scmp.eq.s32.totalorder %s33, 1
      %p266 = por %p264, %p265
      %p268 = scmp.ne.s32.totalorder %s253, %s267
      %p269 = scmp.eq.s32.totalorder %s33, 0
      %p270 = por %p268, %p269
      %s272 = sadd.s32 %s271, 1
      %p275 = scmp.eq.s32.totalorder %s27, 1
      %p276 = scmp.ne.s32.totalorder %s271, %s273
      %p277 = scmp.eq.s32.totalorder %s27, 0
      %p278 = por %p276, %p277
      %p279 = scmp.ne.s32.totalorder %s271, %s273
      %p280 = scmp.eq.s32.totalorder %s32, 1
      %p281 = por %p279, %p280
      %p282 = scmp.ne.s32.totalorder %s273, %s274
      %p283 = scmp.eq.s32.totalorder %s32, 0
      %p284 = por %p282, %p283
      %p285 = scmp.ne.s32.totalorder %s273, %s274
      %p286 = scmp.eq.s32.totalorder %s33, 1
      %p287 = por %p285, %p286
      %p289 = scmp.ne.s32.totalorder %s274, %s288
      %p290 = scmp.eq.s32.totalorder %s33, 0
      %p291 = por %p289, %p290
      %s293 = sadd.s32 %s292, 1
      %p296 = scmp.eq.s32.totalorder %s27, 1
      %p297 = scmp.ne.s32.totalorder %s292, %s294
      %p298 = scmp.eq.s32.totalorder %s27, 0
      %p299 = por %p297, %p298
      %p300 = scmp.ne.s32.totalorder %s292, %s294
      %p301 = scmp.eq.s32.totalorder %s32, 1
      %p302 = por %p300, %p301
      %p303 = scmp.ne.s32.totalorder %s294, %s295
      %p304 = scmp.eq.s32.totalorder %s32, 0
      %p305 = por %p303, %p304
      %p306 = scmp.ne.s32.totalorder %s294, %s295
      %p307 = scmp.eq.s32.totalorder %s33, 1
      %p308 = por %p306, %p307
      %p310 = scmp.ne.s32.totalorder %s295, %s309
      %p311 = scmp.eq.s32.totalorder %s33, 0
      %p312 = por %p310, %p311
      %s314 = sadd.s32 %s313, 1
      %p317 = scmp.eq.s32.totalorder %s27, 1
      %p318 = scmp.ne.s32.totalorder %s313, %s315
      %p319 = scmp.eq.s32.totalorder %s27, 0
      %p320 = por %p318, %p319
      %p321 = scmp.ne.s32.totalorder %s313, %s315
      %p322 = scmp.eq.s32.totalorder %s32, 1
      %p323 = por %p321, %p322
      %p324 = scmp.ne.s32.totalorder %s315, %s316
      %p325 = scmp.eq.s32.totalorder %s32, 0
      %p326 = por %p324, %p325
      %p327 = scmp.ne.s32.totalorder %s315, %s316
      %p328 = scmp.eq.s32.totalorder %s33, 1
      %p329 = por %p327, %p328
      %p331 = scmp.ne.s32.totalorder %s316, %s330
      %p332 = scmp.eq.s32.totalorder %s33, 0
      %p333 = por %p331, %p332
      %s335 = sadd.s32 %s334, 1
      %p338 = scmp.eq.s32.totalorder %s27, 1
      %p339 = scmp.ne.s32.totalorder %s334, %s336
      %p340 = scmp.eq.s32.totalorder %s27, 0
      %p341 = por %p339, %p340
      %p342 = scmp.ne.s32.totalorder %s334, %s336
      %p343 = scmp.eq.s32.totalorder %s32, 1
      %p344 = por %p342, %p343
      %p345 = scmp.ne.s32.totalorder %s336, %s337
      %p346 = scmp.eq.s32.totalorder %s32, 0
      %p347 = por %p345, %p346
      %p348 = scmp.ne.s32.totalorder %s336, %s337
      %p349 = scmp.eq.s32.totalorder %s33, 1
      %p350 = por %p348, %p349
      %p352 = scmp.ne.s32.totalorder %s337, %s351
      %p353 = scmp.eq.s32.totalorder %s33, 0
      %p354 = por %p352, %p353
      %s356 = sadd.s32 %s355, 1
      %p359 = scmp.eq.s32.totalorder %s27, 1
      %p360 = scmp.ne.s32.totalorder %s355, %s357
      %p361 = scmp.eq.s32.totalorder %s27, 0
      %p362 = por %p360, %p361
      %p363 = scmp.ne.s32.totalorder %s355, %s357
      %p364 = scmp.eq.s32.totalorder %s32, 1
      %p365 = por %p363, %p364
      %p366 = scmp.ne.s32.totalorder %s357, %s358
      %p367 = scmp.eq.s32.totalorder %s32, 0
      %p368 = por %p366, %p367
      %p369 = scmp.ne.s32.totalorder %s357, %s358
      %p370 = scmp.eq.s32.totalorder %s33, 1
      %p371 = por %p369, %p370
      %p373 = scmp.ne.s32.totalorder %s358, %s372
      %p374 = scmp.eq.s32.totalorder %s33, 0
      %p375 = por %p373, %p374
      %s377 = sadd.s32 %s376, 1
      %p380 = scmp.eq.s32.totalorder %s27, 1
      %p381 = scmp.ne.s32.totalorder %s376, %s378
      %p382 = scmp.eq.s32.totalorder %s27, 0
      %p383 = por %p381, %p382
      %p384 = scmp.ne.s32.totalorder %s376, %s378
      %p385 = scmp.eq.s32.totalorder %s32, 1
      %p386 = por %p384, %p385
      %p387 = scmp.ne.s32.totalorder %s378, %s379
      %p388 = scmp.eq.s32.totalorder %s32, 0
      %p389 = por %p387, %p388
      %p390 = scmp.ne.s32.totalorder %s378, %s379
      %p391 = scmp.eq.s32.totalorder %s33, 1
      %p392 = por %p390, %p391
      %p394 = scmp.ne.s32.totalorder %s379, %s393
      %p395 = scmp.eq.s32.totalorder %s33, 0
      %p396 = por %p394, %p395
      %s398 = sadd.s32 %s397, 1
      %p401 = scmp.eq.s32.totalorder %s27, 1
      %p402 = scmp.ne.s32.totalorder %s397, %s399
      %p403 = scmp.eq.s32.totalorder %s27, 0
      %p404 = por %p402, %p403
      %p405 = scmp.ne.s32.totalorder %s397, %s399
      %p406 = scmp.eq.s32.totalorder %s32, 1
      %p407 = por %p405, %p406
      %p408 = scmp.ne.s32.totalorder %s399, %s400
      %p409 = scmp.eq.s32.totalorder %s32, 0
      %p410 = por %p408, %p409
      %p411 = scmp.ne.s32.totalorder %s399, %s400
      %p412 = scmp.eq.s32.totalorder %s33, 1
      %p413 = por %p411, %p412
      %p415 = scmp.ne.s32.totalorder %s400, %s414
      %p416 = scmp.eq.s32.totalorder %s33, 0
      %p417 = por %p415, %p416
      %s418 = ssub.s32 %s27, %s34
      %p419 = scmp.eq.s32.totalorder %s418, 0
      %s421 = sadd.s32 %s420, 1
      %s422 = scalar_select %p419, %s420, %s421
      %p425 = pneg %p419
      %p426 = scmp.eq.s32.totalorder %s27, 1
      %p427 = por %p425, %p426
      %p428 = scmp.ne.s32.totalorder %s420, %s423
      %p429 = scmp.eq.s32.totalorder %s27, 0
      %p430 = por %p428, %p429
      %p431 = scmp.ne.s32.totalorder %s420, %s423
      %p432 = scmp.eq.s32.totalorder %s32, 1
      %p433 = por %p431, %p432
      %p434 = scmp.ne.s32.totalorder %s423, %s424
      %p435 = scmp.eq.s32.totalorder %s32, 0
      %p436 = por %p434, %p435
      %p437 = scmp.ne.s32.totalorder %s423, %s424
      %p438 = scmp.eq.s32.totalorder %s33, 1
      %p439 = por %p437, %p438
      %p441 = scmp.ne.s32.totalorder %s424, %s440
      %p442 = scmp.eq.s32.totalorder %s33, 0
      %p443 = por %p441, %p442
      %p444 = scmp.le.s32.totalorder 1, %s27
      %p445 = scmp.lt.s32.totalorder %s27, 3
      %p446 = pnand %p444, %p445
      %p447 = pneg %p446
      // Predicated region
      $region9: #{pixelcnn_forward.1} parent=5 // pred_check
        _
      $region10: #{pixelcnn_forward.1} parent=5 // pred_check_branch
        %449 = sbr.rel (%p446) target = $region12
      $region11: #{pixelcnn_forward.1} parent=5 // pred_region
        %s450 = ssub.s32 %s27, 1
        // Predicated region
        $region13: #{pixelcnn_forward.1} parent=11 // pred_check
          %p451 = pneg %p74
        $region14: #{pixelcnn_forward.1} parent=11 // pred_check_branch
          %453 = sbr.rel (%p451) target = $region16
        $region15: #{pixelcnn_forward.1} parent=11 // pred_region
          _
        $region16: #{pixelcnn_forward.1} parent=11 // pred_fallthru
          _
        // Predicated region
        $region17: #{pixelcnn_forward.1} parent=11 // pred_check
          %p454 = pneg %p95
        $region18: #{pixelcnn_forward.1} parent=11 // pred_check_branch
          %456 = sbr.rel (%p454) target = $region20
        $region19: #{pixelcnn_forward.1} parent=11 // pred_region
          _
        $region20: #{pixelcnn_forward.1} parent=11 // pred_fallthru
          _
        // Predicated region
        $region21: #{pixelcnn_forward.1} parent=11 // pred_check
          %p457 = pneg %p116
        $region22: #{pixelcnn_forward.1} parent=11 // pred_check_branch
          %459 = sbr.rel (%p457) target = $region24
        $region23: #{pixelcnn_forward.1} parent=11 // pred_region
          _
        $region24: #{pixelcnn_forward.1} parent=11 // pred_fallthru
          _
        // Predicated region
        $region25: #{pixelcnn_forward.1} parent=11 // pred_check
          %p460 = pneg %p137
        $region26: #{pixelcnn_forward.1} parent=11 // pred_check_branch
          %462 = sbr.rel (%p460) target = $region28
        $region27: #{pixelcnn_forward.1} parent=11 // pred_region
          _
        $region28: #{pixelcnn_forward.1} parent=11 // pred_fallthru
          _
        // Predicated region
        $region29: #{pixelcnn_forward.1} parent=11 // pred_check
          %p463 = pneg %p158
        $region30: #{pixelcnn_forward.1} parent=11 // pred_check_branch
          %465 = sbr.rel (%p463) target = $region32
        $region31: #{pixelcnn_forward.1} parent=11 // pred_region
          _
        $region32: #{pixelcnn_forward.1} parent=11 // pred_fallthru
          _
        // Predicated region
        $region33: #{pixelcnn_forward.1} parent=11 // pred_check
          %p466 = pneg %p179
        $region34: #{pixelcnn_forward.1} parent=11 // pred_check_branch
          %468 = sbr.rel (%p466) target = $region36
        $region35: #{pixelcnn_forward.1} parent=11 // pred_region
          _
        $region36: #{pixelcnn_forward.1} parent=11 // pred_fallthru
          _
        // Predicated region
        $region37: #{pixelcnn_forward.1} parent=11 // pred_check
          %p469 = pneg %p200
        $region38: #{pixelcnn_forward.1} parent=11 // pred_check_branch
          %471 = sbr.rel (%p469) target = $region40
        $region39: #{pixelcnn_forward.1} parent=11 // pred_region
          _
        $region40: #{pixelcnn_forward.1} parent=11 // pred_fallthru
          _
        // Predicated region
        $region41: #{pixelcnn_forward.1} parent=11 // pred_check
          %p472 = pneg %p221
        $region42: #{pixelcnn_forward.1} parent=11 // pred_check_branch
          %474 = sbr.rel (%p472) target = $region44
        $region43: #{pixelcnn_forward.1} parent=11 // pred_region
          _
        $region44: #{pixelcnn_forward.1} parent=11 // pred_fallthru
          _
        // Predicated region
        $region45: #{pixelcnn_forward.1} parent=11 // pred_check
          %p475 = pneg %p242
        $region46: #{pixelcnn_forward.1} parent=11 // pred_check_branch
          %477 = sbr.rel (%p475) target = $region48
        $region47: #{pixelcnn_forward.1} parent=11 // pred_region
          _
        $region48: #{pixelcnn_forward.1} parent=11 // pred_fallthru
          _
        // Predicated region
        $region49: #{pixelcnn_forward.1} parent=11 // pred_check
          %p478 = pneg %p263
        $region50: #{pixelcnn_forward.1} parent=11 // pred_check_branch
          %480 = sbr.rel (%p478) target = $region52
        $region51: #{pixelcnn_forward.1} parent=11 // pred_region
          _
        $region52: #{pixelcnn_forward.1} parent=11 // pred_fallthru
          _
        // Predicated region
        $region53: #{pixelcnn_forward.1} parent=11 // pred_check
          %p481 = pneg %p284
        $region54: #{pixelcnn_forward.1} parent=11 // pred_check_branch
          %483 = sbr.rel (%p481) target = $region56
        $region55: #{pixelcnn_forward.1} parent=11 // pred_region
          _
        $region56: #{pixelcnn_forward.1} parent=11 // pred_fallthru
          _
        // Predicated region
        $region57: #{pixelcnn_forward.1} parent=11 // pred_check
          %p484 = pneg %p305
        $region58: #{pixelcnn_forward.1} parent=11 // pred_check_branch
          %486 = sbr.rel (%p484) target = $region60
        $region59: #{pixelcnn_forward.1} parent=11 // pred_region
          _
        $region60: #{pixelcnn_forward.1} parent=11 // pred_fallthru
          _
        // Predicated region
        $region61: #{pixelcnn_forward.1} parent=11 // pred_check
          %p487 = pneg %p326
        $region62: #{pixelcnn_forward.1} parent=11 // pred_check_branch
          %489 = sbr.rel (%p487) target = $region64
        $region63: #{pixelcnn_forward.1} parent=11 // pred_region
          _
        $region64: #{pixelcnn_forward.1} parent=11 // pred_fallthru
          _
        // Predicated region
        $region65: #{pixelcnn_forward.1} parent=11 // pred_check
          %p490 = pneg %p347
        $region66: #{pixelcnn_forward.1} parent=11 // pred_check_branch
          %492 = sbr.rel (%p490) target = $region68
        $region67: #{pixelcnn_forward.1} parent=11 // pred_region
          _
        $region68: #{pixelcnn_forward.1} parent=11 // pred_fallthru
          _
        // Predicated region
        $region69: #{pixelcnn_forward.1} parent=11 // pred_check
          %p493 = pneg %p368
        $region70: #{pixelcnn_forward.1} parent=11 // pred_check_branch
          %495 = sbr.rel (%p493) target = $region72
        $region71: #{pixelcnn_forward.1} parent=11 // pred_region
          _
        $region72: #{pixelcnn_forward.1} parent=11 // pred_fallthru
          _
        // Predicated region
        $region73: #{pixelcnn_forward.1} parent=11 // pred_check
          %p496 = pneg %p389
        $region74: #{pixelcnn_forward.1} parent=11 // pred_check_branch
          %498 = sbr.rel (%p496) target = $region76
        $region75: #{pixelcnn_forward.1} parent=11 // pred_region
          _
        $region76: #{pixelcnn_forward.1} parent=11 // pred_fallthru
          _
        // Predicated region
        $region77: #{pixelcnn_forward.1} parent=11 // pred_check
          %p499 = pneg %p410
        $region78: #{pixelcnn_forward.1} parent=11 // pred_check_branch
          %501 = sbr.rel (%p499) target = $region80
        $region79: #{pixelcnn_forward.1} parent=11 // pred_region
          _
        $region80: #{pixelcnn_forward.1} parent=11 // pred_fallthru
          _
      $region12: #{pixelcnn_forward.1} parent=5 // pred_fallthru
        _
      %p502 = scmp.lt.s32.totalorder %s27, 2
      // Predicated region
      $region81: #{pixelcnn_forward.1} parent=5 // pred_check
        %p503 = pneg %p502
      $region82: #{pixelcnn_forward.1} parent=5 // pred_check_branch
        %505 = sbr.rel (%p503) target = $region84
      $region83: #{pixelcnn_forward.1} parent=5 // pred_region
        // Predicated region
        $region85: #{pixelcnn_forward.1} parent=83 // pred_check
          %p506 = pneg %p47
        $region86: #{pixelcnn_forward.1} parent=83 // pred_check_branch
          %508 = sbr.rel (%p506) target = $region88
        $region87: #{pixelcnn_forward.1} parent=83 // pred_region
          %p509 = scmp.lt.s32.totalorder %s27, 1
          %s510 = scalar_select %p509, %s27, 1
          %s511 = smul.addr %s510, 38
          %s512 = smul.addr %s511, 4
          %s513 = scalar_lea.vmem %s0, %s512
        $region88: #{pixelcnn_forward.1} parent=83 // pred_fallthru
          _
      $region84: #{pixelcnn_forward.1} parent=5 // pred_fallthru
        _
      %p514 = scmp.le.s32.totalorder 1, %s27
      %p515 = scmp.lt.s32.totalorder %s27, 3
      %p516 = pnand %p514, %p515
      %p517 = pneg %p516
      // Predicated region
      $region89: #{pixelcnn_forward.1} parent=5 // pred_check
        _
      $region90: #{pixelcnn_forward.1} parent=5 // pred_check_branch
        %519 = sbr.rel (%p516) target = $region92
      $region91: #{pixelcnn_forward.1} parent=5 // pred_region
        %s520 = ssub.s32 %s27, 1
        %p521 = scmp.lt.s32.totalorder %s32, 1
        %s522 = scalar_select %p521, %s32, 1
        %s523 = smul.addr %s522, 38
        %s524 = smul.addr %s523, 4
        %s525 = scalar_lea.vmem %s0, %s524
        %p526 = pneg %p53
        %p527 = pneg %p50
        %p528 = pneg %p74
        %p529 = pneg %p71
        %p530 = pneg %p95
        %p531 = pneg %p92
        %p532 = pneg %p116
        %p533 = pneg %p113
        %p534 = pneg %p137
        %p535 = pneg %p134
        %p536 = pneg %p158
        %p537 = pneg %p155
        %p538 = pneg %p179
        %p539 = pneg %p176
        %p540 = pneg %p200
        %p541 = pneg %p197
        %p542 = pneg %p221
        %p543 = pneg %p218
        %p544 = pneg %p242
        %p545 = pneg %p239
        %p546 = pneg %p263
        %p547 = pneg %p260
        %p548 = pneg %p284
        %p549 = pneg %p281
        %p550 = pneg %p305
        %p551 = pneg %p302
        %p552 = pneg %p326
        %p553 = pneg %p323
        %p554 = pneg %p347
        %p555 = pneg %p344
        %p556 = pneg %p368
        %p557 = pneg %p365
        %p558 = pneg %p389
        %p559 = pneg %p386
        %p560 = pneg %p410
        %p561 = pneg %p407
        %p562 = pneg %p436
        %p563 = pneg %p433
        %s564 = sand.u32 %s423, 1
        %s565 = scalar_lea.sflag [#allocation3], %s564
        %s566 = sand.u32 %s423, 1
        %s567 = smul.addr %s566, 768
        %s568 = scalar_lea.vmem [#allocation2], %s567
        %p569 = scmp.lt.s32.totalorder %s32, 1
        %s570 = scalar_select %p569, %s32, 1
        %s571 = smul.addr %s570, 38
        %s572 = smul.addr %s571, 4
        %s573 = scalar_lea.vmem %s0, %s572
        %v575 = vlaneseq
        %v576 = vshrl.u32 %v575, 7
        %v577 = vadd.s32 %v576, 8
        %v578 = vadd.s32 %v576, 16
        %v579 = vadd.s32 %v576, 24
        %v580 = vadd.s32 %v576, 32
        %v581 = vadd.s32 %v576, 40
        %v582 = vadd.s32 %v576, 48
        %v583 = vadd.s32 %v576, 56
        %v584 = vadd.s32 %v576, 64
        %v585 = vadd.s32 %v576, 72
        %v586 = vadd.s32 %v576, 80
        %v587 = vadd.s32 %v576, 88
        %v588 = vadd.s32 %v576, 96
        %v589 = vadd.s32 %v576, 104
        %v590 = vadd.s32 %v576, 112
        %v591 = vadd.s32 %v576, 120
        %v592 = vadd.s32 %v576, 128
        %v593 = vadd.s32 %v576, 136
        %v594 = vadd.s32 %v576, 144
        %v595 = vadd.s32 %v576, 152
        %v596 = vadd.s32 %v576, 160
        %v597 = vadd.s32 %v576, 168
        %v598 = vadd.s32 %v576, 176
        %v599 = vadd.s32 %v576, 184
        %v600 = vadd.s32 %v576, 192
        %v601 = vadd.s32 %v576, 200
        %v602 = vadd.s32 %v576, 208
        %v603 = vadd.s32 %v576, 216
        %v604 = vadd.s32 %v576, 224
        %v605 = vadd.s32 %v576, 232
        %v606 = vadd.s32 %v576, 240
        %v607 = vadd.s32 %v576, 248
        %vm608 = vcmp.lt.s32.totalorder %v576, 0
        %v609 = vsub.s32 0, %v576
        %v610 = vsel %vm608, %v609, %v576
        %v611 = vshrl.u32 %v610, 4
        %v612 = vand.u32 %v610, 15
        %v613 = vsub.s32 0, %v612
        %v614 = vsel %vm608, %v613, %v612
        %vm615 = vcmp.lt.s32.totalorder %v577, 0
        %v616 = vsub.s32 0, %v577
        %v617 = vsel %vm615, %v616, %v577
        %v618 = vshrl.u32 %v617, 4
        %v619 = vand.u32 %v617, 15
        %v620 = vsub.s32 0, %v619
        %v621 = vsel %vm615, %v620, %v619
        %vm622 = vcmp.lt.s32.totalorder %v578, 0
        %v623 = vsub.s32 0, %v578
        %v624 = vsel %vm622, %v623, %v578
        %v625 = vshrl.u32 %v624, 4
        %v626 = vand.u32 %v624, 15
        %v627 = vsub.s32 0, %v626
        %v628 = vsel %vm622, %v627, %v626
        %vm629 = vcmp.lt.s32.totalorder %v579, 0
        %v630 = vsub.s32 0, %v579
        %v631 = vsel %vm629, %v630, %v579
        %v632 = vshrl.u32 %v631, 4
        %v633 = vand.u32 %v631, 15
        %v634 = vsub.s32 0, %v633
        %v635 = vsel %vm629, %v634, %v633
        %vm636 = vcmp.lt.s32.totalorder %v580, 0
        %v637 = vsub.s32 0, %v580
        %v638 = vsel %vm636, %v637, %v580
        %v639 = vshrl.u32 %v638, 4
        %v640 = vand.u32 %v638, 15
        %v641 = vsub.s32 0, %v640
        %v642 = vsel %vm636, %v641, %v640
        %vm643 = vcmp.lt.s32.totalorder %v581, 0
        %v644 = vsub.s32 0, %v581
        %v645 = vsel %vm643, %v644, %v581
        %v646 = vshrl.u32 %v645, 4
        %v647 = vand.u32 %v645, 15
        %v648 = vsub.s32 0, %v647
        %v649 = vsel %vm643, %v648, %v647
        %vm650 = vcmp.lt.s32.totalorder %v582, 0
        %v651 = vsub.s32 0, %v582
        %v652 = vsel %vm650, %v651, %v582
        %v653 = vshrl.u32 %v652, 4
        %v654 = vand.u32 %v652, 15
        %v655 = vsub.s32 0, %v654
        %v656 = vsel %vm650, %v655, %v654
        %vm657 = vcmp.lt.s32.totalorder %v583, 0
        %v658 = vsub.s32 0, %v583
        %v659 = vsel %vm657, %v658, %v583
        %v660 = vshrl.u32 %v659, 4
        %v661 = vand.u32 %v659, 15
        %v662 = vsub.s32 0, %v661
        %v663 = vsel %vm657, %v662, %v661
        %vm664 = vcmp.lt.s32.totalorder %v584, 0
        %v665 = vsub.s32 0, %v584
        %v666 = vsel %vm664, %v665, %v584
        %v667 = vshrl.u32 %v666, 4
        %v668 = vand.u32 %v666, 15
        %v669 = vsub.s32 0, %v668
        %v670 = vsel %vm664, %v669, %v668
        %vm671 = vcmp.lt.s32.totalorder %v585, 0
        %v672 = vsub.s32 0, %v585
        %v673 = vsel %vm671, %v672, %v585
        %v674 = vshrl.u32 %v673, 4
        %v675 = vand.u32 %v673, 15
        %v676 = vsub.s32 0, %v675
        %v677 = vsel %vm671, %v676, %v675
        %vm678 = vcmp.lt.s32.totalorder %v586, 0
        %v679 = vsub.s32 0, %v586
        %v680 = vsel %vm678, %v679, %v586
        %v681 = vshrl.u32 %v680, 4
        %v682 = vand.u32 %v680, 15
        %v683 = vsub.s32 0, %v682
        %v684 = vsel %vm678, %v683, %v682
        %vm685 = vcmp.lt.s32.totalorder %v587, 0
        %v686 = vsub.s32 0, %v587
        %v687 = vsel %vm685, %v686, %v587
        %v688 = vshrl.u32 %v687, 4
        %v689 = vand.u32 %v687, 15
        %v690 = vsub.s32 0, %v689
        %v691 = vsel %vm685, %v690, %v689
        %vm692 = vcmp.lt.s32.totalorder %v588, 0
        %v693 = vsub.s32 0, %v588
        %v694 = vsel %vm692, %v693, %v588
        %v695 = vshrl.u32 %v694, 4
        %v696 = vand.u32 %v694, 15
        %v697 = vsub.s32 0, %v696
        %v698 = vsel %vm692, %v697, %v696
        %vm699 = vcmp.lt.s32.totalorder %v589, 0
        %v700 = vsub.s32 0, %v589
        %v701 = vsel %vm699, %v700, %v589
        %v702 = vshrl.u32 %v701, 4
        %v703 = vand.u32 %v701, 15
        %v704 = vsub.s32 0, %v703
        %v705 = vsel %vm699, %v704, %v703
        %vm706 = vcmp.lt.s32.totalorder %v590, 0
        %v707 = vsub.s32 0, %v590
        %v708 = vsel %vm706, %v707, %v590
        %v709 = vshrl.u32 %v708, 4
        %v710 = vand.u32 %v708, 15
        %v711 = vsub.s32 0, %v710
        %v712 = vsel %vm706, %v711, %v710
        %vm713 = vcmp.lt.s32.totalorder %v591, 0
        %v714 = vsub.s32 0, %v591
        %v715 = vsel %vm713, %v714, %v591
        %v716 = vshrl.u32 %v715, 4
        %v717 = vand.u32 %v715, 15
        %v718 = vsub.s32 0, %v717
        %v719 = vsel %vm713, %v718, %v717
        %vm720 = vcmp.lt.s32.totalorder %v592, 0
        %v721 = vsub.s32 0, %v592
        %v722 = vsel %vm720, %v721, %v592
        %v723 = vshrl.u32 %v722, 4
        %v724 = vand.u32 %v722, 15
        %v725 = vsub.s32 0, %v724
        %v726 = vsel %vm720, %v725, %v724
        %vm727 = vcmp.lt.s32.totalorder %v593, 0
        %v728 = vsub.s32 0, %v593
        %v729 = vsel %vm727, %v728, %v593
        %v730 = vshrl.u32 %v729, 4
        %v731 = vand.u32 %v729, 15
        %v732 = vsub.s32 0, %v731
        %v733 = vsel %vm727, %v732, %v731
        %vm734 = vcmp.lt.s32.totalorder %v594, 0
        %v735 = vsub.s32 0, %v594
        %v736 = vsel %vm734, %v735, %v594
        %v737 = vshrl.u32 %v736, 4
        %v738 = vand.u32 %v736, 15
        %v739 = vsub.s32 0, %v738
        %v740 = vsel %vm734, %v739, %v738
        %vm741 = vcmp.lt.s32.totalorder %v595, 0
        %v742 = vsub.s32 0, %v595
        %v743 = vsel %vm741, %v742, %v595
        %v744 = vshrl.u32 %v743, 4
        %v745 = vand.u32 %v743, 15
        %v746 = vsub.s32 0, %v745
        %v747 = vsel %vm741, %v746, %v745
        %vm748 = vcmp.lt.s32.totalorder %v596, 0
        %v749 = vsub.s32 0, %v596
        %v750 = vsel %vm748, %v749, %v596
        %v751 = vshrl.u32 %v750, 4
        %v752 = vand.u32 %v750, 15
        %v753 = vsub.s32 0, %v752
        %v754 = vsel %vm748, %v753, %v752
        %vm755 = vcmp.lt.s32.totalorder %v597, 0
        %v756 = vsub.s32 0, %v597
        %v757 = vsel %vm755, %v756, %v597
        %v758 = vshrl.u32 %v757, 4
        %v759 = vand.u32 %v757, 15
        %v760 = vsub.s32 0, %v759
        %v761 = vsel %vm755, %v760, %v759
        %vm762 = vcmp.lt.s32.totalorder %v598, 0
        %v763 = vsub.s32 0, %v598
        %v764 = vsel %vm762, %v763, %v598
        %v765 = vshrl.u32 %v764, 4
        %v766 = vand.u32 %v764, 15
        %v767 = vsub.s32 0, %v766
        %v768 = vsel %vm762, %v767, %v766
        %vm769 = vcmp.lt.s32.totalorder %v599, 0
        %v770 = vsub.s32 0, %v599
        %v771 = vsel %vm769, %v770, %v599
        %v772 = vshrl.u32 %v771, 4
        %v773 = vand.u32 %v771, 15
        %v774 = vsub.s32 0, %v773
        %v775 = vsel %vm769, %v774, %v773
        %vm776 = vcmp.lt.s32.totalorder %v600, 0
        %v777 = vsub.s32 0, %v600
        %v778 = vsel %vm776, %v777, %v600
        %v779 = vshrl.u32 %v778, 4
        %v780 = vand.u32 %v778, 15
        %v781 = vsub.s32 0, %v780
        %v782 = vsel %vm776, %v781, %v780
        %vm783 = vcmp.lt.s32.totalorder %v601, 0
        %v784 = vsub.s32 0, %v601
        %v785 = vsel %vm783, %v784, %v601
        %v786 = vshrl.u32 %v785, 4
        %v787 = vand.u32 %v785, 15
        %v788 = vsub.s32 0, %v787
        %v789 = vsel %vm783, %v788, %v787
        %vm790 = vcmp.lt.s32.totalorder %v602, 0
        %v791 = vsub.s32 0, %v602
        %v792 = vsel %vm790, %v791, %v602
        %v793 = vshrl.u32 %v792, 4
        %v794 = vand.u32 %v792, 15
        %v795 = vsub.s32 0, %v794
        %v796 = vsel %vm790, %v795, %v794
        %vm797 = vcmp.lt.s32.totalorder %v603, 0
        %v798 = vsub.s32 0, %v603
        %v799 = vsel %vm797, %v798, %v603
        %v800 = vshrl.u32 %v799, 4
        %v801 = vand.u32 %v799, 15
        %v802 = vsub.s32 0, %v801
        %v803 = vsel %vm797, %v802, %v801
        %vm804 = vcmp.lt.s32.totalorder %v604, 0
        %v805 = vsub.s32 0, %v604
        %v806 = vsel %vm804, %v805, %v604
        %v807 = vshrl.u32 %v806, 4
        %v808 = vand.u32 %v806, 15
        %v809 = vsub.s32 0, %v808
        %v810 = vsel %vm804, %v809, %v808
        %vm811 = vcmp.lt.s32.totalorder %v605, 0
        %v812 = vsub.s32 0, %v605
        %v813 = vsel %vm811, %v812, %v605
        %v814 = vshrl.u32 %v813, 4
        %v815 = vand.u32 %v813, 15
        %v816 = vsub.s32 0, %v815
        %v817 = vsel %vm811, %v816, %v815
        %vm818 = vcmp.lt.s32.totalorder %v606, 0
        %v819 = vsub.s32 0, %v606
        %v820 = vsel %vm818, %v819, %v606
        %v821 = vshrl.u32 %v820, 4
        %v822 = vand.u32 %v820, 15
        %v823 = vsub.s32 0, %v822
        %v824 = vsel %vm818, %v823, %v822
        %vm825 = vcmp.lt.s32.totalorder %v607, 0
        %v826 = vsub.s32 0, %v607
        %v827 = vsel %vm825, %v826, %v607
        %v828 = vshrl.u32 %v827, 4
        %v829 = vand.u32 %v827, 15
        %v830 = vsub.s32 0, %v829
        %v831 = vsel %vm825, %v830, %v829
        %vm832 = vcmp.ne.s32.totalorder %v614, 0
        %vm833 = vcmp.ne.s32.totalorder %v621, 0
        %vm834 = vcmp.ne.s32.totalorder %v628, 0
        %vm835 = vcmp.ne.s32.totalorder %v635, 0
        %vm836 = vcmp.ne.s32.totalorder %v642, 0
        %vm837 = vcmp.ne.s32.totalorder %v649, 0
        %vm838 = vcmp.ne.s32.totalorder %v656, 0
        %vm839 = vcmp.ne.s32.totalorder %v663, 0
        %vm840 = vcmp.ne.s32.totalorder %v670, 0
        %vm841 = vcmp.ne.s32.totalorder %v677, 0
        %vm842 = vcmp.ne.s32.totalorder %v684, 0
        %vm843 = vcmp.ne.s32.totalorder %v691, 0
        %vm844 = vcmp.ne.s32.totalorder %v698, 0
        %vm845 = vcmp.ne.s32.totalorder %v705, 0
        %vm846 = vcmp.ne.s32.totalorder %v712, 0
        %vm847 = vcmp.ne.s32.totalorder %v719, 0
        %vm848 = vcmp.ne.s32.totalorder %v726, 0
        %vm849 = vcmp.ne.s32.totalorder %v733, 0
        %vm850 = vcmp.ne.s32.totalorder %v740, 0
        %vm851 = vcmp.ne.s32.totalorder %v747, 0
        %vm852 = vcmp.ne.s32.totalorder %v754, 0
        %vm853 = vcmp.ne.s32.totalorder %v761, 0
        %vm854 = vcmp.ne.s32.totalorder %v768, 0
        %vm855 = vcmp.ne.s32.totalorder %v775, 0
        %vm856 = vcmp.ne.s32.totalorder %v782, 0
        %vm857 = vcmp.ne.s32.totalorder %v789, 0
        %vm858 = vcmp.ne.s32.totalorder %v796, 0
        %vm859 = vcmp.ne.s32.totalorder %v803, 0
        %vm860 = vcmp.ne.s32.totalorder %v810, 0
        %vm861 = vcmp.ne.s32.totalorder %v817, 0
        %vm862 = vcmp.ne.s32.totalorder %v824, 0
        %vm863 = vcmp.ne.s32.totalorder %v831, 0
        %vm864 = vcmp.lt.s32.totalorder %v614, 0
        %vm865 = vcmp.lt.s32.totalorder %v621, 0
        %vm866 = vcmp.lt.s32.totalorder %v628, 0
        %vm867 = vcmp.lt.s32.totalorder %v635, 0
        %vm868 = vcmp.lt.s32.totalorder %v642, 0
        %vm869 = vcmp.lt.s32.totalorder %v649, 0
        %vm870 = vcmp.lt.s32.totalorder %v656, 0
        %vm871 = vcmp.lt.s32.totalorder %v663, 0
        %vm872 = vcmp.lt.s32.totalorder %v670, 0
        %vm873 = vcmp.lt.s32.totalorder %v677, 0
        %vm874 = vcmp.lt.s32.totalorder %v684, 0
        %vm875 = vcmp.lt.s32.totalorder %v691, 0
        %vm876 = vcmp.lt.s32.totalorder %v698, 0
        %vm877 = vcmp.lt.s32.totalorder %v705, 0
        %vm878 = vcmp.lt.s32.totalorder %v712, 0
        %vm879 = vcmp.lt.s32.totalorder %v719, 0
        %vm880 = vcmp.lt.s32.totalorder %v726, 0
        %vm881 = vcmp.lt.s32.totalorder %v733, 0
        %vm882 = vcmp.lt.s32.totalorder %v740, 0
        %vm883 = vcmp.lt.s32.totalorder %v747, 0
        %vm884 = vcmp.lt.s32.totalorder %v754, 0
        %vm885 = vcmp.lt.s32.totalorder %v761, 0
        %vm886 = vcmp.lt.s32.totalorder %v768, 0
        %vm887 = vcmp.lt.s32.totalorder %v775, 0
        %vm888 = vcmp.lt.s32.totalorder %v782, 0
        %vm889 = vcmp.lt.s32.totalorder %v789, 0
        %vm890 = vcmp.lt.s32.totalorder %v796, 0
        %vm891 = vcmp.lt.s32.totalorder %v803, 0
        %vm892 = vcmp.lt.s32.totalorder %v810, 0
        %vm893 = vcmp.lt.s32.totalorder %v817, 0
        %vm894 = vcmp.lt.s32.totalorder %v824, 0
        %vm895 = vcmp.lt.s32.totalorder %v831, 0
        %vm896 = vmand %vm864, %vm832
        %vm897 = vmand %vm865, %vm833
        %vm898 = vmand %vm866, %vm834
        %vm899 = vmand %vm867, %vm835
        %vm900 = vmand %vm868, %vm836
        %vm901 = vmand %vm869, %vm837
        %vm902 = vmand %vm870, %vm838
        %vm903 = vmand %vm871, %vm839
        %vm904 = vmand %vm872, %vm840
        %vm905 = vmand %vm873, %vm841
        %vm906 = vmand %vm874, %vm842
        %vm907 = vmand %vm875, %vm843
        %vm908 = vmand %vm876, %vm844
        %vm909 = vmand %vm877, %vm845
        %vm910 = vmand %vm878, %vm846
        %vm911 = vmand %vm879, %vm847
        %vm912 = vmand %vm880, %vm848
        %vm913 = vmand %vm881, %vm849
        %vm914 = vmand %vm882, %vm850
        %vm915 = vmand %vm883, %vm851
        %vm916 = vmand %vm884, %vm852
        %vm917 = vmand %vm885, %vm853
        %vm918 = vmand %vm886, %vm854
        %vm919 = vmand %vm887, %vm855
        %vm920 = vmand %vm888, %vm856
        %vm921 = vmand %vm889, %vm857
        %vm922 = vmand %vm890, %vm858
        %vm923 = vmand %vm891, %vm859
        %vm924 = vmand %vm892, %vm860
        %vm925 = vmand %vm893, %vm861
        %vm926 = vmand %vm894, %vm862
        %vm927 = vmand %vm895, %vm863
        %v928 = vadd.s32 %v614, 16
        %v929 = vadd.s32 %v621, 16
        %v930 = vadd.s32 %v628, 16
        %v931 = vadd.s32 %v635, 16
        %v932 = vadd.s32 %v642, 16
        %v933 = vadd.s32 %v649, 16
        %v934 = vadd.s32 %v656, 16
        %v935 = vadd.s32 %v663, 16
        %v936 = vadd.s32 %v670, 16
        %v937 = vadd.s32 %v677, 16
        %v938 = vadd.s32 %v684, 16
        %v939 = vadd.s32 %v691, 16
        %v940 = vadd.s32 %v698, 16
        %v941 = vadd.s32 %v705, 16
        %v942 = vadd.s32 %v712, 16
        %v943 = vadd.s32 %v719, 16
        %v944 = vadd.s32 %v726, 16
        %v945 = vadd.s32 %v733, 16
        %v946 = vadd.s32 %v740, 16
        %v947 = vadd.s32 %v747, 16
        %v948 = vadd.s32 %v754, 16
        %v949 = vadd.s32 %v761, 16
        %v950 = vadd.s32 %v768, 16
        %v951 = vadd.s32 %v775, 16
        %v952 = vadd.s32 %v782, 16
        %v953 = vadd.s32 %v789, 16
        %v954 = vadd.s32 %v796, 16
        %v955 = vadd.s32 %v803, 16
        %v956 = vadd.s32 %v810, 16
        %v957 = vadd.s32 %v817, 16
        %v958 = vadd.s32 %v824, 16
        %v959 = vadd.s32 %v831, 16
        %v960 = vsel %vm896, %v928, %v614
        %v961 = vsel %vm897, %v929, %v621
        %v962 = vsel %vm898, %v930, %v628
        %v963 = vsel %vm899, %v931, %v635
        %v964 = vsel %vm900, %v932, %v642
        %v965 = vsel %vm901, %v933, %v649
        %v966 = vsel %vm902, %v934, %v656
        %v967 = vsel %vm903, %v935, %v663
        %v968 = vsel %vm904, %v936, %v670
        %v969 = vsel %vm905, %v937, %v677
        %v970 = vsel %vm906, %v938, %v684
        %v971 = vsel %vm907, %v939, %v691
        %v972 = vsel %vm908, %v940, %v698
        %v973 = vsel %vm909, %v941, %v705
        %v974 = vsel %vm910, %v942, %v712
        %v975 = vsel %vm911, %v943, %v719
        %v976 = vsel %vm912, %v944, %v726
        %v977 = vsel %vm913, %v945, %v733
        %v978 = vsel %vm914, %v946, %v740
        %v979 = vsel %vm915, %v947, %v747
        %v980 = vsel %vm916, %v948, %v754
        %v981 = vsel %vm917, %v949, %v761
        %v982 = vsel %vm918, %v950, %v768
        %v983 = vsel %vm919, %v951, %v775
        %v984 = vsel %vm920, %v952, %v782
        %v985 = vsel %vm921, %v953, %v789
        %v986 = vsel %vm922, %v954, %v796
        %v987 = vsel %vm923, %v955, %v803
        %v988 = vsel %vm924, %v956, %v810
        %v989 = vsel %vm925, %v957, %v817
        %v990 = vsel %vm926, %v958, %v824
        %v991 = vsel %vm927, %v959, %v831
        %vm992 = vcmp.gt.s32.totalorder %v960, 0
        %vm993 = vcmp.gt.s32.totalorder %v961, 0
        %vm994 = vcmp.gt.s32.totalorder %v962, 0
        %vm995 = vcmp.gt.s32.totalorder %v963, 0
        %vm996 = vcmp.gt.s32.totalorder %v964, 0
        %vm997 = vcmp.gt.s32.totalorder %v965, 0
        %vm998 = vcmp.gt.s32.totalorder %v966, 0
        %vm999 = vcmp.gt.s32.totalorder %v967, 0
        %vm1000 = vcmp.gt.s32.totalorder %v968, 0
        %vm1001 = vcmp.gt.s32.totalorder %v969, 0
        %vm1002 = vcmp.gt.s32.totalorder %v970, 0
        %vm1003 = vcmp.gt.s32.totalorder %v971, 0
        %vm1004 = vcmp.gt.s32.totalorder %v972, 0
        %vm1005 = vcmp.gt.s32.totalorder %v973, 0
        %vm1006 = vcmp.gt.s32.totalorder %v974, 0
        %vm1007 = vcmp.gt.s32.totalorder %v975, 0
        %vm1008 = vcmp.gt.s32.totalorder %v976, 0
        %vm1009 = vcmp.gt.s32.totalorder %v977, 0
        %vm1010 = vcmp.gt.s32.totalorder %v978, 0
        %vm1011 = vcmp.gt.s32.totalorder %v979, 0
        %vm1012 = vcmp.gt.s32.totalorder %v980, 0
        %vm1013 = vcmp.gt.s32.totalorder %v981, 0
        %vm1014 = vcmp.gt.s32.totalorder %v982, 0
        %vm1015 = vcmp.gt.s32.totalorder %v983, 0
        %vm1016 = vcmp.gt.s32.totalorder %v984, 0
        %vm1017 = vcmp.gt.s32.totalorder %v985, 0
        %vm1018 = vcmp.gt.s32.totalorder %v986, 0
        %vm1019 = vcmp.gt.s32.totalorder %v987, 0
        %vm1020 = vcmp.gt.s32.totalorder %v988, 0
        %vm1021 = vcmp.gt.s32.totalorder %v989, 0
        %vm1022 = vcmp.gt.s32.totalorder %v990, 0
        %vm1023 = vcmp.gt.s32.totalorder %v991, 0
        %vm1024 = vcmp.lt.s32.totalorder %v960, 15
        %vm1025 = vcmp.lt.s32.totalorder %v961, 15
        %vm1026 = vcmp.lt.s32.totalorder %v962, 15
        %vm1027 = vcmp.lt.s32.totalorder %v963, 15
        %vm1028 = vcmp.lt.s32.totalorder %v964, 15
        %vm1029 = vcmp.lt.s32.totalorder %v965, 15
        %vm1030 = vcmp.lt.s32.totalorder %v966, 15
        %vm1031 = vcmp.lt.s32.totalorder %v967, 15
        %vm1032 = vcmp.lt.s32.totalorder %v968, 15
        %vm1033 = vcmp.lt.s32.totalorder %v969, 15
        %vm1034 = vcmp.lt.s32.totalorder %v970, 15
        %vm1035 = vcmp.lt.s32.totalorder %v971, 15
        %vm1036 = vcmp.lt.s32.totalorder %v972, 15
        %vm1037 = vcmp.lt.s32.totalorder %v973, 15
        %vm1038 = vcmp.lt.s32.totalorder %v974, 15
        %vm1039 = vcmp.lt.s32.totalorder %v975, 15
        %vm1040 = vcmp.lt.s32.totalorder %v976, 15
        %vm1041 = vcmp.lt.s32.totalorder %v977, 15
        %vm1042 = vcmp.lt.s32.totalorder %v978, 15
        %vm1043 = vcmp.lt.s32.totalorder %v979, 15
        %vm1044 = vcmp.lt.s32.totalorder %v980, 15
        %vm1045 = vcmp.lt.s32.totalorder %v981, 15
        %vm1046 = vcmp.lt.s32.totalorder %v982, 15
        %vm1047 = vcmp.lt.s32.totalorder %v983, 15
        %vm1048 = vcmp.lt.s32.totalorder %v984, 15
        %vm1049 = vcmp.lt.s32.totalorder %v985, 15
        %vm1050 = vcmp.lt.s32.totalorder %v986, 15
        %vm1051 = vcmp.lt.s32.totalorder %v987, 15
        %vm1052 = vcmp.lt.s32.totalorder %v988, 15
        %vm1053 = vcmp.lt.s32.totalorder %v989, 15
        %vm1054 = vcmp.lt.s32.totalorder %v990, 15
        %vm1055 = vcmp.lt.s32.totalorder %v991, 15
        %v1056 = vld [vmem:[%s573] sm:$0xf]
        %v1057 = vld [vmem:[%s573 + $0x4] sm:$0xf]
        %v1058 = vld [vmem:[%s573 + $0x8] sm:$0xf]
        %v1059 = vld [vmem:[%s573 + $0xc] sm:$0xf]
        %v1060 = vld [vmem:[%s573 + $0x10] sm:$0xf]
        %v1061 = vld [vmem:[%s573 + $0x14] sm:$0xf]
        %v1062 = vld [vmem:[%s573 + $0x18] sm:$0xf]
        %v1063 = vld [vmem:[%s573 + $0x1c] sm:$0xf]
        %v1064 = vld [vmem:[%s573 + $0x20] sm:$0xf]
        %v1065 = vld [vmem:[%s573 + $0x24] sm:$0xf]
        %v1066 = vld [vmem:[%s573 + $0x28] sm:$0xf]
        %v1067 = vld [vmem:[%s573 + $0x2c] sm:$0xf]
        %v1068 = vld [vmem:[%s573 + $0x30] sm:$0xf]
        %v1069 = vld [vmem:[%s573 + $0x34] sm:$0xf]
        %v1070 = vld [vmem:[%s573 + $0x38] sm:$0xf]
        %v1071 = vld [vmem:[%s573 + $0x3c] sm:$0xf]
        %v1072 = vld [vmem:[%s573 + $0x40] sm:$0xf]
        %v1073 = vld [vmem:[%s573 + $0x44] sm:$0xf]
        %v1074 = vld [vmem:[%s573 + $0x48] sm:$0xf]
        %v1075 = vld [vmem:[%s573 + $0x4c] sm:$0xf]
        %v1076 = vld [vmem:[%s573 + $0x50] sm:$0xf]
        %v1077 = vld [vmem:[%s573 + $0x54] sm:$0xf]
        %v1078 = vld [vmem:[%s573 + $0x58] sm:$0xf]
        %v1079 = vld [vmem:[%s573 + $0x5c] sm:$0xf]
        %v1080 = vld [vmem:[%s573 + $0x60] sm:$0xf]
        %v1081 = vld [vmem:[%s573 + $0x64] sm:$0xf]
        %v1082 = vld [vmem:[%s573 + $0x68] sm:$0xf]
        %v1083 = vld [vmem:[%s573 + $0x6c] sm:$0xf]
        %v1084 = vld [vmem:[%s573 + $0x70] sm:$0xf]
        %v1085 = vld [vmem:[%s573 + $0x74] sm:$0xf]
        %v1086 = vld [vmem:[%s573 + $0x78] sm:$0xf]
        %v1087 = vld [vmem:[%s573 + $0x7c] sm:$0xf]
        %v1088 = vld [vmem:[%s573 + $0x80] sm:$0xf]
        %v1089 = vld [vmem:[%s573 + $0x84] sm:$0xf]
        %v1090 = vld [vmem:[%s573 + $0x88] sm:$0xf]
        %v1091 = vld [vmem:[%s573 + $0x8c] sm:$0xf]
        %v1092 = vld [vmem:[%s573 + $0x90] sm:$0xf]
        %v1093 = vld [vmem:[%s573 + $0x94] sm:$0xf]
        %v1126 = vunpack.c.l.b16 %v1056
        %v1127 = vunpack.c.l.b16 %v1057
        %v1128 = vunpack.c.l.b16 %v1058
        %v1129 = vunpack.c.l.b16 %v1059
        %v1130 = vunpack.c.l.b16 %v1060
        %v1131 = vunpack.c.l.b16 %v1061
        %v1132 = vunpack.c.l.b16 %v1062
        %v1133 = vunpack.c.l.b16 %v1063
        %v1134 = vunpack.c.l.b16 %v1064
        %v1135 = vunpack.c.l.b16 %v1065
        %v1136 = vunpack.c.l.b16 %v1066
        %v1137 = vunpack.c.l.b16 %v1067
        %v1138 = vunpack.c.l.b16 %v1068
        %v1139 = vunpack.c.l.b16 %v1069
        %v1140 = vunpack.c.l.b16 %v1070
        %v1141 = vunpack.c.l.b16 %v1071
        %v1142 = vunpack.c.l.b16 %v1072
        %v1143 = vunpack.c.l.b16 %v1073
        %v1144 = vunpack.c.l.b16 %v1074
        %v1145 = vunpack.c.l.b16 %v1075
        %v1146 = vunpack.c.l.b16 %v1076
        %v1147 = vunpack.c.l.b16 %v1077
        %v1148 = vunpack.c.l.b16 %v1078
        %v1149 = vunpack.c.l.b16 %v1079
        %v1150 = vunpack.c.l.b16 %v1080
        %v1151 = vunpack.c.l.b16 %v1081
        %v1152 = vunpack.c.l.b16 %v1082
        %v1153 = vunpack.c.l.b16 %v1083
        %v1154 = vunpack.c.l.b16 %v1084
        %v1155 = vunpack.c.l.b16 %v1085
        %v1156 = vunpack.c.l.b16 %v1086
        %v1157 = vunpack.c.l.b16 %v1087
        %v1158 = vpack.c.b16 %v1127, %v1126
        %v1159 = vpack.c.b16 %v1129, %v1128
        %v1160 = vpack.c.b16 %v1131, %v1130
        %v1161 = vpack.c.b16 %v1133, %v1132
        %v1162 = vpack.c.b16 %v1135, %v1134
        %v1163 = vpack.c.b16 %v1137, %v1136
        %v1164 = vpack.c.b16 %v1139, %v1138
        %v1165 = vpack.c.b16 %v1141, %v1140
        %v1166 = vpack.c.b16 %v1143, %v1142
        %v1167 = vpack.c.b16 %v1145, %v1144
        %v1168 = vpack.c.b16 %v1147, %v1146
        %v1169 = vpack.c.b16 %v1149, %v1148
        %v1170 = vpack.c.b16 %v1151, %v1150
        %v1171 = vpack.c.b16 %v1153, %v1152
        %v1172 = vpack.c.b16 %v1155, %v1154
        %v1173 = vpack.c.b16 %v1157, %v1156
        %v1176 = vunpack.c.l.b16 %v1088
        %v1177 = vunpack.c.l.b16 %v1089
        %v1178 = vpack.c.b16 %v1177, %v1176
        %1179 = vrot.lane.b32.xlu0 %v1159, 21
        %v1180 = vpop.permute.xlu0 %1179
        %1181 = vrot.lane.b32.xlu0 %v1160, 21
        %v1182 = vpop.permute.xlu0 %1181
        %1183 = vrot.lane.b32.xlu0 %v1161, 21
        %v1184 = vpop.permute.xlu0 %1183
        %1185 = vrot.lane.b32.xlu0 %v1162, 21
        %v1186 = vpop.permute.xlu0 %1185
        %1187 = vrot.lane.b32.xlu0 %v1163, 21
        %v1188 = vpop.permute.xlu0 %1187
        %1189 = vrot.lane.b32.xlu0 %v1164, 21
        %v1190 = vpop.permute.xlu0 %1189
        %1191 = vrot.lane.b32.xlu0 %v1165, 21
        %v1192 = vpop.permute.xlu0 %1191
        %1193 = vrot.lane.b32.xlu0 %v1166, 21
        %v1194 = vpop.permute.xlu0 %1193
        %1195 = vrot.lane.b32.xlu0 %v1167, 21
        %v1196 = vpop.permute.xlu0 %1195
        %1197 = vrot.lane.b32.xlu0 %v1168, 21
        %v1198 = vpop.permute.xlu0 %1197
        %1199 = vrot.lane.b32.xlu0 %v1169, 21
        %v1200 = vpop.permute.xlu0 %1199
        %1201 = vrot.lane.b32.xlu0 %v1170, 21
        %v1202 = vpop.permute.xlu0 %1201
        %1203 = vrot.lane.b32.xlu0 %v1171, 21
        %v1204 = vpop.permute.xlu0 %1203
        %1205 = vrot.lane.b32.xlu0 %v1172, 21
        %v1206 = vpop.permute.xlu0 %1205
        %1207 = vrot.lane.b32.xlu0 %v1173, 21
        %v1208 = vpop.permute.xlu0 %1207
        %1209 = vrot.lane.b32.xlu0 %v1178, 21
        %v1210 = vpop.permute.xlu0 %1209
        %v1213 = vunpack.c.l.b16 %v1090
        %v1214 = vunpack.c.l.b16 %v1091
        %v1215 = vpack.c.b16 %v1214, %v1213
        %1216 = vrot.lane.b32.xlu0 %v1160, 42
        %v1217 = vpop.permute.xlu0 %1216
        %1218 = vrot.lane.b32.xlu0 %v1161, 42
        %v1219 = vpop.permute.xlu0 %1218
        %1220 = vrot.lane.b32.xlu0 %v1162, 42
        %v1221 = vpop.permute.xlu0 %1220
        %1222 = vrot.lane.b32.xlu0 %v1163, 42
        %v1223 = vpop.permute.xlu0 %1222
        %1224 = vrot.lane.b32.xlu0 %v1164, 42
        %v1225 = vpop.permute.xlu0 %1224
        %1226 = vrot.lane.b32.xlu0 %v1165, 42
        %v1227 = vpop.permute.xlu0 %1226
        %1228 = vrot.lane.b32.xlu0 %v1166, 42
        %v1229 = vpop.permute.xlu0 %1228
        %1230 = vrot.lane.b32.xlu0 %v1167, 42
        %v1231 = vpop.permute.xlu0 %1230
        %1232 = vrot.lane.b32.xlu0 %v1168, 42
        %v1233 = vpop.permute.xlu0 %1232
        %1234 = vrot.lane.b32.xlu0 %v1169, 42
        %v1235 = vpop.permute.xlu0 %1234
        %1236 = vrot.lane.b32.xlu0 %v1170, 42
        %v1237 = vpop.permute.xlu0 %1236
        %1238 = vrot.lane.b32.xlu0 %v1171, 42
        %v1239 = vpop.permute.xlu0 %1238
        %1240 = vrot.lane.b32.xlu0 %v1172, 42
        %v1241 = vpop.permute.xlu0 %1240
        %1242 = vrot.lane.b32.xlu0 %v1173, 42
        %v1243 = vpop.permute.xlu0 %1242
        %1244 = vrot.lane.b32.xlu0 %v1178, 42
        %v1245 = vpop.permute.xlu0 %1244
        %1246 = vrot.lane.b32.xlu0 %v1215, 42
        %v1247 = vpop.permute.xlu0 %1246
        %v1250 = vunpack.c.l.b16 %v1092
        %v1251 = vunpack.c.l.b16 %v1093
        %v1252 = vpack.c.b16 %v1251, %v1250
        %1253 = vrot.lane.b32.xlu0 %v1161, 63
        %v1254 = vpop.permute.xlu0 %1253
        %1255 = vrot.lane.b32.xlu0 %v1162, 63
        %v1256 = vpop.permute.xlu0 %1255
        %1257 = vrot.lane.b32.xlu0 %v1163, 63
        %v1258 = vpop.permute.xlu0 %1257
        %1259 = vrot.lane.b32.xlu0 %v1164, 63
        %v1260 = vpop.permute.xlu0 %1259
        %1261 = vrot.lane.b32.xlu0 %v1165, 63
        %v1262 = vpop.permute.xlu0 %1261
        %1263 = vrot.lane.b32.xlu0 %v1166, 63
        %v1264 = vpop.permute.xlu0 %1263
        %1265 = vrot.lane.b32.xlu0 %v1167, 63
        %v1266 = vpop.permute.xlu0 %1265
        %1267 = vrot.lane.b32.xlu0 %v1168, 63
        %v1268 = vpop.permute.xlu0 %1267
        %1269 = vrot.lane.b32.xlu0 %v1169, 63
        %v1270 = vpop.permute.xlu0 %1269
        %1271 = vrot.lane.b32.xlu0 %v1170, 63
        %v1272 = vpop.permute.xlu0 %1271
        %1273 = vrot.lane.b32.xlu0 %v1171, 63
        %v1274 = vpop.permute.xlu0 %1273
        %1275 = vrot.lane.b32.xlu0 %v1172, 63
        %v1276 = vpop.permute.xlu0 %1275
        %1277 = vrot.lane.b32.xlu0 %v1173, 63
        %v1278 = vpop.permute.xlu0 %1277
        %1279 = vrot.lane.b32.xlu0 %v1178, 63
        %v1280 = vpop.permute.xlu0 %1279
        %1281 = vrot.lane.b32.xlu0 %v1215, 63
        %v1282 = vpop.permute.xlu0 %1281
        %1283 = vrot.lane.b32.xlu0 %v1252, 63
        %v1284 = vpop.permute.xlu0 %1283
        %vm1285 = vcmask 171008
        %v1288 = vsel %vm1285, %v1158, %v1180
        %v1291 = vsel %vm1285, %v1159, %v1182
        %v1294 = vsel %vm1285, %v1160, %v1184
        %v1297 = vsel %vm1285, %v1161, %v1186
        %v1300 = vsel %vm1285, %v1162, %v1188
        %v1303 = vsel %vm1285, %v1163, %v1190
        %v1306 = vsel %vm1285, %v1164, %v1192
        %v1309 = vsel %vm1285, %v1165, %v1194
        %v1312 = vsel %vm1285, %v1166, %v1196
        %v1315 = vsel %vm1285, %v1167, %v1198
        %v1318 = vsel %vm1285, %v1168, %v1200
        %v1321 = vsel %vm1285, %v1169, %v1202
        %v1324 = vsel %vm1285, %v1170, %v1204
        %v1327 = vsel %vm1285, %v1171, %v1206
        %v1330 = vsel %vm1285, %v1172, %v1208
        %v1333 = vsel %vm1285, %v1173, %v1210
        %vm1334 = vcmask 343040
        %v1336 = vsel %vm1334, %v1288, %v1217
        %v1338 = vsel %vm1334, %v1291, %v1219
        %v1340 = vsel %vm1334, %v1294, %v1221
        %v1342 = vsel %vm1334, %v1297, %v1223
        %v1344 = vsel %vm1334, %v1300, %v1225
        %v1346 = vsel %vm1334, %v1303, %v1227
        %v1348 = vsel %vm1334, %v1306, %v1229
        %v1350 = vsel %vm1334, %v1309, %v1231
        %v1352 = vsel %vm1334, %v1312, %v1233
        %v1354 = vsel %vm1334, %v1315, %v1235
        %v1356 = vsel %vm1334, %v1318, %v1237
        %v1358 = vsel %vm1334, %v1321, %v1239
        %v1360 = vsel %vm1334, %v1324, %v1241
        %v1362 = vsel %vm1334, %v1327, %v1243
        %v1364 = vsel %vm1334, %v1330, %v1245
        %v1366 = vsel %vm1334, %v1333, %v1247
        %vm1367 = vcmask 515072
        %v1369 = vsel %vm1367, %v1336, %v1254
        %v1371 = vsel %vm1367, %v1338, %v1256
        %v1373 = vsel %vm1367, %v1340, %v1258
        %v1375 = vsel %vm1367, %v1342, %v1260
        %v1377 = vsel %vm1367, %v1344, %v1262
        %v1379 = vsel %vm1367, %v1346, %v1264
        %v1381 = vsel %vm1367, %v1348, %v1266
        %v1383 = vsel %vm1367, %v1350, %v1268
        %v1385 = vsel %vm1367, %v1352, %v1270
        %v1387 = vsel %vm1367, %v1354, %v1272
        %v1389 = vsel %vm1367, %v1356, %v1274
        %v1391 = vsel %vm1367, %v1358, %v1276
        %v1393 = vsel %vm1367, %v1360, %v1278
        %v1395 = vsel %vm1367, %v1362, %v1280
        %v1397 = vsel %vm1367, %v1364, %v1282
        %v1399 = vsel %vm1367, %v1366, %v1284
        %vm1400 = vcmask 687104
        %v1402 = vsel %vm1400, %v1369, 0
        %v1404 = vsel %vm1400, %v1371, 0
        %v1406 = vsel %vm1400, %v1373, 0
        %v1408 = vsel %vm1400, %v1375, 0
        %v1410 = vsel %vm1400, %v1377, 0
        %v1412 = vsel %vm1400, %v1379, 0
        %v1414 = vsel %vm1400, %v1381, 0
        %v1416 = vsel %vm1400, %v1383, 0
        %v1418 = vsel %vm1400, %v1385, 0
        %v1420 = vsel %vm1400, %v1387, 0
        %v1422 = vsel %vm1400, %v1389, 0
        %v1424 = vsel %vm1400, %v1391, 0
        %v1426 = vsel %vm1400, %v1393, 0
        %v1428 = vsel %vm1400, %v1395, 0
        %v1430 = vsel %vm1400, %v1397, 0
        %v1432 = vsel %vm1400, %v1399, 0
        %v1434 = vld [vmem:[%s1] sm:$0xf]
        %v1435 = vld [vmem:[%s1 + $0x4] sm:$0xf]
        %v1436 = vld [vmem:[%s1 + $0x8] sm:$0xf]
        %v1437 = vld [vmem:[%s1 + $0xc] sm:$0xf]
        %v1438 = vld [vmem:[%s1 + $0x10] sm:$0xf]
        %v1439 = vld [vmem:[%s1 + $0x14] sm:$0xf]
        %v1440 = vld [vmem:[%s1 + $0x18] sm:$0xf]
        %v1441 = vld [vmem:[%s1 + $0x1c] sm:$0xf]
        %v1442 = vld [vmem:[%s1 + $0x20] sm:$0xf]
        %v1443 = vld [vmem:[%s1 + $0x24] sm:$0xf]
        %v1444 = vld [vmem:[%s1 + $0x28] sm:$0xf]
        %v1445 = vld [vmem:[%s1 + $0x2c] sm:$0xf]
        %v1446 = vld [vmem:[%s1 + $0x30] sm:$0xf]
        %v1447 = vld [vmem:[%s1 + $0x34] sm:$0xf]
        %v1448 = vld [vmem:[%s1 + $0x38] sm:$0xf]
        %v1449 = vld [vmem:[%s1 + $0x3c] sm:$0xf]
        %v1466 = vunpack.c.l.b16 %v1434
        %v1467 = vunpack.c.l.b16 %v1435
        %v1468 = vunpack.c.l.b16 %v1436
        %v1469 = vunpack.c.l.b16 %v1437
        %v1470 = vunpack.c.l.b16 %v1438
        %v1471 = vunpack.c.l.b16 %v1439
        %v1472 = vunpack.c.l.b16 %v1440
        %v1473 = vunpack.c.l.b16 %v1441
        %v1474 = vunpack.c.l.b16 %v1442
        %v1475 = vunpack.c.l.b16 %v1443
        %v1476 = vunpack.c.l.b16 %v1444
        %v1477 = vunpack.c.l.b16 %v1445
        %v1478 = vunpack.c.l.b16 %v1446
        %v1479 = vunpack.c.l.b16 %v1447
        %v1480 = vunpack.c.l.b16 %v1448
        %v1481 = vunpack.c.l.b16 %v1449
        %v1482 = vpack.c.b16 %v1467, %v1466
        %v1483 = vpack.c.b16 %v1469, %v1468
        %v1484 = vpack.c.b16 %v1471, %v1470
        %v1485 = vpack.c.b16 %v1473, %v1472
        %v1486 = vpack.c.b16 %v1475, %v1474
        %v1487 = vpack.c.b16 %v1477, %v1476
        %v1488 = vpack.c.b16 %v1479, %v1478
        %v1489 = vpack.c.b16 %v1481, %v1480
        %1498 = vmatpush.bf16.msra.mxu0 %v1489
        %1499 = vmatpush.bf16.msra.mxu0 %v1488
        %1500 = vmatpush.bf16.msra.mxu0 %v1487
        %1501 = vmatpush.bf16.msra.mxu0 %v1486
        %1502 = vmatpush.bf16.msra.mxu0 %v1485
        %1503 = vmatpush.bf16.msra.mxu0 %v1484
        %1504 = vmatpush.bf16.msra.mxu0 %v1483
        %1505 = vmatpush.bf16.msra.mxu0 %v1482
        %1506 = vmatmul.bf16.gmra.mxu0 %v1402
        %v1507 = vpop.f32.mrf.mxu0
        %v1508 = vadd.f32 0.0, %v1507
        %v1509 = vpop.f32.mrf.mxu0
        %v1510 = vadd.f32 0.0, %v1509
        %1511 = vmatmul.bf16.gmra.mxu0 %v1404
        %v1512 = vpop.f32.mrf.mxu0
        %v1513 = vadd.f32 0.0, %v1512
        %v1514 = vpop.f32.mrf.mxu0
        %v1515 = vadd.f32 0.0, %v1514
        %1516 = vmatmul.bf16.gmra.mxu0 %v1406
        %v1517 = vpop.f32.mrf.mxu0
        %v1518 = vadd.f32 0.0, %v1517
        %v1519 = vpop.f32.mrf.mxu0
        %v1520 = vadd.f32 0.0, %v1519
        %1521 = vmatmul.bf16.gmra.mxu0 %v1408
        %v1522 = vpop.f32.mrf.mxu0
        %v1523 = vadd.f32 0.0, %v1522
        %v1524 = vpop.f32.mrf.mxu0
        %v1525 = vadd.f32 0.0, %v1524
        %1526 = vmatmul.bf16.gmra.mxu0 %v1410
        %v1527 = vpop.f32.mrf.mxu0
        %v1528 = vadd.f32 0.0, %v1527
        %v1529 = vpop.f32.mrf.mxu0
        %v1530 = vadd.f32 0.0, %v1529
        %1531 = vmatmul.bf16.gmra.mxu0 %v1412
        %v1532 = vpop.f32.mrf.mxu0
        %v1533 = vadd.f32 0.0, %v1532
        %v1534 = vpop.f32.mrf.mxu0
        %v1535 = vadd.f32 0.0, %v1534
        %1536 = vmatmul.bf16.gmra.mxu0 %v1414
        %v1537 = vpop.f32.mrf.mxu0
        %v1538 = vadd.f32 0.0, %v1537
        %v1539 = vpop.f32.mrf.mxu0
        %v1540 = vadd.f32 0.0, %v1539
        %1541 = vmatmul.bf16.gmra.mxu0 %v1416
        %v1542 = vpop.f32.mrf.mxu0
        %v1543 = vadd.f32 0.0, %v1542
        %v1544 = vpop.f32.mrf.mxu0
        %v1545 = vadd.f32 0.0, %v1544
        %1546 = vmatmul.bf16.gmra.mxu0 %v1418
        %v1547 = vpop.f32.mrf.mxu0
        %v1548 = vadd.f32 0.0, %v1547
        %v1549 = vpop.f32.mrf.mxu0
        %v1550 = vadd.f32 0.0, %v1549
        %1551 = vmatmul.bf16.gmra.mxu0 %v1420
        %v1552 = vpop.f32.mrf.mxu0
        %v1553 = vadd.f32 0.0, %v1552
        %v1554 = vpop.f32.mrf.mxu0
        %v1555 = vadd.f32 0.0, %v1554
        %1556 = vmatmul.bf16.gmra.mxu0 %v1422
        %v1557 = vpop.f32.mrf.mxu0
        %v1558 = vadd.f32 0.0, %v1557
        %v1559 = vpop.f32.mrf.mxu0
        %v1560 = vadd.f32 0.0, %v1559
        %1561 = vmatmul.bf16.gmra.mxu0 %v1424
        %v1562 = vpop.f32.mrf.mxu0
        %v1563 = vadd.f32 0.0, %v1562
        %v1564 = vpop.f32.mrf.mxu0
        %v1565 = vadd.f32 0.0, %v1564
        %1566 = vmatmul.bf16.gmra.mxu0 %v1426
        %v1567 = vpop.f32.mrf.mxu0
        %v1568 = vadd.f32 0.0, %v1567
        %v1569 = vpop.f32.mrf.mxu0
        %v1570 = vadd.f32 0.0, %v1569
        %1571 = vmatmul.bf16.gmra.mxu0 %v1428
        %v1572 = vpop.f32.mrf.mxu0
        %v1573 = vadd.f32 0.0, %v1572
        %v1574 = vpop.f32.mrf.mxu0
        %v1575 = vadd.f32 0.0, %v1574
        %1576 = vmatmul.bf16.gmra.mxu0 %v1430
        %v1577 = vpop.f32.mrf.mxu0
        %v1578 = vadd.f32 0.0, %v1577
        %v1579 = vpop.f32.mrf.mxu0
        %v1580 = vadd.f32 0.0, %v1579
        %1581 = vmatmul.bf16.gmra.mxu0 %v1432
        %v1582 = vpop.f32.mrf.mxu0
        %v1583 = vadd.f32 0.0, %v1582
        %v1584 = vpop.f32.mrf.mxu0
        %v1585 = vadd.f32 0.0, %v1584
        %1586 = vdwg.mxu0
        %v1587 = vld [vmem:[%s2] sm:$0x1]
        %v1589 = vperm.slane %v1587, 0
        %v1591 = vmul.f32 %v1508, %v1589
        %v1592 = vmul.f32 %v1510, %v1589
        %v1593 = vmul.f32 %v1513, %v1589
        %v1594 = vmul.f32 %v1515, %v1589
        %v1595 = vmul.f32 %v1518, %v1589
        %v1596 = vmul.f32 %v1520, %v1589
        %v1597 = vmul.f32 %v1523, %v1589
        %v1598 = vmul.f32 %v1525, %v1589
        %v1599 = vmul.f32 %v1528, %v1589
        %v1600 = vmul.f32 %v1530, %v1589
        %v1601 = vmul.f32 %v1533, %v1589
        %v1602 = vmul.f32 %v1535, %v1589
        %v1603 = vmul.f32 %v1538, %v1589
        %v1604 = vmul.f32 %v1540, %v1589
        %v1605 = vmul.f32 %v1543, %v1589
        %v1606 = vmul.f32 %v1545, %v1589
        %v1607 = vmul.f32 %v1548, %v1589
        %v1608 = vmul.f32 %v1550, %v1589
        %v1609 = vmul.f32 %v1553, %v1589
        %v1610 = vmul.f32 %v1555, %v1589
        %v1611 = vmul.f32 %v1558, %v1589
        %v1612 = vmul.f32 %v1560, %v1589
        %v1613 = vmul.f32 %v1563, %v1589
        %v1614 = vmul.f32 %v1565, %v1589
        %v1615 = vmul.f32 %v1568, %v1589
        %v1616 = vmul.f32 %v1570, %v1589
        %v1617 = vmul.f32 %v1573, %v1589
        %v1618 = vmul.f32 %v1575, %v1589
        %v1619 = vmul.f32 %v1578, %v1589
        %v1620 = vmul.f32 %v1580, %v1589
        %v1621 = vmul.f32 %v1583, %v1589
        %v1622 = vmul.f32 %v1585, %v1589
        %v1623 = vld [vmem:[%s3] sm:$0x1]
        %v1625 = vperm.slane %v1623, 0
        %v1627 = vadd.f32 %v1591, %v1625
        %v1628 = vadd.f32 %v1592, %v1625
        %v1629 = vadd.f32 %v1593, %v1625
        %v1630 = vadd.f32 %v1594, %v1625
        %v1631 = vadd.f32 %v1595, %v1625
        %v1632 = vadd.f32 %v1596, %v1625
        %v1633 = vadd.f32 %v1597, %v1625
        %v1634 = vadd.f32 %v1598, %v1625
        %v1635 = vadd.f32 %v1599, %v1625
        %v1636 = vadd.f32 %v1600, %v1625
        %v1637 = vadd.f32 %v1601, %v1625
        %v1638 = vadd.f32 %v1602, %v1625
        %v1639 = vadd.f32 %v1603, %v1625
        %v1640 = vadd.f32 %v1604, %v1625
        %v1641 = vadd.f32 %v1605, %v1625
        %v1642 = vadd.f32 %v1606, %v1625
        %v1643 = vadd.f32 %v1607, %v1625
        %v1644 = vadd.f32 %v1608, %v1625
        %v1645 = vadd.f32 %v1609, %v1625
        %v1646 = vadd.f32 %v1610, %v1625
        %v1647 = vadd.f32 %v1611, %v1625
        %v1648 = vadd.f32 %v1612, %v1625
        %v1649 = vadd.f32 %v1613, %v1625
        %v1650 = vadd.f32 %v1614, %v1625
        %v1651 = vadd.f32 %v1615, %v1625
        %v1652 = vadd.f32 %v1616, %v1625
        %v1653 = vadd.f32 %v1617, %v1625
        %v1654 = vadd.f32 %v1618, %v1625
        %v1655 = vadd.f32 %v1619, %v1625
        %v1656 = vadd.f32 %v1620, %v1625
        %v1657 = vadd.f32 %v1621, %v1625
        %v1658 = vadd.f32 %v1622, %v1625
        %v1659 = vmax.f32 %v1627, 0.0
        %v1660 = vmax.f32 %v1628, 0.0
        %v1661 = vmax.f32 %v1629, 0.0
        %v1662 = vmax.f32 %v1630, 0.0
        %v1663 = vmax.f32 %v1631, 0.0
        %v1664 = vmax.f32 %v1632, 0.0
        %v1665 = vmax.f32 %v1633, 0.0
        %v1666 = vmax.f32 %v1634, 0.0
        %v1667 = vmax.f32 %v1635, 0.0
        %v1668 = vmax.f32 %v1636, 0.0
        %v1669 = vmax.f32 %v1637, 0.0
        %v1670 = vmax.f32 %v1638, 0.0
        %v1671 = vmax.f32 %v1639, 0.0
        %v1672 = vmax.f32 %v1640, 0.0
        %v1673 = vmax.f32 %v1641, 0.0
        %v1674 = vmax.f32 %v1642, 0.0
        %v1675 = vmax.f32 %v1643, 0.0
        %v1676 = vmax.f32 %v1644, 0.0
        %v1677 = vmax.f32 %v1645, 0.0
        %v1678 = vmax.f32 %v1646, 0.0
        %v1679 = vmax.f32 %v1647, 0.0
        %v1680 = vmax.f32 %v1648, 0.0
        %v1681 = vmax.f32 %v1649, 0.0
        %v1682 = vmax.f32 %v1650, 0.0
        %v1683 = vmax.f32 %v1651, 0.0
        %v1684 = vmax.f32 %v1652, 0.0
        %v1685 = vmax.f32 %v1653, 0.0
        %v1686 = vmax.f32 %v1654, 0.0
        %v1687 = vmax.f32 %v1655, 0.0
        %v1688 = vmax.f32 %v1656, 0.0
        %v1689 = vmax.f32 %v1657, 0.0
        %v1690 = vmax.f32 %v1658, 0.0
        %v1691 = vpack.c.bf16 %v1660, %v1659
        %v1692 = vpack.c.bf16 %v1662, %v1661
        %v1693 = vpack.c.bf16 %v1664, %v1663
        %v1694 = vpack.c.bf16 %v1666, %v1665
        %v1695 = vpack.c.bf16 %v1668, %v1667
        %v1696 = vpack.c.bf16 %v1670, %v1669
        %v1697 = vpack.c.bf16 %v1672, %v1671
        %v1698 = vpack.c.bf16 %v1674, %v1673
        %v1699 = vpack.c.bf16 %v1676, %v1675
        %v1700 = vpack.c.bf16 %v1678, %v1677
        %v1701 = vpack.c.bf16 %v1680, %v1679
        %v1702 = vpack.c.bf16 %v1682, %v1681
        %v1703 = vpack.c.bf16 %v1684, %v1683
        %v1704 = vpack.c.bf16 %v1686, %v1685
        %v1705 = vpack.c.bf16 %v1688, %v1687
        %v1706 = vpack.c.bf16 %v1690, %v1689
        %v1707 = vld [vmem:[%s4] sm:$0xf]
        %v1708 = vld [vmem:[%s4 + $0x4] sm:$0xf]
        %v1709 = vld [vmem:[%s4 + $0x8] sm:$0xf]
        %v1710 = vld [vmem:[%s4 + $0xc] sm:$0xf]
        %v1711 = vld [vmem:[%s4 + $0x10] sm:$0xf]
        %v1712 = vld [vmem:[%s4 + $0x14] sm:$0xf]
        %v1713 = vld [vmem:[%s4 + $0x18] sm:$0xf]
        %v1714 = vld [vmem:[%s4 + $0x1c] sm:$0xf]
        %v1715 = vld [vmem:[%s4 + $0x20] sm:$0xf]
        %v1716 = vld [vmem:[%s4 + $0x24] sm:$0xf]
        %v1717 = vld [vmem:[%s4 + $0x28] sm:$0xf]
        %v1718 = vld [vmem:[%s4 + $0x2c] sm:$0xf]
        %v1719 = vld [vmem:[%s4 + $0x30] sm:$0xf]
        %v1720 = vld [vmem:[%s4 + $0x34] sm:$0xf]
        %v1721 = vld [vmem:[%s4 + $0x38] sm:$0xf]
        %v1722 = vld [vmem:[%s4 + $0x3c] sm:$0xf]
        %v1739 = vunpack.c.l.b16 %v1707
        %v1740 = vunpack.c.l.b16 %v1708
        %v1741 = vunpack.c.l.b16 %v1709
        %v1742 = vunpack.c.l.b16 %v1710
        %v1743 = vunpack.c.l.b16 %v1711
        %v1744 = vunpack.c.l.b16 %v1712
        %v1745 = vunpack.c.l.b16 %v1713
        %v1746 = vunpack.c.l.b16 %v1714
        %v1747 = vunpack.c.l.b16 %v1715
        %v1748 = vunpack.c.l.b16 %v1716
        %v1749 = vunpack.c.l.b16 %v1717
        %v1750 = vunpack.c.l.b16 %v1718
        %v1751 = vunpack.c.l.b16 %v1719
        %v1752 = vunpack.c.l.b16 %v1720
        %v1753 = vunpack.c.l.b16 %v1721
        %v1754 = vunpack.c.l.b16 %v1722
        %v1755 = vpack.c.b16 %v1740, %v1739
        %v1756 = vpack.c.b16 %v1742, %v1741
        %v1757 = vpack.c.b16 %v1744, %v1743
        %v1758 = vpack.c.b16 %v1746, %v1745
        %v1759 = vpack.c.b16 %v1748, %v1747
        %v1760 = vpack.c.b16 %v1750, %v1749
        %v1761 = vpack.c.b16 %v1752, %v1751
        %v1762 = vpack.c.b16 %v1754, %v1753
        %1771 = vmatpush.bf16.msra.mxu0 %v1762
        %1772 = vmatpush.bf16.msra.mxu0 %v1761
        %1773 = vmatpush.bf16.msra.mxu0 %v1760
        %1774 = vmatpush.bf16.msra.mxu0 %v1759
        %1775 = vmatpush.bf16.msra.mxu0 %v1758
        %1776 = vmatpush.bf16.msra.mxu0 %v1757
        %1777 = vmatpush.bf16.msra.mxu0 %v1756
        %1778 = vmatpush.bf16.msra.mxu0 %v1755
        %1779 = vmatmul.bf16.gmra.mxu0 %v1691
        %v1780 = vpop.f32.mrf.mxu0
        %v1781 = vadd.f32 0.0, %v1780
        %v1782 = vpop.f32.mrf.mxu0
        %v1783 = vadd.f32 0.0, %v1782
        %1784 = vmatmul.bf16.gmra.mxu0 %v1692
        %v1785 = vpop.f32.mrf.mxu0
        %v1786 = vadd.f32 0.0, %v1785
        %v1787 = vpop.f32.mrf.mxu0
        %v1788 = vadd.f32 0.0, %v1787
        %1789 = vmatmul.bf16.gmra.mxu0 %v1693
        %v1790 = vpop.f32.mrf.mxu0
        %v1791 = vadd.f32 0.0, %v1790
        %v1792 = vpop.f32.mrf.mxu0
        %v1793 = vadd.f32 0.0, %v1792
        %1794 = vmatmul.bf16.gmra.mxu0 %v1694
        %v1795 = vpop.f32.mrf.mxu0
        %v1796 = vadd.f32 0.0, %v1795
        %v1797 = vpop.f32.mrf.mxu0
        %v1798 = vadd.f32 0.0, %v1797
        %1799 = vmatmul.bf16.gmra.mxu0 %v1695
        %v1800 = vpop.f32.mrf.mxu0
        %v1801 = vadd.f32 0.0, %v1800
        %v1802 = vpop.f32.mrf.mxu0
        %v1803 = vadd.f32 0.0, %v1802
        %1804 = vmatmul.bf16.gmra.mxu0 %v1696
        %v1805 = vpop.f32.mrf.mxu0
        %v1806 = vadd.f32 0.0, %v1805
        %v1807 = vpop.f32.mrf.mxu0
        %v1808 = vadd.f32 0.0, %v1807
        %1809 = vmatmul.bf16.gmra.mxu0 %v1697
        %v1810 = vpop.f32.mrf.mxu0
        %v1811 = vadd.f32 0.0, %v1810
        %v1812 = vpop.f32.mrf.mxu0
        %v1813 = vadd.f32 0.0, %v1812
        %1814 = vmatmul.bf16.gmra.mxu0 %v1698
        %v1815 = vpop.f32.mrf.mxu0
        %v1816 = vadd.f32 0.0, %v1815
        %v1817 = vpop.f32.mrf.mxu0
        %v1818 = vadd.f32 0.0, %v1817
        %1819 = vmatmul.bf16.gmra.mxu0 %v1699
        %v1820 = vpop.f32.mrf.mxu0
        %v1821 = vadd.f32 0.0, %v1820
        %v1822 = vpop.f32.mrf.mxu0
        %v1823 = vadd.f32 0.0, %v1822
        %1824 = vmatmul.bf16.gmra.mxu0 %v1700
        %v1825 = vpop.f32.mrf.mxu0
        %v1826 = vadd.f32 0.0, %v1825
        %v1827 = vpop.f32.mrf.mxu0
        %v1828 = vadd.f32 0.0, %v1827
        %1829 = vmatmul.bf16.gmra.mxu0 %v1701
        %v1830 = vpop.f32.mrf.mxu0
        %v1831 = vadd.f32 0.0, %v1830
        %v1832 = vpop.f32.mrf.mxu0
        %v1833 = vadd.f32 0.0, %v1832
        %1834 = vmatmul.bf16.gmra.mxu0 %v1702
        %v1835 = vpop.f32.mrf.mxu0
        %v1836 = vadd.f32 0.0, %v1835
        %v1837 = vpop.f32.mrf.mxu0
        %v1838 = vadd.f32 0.0, %v1837
        %1839 = vmatmul.bf16.gmra.mxu0 %v1703
        %v1840 = vpop.f32.mrf.mxu0
        %v1841 = vadd.f32 0.0, %v1840
        %v1842 = vpop.f32.mrf.mxu0
        %v1843 = vadd.f32 0.0, %v1842
        %1844 = vmatmul.bf16.gmra.mxu0 %v1704
        %v1845 = vpop.f32.mrf.mxu0
        %v1846 = vadd.f32 0.0, %v1845
        %v1847 = vpop.f32.mrf.mxu0
        %v1848 = vadd.f32 0.0, %v1847
        %1849 = vmatmul.bf16.gmra.mxu0 %v1705
        %v1850 = vpop.f32.mrf.mxu0
        %v1851 = vadd.f32 0.0, %v1850
        %v1852 = vpop.f32.mrf.mxu0
        %v1853 = vadd.f32 0.0, %v1852
        %1854 = vmatmul.bf16.gmra.mxu0 %v1706
        %v1855 = vpop.f32.mrf.mxu0
        %v1856 = vadd.f32 0.0, %v1855
        %v1857 = vpop.f32.mrf.mxu0
        %v1858 = vadd.f32 0.0, %v1857
        %1859 = vdwg.mxu0
        %v1860 = vld [vmem:[%s5] sm:$0x1]
        %v1862 = vperm.slane %v1860, 0
        %v1864 = vmul.f32 %v1781, %v1862
        %v1865 = vmul.f32 %v1783, %v1862
        %v1866 = vmul.f32 %v1786, %v1862
        %v1867 = vmul.f32 %v1788, %v1862
        %v1868 = vmul.f32 %v1791, %v1862
        %v1869 = vmul.f32 %v1793, %v1862
        %v1870 = vmul.f32 %v1796, %v1862
        %v1871 = vmul.f32 %v1798, %v1862
        %v1872 = vmul.f32 %v1801, %v1862
        %v1873 = vmul.f32 %v1803, %v1862
        %v1874 = vmul.f32 %v1806, %v1862
        %v1875 = vmul.f32 %v1808, %v1862
        %v1876 = vmul.f32 %v1811, %v1862
        %v1877 = vmul.f32 %v1813, %v1862
        %v1878 = vmul.f32 %v1816, %v1862
        %v1879 = vmul.f32 %v1818, %v1862
        %v1880 = vmul.f32 %v1821, %v1862
        %v1881 = vmul.f32 %v1823, %v1862
        %v1882 = vmul.f32 %v1826, %v1862
        %v1883 = vmul.f32 %v1828, %v1862
        %v1884 = vmul.f32 %v1831, %v1862
        %v1885 = vmul.f32 %v1833, %v1862
        %v1886 = vmul.f32 %v1836, %v1862
        %v1887 = vmul.f32 %v1838, %v1862
        %v1888 = vmul.f32 %v1841, %v1862
        %v1889 = vmul.f32 %v1843, %v1862
        %v1890 = vmul.f32 %v1846, %v1862
        %v1891 = vmul.f32 %v1848, %v1862
        %v1892 = vmul.f32 %v1851, %v1862
        %v1893 = vmul.f32 %v1853, %v1862
        %v1894 = vmul.f32 %v1856, %v1862
        %v1895 = vmul.f32 %v1858, %v1862
        %v1896 = vld [vmem:[%s6] sm:$0x1]
        %v1898 = vperm.slane %v1896, 0
        %v1900 = vadd.f32 %v1864, %v1898
        %v1901 = vadd.f32 %v1865, %v1898
        %v1902 = vadd.f32 %v1866, %v1898
        %v1903 = vadd.f32 %v1867, %v1898
        %v1904 = vadd.f32 %v1868, %v1898
        %v1905 = vadd.f32 %v1869, %v1898
        %v1906 = vadd.f32 %v1870, %v1898
        %v1907 = vadd.f32 %v1871, %v1898
        %v1908 = vadd.f32 %v1872, %v1898
        %v1909 = vadd.f32 %v1873, %v1898
        %v1910 = vadd.f32 %v1874, %v1898
        %v1911 = vadd.f32 %v1875, %v1898
        %v1912 = vadd.f32 %v1876, %v1898
        %v1913 = vadd.f32 %v1877, %v1898
        %v1914 = vadd.f32 %v1878, %v1898
        %v1915 = vadd.f32 %v1879, %v1898
        %v1916 = vadd.f32 %v1880, %v1898
        %v1917 = vadd.f32 %v1881, %v1898
        %v1918 = vadd.f32 %v1882, %v1898
        %v1919 = vadd.f32 %v1883, %v1898
        %v1920 = vadd.f32 %v1884, %v1898
        %v1921 = vadd.f32 %v1885, %v1898
        %v1922 = vadd.f32 %v1886, %v1898
        %v1923 = vadd.f32 %v1887, %v1898
        %v1924 = vadd.f32 %v1888, %v1898
        %v1925 = vadd.f32 %v1889, %v1898
        %v1926 = vadd.f32 %v1890, %v1898
        %v1927 = vadd.f32 %v1891, %v1898
        %v1928 = vadd.f32 %v1892, %v1898
        %v1929 = vadd.f32 %v1893, %v1898
        %v1930 = vadd.f32 %v1894, %v1898
        %v1931 = vadd.f32 %v1895, %v1898
        %v1932 = vmax.f32 %v1900, 0.0
        %v1933 = vmax.f32 %v1901, 0.0
        %v1934 = vmax.f32 %v1902, 0.0
        %v1935 = vmax.f32 %v1903, 0.0
        %v1936 = vmax.f32 %v1904, 0.0
        %v1937 = vmax.f32 %v1905, 0.0
        %v1938 = vmax.f32 %v1906, 0.0
        %v1939 = vmax.f32 %v1907, 0.0
        %v1940 = vmax.f32 %v1908, 0.0
        %v1941 = vmax.f32 %v1909, 0.0
        %v1942 = vmax.f32 %v1910, 0.0
        %v1943 = vmax.f32 %v1911, 0.0
        %v1944 = vmax.f32 %v1912, 0.0
        %v1945 = vmax.f32 %v1913, 0.0
        %v1946 = vmax.f32 %v1914, 0.0
        %v1947 = vmax.f32 %v1915, 0.0
        %v1948 = vmax.f32 %v1916, 0.0
        %v1949 = vmax.f32 %v1917, 0.0
        %v1950 = vmax.f32 %v1918, 0.0
        %v1951 = vmax.f32 %v1919, 0.0
        %v1952 = vmax.f32 %v1920, 0.0
        %v1953 = vmax.f32 %v1921, 0.0
        %v1954 = vmax.f32 %v1922, 0.0
        %v1955 = vmax.f32 %v1923, 0.0
        %v1956 = vmax.f32 %v1924, 0.0
        %v1957 = vmax.f32 %v1925, 0.0
        %v1958 = vmax.f32 %v1926, 0.0
        %v1959 = vmax.f32 %v1927, 0.0
        %v1960 = vmax.f32 %v1928, 0.0
        %v1961 = vmax.f32 %v1929, 0.0
        %v1962 = vmax.f32 %v1930, 0.0
        %v1963 = vmax.f32 %v1931, 0.0
        %v1965 = vrot.slane %v1961, 7
        %vm1997 = vcmask 1040384
        %v1998 = vrot.slane 0.0, 7
        %v1999 = vsel %vm1997, %v1998, %v1998
        %v2000 = vrot.slane %v1932, 7
        %v2001 = vsel %vm1997, %v1998, %v2000
        %v2002 = vrot.slane %v1933, 7
        %v2003 = vsel %vm1997, %v2000, %v2002
        %v2004 = vrot.slane %v1934, 7
        %v2005 = vsel %vm1997, %v2002, %v2004
        %v2006 = vrot.slane %v1935, 7
        %v2007 = vsel %vm1997, %v2004, %v2006
        %v2008 = vrot.slane %v1936, 7
        %v2009 = vsel %vm1997, %v2006, %v2008
        %v2010 = vrot.slane %v1937, 7
        %v2011 = vsel %vm1997, %v2008, %v2010
        %v2012 = vrot.slane %v1938, 7
        %v2013 = vsel %vm1997, %v2010, %v2012
        %v2014 = vrot.slane %v1939, 7
        %v2015 = vsel %vm1997, %v2012, %v2014
        %v2016 = vrot.slane %v1940, 7
        %v2017 = vsel %vm1997, %v2014, %v2016
        %v2018 = vrot.slane %v1941, 7
        %v2019 = vsel %vm1997, %v2016, %v2018
        %v2020 = vrot.slane %v1942, 7
        %v2021 = vsel %vm1997, %v2018, %v2020
        %v2022 = vrot.slane %v1943, 7
        %v2023 = vsel %vm1997, %v2020, %v2022
        %v2024 = vrot.slane %v1944, 7
        %v2025 = vsel %vm1997, %v2022, %v2024
        %v2026 = vrot.slane %v1945, 7
        %v2027 = vsel %vm1997, %v2024, %v2026
        %v2028 = vrot.slane %v1946, 7
        %v2029 = vsel %vm1997, %v2026, %v2028
        %v2030 = vrot.slane %v1947, 7
        %v2031 = vsel %vm1997, %v2028, %v2030
        %v2032 = vrot.slane %v1948, 7
        %v2033 = vsel %vm1997, %v2030, %v2032
        %v2034 = vrot.slane %v1949, 7
        %v2035 = vsel %vm1997, %v2032, %v2034
        %v2036 = vrot.slane %v1950, 7
        %v2037 = vsel %vm1997, %v2034, %v2036
        %v2038 = vrot.slane %v1951, 7
        %v2039 = vsel %vm1997, %v2036, %v2038
        %v2040 = vrot.slane %v1952, 7
        %v2041 = vsel %vm1997, %v2038, %v2040
        %v2042 = vrot.slane %v1953, 7
        %v2043 = vsel %vm1997, %v2040, %v2042
        %v2044 = vrot.slane %v1954, 7
        %v2045 = vsel %vm1997, %v2042, %v2044
        %v2046 = vrot.slane %v1955, 7
        %v2047 = vsel %vm1997, %v2044, %v2046
        %v2048 = vrot.slane %v1956, 7
        %v2049 = vsel %vm1997, %v2046, %v2048
        %v2050 = vrot.slane %v1957, 7
        %v2051 = vsel %vm1997, %v2048, %v2050
        %v2052 = vrot.slane %v1958, 7
        %v2053 = vsel %vm1997, %v2050, %v2052
        %v2054 = vrot.slane %v1959, 7
        %v2055 = vsel %vm1997, %v2052, %v2054
        %v2056 = vrot.slane %v1960, 7
        %v2057 = vsel %vm1997, %v2054, %v2056
        %v2058 = vsel %vm1997, %v2056, %v1965
        %v2091 = vsel %vm1997, %v1965, %v1998
        %v2092 = vsel %vm992, %v2091, 0.0
        %v2093 = vsel %vm993, %v1999, 0.0
        %v2094 = vsel %vm994, %v2001, 0.0
        %v2095 = vsel %vm995, %v2003, 0.0
        %v2096 = vsel %vm996, %v2005, 0.0
        %v2097 = vsel %vm997, %v2007, 0.0
        %v2098 = vsel %vm998, %v2009, 0.0
        %v2099 = vsel %vm999, %v2011, 0.0
        %v2100 = vsel %vm1000, %v2013, 0.0
        %v2101 = vsel %vm1001, %v2015, 0.0
        %v2102 = vsel %vm1002, %v2017, 0.0
        %v2103 = vsel %vm1003, %v2019, 0.0
        %v2104 = vsel %vm1004, %v2021, 0.0
        %v2105 = vsel %vm1005, %v2023, 0.0
        %v2106 = vsel %vm1006, %v2025, 0.0
        %v2107 = vsel %vm1007, %v2027, 0.0
        %v2108 = vsel %vm1008, %v2029, 0.0
        %v2109 = vsel %vm1009, %v2031, 0.0
        %v2110 = vsel %vm1010, %v2033, 0.0
        %v2111 = vsel %vm1011, %v2035, 0.0
        %v2112 = vsel %vm1012, %v2037, 0.0
        %v2113 = vsel %vm1013, %v2039, 0.0
        %v2114 = vsel %vm1014, %v2041, 0.0
        %v2115 = vsel %vm1015, %v2043, 0.0
        %v2116 = vsel %vm1016, %v2045, 0.0
        %v2117 = vsel %vm1017, %v2047, 0.0
        %v2118 = vsel %vm1018, %v2049, 0.0
        %v2119 = vsel %vm1019, %v2051, 0.0
        %v2120 = vsel %vm1020, %v2053, 0.0
        %v2121 = vsel %vm1021, %v2055, 0.0
        %v2122 = vsel %vm1022, %v2057, 0.0
        %v2123 = vsel %vm1023, %v2058, 0.0
        %v2124 = vpack.c.bf16 %v2092, %v2092
        %v2125 = vpack.c.bf16 %v2093, %v2093
        %v2126 = vpack.c.bf16 %v2094, %v2094
        %v2127 = vpack.c.bf16 %v2095, %v2095
        %v2128 = vpack.c.bf16 %v2096, %v2096
        %v2129 = vpack.c.bf16 %v2097, %v2097
        %v2130 = vpack.c.bf16 %v2098, %v2098
        %v2131 = vpack.c.bf16 %v2099, %v2099
        %v2132 = vpack.c.bf16 %v2100, %v2100
        %v2133 = vpack.c.bf16 %v2101, %v2101
        %v2134 = vpack.c.bf16 %v2102, %v2102
        %v2135 = vpack.c.bf16 %v2103, %v2103
        %v2136 = vpack.c.bf16 %v2104, %v2104
        %v2137 = vpack.c.bf16 %v2105, %v2105
        %v2138 = vpack.c.bf16 %v2106, %v2106
        %v2139 = vpack.c.bf16 %v2107, %v2107
        %v2140 = vpack.c.bf16 %v2108, %v2108
        %v2141 = vpack.c.bf16 %v2109, %v2109
        %v2142 = vpack.c.bf16 %v2110, %v2110
        %v2143 = vpack.c.bf16 %v2111, %v2111
        %v2144 = vpack.c.bf16 %v2112, %v2112
        %v2145 = vpack.c.bf16 %v2113, %v2113
        %v2146 = vpack.c.bf16 %v2114, %v2114
        %v2147 = vpack.c.bf16 %v2115, %v2115
        %v2148 = vpack.c.bf16 %v2116, %v2116
        %v2149 = vpack.c.bf16 %v2117, %v2117
        %v2150 = vpack.c.bf16 %v2118, %v2118
        %v2151 = vpack.c.bf16 %v2119, %v2119
        %v2152 = vpack.c.bf16 %v2120, %v2120
        %v2153 = vpack.c.bf16 %v2121, %v2121
        %v2154 = vpack.c.bf16 %v2122, %v2122
        %v2155 = vpack.c.bf16 %v2123, %v2123
        %v2156 = vpack.c.bf16 0.0, 0.0
        %v2157 = vpack.c.bf16 %v1932, %v1932
        %v2158 = vpack.c.bf16 %v1933, %v1933
        %v2159 = vpack.c.bf16 %v1934, %v1934
        %v2160 = vpack.c.bf16 %v1935, %v1935
        %v2161 = vpack.c.bf16 %v1936, %v1936
        %v2162 = vpack.c.bf16 %v1937, %v1937
        %v2163 = vpack.c.bf16 %v1938, %v1938
        %v2164 = vpack.c.bf16 %v1939, %v1939
        %v2165 = vpack.c.bf16 %v1940, %v1940
        %v2166 = vpack.c.bf16 %v1941, %v1941
        %v2167 = vpack.c.bf16 %v1942, %v1942
        %v2168 = vpack.c.bf16 %v1943, %v1943
        %v2169 = vpack.c.bf16 %v1944, %v1944
        %v2170 = vpack.c.bf16 %v1945, %v1945
        %v2171 = vpack.c.bf16 %v1946, %v1946
        %v2172 = vpack.c.bf16 %v1947, %v1947
        %v2173 = vpack.c.bf16 %v1948, %v1948
        %v2174 = vpack.c.bf16 %v1949, %v1949
        %v2175 = vpack.c.bf16 %v1950, %v1950
        %v2176 = vpack.c.bf16 %v1951, %v1951
        %v2177 = vpack.c.bf16 %v1952, %v1952
        %v2178 = vpack.c.bf16 %v1953, %v1953
        %v2179 = vpack.c.bf16 %v1954, %v1954
        %v2180 = vpack.c.bf16 %v1955, %v1955
        %v2181 = vpack.c.bf16 %v1956, %v1956
        %v2182 = vpack.c.bf16 %v1957, %v1957
        %v2183 = vpack.c.bf16 %v1958, %v1958
        %v2184 = vpack.c.bf16 %v1959, %v1959
        %v2185 = vpack.c.bf16 %v1960, %v1960
        %v2186 = vpack.c.bf16 %v1961, %v1961
        %vm2187 = vcmask 1046528
        %v2188 = vrot.slane 0.0, 1
        %v2189 = vsel %vm2187, %v2188, %v2188
        %v2190 = vrot.slane %v1932, 1
        %v2191 = vsel %vm2187, %v2188, %v2190
        %v2192 = vrot.slane %v1933, 1
        %v2193 = vsel %vm2187, %v2190, %v2192
        %v2194 = vrot.slane %v1934, 1
        %v2195 = vsel %vm2187, %v2192, %v2194
        %v2196 = vrot.slane %v1935, 1
        %v2197 = vsel %vm2187, %v2194, %v2196
        %v2198 = vrot.slane %v1936, 1
        %v2199 = vsel %vm2187, %v2196, %v2198
        %v2200 = vrot.slane %v1937, 1
        %v2201 = vsel %vm2187, %v2198, %v2200
        %v2202 = vrot.slane %v1938, 1
        %v2203 = vsel %vm2187, %v2200, %v2202
        %v2204 = vrot.slane %v1939, 1
        %v2205 = vsel %vm2187, %v2202, %v2204
        %v2206 = vrot.slane %v1940, 1
        %v2207 = vsel %vm2187, %v2204, %v2206
        %v2208 = vrot.slane %v1941, 1
        %v2209 = vsel %vm2187, %v2206, %v2208
        %v2210 = vrot.slane %v1942, 1
        %v2211 = vsel %vm2187, %v2208, %v2210
        %v2212 = vrot.slane %v1943, 1
        %v2213 = vsel %vm2187, %v2210, %v2212
        %v2214 = vrot.slane %v1944, 1
        %v2215 = vsel %vm2187, %v2212, %v2214
        %v2216 = vrot.slane %v1945, 1
        %v2217 = vsel %vm2187, %v2214, %v2216
        %v2218 = vrot.slane %v1946, 1
        %v2219 = vsel %vm2187, %v2216, %v2218
        %v2220 = vrot.slane %v1947, 1
        %v2221 = vsel %vm2187, %v2218, %v2220
        %v2222 = vrot.slane %v1948, 1
        %v2223 = vsel %vm2187, %v2220, %v2222
        %v2224 = vrot.slane %v1949, 1
        %v2225 = vsel %vm2187, %v2222, %v2224
        %v2226 = vrot.slane %v1950, 1
        %v2227 = vsel %vm2187, %v2224, %v2226
        %v2228 = vrot.slane %v1951, 1
        %v2229 = vsel %vm2187, %v2226, %v2228
        %v2230 = vrot.slane %v1952, 1
        %v2231 = vsel %vm2187, %v2228, %v2230
        %v2232 = vrot.slane %v1953, 1
        %v2233 = vsel %vm2187, %v2230, %v2232
        %v2234 = vrot.slane %v1954, 1
        %v2235 = vsel %vm2187, %v2232, %v2234
        %v2236 = vrot.slane %v1955, 1
        %v2237 = vsel %vm2187, %v2234, %v2236
        %v2238 = vrot.slane %v1956, 1
        %v2239 = vsel %vm2187, %v2236, %v2238
        %v2240 = vrot.slane %v1957, 1
        %v2241 = vsel %vm2187, %v2238, %v2240
        %v2242 = vrot.slane %v1958, 1
        %v2243 = vsel %vm2187, %v2240, %v2242
        %v2244 = vrot.slane %v1959, 1
        %v2245 = vsel %vm2187, %v2242, %v2244
        %v2246 = vrot.slane %v1960, 1
        %v2247 = vsel %vm2187, %v2244, %v2246
        %v2248 = vrot.slane %v1961, 1
        %v2249 = vsel %vm2187, %v2246, %v2248
        %v2283 = vsel %vm2187, %v2248, %v2188
        %v2284 = vsel %vm1024, %v2189, 0.0
        %v2285 = vsel %vm1025, %v2191, 0.0
        %v2286 = vsel %vm1026, %v2193, 0.0
        %v2287 = vsel %vm1027, %v2195, 0.0
        %v2288 = vsel %vm1028, %v2197, 0.0
        %v2289 = vsel %vm1029, %v2199, 0.0
        %v2290 = vsel %vm1030, %v2201, 0.0
        %v2291 = vsel %vm1031, %v2203, 0.0
        %v2292 = vsel %vm1032, %v2205, 0.0
        %v2293 = vsel %vm1033, %v2207, 0.0
        %v2294 = vsel %vm1034, %v2209, 0.0
        %v2295 = vsel %vm1035, %v2211, 0.0
        %v2296 = vsel %vm1036, %v2213, 0.0
        %v2297 = vsel %vm1037, %v2215, 0.0
        %v2298 = vsel %vm1038, %v2217, 0.0
        %v2299 = vsel %vm1039, %v2219, 0.0
        %v2300 = vsel %vm1040, %v2221, 0.0
        %v2301 = vsel %vm1041, %v2223, 0.0
        %v2302 = vsel %vm1042, %v2225, 0.0
        %v2303 = vsel %vm1043, %v2227, 0.0
        %v2304 = vsel %vm1044, %v2229, 0.0
        %v2305 = vsel %vm1045, %v2231, 0.0
        %v2306 = vsel %vm1046, %v2233, 0.0
        %v2307 = vsel %vm1047, %v2235, 0.0
        %v2308 = vsel %vm1048, %v2237, 0.0
        %v2309 = vsel %vm1049, %v2239, 0.0
        %v2310 = vsel %vm1050, %v2241, 0.0
        %v2311 = vsel %vm1051, %v2243, 0.0
        %v2312 = vsel %vm1052, %v2245, 0.0
        %v2313 = vsel %vm1053, %v2247, 0.0
        %v2314 = vsel %vm1054, %v2249, 0.0
        %v2315 = vsel %vm1055, %v2283, 0.0
        %v2316 = vpack.c.bf16 %v2284, %v2284
        %v2317 = vpack.c.bf16 %v2285, %v2285
        %v2318 = vpack.c.bf16 %v2286, %v2286
        %v2319 = vpack.c.bf16 %v2287, %v2287
        %v2320 = vpack.c.bf16 %v2288, %v2288
        %v2321 = vpack.c.bf16 %v2289, %v2289
        %v2322 = vpack.c.bf16 %v2290, %v2290
        %v2323 = vpack.c.bf16 %v2291, %v2291
        %v2324 = vpack.c.bf16 %v2292, %v2292
        %v2325 = vpack.c.bf16 %v2293, %v2293
        %v2326 = vpack.c.bf16 %v2294, %v2294
        %v2327 = vpack.c.bf16 %v2295, %v2295
        %v2328 = vpack.c.bf16 %v2296, %v2296
        %v2329 = vpack.c.bf16 %v2297, %v2297
        %v2330 = vpack.c.bf16 %v2298, %v2298
        %v2331 = vpack.c.bf16 %v2299, %v2299
        %v2332 = vpack.c.bf16 %v2300, %v2300
        %v2333 = vpack.c.bf16 %v2301, %v2301
        %v2334 = vpack.c.bf16 %v2302, %v2302
        %v2335 = vpack.c.bf16 %v2303, %v2303
        %v2336 = vpack.c.bf16 %v2304, %v2304
        %v2337 = vpack.c.bf16 %v2305, %v2305
        %v2338 = vpack.c.bf16 %v2306, %v2306
        %v2339 = vpack.c.bf16 %v2307, %v2307
        %v2340 = vpack.c.bf16 %v2308, %v2308
        %v2341 = vpack.c.bf16 %v2309, %v2309
        %v2342 = vpack.c.bf16 %v2310, %v2310
        %v2343 = vpack.c.bf16 %v2311, %v2311
        %v2344 = vpack.c.bf16 %v2312, %v2312
        %v2345 = vpack.c.bf16 %v2313, %v2313
        %v2346 = vpack.c.bf16 %v2314, %v2314
        %v2347 = vpack.c.bf16 %v2315, %v2315
        %v2349 = vrot.slane %v1963, 7
        %v2352 = vrot.slane %v1962, 7
        %v2353 = vsel %vm1997, %v1965, %v2352
        %v2354 = vsel %vm1997, %v2352, %v2349
        %v2358 = vsel %vm1997, %v2349, %v2000
        %v2359 = vsel %vm992, %v2358, 0.0
        %v2360 = vsel %vm993, %v2003, 0.0
        %v2361 = vsel %vm994, %v2005, 0.0
        %v2362 = vsel %vm995, %v2007, 0.0
        %v2363 = vsel %vm996, %v2009, 0.0
        %v2364 = vsel %vm997, %v2011, 0.0
        %v2365 = vsel %vm998, %v2013, 0.0
        %v2366 = vsel %vm999, %v2015, 0.0
        %v2367 = vsel %vm1000, %v2017, 0.0
        %v2368 = vsel %vm1001, %v2019, 0.0
        %v2369 = vsel %vm1002, %v2021, 0.0
        %v2370 = vsel %vm1003, %v2023, 0.0
        %v2371 = vsel %vm1004, %v2025, 0.0
        %v2372 = vsel %vm1005, %v2027, 0.0
        %v2373 = vsel %vm1006, %v2029, 0.0
        %v2374 = vsel %vm1007, %v2031, 0.0
        %v2375 = vsel %vm1008, %v2033, 0.0
        %v2376 = vsel %vm1009, %v2035, 0.0
        %v2377 = vsel %vm1010, %v2037, 0.0
        %v2378 = vsel %vm1011, %v2039, 0.0
        %v2379 = vsel %vm1012, %v2041, 0.0
        %v2380 = vsel %vm1013, %v2043, 0.0
        %v2381 = vsel %vm1014, %v2045, 0.0
        %v2382 = vsel %vm1015, %v2047, 0.0
        %v2383 = vsel %vm1016, %v2049, 0.0
        %v2384 = vsel %vm1017, %v2051, 0.0
        %v2385 = vsel %vm1018, %v2053, 0.0
        %v2386 = vsel %vm1019, %v2055, 0.0
        %v2387 = vsel %vm1020, %v2057, 0.0
        %v2388 = vsel %vm1021, %v2058, 0.0
        %v2389 = vsel %vm1022, %v2353, 0.0
        %v2390 = vsel %vm1023, %v2354, 0.0
        %v2391 = vpack.c.bf16 %v2359, %v2359
        %v2392 = vpack.c.bf16 %v2360, %v2360
        %v2393 = vpack.c.bf16 %v2361, %v2361
        %v2394 = vpack.c.bf16 %v2362, %v2362
        %v2395 = vpack.c.bf16 %v2363, %v2363
        %v2396 = vpack.c.bf16 %v2364, %v2364
        %v2397 = vpack.c.bf16 %v2365, %v2365
        %v2398 = vpack.c.bf16 %v2366, %v2366
        %v2399 = vpack.c.bf16 %v2367, %v2367
        %v2400 = vpack.c.bf16 %v2368, %v2368
        %v2401 = vpack.c.bf16 %v2369, %v2369
        %v2402 = vpack.c.bf16 %v2370, %v2370
        %v2403 = vpack.c.bf16 %v2371, %v2371
        %v2404 = vpack.c.bf16 %v2372, %v2372
        %v2405 = vpack.c.bf16 %v2373, %v2373
        %v2406 = vpack.c.bf16 %v2374, %v2374
        %v2407 = vpack.c.bf16 %v2375, %v2375
        %v2408 = vpack.c.bf16 %v2376, %v2376
        %v2409 = vpack.c.bf16 %v2377, %v2377
        %v2410 = vpack.c.bf16 %v2378, %v2378
        %v2411 = vpack.c.bf16 %v2379, %v2379
        %v2412 = vpack.c.bf16 %v2380, %v2380
        %v2413 = vpack.c.bf16 %v2381, %v2381
        %v2414 = vpack.c.bf16 %v2382, %v2382
        %v2415 = vpack.c.bf16 %v2383, %v2383
        %v2416 = vpack.c.bf16 %v2384, %v2384
        %v2417 = vpack.c.bf16 %v2385, %v2385
        %v2418 = vpack.c.bf16 %v2386, %v2386
        %v2419 = vpack.c.bf16 %v2387, %v2387
        %v2420 = vpack.c.bf16 %v2388, %v2388
        %v2421 = vpack.c.bf16 %v2389, %v2389
        %v2422 = vpack.c.bf16 %v2390, %v2390
        %v2423 = vpack.c.bf16 %v1962, %v1962
        %v2424 = vpack.c.bf16 %v1963, %v1963
        %v2457 = vunpack.c.l.b16 %v2124
        %v2458 = vunpack.c.l.b16 %v2125
        %v2459 = vunpack.c.l.b16 %v2126
        %v2460 = vunpack.c.l.b16 %v2127
        %v2461 = vunpack.c.l.b16 %v2128
        %v2462 = vunpack.c.l.b16 %v2129
        %v2463 = vunpack.c.l.b16 %v2130
        %v2464 = vunpack.c.l.b16 %v2131
        %v2465 = vunpack.c.l.b16 %v2132
        %v2466 = vunpack.c.l.b16 %v2133
        %v2467 = vunpack.c.l.b16 %v2134
        %v2468 = vunpack.c.l.b16 %v2135
        %v2469 = vunpack.c.l.b16 %v2136
        %v2470 = vunpack.c.l.b16 %v2137
        %v2471 = vunpack.c.l.b16 %v2138
        %v2472 = vunpack.c.l.b16 %v2139
        %v2473 = vunpack.c.l.b16 %v2140
        %v2474 = vunpack.c.l.b16 %v2141
        %v2475 = vunpack.c.l.b16 %v2142
        %v2476 = vunpack.c.l.b16 %v2143
        %v2477 = vunpack.c.l.b16 %v2144
        %v2478 = vunpack.c.l.b16 %v2145
        %v2479 = vunpack.c.l.b16 %v2146
        %v2480 = vunpack.c.l.b16 %v2147
        %v2481 = vunpack.c.l.b16 %v2148
        %v2482 = vunpack.c.l.b16 %v2149
        %v2483 = vunpack.c.l.b16 %v2150
        %v2484 = vunpack.c.l.b16 %v2151
        %v2485 = vunpack.c.l.b16 %v2152
        %v2486 = vunpack.c.l.b16 %v2153
        %v2487 = vunpack.c.l.b16 %v2154
        %v2488 = vunpack.c.l.b16 %v2155
        %v2489 = vpack.c.b16 %v2458, %v2457
        %v2490 = vpack.c.b16 %v2460, %v2459
        %v2491 = vpack.c.b16 %v2462, %v2461
        %v2492 = vpack.c.b16 %v2464, %v2463
        %v2493 = vpack.c.b16 %v2466, %v2465
        %v2494 = vpack.c.b16 %v2468, %v2467
        %v2495 = vpack.c.b16 %v2470, %v2469
        %v2496 = vpack.c.b16 %v2472, %v2471
        %v2497 = vpack.c.b16 %v2474, %v2473
        %v2498 = vpack.c.b16 %v2476, %v2475
        %v2499 = vpack.c.b16 %v2478, %v2477
        %v2500 = vpack.c.b16 %v2480, %v2479
        %v2501 = vpack.c.b16 %v2482, %v2481
        %v2502 = vpack.c.b16 %v2484, %v2483
        %v2503 = vpack.c.b16 %v2486, %v2485
        %v2504 = vpack.c.b16 %v2488, %v2487
        %v2536 = vunpack.c.l.b16 %v2156
        %v2537 = vunpack.c.l.b16 %v2157
        %v2538 = vunpack.c.l.b16 %v2158
        %v2539 = vunpack.c.l.b16 %v2159
        %v2540 = vunpack.c.l.b16 %v2160
        %v2541 = vunpack.c.l.b16 %v2161
        %v2542 = vunpack.c.l.b16 %v2162
        %v2543 = vunpack.c.l.b16 %v2163
        %v2544 = vunpack.c.l.b16 %v2164
        %v2545 = vunpack.c.l.b16 %v2165
        %v2546 = vunpack.c.l.b16 %v2166
        %v2547 = vunpack.c.l.b16 %v2167
        %v2548 = vunpack.c.l.b16 %v2168
        %v2549 = vunpack.c.l.b16 %v2169
        %v2550 = vunpack.c.l.b16 %v2170
        %v2551 = vunpack.c.l.b16 %v2171
        %v2552 = vunpack.c.l.b16 %v2172
        %v2553 = vunpack.c.l.b16 %v2173
        %v2554 = vunpack.c.l.b16 %v2174
        %v2555 = vunpack.c.l.b16 %v2175
        %v2556 = vunpack.c.l.b16 %v2176
        %v2557 = vunpack.c.l.b16 %v2177
        %v2558 = vunpack.c.l.b16 %v2178
        %v2559 = vunpack.c.l.b16 %v2179
        %v2560 = vunpack.c.l.b16 %v2180
        %v2561 = vunpack.c.l.b16 %v2181
        %v2562 = vunpack.c.l.b16 %v2182
        %v2563 = vunpack.c.l.b16 %v2183
        %v2564 = vunpack.c.l.b16 %v2184
        %v2565 = vunpack.c.l.b16 %v2185
        %v2566 = vunpack.c.l.b16 %v2186
        %v2567 = vpack.c.b16 %v2536, %v2536
        %v2568 = vpack.c.b16 %v2538, %v2537
        %v2569 = vpack.c.b16 %v2540, %v2539
        %v2570 = vpack.c.b16 %v2542, %v2541
        %v2571 = vpack.c.b16 %v2544, %v2543
        %v2572 = vpack.c.b16 %v2546, %v2545
        %v2573 = vpack.c.b16 %v2548, %v2547
        %v2574 = vpack.c.b16 %v2550, %v2549
        %v2575 = vpack.c.b16 %v2552, %v2551
        %v2576 = vpack.c.b16 %v2554, %v2553
        %v2577 = vpack.c.b16 %v2556, %v2555
        %v2578 = vpack.c.b16 %v2558, %v2557
        %v2579 = vpack.c.b16 %v2560, %v2559
        %v2580 = vpack.c.b16 %v2562, %v2561
        %v2581 = vpack.c.b16 %v2564, %v2563
        %v2582 = vpack.c.b16 %v2566, %v2565
        %2583 = vrot.lane.b32.xlu0 %v2567, 32
        %v2584 = vpop.permute.xlu0 %2583
        %2585 = vrot.lane.b32.xlu0 %v2568, 32
        %v2586 = vpop.permute.xlu0 %2585
        %2587 = vrot.lane.b32.xlu0 %v2569, 32
        %v2588 = vpop.permute.xlu0 %2587
        %2589 = vrot.lane.b32.xlu0 %v2570, 32
        %v2590 = vpop.permute.xlu0 %2589
        %2591 = vrot.lane.b32.xlu0 %v2571, 32
        %v2592 = vpop.permute.xlu0 %2591
        %2593 = vrot.lane.b32.xlu0 %v2572, 32
        %v2594 = vpop.permute.xlu0 %2593
        %2595 = vrot.lane.b32.xlu0 %v2573, 32
        %v2596 = vpop.permute.xlu0 %2595
        %2597 = vrot.lane.b32.xlu0 %v2574, 32
        %v2598 = vpop.permute.xlu0 %2597
        %2599 = vrot.lane.b32.xlu0 %v2575, 32
        %v2600 = vpop.permute.xlu0 %2599
        %2601 = vrot.lane.b32.xlu0 %v2576, 32
        %v2602 = vpop.permute.xlu0 %2601
        %2603 = vrot.lane.b32.xlu0 %v2577, 32
        %v2604 = vpop.permute.xlu0 %2603
        %2605 = vrot.lane.b32.xlu0 %v2578, 32
        %v2606 = vpop.permute.xlu0 %2605
        %2607 = vrot.lane.b32.xlu0 %v2579, 32
        %v2608 = vpop.permute.xlu0 %2607
        %2609 = vrot.lane.b32.xlu0 %v2580, 32
        %v2610 = vpop.permute.xlu0 %2609
        %2611 = vrot.lane.b32.xlu0 %v2581, 32
        %v2612 = vpop.permute.xlu0 %2611
        %2613 = vrot.lane.b32.xlu0 %v2582, 32
        %v2614 = vpop.permute.xlu0 %2613
        %v2647 = vunpack.c.l.b16 %v2316
        %v2648 = vunpack.c.l.b16 %v2317
        %v2649 = vunpack.c.l.b16 %v2318
        %v2650 = vunpack.c.l.b16 %v2319
        %v2651 = vunpack.c.l.b16 %v2320
        %v2652 = vunpack.c.l.b16 %v2321
        %v2653 = vunpack.c.l.b16 %v2322
        %v2654 = vunpack.c.l.b16 %v2323
        %v2655 = vunpack.c.l.b16 %v2324
        %v2656 = vunpack.c.l.b16 %v2325
        %v2657 = vunpack.c.l.b16 %v2326
        %v2658 = vunpack.c.l.b16 %v2327
        %v2659 = vunpack.c.l.b16 %v2328
        %v2660 = vunpack.c.l.b16 %v2329
        %v2661 = vunpack.c.l.b16 %v2330
        %v2662 = vunpack.c.l.b16 %v2331
        %v2663 = vunpack.c.l.b16 %v2332
        %v2664 = vunpack.c.l.b16 %v2333
        %v2665 = vunpack.c.l.b16 %v2334
        %v2666 = vunpack.c.l.b16 %v2335
        %v2667 = vunpack.c.l.b16 %v2336
        %v2668 = vunpack.c.l.b16 %v2337
        %v2669 = vunpack.c.l.b16 %v2338
        %v2670 = vunpack.c.l.b16 %v2339
        %v2671 = vunpack.c.l.b16 %v2340
        %v2672 = vunpack.c.l.b16 %v2341
        %v2673 = vunpack.c.l.b16 %v2342
        %v2674 = vunpack.c.l.b16 %v2343
        %v2675 = vunpack.c.l.b16 %v2344
        %v2676 = vunpack.c.l.b16 %v2345
        %v2677 = vunpack.c.l.b16 %v2346
        %v2678 = vunpack.c.l.b16 %v2347
        %v2679 = vpack.c.b16 %v2648, %v2647
        %v2680 = vpack.c.b16 %v2650, %v2649
        %v2681 = vpack.c.b16 %v2652, %v2651
        %v2682 = vpack.c.b16 %v2654, %v2653
        %v2683 = vpack.c.b16 %v2656, %v2655
        %v2684 = vpack.c.b16 %v2658, %v2657
        %v2685 = vpack.c.b16 %v2660, %v2659
        %v2686 = vpack.c.b16 %v2662, %v2661
        %v2687 = vpack.c.b16 %v2664, %v2663
        %v2688 = vpack.c.b16 %v2666, %v2665
        %v2689 = vpack.c.b16 %v2668, %v2667
        %v2690 = vpack.c.b16 %v2670, %v2669
        %v2691 = vpack.c.b16 %v2672, %v2671
        %v2692 = vpack.c.b16 %v2674, %v2673
        %v2693 = vpack.c.b16 %v2676, %v2675
        %v2694 = vpack.c.b16 %v2678, %v2677
        %2695 = vrot.lane.b32.xlu0 %v2679, 64
        %v2696 = vpop.permute.xlu0 %2695
        %2697 = vrot.lane.b32.xlu0 %v2680, 64
        %v2698 = vpop.permute.xlu0 %2697
        %2699 = vrot.lane.b32.xlu0 %v2681, 64
        %v2700 = vpop.permute.xlu0 %2699
        %2701 = vrot.lane.b32.xlu0 %v2682, 64
        %v2702 = vpop.permute.xlu0 %2701
        %2703 = vrot.lane.b32.xlu0 %v2683, 64
        %v2704 = vpop.permute.xlu0 %2703
        %2705 = vrot.lane.b32.xlu0 %v2684, 64
        %v2706 = vpop.permute.xlu0 %2705
        %2707 = vrot.lane.b32.xlu0 %v2685, 64
        %v2708 = vpop.permute.xlu0 %2707
        %2709 = vrot.lane.b32.xlu0 %v2686, 64
        %v2710 = vpop.permute.xlu0 %2709
        %2711 = vrot.lane.b32.xlu0 %v2687, 64
        %v2712 = vpop.permute.xlu0 %2711
        %2713 = vrot.lane.b32.xlu0 %v2688, 64
        %v2714 = vpop.permute.xlu0 %2713
        %2715 = vrot.lane.b32.xlu0 %v2689, 64
        %v2716 = vpop.permute.xlu0 %2715
        %2717 = vrot.lane.b32.xlu0 %v2690, 64
        %v2718 = vpop.permute.xlu0 %2717
        %2719 = vrot.lane.b32.xlu0 %v2691, 64
        %v2720 = vpop.permute.xlu0 %2719
        %2721 = vrot.lane.b32.xlu0 %v2692, 64
        %v2722 = vpop.permute.xlu0 %2721
        %2723 = vrot.lane.b32.xlu0 %v2693, 64
        %v2724 = vpop.permute.xlu0 %2723
        %2725 = vrot.lane.b32.xlu0 %v2694, 64
        %v2726 = vpop.permute.xlu0 %2725
        %v2759 = vunpack.c.l.b16 %v2391
        %v2760 = vunpack.c.l.b16 %v2392
        %v2761 = vunpack.c.l.b16 %v2393
        %v2762 = vunpack.c.l.b16 %v2394
        %v2763 = vunpack.c.l.b16 %v2395
        %v2764 = vunpack.c.l.b16 %v2396
        %v2765 = vunpack.c.l.b16 %v2397
        %v2766 = vunpack.c.l.b16 %v2398
        %v2767 = vunpack.c.l.b16 %v2399
        %v2768 = vunpack.c.l.b16 %v2400
        %v2769 = vunpack.c.l.b16 %v2401
        %v2770 = vunpack.c.l.b16 %v2402
        %v2771 = vunpack.c.l.b16 %v2403
        %v2772 = vunpack.c.l.b16 %v2404
        %v2773 = vunpack.c.l.b16 %v2405
        %v2774 = vunpack.c.l.b16 %v2406
        %v2775 = vunpack.c.l.b16 %v2407
        %v2776 = vunpack.c.l.b16 %v2408
        %v2777 = vunpack.c.l.b16 %v2409
        %v2778 = vunpack.c.l.b16 %v2410
        %v2779 = vunpack.c.l.b16 %v2411
        %v2780 = vunpack.c.l.b16 %v2412
        %v2781 = vunpack.c.l.b16 %v2413
        %v2782 = vunpack.c.l.b16 %v2414
        %v2783 = vunpack.c.l.b16 %v2415
        %v2784 = vunpack.c.l.b16 %v2416
        %v2785 = vunpack.c.l.b16 %v2417
        %v2786 = vunpack.c.l.b16 %v2418
        %v2787 = vunpack.c.l.b16 %v2419
        %v2788 = vunpack.c.l.b16 %v2420
        %v2789 = vunpack.c.l.b16 %v2421
        %v2790 = vunpack.c.l.b16 %v2422
        %v2791 = vpack.c.b16 %v2760, %v2759
        %v2792 = vpack.c.b16 %v2762, %v2761
        %v2793 = vpack.c.b16 %v2764, %v2763
        %v2794 = vpack.c.b16 %v2766, %v2765
        %v2795 = vpack.c.b16 %v2768, %v2767
        %v2796 = vpack.c.b16 %v2770, %v2769
        %v2797 = vpack.c.b16 %v2772, %v2771
        %v2798 = vpack.c.b16 %v2774, %v2773
        %v2799 = vpack.c.b16 %v2776, %v2775
        %v2800 = vpack.c.b16 %v2778, %v2777
        %v2801 = vpack.c.b16 %v2780, %v2779
        %v2802 = vpack.c.b16 %v2782, %v2781
        %v2803 = vpack.c.b16 %v2784, %v2783
        %v2804 = vpack.c.b16 %v2786, %v2785
        %v2805 = vpack.c.b16 %v2788, %v2787
        %v2806 = vpack.c.b16 %v2790, %v2789
        %2807 = vrot.lane.b32.xlu0 %v2791, 96
        %v2808 = vpop.permute.xlu0 %2807
        %2809 = vrot.lane.b32.xlu0 %v2792, 96
        %v2810 = vpop.permute.xlu0 %2809
        %2811 = vrot.lane.b32.xlu0 %v2793, 96
        %v2812 = vpop.permute.xlu0 %2811
        %2813 = vrot.lane.b32.xlu0 %v2794, 96
        %v2814 = vpop.permute.xlu0 %2813
        %2815 = vrot.lane.b32.xlu0 %v2795, 96
        %v2816 = vpop.permute.xlu0 %2815
        %2817 = vrot.lane.b32.xlu0 %v2796, 96
        %v2818 = vpop.permute.xlu0 %2817
        %2819 = vrot.lane.b32.xlu0 %v2797, 96
        %v2820 = vpop.permute.xlu0 %2819
        %2821 = vrot.lane.b32.xlu0 %v2798, 96
        %v2822 = vpop.permute.xlu0 %2821
        %2823 = vrot.lane.b32.xlu0 %v2799, 96
        %v2824 = vpop.permute.xlu0 %2823
        %2825 = vrot.lane.b32.xlu0 %v2800, 96
        %v2826 = vpop.permute.xlu0 %2825
        %2827 = vrot.lane.b32.xlu0 %v2801, 96
        %v2828 = vpop.permute.xlu0 %2827
        %2829 = vrot.lane.b32.xlu0 %v2802, 96
        %v2830 = vpop.permute.xlu0 %2829
        %2831 = vrot.lane.b32.xlu0 %v2803, 96
        %v2832 = vpop.permute.xlu0 %2831
        %2833 = vrot.lane.b32.xlu0 %v2804, 96
        %v2834 = vpop.permute.xlu0 %2833
        %2835 = vrot.lane.b32.xlu0 %v2805, 96
        %v2836 = vpop.permute.xlu0 %2835
        %2837 = vrot.lane.b32.xlu0 %v2806, 96
        %v2838 = vpop.permute.xlu0 %2837
        %v2841 = vunpack.c.l.b16 %v2423
        %v2842 = vunpack.c.l.b16 %v2424
        %v2843 = vpack.c.b16 %v2842, %v2841
        %vm2860 = vcmask 261120
        %v2863 = vsel %vm2860, %v2489, %v2584
        %v2866 = vsel %vm2860, %v2490, %v2586
        %v2869 = vsel %vm2860, %v2491, %v2588
        %v2872 = vsel %vm2860, %v2492, %v2590
        %v2875 = vsel %vm2860, %v2493, %v2592
        %v2878 = vsel %vm2860, %v2494, %v2594
        %v2881 = vsel %vm2860, %v2495, %v2596
        %v2884 = vsel %vm2860, %v2496, %v2598
        %v2887 = vsel %vm2860, %v2497, %v2600
        %v2890 = vsel %vm2860, %v2498, %v2602
        %v2893 = vsel %vm2860, %v2499, %v2604
        %v2896 = vsel %vm2860, %v2500, %v2606
        %v2899 = vsel %vm2860, %v2501, %v2608
        %v2902 = vsel %vm2860, %v2502, %v2610
        %v2905 = vsel %vm2860, %v2503, %v2612
        %v2908 = vsel %vm2860, %v2504, %v2614
        %vm2909 = vcmask 523264
        %v2911 = vsel %vm2909, %v2863, %v2696
        %v2913 = vsel %vm2909, %v2866, %v2698
        %v2915 = vsel %vm2909, %v2869, %v2700
        %v2917 = vsel %vm2909, %v2872, %v2702
        %v2919 = vsel %vm2909, %v2875, %v2704
        %v2921 = vsel %vm2909, %v2878, %v2706
        %v2923 = vsel %vm2909, %v2881, %v2708
        %v2925 = vsel %vm2909, %v2884, %v2710
        %v2927 = vsel %vm2909, %v2887, %v2712
        %v2929 = vsel %vm2909, %v2890, %v2714
        %v2931 = vsel %vm2909, %v2893, %v2716
        %v2933 = vsel %vm2909, %v2896, %v2718
        %v2935 = vsel %vm2909, %v2899, %v2720
        %v2937 = vsel %vm2909, %v2902, %v2722
        %v2939 = vsel %vm2909, %v2905, %v2724
        %v2941 = vsel %vm2909, %v2908, %v2726
        %vm2942 = vcmask 785408
        %v2944 = vsel %vm2942, %v2911, %v2808
        %v2947 = vsel %vm2942, %v2913, %v2810
        %v2950 = vsel %vm2942, %v2915, %v2812
        %v2953 = vsel %vm2942, %v2917, %v2814
        %v2956 = vsel %vm2942, %v2919, %v2816
        %v2959 = vsel %vm2942, %v2921, %v2818
        %v2962 = vsel %vm2942, %v2923, %v2820
        %v2965 = vsel %vm2942, %v2925, %v2822
        %v2968 = vsel %vm2942, %v2927, %v2824
        %v2971 = vsel %vm2942, %v2929, %v2826
        %v2974 = vsel %vm2942, %v2931, %v2828
        %v2977 = vsel %vm2942, %v2933, %v2830
        %v2980 = vsel %vm2942, %v2935, %v2832
        %v2983 = vsel %vm2942, %v2937, %v2834
        %v2986 = vsel %vm2942, %v2939, %v2836
        %v2989 = vsel %vm2942, %v2941, %v2838
        %v2991 = vld [vmem:[%s7] sm:$0xf]
        %v2992 = vld [vmem:[%s7 + $0x4] sm:$0xf]
        %v2993 = vld [vmem:[%s7 + $0x8] sm:$0xf]
        %v2994 = vld [vmem:[%s7 + $0xc] sm:$0xf]
        %v2995 = vld [vmem:[%s7 + $0x10] sm:$0xf]
        %v2996 = vld [vmem:[%s7 + $0x14] sm:$0xf]
        %v2997 = vld [vmem:[%s7 + $0x18] sm:$0xf]
        %v2998 = vld [vmem:[%s7 + $0x1c] sm:$0xf]
        %v2999 = vld [vmem:[%s7 + $0x20] sm:$0xf]
        %v3000 = vld [vmem:[%s7 + $0x24] sm:$0xf]
        %v3001 = vld [vmem:[%s7 + $0x28] sm:$0xf]
        %v3002 = vld [vmem:[%s7 + $0x2c] sm:$0xf]
        %v3003 = vld [vmem:[%s7 + $0x30] sm:$0xf]
        %v3004 = vld [vmem:[%s7 + $0x34] sm:$0xf]
        %v3005 = vld [vmem:[%s7 + $0x38] sm:$0xf]
        %v3006 = vld [vmem:[%s7 + $0x3c] sm:$0xf]
        %v3007 = vld [vmem:[%s7 + $0x40] sm:$0xf]
        %v3008 = vld [vmem:[%s7 + $0x44] sm:$0xf]
        %v3009 = vld [vmem:[%s7 + $0x48] sm:$0xf]
        %v3010 = vld [vmem:[%s7 + $0x4c] sm:$0xf]
        %v3011 = vld [vmem:[%s7 + $0x50] sm:$0xf]
        %v3012 = vld [vmem:[%s7 + $0x54] sm:$0xf]
        %v3013 = vld [vmem:[%s7 + $0x58] sm:$0xf]
        %v3014 = vld [vmem:[%s7 + $0x5c] sm:$0xf]
        %v3015 = vld [vmem:[%s7 + $0x60] sm:$0xf]
        %v3016 = vld [vmem:[%s7 + $0x64] sm:$0xf]
        %v3017 = vld [vmem:[%s7 + $0x68] sm:$0xf]
        %v3018 = vld [vmem:[%s7 + $0x6c] sm:$0xf]
        %v3019 = vld [vmem:[%s7 + $0x70] sm:$0xf]
        %v3020 = vld [vmem:[%s7 + $0x74] sm:$0xf]
        %v3021 = vld [vmem:[%s7 + $0x78] sm:$0xf]
        %v3022 = vld [vmem:[%s7 + $0x7c] sm:$0xf]
        %v3055 = vunpack.c.l.b16 %v2991
        %v3056 = vunpack.c.l.b16 %v2992
        %v3057 = vunpack.c.l.b16 %v2993
        %v3058 = vunpack.c.l.b16 %v2994
        %v3059 = vunpack.c.l.b16 %v2995
        %v3060 = vunpack.c.l.b16 %v2996
        %v3061 = vunpack.c.l.b16 %v2997
        %v3062 = vunpack.c.l.b16 %v2998
        %v3063 = vunpack.c.l.b16 %v2999
        %v3064 = vunpack.c.l.b16 %v3000
        %v3065 = vunpack.c.l.b16 %v3001
        %v3066 = vunpack.c.l.b16 %v3002
        %v3067 = vunpack.c.l.b16 %v3003
        %v3068 = vunpack.c.l.b16 %v3004
        %v3069 = vunpack.c.l.b16 %v3005
        %v3070 = vunpack.c.l.b16 %v3006
        %v3071 = vunpack.c.l.b16 %v3007
        %v3072 = vunpack.c.l.b16 %v3008
        %v3073 = vunpack.c.l.b16 %v3009
        %v3074 = vunpack.c.l.b16 %v3010
        %v3075 = vunpack.c.l.b16 %v3011
        %v3076 = vunpack.c.l.b16 %v3012
        %v3077 = vunpack.c.l.b16 %v3013
        %v3078 = vunpack.c.l.b16 %v3014
        %v3079 = vunpack.c.l.b16 %v3015
        %v3080 = vunpack.c.l.b16 %v3016
        %v3081 = vunpack.c.l.b16 %v3017
        %v3082 = vunpack.c.l.b16 %v3018
        %v3083 = vunpack.c.l.b16 %v3019
        %v3084 = vunpack.c.l.b16 %v3020
        %v3085 = vunpack.c.l.b16 %v3021
        %v3086 = vunpack.c.l.b16 %v3022
        %v3087 = vpack.c.b16 %v3056, %v3055
        %v3088 = vpack.c.b16 %v3058, %v3057
        %v3089 = vpack.c.b16 %v3060, %v3059
        %v3090 = vpack.c.b16 %v3062, %v3061
        %v3091 = vpack.c.b16 %v3064, %v3063
        %v3092 = vpack.c.b16 %v3066, %v3065
        %v3093 = vpack.c.b16 %v3068, %v3067
        %v3094 = vpack.c.b16 %v3070, %v3069
        %v3095 = vpack.c.b16 %v3072, %v3071
        %v3096 = vpack.c.b16 %v3074, %v3073
        %v3097 = vpack.c.b16 %v3076, %v3075
        %v3098 = vpack.c.b16 %v3078, %v3077
        %v3099 = vpack.c.b16 %v3080, %v3079
        %v3100 = vpack.c.b16 %v3082, %v3081
        %v3101 = vpack.c.b16 %v3084, %v3083
        %v3102 = vpack.c.b16 %v3086, %v3085
        %3119 = vmatpush.bf16.msra.mxu0 %v3094
        %3120 = vmatpush.bf16.msra.mxu0 %v3093
        %3121 = vmatpush.bf16.msra.mxu0 %v3092
        %3122 = vmatpush.bf16.msra.mxu0 %v3091
        %3123 = vmatpush.bf16.msra.mxu0 %v3090
        %3124 = vmatpush.bf16.msra.mxu0 %v3089
        %3125 = vmatpush.bf16.msra.mxu0 %v3088
        %3126 = vmatpush.bf16.msra.mxu0 %v3087
        %3127 = vmatmul.bf16.gmra.mxu0 %v2944
        %v3128 = vpop.f32.mrf.mxu0
        %v3129 = vadd.f32 0.0, %v3128
        %v3130 = vpop.f32.mrf.mxu0
        %v3131 = vadd.f32 0.0, %v3130
        %3132 = vmatmul.bf16.gmra.mxu0 %v2947
        %v3133 = vpop.f32.mrf.mxu0
        %v3134 = vadd.f32 0.0, %v3133
        %v3135 = vpop.f32.mrf.mxu0
        %v3136 = vadd.f32 0.0, %v3135
        %3137 = vmatmul.bf16.gmra.mxu0 %v2950
        %v3138 = vpop.f32.mrf.mxu0
        %v3139 = vadd.f32 0.0, %v3138
        %v3140 = vpop.f32.mrf.mxu0
        %v3141 = vadd.f32 0.0, %v3140
        %3142 = vmatmul.bf16.gmra.mxu0 %v2953
        %v3143 = vpop.f32.mrf.mxu0
        %v3144 = vadd.f32 0.0, %v3143
        %v3145 = vpop.f32.mrf.mxu0
        %v3146 = vadd.f32 0.0, %v3145
        %3147 = vmatmul.bf16.gmra.mxu0 %v2956
        %v3148 = vpop.f32.mrf.mxu0
        %v3149 = vadd.f32 0.0, %v3148
        %v3150 = vpop.f32.mrf.mxu0
        %v3151 = vadd.f32 0.0, %v3150
        %3152 = vmatmul.bf16.gmra.mxu0 %v2959
        %v3153 = vpop.f32.mrf.mxu0
        %v3154 = vadd.f32 0.0, %v3153
        %v3155 = vpop.f32.mrf.mxu0
        %v3156 = vadd.f32 0.0, %v3155
        %3157 = vmatmul.bf16.gmra.mxu0 %v2962
        %v3158 = vpop.f32.mrf.mxu0
        %v3159 = vadd.f32 0.0, %v3158
        %v3160 = vpop.f32.mrf.mxu0
        %v3161 = vadd.f32 0.0, %v3160
        %3162 = vmatmul.bf16.gmra.mxu0 %v2965
        %v3163 = vpop.f32.mrf.mxu0
        %v3164 = vadd.f32 0.0, %v3163
        %v3165 = vpop.f32.mrf.mxu0
        %v3166 = vadd.f32 0.0, %v3165
        %3167 = vmatmul.bf16.gmra.mxu0 %v2968
        %v3168 = vpop.f32.mrf.mxu0
        %v3169 = vadd.f32 0.0, %v3168
        %v3170 = vpop.f32.mrf.mxu0
        %v3171 = vadd.f32 0.0, %v3170
        %3172 = vmatmul.bf16.gmra.mxu0 %v2971
        %v3173 = vpop.f32.mrf.mxu0
        %v3174 = vadd.f32 0.0, %v3173
        %v3175 = vpop.f32.mrf.mxu0
        %v3176 = vadd.f32 0.0, %v3175
        %3177 = vmatmul.bf16.gmra.mxu0 %v2974
        %v3178 = vpop.f32.mrf.mxu0
        %v3179 = vadd.f32 0.0, %v3178
        %v3180 = vpop.f32.mrf.mxu0
        %v3181 = vadd.f32 0.0, %v3180
        %3182 = vmatmul.bf16.gmra.mxu0 %v2977
        %v3183 = vpop.f32.mrf.mxu0
        %v3184 = vadd.f32 0.0, %v3183
        %v3185 = vpop.f32.mrf.mxu0
        %v3186 = vadd.f32 0.0, %v3185
        %3187 = vmatmul.bf16.gmra.mxu0 %v2980
        %v3188 = vpop.f32.mrf.mxu0
        %v3189 = vadd.f32 0.0, %v3188
        %v3190 = vpop.f32.mrf.mxu0
        %v3191 = vadd.f32 0.0, %v3190
        %3192 = vmatmul.bf16.gmra.mxu0 %v2983
        %v3193 = vpop.f32.mrf.mxu0
        %v3194 = vadd.f32 0.0, %v3193
        %v3195 = vpop.f32.mrf.mxu0
        %v3196 = vadd.f32 0.0, %v3195
        %3197 = vmatmul.bf16.gmra.mxu0 %v2986
        %v3198 = vpop.f32.mrf.mxu0
        %v3199 = vadd.f32 0.0, %v3198
        %v3200 = vpop.f32.mrf.mxu0
        %v3201 = vadd.f32 0.0, %v3200
        %3202 = vmatmul.bf16.gmra.mxu0 %v2989
        %v3203 = vpop.f32.mrf.mxu0
        %v3204 = vadd.f32 0.0, %v3203
        %v3205 = vpop.f32.mrf.mxu0
        %v3206 = vadd.f32 0.0, %v3205
        %3207 = vdwg.mxu0
        %3208 = vmatpush.bf16.msra.mxu0 %v3102
        %3209 = vmatpush.bf16.msra.mxu0 %v3101
        %3210 = vmatpush.bf16.msra.mxu0 %v3100
        %3211 = vmatpush.bf16.msra.mxu0 %v3099
        %3212 = vmatpush.bf16.msra.mxu0 %v3098
        %3213 = vmatpush.bf16.msra.mxu0 %v3097
        %3214 = vmatpush.bf16.msra.mxu0 %v3096
        %3215 = vmatpush.bf16.msra.mxu0 %v3095
        %3216 = vmatmul.bf16.gmra.mxu0 %v2568
        %v3217 = vpop.f32.mrf.mxu0
        %v3218 = vadd.f32 %v3129, %v3217
        %v3219 = vpop.f32.mrf.mxu0
        %v3220 = vadd.f32 %v3131, %v3219
        %3221 = vmatmul.bf16.gmra.mxu0 %v2569
        %v3222 = vpop.f32.mrf.mxu0
        %v3223 = vadd.f32 %v3134, %v3222
        %v3224 = vpop.f32.mrf.mxu0
        %v3225 = vadd.f32 %v3136, %v3224
        %3226 = vmatmul.bf16.gmra.mxu0 %v2570
        %v3227 = vpop.f32.mrf.mxu0
        %v3228 = vadd.f32 %v3139, %v3227
        %v3229 = vpop.f32.mrf.mxu0
        %v3230 = vadd.f32 %v3141, %v3229
        %3231 = vmatmul.bf16.gmra.mxu0 %v2571
        %v3232 = vpop.f32.mrf.mxu0
        %v3233 = vadd.f32 %v3144, %v3232
        %v3234 = vpop.f32.mrf.mxu0
        %v3235 = vadd.f32 %v3146, %v3234
        %3236 = vmatmul.bf16.gmra.mxu0 %v2572
        %v3237 = vpop.f32.mrf.mxu0
        %v3238 = vadd.f32 %v3149, %v3237
        %v3239 = vpop.f32.mrf.mxu0
        %v3240 = vadd.f32 %v3151, %v3239
        %3241 = vmatmul.bf16.gmra.mxu0 %v2573
        %v3242 = vpop.f32.mrf.mxu0
        %v3243 = vadd.f32 %v3154, %v3242
        %v3244 = vpop.f32.mrf.mxu0
        %v3245 = vadd.f32 %v3156, %v3244
        %3246 = vmatmul.bf16.gmra.mxu0 %v2574
        %v3247 = vpop.f32.mrf.mxu0
        %v3248 = vadd.f32 %v3159, %v3247
        %v3249 = vpop.f32.mrf.mxu0
        %v3250 = vadd.f32 %v3161, %v3249
        %3251 = vmatmul.bf16.gmra.mxu0 %v2575
        %v3252 = vpop.f32.mrf.mxu0
        %v3253 = vadd.f32 %v3164, %v3252
        %v3254 = vpop.f32.mrf.mxu0
        %v3255 = vadd.f32 %v3166, %v3254
        %3256 = vmatmul.bf16.gmra.mxu0 %v2576
        %v3257 = vpop.f32.mrf.mxu0
        %v3258 = vadd.f32 %v3169, %v3257
        %v3259 = vpop.f32.mrf.mxu0
        %v3260 = vadd.f32 %v3171, %v3259
        %3261 = vmatmul.bf16.gmra.mxu0 %v2577
        %v3262 = vpop.f32.mrf.mxu0
        %v3263 = vadd.f32 %v3174, %v3262
        %v3264 = vpop.f32.mrf.mxu0
        %v3265 = vadd.f32 %v3176, %v3264
        %3266 = vmatmul.bf16.gmra.mxu0 %v2578
        %v3267 = vpop.f32.mrf.mxu0
        %v3268 = vadd.f32 %v3179, %v3267
        %v3269 = vpop.f32.mrf.mxu0
        %v3270 = vadd.f32 %v3181, %v3269
        %3271 = vmatmul.bf16.gmra.mxu0 %v2579
        %v3272 = vpop.f32.mrf.mxu0
        %v3273 = vadd.f32 %v3184, %v3272
        %v3274 = vpop.f32.mrf.mxu0
        %v3275 = vadd.f32 %v3186, %v3274
        %3276 = vmatmul.bf16.gmra.mxu0 %v2580
        %v3277 = vpop.f32.mrf.mxu0
        %v3278 = vadd.f32 %v3189, %v3277
        %v3279 = vpop.f32.mrf.mxu0
        %v3280 = vadd.f32 %v3191, %v3279
        %3281 = vmatmul.bf16.gmra.mxu0 %v2581
        %v3282 = vpop.f32.mrf.mxu0
        %v3283 = vadd.f32 %v3194, %v3282
        %v3284 = vpop.f32.mrf.mxu0
        %v3285 = vadd.f32 %v3196, %v3284
        %3286 = vmatmul.bf16.gmra.mxu0 %v2582
        %v3287 = vpop.f32.mrf.mxu0
        %v3288 = vadd.f32 %v3199, %v3287
        %v3289 = vpop.f32.mrf.mxu0
        %v3290 = vadd.f32 %v3201, %v3289
        %3291 = vmatmul.bf16.gmra.mxu0 %v2843
        %v3292 = vpop.f32.mrf.mxu0
        %v3293 = vadd.f32 %v3204, %v3292
        %v3294 = vpop.f32.mrf.mxu0
        %v3295 = vadd.f32 %v3206, %v3294
        %3296 = vdwg.mxu0
        %v3297 = vld [vmem:[%s8] sm:$0x1]
        %v3299 = vperm.slane %v3297, 0
        %v3301 = vmul.f32 %v3218, %v3299
        %v3302 = vmul.f32 %v3220, %v3299
        %v3303 = vmul.f32 %v3223, %v3299
        %v3304 = vmul.f32 %v3225, %v3299
        %v3305 = vmul.f32 %v3228, %v3299
        %v3306 = vmul.f32 %v3230, %v3299
        %v3307 = vmul.f32 %v3233, %v3299
        %v3308 = vmul.f32 %v3235, %v3299
        %v3309 = vmul.f32 %v3238, %v3299
        %v3310 = vmul.f32 %v3240, %v3299
        %v3311 = vmul.f32 %v3243, %v3299
        %v3312 = vmul.f32 %v3245, %v3299
        %v3313 = vmul.f32 %v3248, %v3299
        %v3314 = vmul.f32 %v3250, %v3299
        %v3315 = vmul.f32 %v3253, %v3299
        %v3316 = vmul.f32 %v3255, %v3299
        %v3317 = vmul.f32 %v3258, %v3299
        %v3318 = vmul.f32 %v3260, %v3299
        %v3319 = vmul.f32 %v3263, %v3299
        %v3320 = vmul.f32 %v3265, %v3299
        %v3321 = vmul.f32 %v3268, %v3299
        %v3322 = vmul.f32 %v3270, %v3299
        %v3323 = vmul.f32 %v3273, %v3299
        %v3324 = vmul.f32 %v3275, %v3299
        %v3325 = vmul.f32 %v3278, %v3299
        %v3326 = vmul.f32 %v3280, %v3299
        %v3327 = vmul.f32 %v3283, %v3299
        %v3328 = vmul.f32 %v3285, %v3299
        %v3329 = vmul.f32 %v3288, %v3299
        %v3330 = vmul.f32 %v3290, %v3299
        %v3331 = vmul.f32 %v3293, %v3299
        %v3332 = vmul.f32 %v3295, %v3299
        %v3333 = vld [vmem:[%s9] sm:$0x1]
        %v3335 = vperm.slane %v3333, 0
        %v3337 = vadd.f32 %v3301, %v3335
        %v3338 = vadd.f32 %v3302, %v3335
        %v3339 = vadd.f32 %v3303, %v3335
        %v3340 = vadd.f32 %v3304, %v3335
        %v3341 = vadd.f32 %v3305, %v3335
        %v3342 = vadd.f32 %v3306, %v3335
        %v3343 = vadd.f32 %v3307, %v3335
        %v3344 = vadd.f32 %v3308, %v3335
        %v3345 = vadd.f32 %v3309, %v3335
        %v3346 = vadd.f32 %v3310, %v3335
        %v3347 = vadd.f32 %v3311, %v3335
        %v3348 = vadd.f32 %v3312, %v3335
        %v3349 = vadd.f32 %v3313, %v3335
        %v3350 = vadd.f32 %v3314, %v3335
        %v3351 = vadd.f32 %v3315, %v3335
        %v3352 = vadd.f32 %v3316, %v3335
        %v3353 = vadd.f32 %v3317, %v3335
        %v3354 = vadd.f32 %v3318, %v3335
        %v3355 = vadd.f32 %v3319, %v3335
        %v3356 = vadd.f32 %v3320, %v3335
        %v3357 = vadd.f32 %v3321, %v3335
        %v3358 = vadd.f32 %v3322, %v3335
        %v3359 = vadd.f32 %v3323, %v3335
        %v3360 = vadd.f32 %v3324, %v3335
        %v3361 = vadd.f32 %v3325, %v3335
        %v3362 = vadd.f32 %v3326, %v3335
        %v3363 = vadd.f32 %v3327, %v3335
        %v3364 = vadd.f32 %v3328, %v3335
        %v3365 = vadd.f32 %v3329, %v3335
        %v3366 = vadd.f32 %v3330, %v3335
        %v3367 = vadd.f32 %v3331, %v3335
        %v3368 = vadd.f32 %v3332, %v3335
        %v3369 = vmax.f32 %v3337, 0.0
        %v3370 = vmax.f32 %v3338, 0.0
        %v3371 = vmax.f32 %v3339, 0.0
        %v3372 = vmax.f32 %v3340, 0.0
        %v3373 = vmax.f32 %v3341, 0.0
        %v3374 = vmax.f32 %v3342, 0.0
        %v3375 = vmax.f32 %v3343, 0.0
        %v3376 = vmax.f32 %v3344, 0.0
        %v3377 = vmax.f32 %v3345, 0.0
        %v3378 = vmax.f32 %v3346, 0.0
        %v3379 = vmax.f32 %v3347, 0.0
        %v3380 = vmax.f32 %v3348, 0.0
        %v3381 = vmax.f32 %v3349, 0.0
        %v3382 = vmax.f32 %v3350, 0.0
        %v3383 = vmax.f32 %v3351, 0.0
        %v3384 = vmax.f32 %v3352, 0.0
        %v3385 = vmax.f32 %v3353, 0.0
        %v3386 = vmax.f32 %v3354, 0.0
        %v3387 = vmax.f32 %v3355, 0.0
        %v3388 = vmax.f32 %v3356, 0.0
        %v3389 = vmax.f32 %v3357, 0.0
        %v3390 = vmax.f32 %v3358, 0.0
        %v3391 = vmax.f32 %v3359, 0.0
        %v3392 = vmax.f32 %v3360, 0.0
        %v3393 = vmax.f32 %v3361, 0.0
        %v3394 = vmax.f32 %v3362, 0.0
        %v3395 = vmax.f32 %v3363, 0.0
        %v3396 = vmax.f32 %v3364, 0.0
        %v3397 = vmax.f32 %v3365, 0.0
        %v3398 = vmax.f32 %v3366, 0.0
        %v3399 = vmax.f32 %v3367, 0.0
        %v3400 = vmax.f32 %v3368, 0.0
        %v3401 = vpack.c.bf16 %v3370, %v3369
        %v3402 = vpack.c.bf16 %v3372, %v3371
        %v3403 = vpack.c.bf16 %v3374, %v3373
        %v3404 = vpack.c.bf16 %v3376, %v3375
        %v3405 = vpack.c.bf16 %v3378, %v3377
        %v3406 = vpack.c.bf16 %v3380, %v3379
        %v3407 = vpack.c.bf16 %v3382, %v3381
        %v3408 = vpack.c.bf16 %v3384, %v3383
        %v3409 = vpack.c.bf16 %v3386, %v3385
        %v3410 = vpack.c.bf16 %v3388, %v3387
        %v3411 = vpack.c.bf16 %v3390, %v3389
        %v3412 = vpack.c.bf16 %v3392, %v3391
        %v3413 = vpack.c.bf16 %v3394, %v3393
        %v3414 = vpack.c.bf16 %v3396, %v3395
        %v3415 = vpack.c.bf16 %v3398, %v3397
        %v3416 = vpack.c.bf16 %v3400, %v3399
        %v3417 = vld [vmem:[%s10] sm:$0xf]
        %v3418 = vld [vmem:[%s10 + $0x4] sm:$0xf]
        %v3419 = vld [vmem:[%s10 + $0x8] sm:$0xf]
        %v3420 = vld [vmem:[%s10 + $0xc] sm:$0xf]
        %v3421 = vld [vmem:[%s10 + $0x10] sm:$0xf]
        %v3422 = vld [vmem:[%s10 + $0x14] sm:$0xf]
        %v3423 = vld [vmem:[%s10 + $0x18] sm:$0xf]
        %v3424 = vld [vmem:[%s10 + $0x1c] sm:$0xf]
        %v3425 = vld [vmem:[%s10 + $0x20] sm:$0xf]
        %v3426 = vld [vmem:[%s10 + $0x24] sm:$0xf]
        %v3427 = vld [vmem:[%s10 + $0x28] sm:$0xf]
        %v3428 = vld [vmem:[%s10 + $0x2c] sm:$0xf]
        %v3429 = vld [vmem:[%s10 + $0x30] sm:$0xf]
        %v3430 = vld [vmem:[%s10 + $0x34] sm:$0xf]
        %v3431 = vld [vmem:[%s10 + $0x38] sm:$0xf]
        %v3432 = vld [vmem:[%s10 + $0x3c] sm:$0xf]
        %v3449 = vunpack.c.l.b16 %v3417
        %v3450 = vunpack.c.l.b16 %v3418
        %v3451 = vunpack.c.l.b16 %v3419
        %v3452 = vunpack.c.l.b16 %v3420
        %v3453 = vunpack.c.l.b16 %v3421
        %v3454 = vunpack.c.l.b16 %v3422
        %v3455 = vunpack.c.l.b16 %v3423
        %v3456 = vunpack.c.l.b16 %v3424
        %v3457 = vunpack.c.l.b16 %v3425
        %v3458 = vunpack.c.l.b16 %v3426
        %v3459 = vunpack.c.l.b16 %v3427
        %v3460 = vunpack.c.l.b16 %v3428
        %v3461 = vunpack.c.l.b16 %v3429
        %v3462 = vunpack.c.l.b16 %v3430
        %v3463 = vunpack.c.l.b16 %v3431
        %v3464 = vunpack.c.l.b16 %v3432
        %v3465 = vpack.c.b16 %v3450, %v3449
        %v3466 = vpack.c.b16 %v3452, %v3451
        %v3467 = vpack.c.b16 %v3454, %v3453
        %v3468 = vpack.c.b16 %v3456, %v3455
        %v3469 = vpack.c.b16 %v3458, %v3457
        %v3470 = vpack.c.b16 %v3460, %v3459
        %v3471 = vpack.c.b16 %v3462, %v3461
        %v3472 = vpack.c.b16 %v3464, %v3463
        %3481 = vmatpush.bf16.msra.mxu0 %v3472
        %3482 = vmatpush.bf16.msra.mxu0 %v3471
        %3483 = vmatpush.bf16.msra.mxu0 %v3470
        %3484 = vmatpush.bf16.msra.mxu0 %v3469
        %3485 = vmatpush.bf16.msra.mxu0 %v3468
        %3486 = vmatpush.bf16.msra.mxu0 %v3467
        %3487 = vmatpush.bf16.msra.mxu0 %v3466
        %3488 = vmatpush.bf16.msra.mxu0 %v3465
        %3489 = vmatmul.bf16.gmra.mxu0 %v3401
        %v3490 = vpop.f32.mrf.mxu0
        %v3491 = vadd.f32 0.0, %v3490
        %v3492 = vpop.f32.mrf.mxu0
        %v3493 = vadd.f32 0.0, %v3492
        %3494 = vmatmul.bf16.gmra.mxu0 %v3402
        %v3495 = vpop.f32.mrf.mxu0
        %v3496 = vadd.f32 0.0, %v3495
        %v3497 = vpop.f32.mrf.mxu0
        %v3498 = vadd.f32 0.0, %v3497
        %3499 = vmatmul.bf16.gmra.mxu0 %v3403
        %v3500 = vpop.f32.mrf.mxu0
        %v3501 = vadd.f32 0.0, %v3500
        %v3502 = vpop.f32.mrf.mxu0
        %v3503 = vadd.f32 0.0, %v3502
        %3504 = vmatmul.bf16.gmra.mxu0 %v3404
        %v3505 = vpop.f32.mrf.mxu0
        %v3506 = vadd.f32 0.0, %v3505
        %v3507 = vpop.f32.mrf.mxu0
        %v3508 = vadd.f32 0.0, %v3507
        %3509 = vmatmul.bf16.gmra.mxu0 %v3405
        %v3510 = vpop.f32.mrf.mxu0
        %v3511 = vadd.f32 0.0, %v3510
        %v3512 = vpop.f32.mrf.mxu0
        %v3513 = vadd.f32 0.0, %v3512
        %3514 = vmatmul.bf16.gmra.mxu0 %v3406
        %v3515 = vpop.f32.mrf.mxu0
        %v3516 = vadd.f32 0.0, %v3515
        %v3517 = vpop.f32.mrf.mxu0
        %v3518 = vadd.f32 0.0, %v3517
        %3519 = vmatmul.bf16.gmra.mxu0 %v3407
        %v3520 = vpop.f32.mrf.mxu0
        %v3521 = vadd.f32 0.0, %v3520
        %v3522 = vpop.f32.mrf.mxu0
        %v3523 = vadd.f32 0.0, %v3522
        %3524 = vmatmul.bf16.gmra.mxu0 %v3408
        %v3525 = vpop.f32.mrf.mxu0
        %v3526 = vadd.f32 0.0, %v3525
        %v3527 = vpop.f32.mrf.mxu0
        %v3528 = vadd.f32 0.0, %v3527
        %3529 = vmatmul.bf16.gmra.mxu0 %v3409
        %v3530 = vpop.f32.mrf.mxu0
        %v3531 = vadd.f32 0.0, %v3530
        %v3532 = vpop.f32.mrf.mxu0
        %v3533 = vadd.f32 0.0, %v3532
        %3534 = vmatmul.bf16.gmra.mxu0 %v3410
        %v3535 = vpop.f32.mrf.mxu0
        %v3536 = vadd.f32 0.0, %v3535
        %v3537 = vpop.f32.mrf.mxu0
        %v3538 = vadd.f32 0.0, %v3537
        %3539 = vmatmul.bf16.gmra.mxu0 %v3411
        %v3540 = vpop.f32.mrf.mxu0
        %v3541 = vadd.f32 0.0, %v3540
        %v3542 = vpop.f32.mrf.mxu0
        %v3543 = vadd.f32 0.0, %v3542
        %3544 = vmatmul.bf16.gmra.mxu0 %v3412
        %v3545 = vpop.f32.mrf.mxu0
        %v3546 = vadd.f32 0.0, %v3545
        %v3547 = vpop.f32.mrf.mxu0
        %v3548 = vadd.f32 0.0, %v3547
        %3549 = vmatmul.bf16.gmra.mxu0 %v3413
        %v3550 = vpop.f32.mrf.mxu0
        %v3551 = vadd.f32 0.0, %v3550
        %v3552 = vpop.f32.mrf.mxu0
        %v3553 = vadd.f32 0.0, %v3552
        %3554 = vmatmul.bf16.gmra.mxu0 %v3414
        %v3555 = vpop.f32.mrf.mxu0
        %v3556 = vadd.f32 0.0, %v3555
        %v3557 = vpop.f32.mrf.mxu0
        %v3558 = vadd.f32 0.0, %v3557
        %3559 = vmatmul.bf16.gmra.mxu0 %v3415
        %v3560 = vpop.f32.mrf.mxu0
        %v3561 = vadd.f32 0.0, %v3560
        %v3562 = vpop.f32.mrf.mxu0
        %v3563 = vadd.f32 0.0, %v3562
        %3564 = vmatmul.bf16.gmra.mxu0 %v3416
        %v3565 = vpop.f32.mrf.mxu0
        %v3566 = vadd.f32 0.0, %v3565
        %v3567 = vpop.f32.mrf.mxu0
        %v3568 = vadd.f32 0.0, %v3567
        %3569 = vdwg.mxu0
        %v3570 = vld [vmem:[%s11] sm:$0x1]
        %v3572 = vperm.slane %v3570, 0
        %v3574 = vmul.f32 %v3491, %v3572
        %v3575 = vmul.f32 %v3493, %v3572
        %v3576 = vmul.f32 %v3496, %v3572
        %v3577 = vmul.f32 %v3498, %v3572
        %v3578 = vmul.f32 %v3501, %v3572
        %v3579 = vmul.f32 %v3503, %v3572
        %v3580 = vmul.f32 %v3506, %v3572
        %v3581 = vmul.f32 %v3508, %v3572
        %v3582 = vmul.f32 %v3511, %v3572
        %v3583 = vmul.f32 %v3513, %v3572
        %v3584 = vmul.f32 %v3516, %v3572
        %v3585 = vmul.f32 %v3518, %v3572
        %v3586 = vmul.f32 %v3521, %v3572
        %v3587 = vmul.f32 %v3523, %v3572
        %v3588 = vmul.f32 %v3526, %v3572
        %v3589 = vmul.f32 %v3528, %v3572
        %v3590 = vmul.f32 %v3531, %v3572
        %v3591 = vmul.f32 %v3533, %v3572
        %v3592 = vmul.f32 %v3536, %v3572
        %v3593 = vmul.f32 %v3538, %v3572
        %v3594 = vmul.f32 %v3541, %v3572
        %v3595 = vmul.f32 %v3543, %v3572
        %v3596 = vmul.f32 %v3546, %v3572
        %v3597 = vmul.f32 %v3548, %v3572
        %v3598 = vmul.f32 %v3551, %v3572
        %v3599 = vmul.f32 %v3553, %v3572
        %v3600 = vmul.f32 %v3556, %v3572
        %v3601 = vmul.f32 %v3558, %v3572
        %v3602 = vmul.f32 %v3561, %v3572
        %v3603 = vmul.f32 %v3563, %v3572
        %v3604 = vmul.f32 %v3566, %v3572
        %v3605 = vmul.f32 %v3568, %v3572
        %v3606 = vadd.f32 %v1627, %v3574
        %v3607 = vadd.f32 %v1628, %v3575
        %v3608 = vadd.f32 %v1629, %v3576
        %v3609 = vadd.f32 %v1630, %v3577
        %v3610 = vadd.f32 %v1631, %v3578
        %v3611 = vadd.f32 %v1632, %v3579
        %v3612 = vadd.f32 %v1633, %v3580
        %v3613 = vadd.f32 %v1634, %v3581
        %v3614 = vadd.f32 %v1635, %v3582
        %v3615 = vadd.f32 %v1636, %v3583
        %v3616 = vadd.f32 %v1637, %v3584
        %v3617 = vadd.f32 %v1638, %v3585
        %v3618 = vadd.f32 %v1639, %v3586
        %v3619 = vadd.f32 %v1640, %v3587
        %v3620 = vadd.f32 %v1641, %v3588
        %v3621 = vadd.f32 %v1642, %v3589
        %v3622 = vadd.f32 %v1643, %v3590
        %v3623 = vadd.f32 %v1644, %v3591
        %v3624 = vadd.f32 %v1645, %v3592
        %v3625 = vadd.f32 %v1646, %v3593
        %v3626 = vadd.f32 %v1647, %v3594
        %v3627 = vadd.f32 %v1648, %v3595
        %v3628 = vadd.f32 %v1649, %v3596
        %v3629 = vadd.f32 %v1650, %v3597
        %v3630 = vadd.f32 %v1651, %v3598
        %v3631 = vadd.f32 %v1652, %v3599
        %v3632 = vadd.f32 %v1653, %v3600
        %v3633 = vadd.f32 %v1654, %v3601
        %v3634 = vadd.f32 %v1655, %v3602
        %v3635 = vadd.f32 %v1656, %v3603
        %v3636 = vadd.f32 %v1657, %v3604
        %v3637 = vadd.f32 %v1658, %v3605
        %v3638 = vld [vmem:[%s12] sm:$0x1]
        %v3640 = vperm.slane %v3638, 0
        %v3642 = vadd.f32 %v3606, %v3640
        %v3643 = vadd.f32 %v3607, %v3640
        %v3644 = vadd.f32 %v3608, %v3640
        %v3645 = vadd.f32 %v3609, %v3640
        %v3646 = vadd.f32 %v3610, %v3640
        %v3647 = vadd.f32 %v3611, %v3640
        %v3648 = vadd.f32 %v3612, %v3640
        %v3649 = vadd.f32 %v3613, %v3640
        %v3650 = vadd.f32 %v3614, %v3640
        %v3651 = vadd.f32 %v3615, %v3640
        %v3652 = vadd.f32 %v3616, %v3640
        %v3653 = vadd.f32 %v3617, %v3640
        %v3654 = vadd.f32 %v3618, %v3640
        %v3655 = vadd.f32 %v3619, %v3640
        %v3656 = vadd.f32 %v3620, %v3640
        %v3657 = vadd.f32 %v3621, %v3640
        %v3658 = vadd.f32 %v3622, %v3640
        %v3659 = vadd.f32 %v3623, %v3640
        %v3660 = vadd.f32 %v3624, %v3640
        %v3661 = vadd.f32 %v3625, %v3640
        %v3662 = vadd.f32 %v3626, %v3640
        %v3663 = vadd.f32 %v3627, %v3640
        %v3664 = vadd.f32 %v3628, %v3640
        %v3665 = vadd.f32 %v3629, %v3640
        %v3666 = vadd.f32 %v3630, %v3640
        %v3667 = vadd.f32 %v3631, %v3640
        %v3668 = vadd.f32 %v3632, %v3640
        %v3669 = vadd.f32 %v3633, %v3640
        %v3670 = vadd.f32 %v3634, %v3640
        %v3671 = vadd.f32 %v3635, %v3640
        %v3672 = vadd.f32 %v3636, %v3640
        %v3673 = vadd.f32 %v3637, %v3640
        %v3674 = vmax.f32 %v3642, 0.0
        %v3675 = vmax.f32 %v3643, 0.0
        %v3676 = vmax.f32 %v3644, 0.0
        %v3677 = vmax.f32 %v3645, 0.0
        %v3678 = vmax.f32 %v3646, 0.0
        %v3679 = vmax.f32 %v3647, 0.0
        %v3680 = vmax.f32 %v3648, 0.0
        %v3681 = vmax.f32 %v3649, 0.0
        %v3682 = vmax.f32 %v3650, 0.0
        %v3683 = vmax.f32 %v3651, 0.0
        %v3684 = vmax.f32 %v3652, 0.0
        %v3685 = vmax.f32 %v3653, 0.0
        %v3686 = vmax.f32 %v3654, 0.0
        %v3687 = vmax.f32 %v3655, 0.0
        %v3688 = vmax.f32 %v3656, 0.0
        %v3689 = vmax.f32 %v3657, 0.0
        %v3690 = vmax.f32 %v3658, 0.0
        %v3691 = vmax.f32 %v3659, 0.0
        %v3692 = vmax.f32 %v3660, 0.0
        %v3693 = vmax.f32 %v3661, 0.0
        %v3694 = vmax.f32 %v3662, 0.0
        %v3695 = vmax.f32 %v3663, 0.0
        %v3696 = vmax.f32 %v3664, 0.0
        %v3697 = vmax.f32 %v3665, 0.0
        %v3698 = vmax.f32 %v3666, 0.0
        %v3699 = vmax.f32 %v3667, 0.0
        %v3700 = vmax.f32 %v3668, 0.0
        %v3701 = vmax.f32 %v3669, 0.0
        %v3702 = vmax.f32 %v3670, 0.0
        %v3703 = vmax.f32 %v3671, 0.0
        %v3704 = vmax.f32 %v3672, 0.0
        %v3705 = vmax.f32 %v3673, 0.0
        %v3706 = vpack.c.bf16 %v3675, %v3674
        %v3707 = vpack.c.bf16 %v3677, %v3676
        %v3708 = vpack.c.bf16 %v3679, %v3678
        %v3709 = vpack.c.bf16 %v3681, %v3680
        %v3710 = vpack.c.bf16 %v3683, %v3682
        %v3711 = vpack.c.bf16 %v3685, %v3684
        %v3712 = vpack.c.bf16 %v3687, %v3686
        %v3713 = vpack.c.bf16 %v3689, %v3688
        %v3714 = vpack.c.bf16 %v3691, %v3690
        %v3715 = vpack.c.bf16 %v3693, %v3692
        %v3716 = vpack.c.bf16 %v3695, %v3694
        %v3717 = vpack.c.bf16 %v3697, %v3696
        %v3718 = vpack.c.bf16 %v3699, %v3698
        %v3719 = vpack.c.bf16 %v3701, %v3700
        %v3720 = vpack.c.bf16 %v3703, %v3702
        %v3721 = vpack.c.bf16 %v3705, %v3704
        %s3722 = scalar_lea.vmem %s4, 64
        %v3723 = vld [vmem:[%s3722] sm:$0xf]
        %v3724 = vld [vmem:[%s3722 + $0x4] sm:$0xf]
        %v3725 = vld [vmem:[%s3722 + $0x8] sm:$0xf]
        %v3726 = vld [vmem:[%s3722 + $0xc] sm:$0xf]
        %v3727 = vld [vmem:[%s3722 + $0x10] sm:$0xf]
        %v3728 = vld [vmem:[%s3722 + $0x14] sm:$0xf]
        %v3729 = vld [vmem:[%s3722 + $0x18] sm:$0xf]
        %v3730 = vld [vmem:[%s3722 + $0x1c] sm:$0xf]
        %v3731 = vld [vmem:[%s3722 + $0x20] sm:$0xf]
        %v3732 = vld [vmem:[%s3722 + $0x24] sm:$0xf]
        %v3733 = vld [vmem:[%s3722 + $0x28] sm:$0xf]
        %v3734 = vld [vmem:[%s3722 + $0x2c] sm:$0xf]
        %v3735 = vld [vmem:[%s3722 + $0x30] sm:$0xf]
        %v3736 = vld [vmem:[%s3722 + $0x34] sm:$0xf]
        %v3737 = vld [vmem:[%s3722 + $0x38] sm:$0xf]
        %v3738 = vld [vmem:[%s3722 + $0x3c] sm:$0xf]
        %v3755 = vunpack.c.l.b16 %v3723
        %v3756 = vunpack.c.l.b16 %v3724
        %v3757 = vunpack.c.l.b16 %v3725
        %v3758 = vunpack.c.l.b16 %v3726
        %v3759 = vunpack.c.l.b16 %v3727
        %v3760 = vunpack.c.l.b16 %v3728
        %v3761 = vunpack.c.l.b16 %v3729
        %v3762 = vunpack.c.l.b16 %v3730
        %v3763 = vunpack.c.l.b16 %v3731
        %v3764 = vunpack.c.l.b16 %v3732
        %v3765 = vunpack.c.l.b16 %v3733
        %v3766 = vunpack.c.l.b16 %v3734
        %v3767 = vunpack.c.l.b16 %v3735
        %v3768 = vunpack.c.l.b16 %v3736
        %v3769 = vunpack.c.l.b16 %v3737
        %v3770 = vunpack.c.l.b16 %v3738
        %v3771 = vpack.c.b16 %v3756, %v3755
        %v3772 = vpack.c.b16 %v3758, %v3757
        %v3773 = vpack.c.b16 %v3760, %v3759
        %v3774 = vpack.c.b16 %v3762, %v3761
        %v3775 = vpack.c.b16 %v3764, %v3763
        %v3776 = vpack.c.b16 %v3766, %v3765
        %v3777 = vpack.c.b16 %v3768, %v3767
        %v3778 = vpack.c.b16 %v3770, %v3769
        %3787 = vmatpush.bf16.msra.mxu0 %v3778
        %3788 = vmatpush.bf16.msra.mxu0 %v3777
        %3789 = vmatpush.bf16.msra.mxu0 %v3776
        %3790 = vmatpush.bf16.msra.mxu0 %v3775
        %3791 = vmatpush.bf16.msra.mxu0 %v3774
        %3792 = vmatpush.bf16.msra.mxu0 %v3773
        %3793 = vmatpush.bf16.msra.mxu0 %v3772
        %3794 = vmatpush.bf16.msra.mxu0 %v3771
        %3795 = vmatmul.bf16.gmra.mxu0 %v3706
        %v3796 = vpop.f32.mrf.mxu0
        %v3797 = vadd.f32 0.0, %v3796
        %v3798 = vpop.f32.mrf.mxu0
        %v3799 = vadd.f32 0.0, %v3798
        %3800 = vmatmul.bf16.gmra.mxu0 %v3707
        %v3801 = vpop.f32.mrf.mxu0
        %v3802 = vadd.f32 0.0, %v3801
        %v3803 = vpop.f32.mrf.mxu0
        %v3804 = vadd.f32 0.0, %v3803
        %3805 = vmatmul.bf16.gmra.mxu0 %v3708
        %v3806 = vpop.f32.mrf.mxu0
        %v3807 = vadd.f32 0.0, %v3806
        %v3808 = vpop.f32.mrf.mxu0
        %v3809 = vadd.f32 0.0, %v3808
        %3810 = vmatmul.bf16.gmra.mxu0 %v3709
        %v3811 = vpop.f32.mrf.mxu0
        %v3812 = vadd.f32 0.0, %v3811
        %v3813 = vpop.f32.mrf.mxu0
        %v3814 = vadd.f32 0.0, %v3813
        %3815 = vmatmul.bf16.gmra.mxu0 %v3710
        %v3816 = vpop.f32.mrf.mxu0
        %v3817 = vadd.f32 0.0, %v3816
        %v3818 = vpop.f32.mrf.mxu0
        %v3819 = vadd.f32 0.0, %v3818
        %3820 = vmatmul.bf16.gmra.mxu0 %v3711
        %v3821 = vpop.f32.mrf.mxu0
        %v3822 = vadd.f32 0.0, %v3821
        %v3823 = vpop.f32.mrf.mxu0
        %v3824 = vadd.f32 0.0, %v3823
        %3825 = vmatmul.bf16.gmra.mxu0 %v3712
        %v3826 = vpop.f32.mrf.mxu0
        %v3827 = vadd.f32 0.0, %v3826
        %v3828 = vpop.f32.mrf.mxu0
        %v3829 = vadd.f32 0.0, %v3828
        %3830 = vmatmul.bf16.gmra.mxu0 %v3713
        %v3831 = vpop.f32.mrf.mxu0
        %v3832 = vadd.f32 0.0, %v3831
        %v3833 = vpop.f32.mrf.mxu0
        %v3834 = vadd.f32 0.0, %v3833
        %3835 = vmatmul.bf16.gmra.mxu0 %v3714
        %v3836 = vpop.f32.mrf.mxu0
        %v3837 = vadd.f32 0.0, %v3836
        %v3838 = vpop.f32.mrf.mxu0
        %v3839 = vadd.f32 0.0, %v3838
        %3840 = vmatmul.bf16.gmra.mxu0 %v3715
        %v3841 = vpop.f32.mrf.mxu0
        %v3842 = vadd.f32 0.0, %v3841
        %v3843 = vpop.f32.mrf.mxu0
        %v3844 = vadd.f32 0.0, %v3843
        %3845 = vmatmul.bf16.gmra.mxu0 %v3716
        %v3846 = vpop.f32.mrf.mxu0
        %v3847 = vadd.f32 0.0, %v3846
        %v3848 = vpop.f32.mrf.mxu0
        %v3849 = vadd.f32 0.0, %v3848
        %3850 = vmatmul.bf16.gmra.mxu0 %v3717
        %v3851 = vpop.f32.mrf.mxu0
        %v3852 = vadd.f32 0.0, %v3851
        %v3853 = vpop.f32.mrf.mxu0
        %v3854 = vadd.f32 0.0, %v3853
        %3855 = vmatmul.bf16.gmra.mxu0 %v3718
        %v3856 = vpop.f32.mrf.mxu0
        %v3857 = vadd.f32 0.0, %v3856
        %v3858 = vpop.f32.mrf.mxu0
        %v3859 = vadd.f32 0.0, %v3858
        %3860 = vmatmul.bf16.gmra.mxu0 %v3719
        %v3861 = vpop.f32.mrf.mxu0
        %v3862 = vadd.f32 0.0, %v3861
        %v3863 = vpop.f32.mrf.mxu0
        %v3864 = vadd.f32 0.0, %v3863
        %3865 = vmatmul.bf16.gmra.mxu0 %v3720
        %v3866 = vpop.f32.mrf.mxu0
        %v3867 = vadd.f32 0.0, %v3866
        %v3868 = vpop.f32.mrf.mxu0
        %v3869 = vadd.f32 0.0, %v3868
        %3870 = vmatmul.bf16.gmra.mxu0 %v3721
        %v3871 = vpop.f32.mrf.mxu0
        %v3872 = vadd.f32 0.0, %v3871
        %v3873 = vpop.f32.mrf.mxu0
        %v3874 = vadd.f32 0.0, %v3873
        %3875 = vdwg.mxu0
        %s3876 = scalar_lea.vmem %s5, 1
        %v3877 = vld [vmem:[%s3876] sm:$0x1]
        %v3879 = vperm.slane %v3877, 0
        %v3881 = vmul.f32 %v3797, %v3879
        %v3882 = vmul.f32 %v3799, %v3879
        %v3883 = vmul.f32 %v3802, %v3879
        %v3884 = vmul.f32 %v3804, %v3879
        %v3885 = vmul.f32 %v3807, %v3879
        %v3886 = vmul.f32 %v3809, %v3879
        %v3887 = vmul.f32 %v3812, %v3879
        %v3888 = vmul.f32 %v3814, %v3879
        %v3889 = vmul.f32 %v3817, %v3879
        %v3890 = vmul.f32 %v3819, %v3879
        %v3891 = vmul.f32 %v3822, %v3879
        %v3892 = vmul.f32 %v3824, %v3879
        %v3893 = vmul.f32 %v3827, %v3879
        %v3894 = vmul.f32 %v3829, %v3879
        %v3895 = vmul.f32 %v3832, %v3879
        %v3896 = vmul.f32 %v3834, %v3879
        %v3897 = vmul.f32 %v3837, %v3879
        %v3898 = vmul.f32 %v3839, %v3879
        %v3899 = vmul.f32 %v3842, %v3879
        %v3900 = vmul.f32 %v3844, %v3879
        %v3901 = vmul.f32 %v3847, %v3879
        %v3902 = vmul.f32 %v3849, %v3879
        %v3903 = vmul.f32 %v3852, %v3879
        %v3904 = vmul.f32 %v3854, %v3879
        %v3905 = vmul.f32 %v3857, %v3879
        %v3906 = vmul.f32 %v3859, %v3879
        %v3907 = vmul.f32 %v3862, %v3879
        %v3908 = vmul.f32 %v3864, %v3879
        %v3909 = vmul.f32 %v3867, %v3879
        %v3910 = vmul.f32 %v3869, %v3879
        %v3911 = vmul.f32 %v3872, %v3879
        %v3912 = vmul.f32 %v3874, %v3879
        %s3913 = scalar_lea.vmem %s6, 1
        %v3914 = vld [vmem:[%s3913] sm:$0x1]
        %v3916 = vperm.slane %v3914, 0
        %v3918 = vadd.f32 %v3881, %v3916
        %v3919 = vadd.f32 %v3882, %v3916
        %v3920 = vadd.f32 %v3883, %v3916
        %v3921 = vadd.f32 %v3884, %v3916
        %v3922 = vadd.f32 %v3885, %v3916
        %v3923 = vadd.f32 %v3886, %v3916
        %v3924 = vadd.f32 %v3887, %v3916
        %v3925 = vadd.f32 %v3888, %v3916
        %v3926 = vadd.f32 %v3889, %v3916
        %v3927 = vadd.f32 %v3890, %v3916
        %v3928 = vadd.f32 %v3891, %v3916
        %v3929 = vadd.f32 %v3892, %v3916
        %v3930 = vadd.f32 %v3893, %v3916
        %v3931 = vadd.f32 %v3894, %v3916
        %v3932 = vadd.f32 %v3895, %v3916
        %v3933 = vadd.f32 %v3896, %v3916
        %v3934 = vadd.f32 %v3897, %v3916
        %v3935 = vadd.f32 %v3898, %v3916
        %v3936 = vadd.f32 %v3899, %v3916
        %v3937 = vadd.f32 %v3900, %v3916
        %v3938 = vadd.f32 %v3901, %v3916
        %v3939 = vadd.f32 %v3902, %v3916
        %v3940 = vadd.f32 %v3903, %v3916
        %v3941 = vadd.f32 %v3904, %v3916
        %v3942 = vadd.f32 %v3905, %v3916
        %v3943 = vadd.f32 %v3906, %v3916
        %v3944 = vadd.f32 %v3907, %v3916
        %v3945 = vadd.f32 %v3908, %v3916
        %v3946 = vadd.f32 %v3909, %v3916
        %v3947 = vadd.f32 %v3910, %v3916
        %v3948 = vadd.f32 %v3911, %v3916
        %v3949 = vadd.f32 %v3912, %v3916
        %v3950 = vmax.f32 %v3918, 0.0
        %v3951 = vmax.f32 %v3919, 0.0
        %v3952 = vmax.f32 %v3920, 0.0
        %v3953 = vmax.f32 %v3921, 0.0
        %v3954 = vmax.f32 %v3922, 0.0
        %v3955 = vmax.f32 %v3923, 0.0
        %v3956 = vmax.f32 %v3924, 0.0
        %v3957 = vmax.f32 %v3925, 0.0
        %v3958 = vmax.f32 %v3926, 0.0
        %v3959 = vmax.f32 %v3927, 0.0
        %v3960 = vmax.f32 %v3928, 0.0
        %v3961 = vmax.f32 %v3929, 0.0
        %v3962 = vmax.f32 %v3930, 0.0
        %v3963 = vmax.f32 %v3931, 0.0
        %v3964 = vmax.f32 %v3932, 0.0
        %v3965 = vmax.f32 %v3933, 0.0
        %v3966 = vmax.f32 %v3934, 0.0
        %v3967 = vmax.f32 %v3935, 0.0
        %v3968 = vmax.f32 %v3936, 0.0
        %v3969 = vmax.f32 %v3937, 0.0
        %v3970 = vmax.f32 %v3938, 0.0
        %v3971 = vmax.f32 %v3939, 0.0
        %v3972 = vmax.f32 %v3940, 0.0
        %v3973 = vmax.f32 %v3941, 0.0
        %v3974 = vmax.f32 %v3942, 0.0
        %v3975 = vmax.f32 %v3943, 0.0
        %v3976 = vmax.f32 %v3944, 0.0
        %v3977 = vmax.f32 %v3945, 0.0
        %v3978 = vmax.f32 %v3946, 0.0
        %v3979 = vmax.f32 %v3947, 0.0
        %v3980 = vmax.f32 %v3948, 0.0
        %v3981 = vmax.f32 %v3949, 0.0
        %v3983 = vrot.slane %v3979, 7
        %v4014 = vrot.slane %v3950, 7
        %v4015 = vsel %vm1997, %v1998, %v4014
        %v4016 = vrot.slane %v3951, 7
        %v4017 = vsel %vm1997, %v4014, %v4016
        %v4018 = vrot.slane %v3952, 7
        %v4019 = vsel %vm1997, %v4016, %v4018
        %v4020 = vrot.slane %v3953, 7
        %v4021 = vsel %vm1997, %v4018, %v4020
        %v4022 = vrot.slane %v3954, 7
        %v4023 = vsel %vm1997, %v4020, %v4022
        %v4024 = vrot.slane %v3955, 7
        %v4025 = vsel %vm1997, %v4022, %v4024
        %v4026 = vrot.slane %v3956, 7
        %v4027 = vsel %vm1997, %v4024, %v4026
        %v4028 = vrot.slane %v3957, 7
        %v4029 = vsel %vm1997, %v4026, %v4028
        %v4030 = vrot.slane %v3958, 7
        %v4031 = vsel %vm1997, %v4028, %v4030
        %v4032 = vrot.slane %v3959, 7
        %v4033 = vsel %vm1997, %v4030, %v4032
        %v4034 = vrot.slane %v3960, 7
        %v4035 = vsel %vm1997, %v4032, %v4034
        %v4036 = vrot.slane %v3961, 7
        %v4037 = vsel %vm1997, %v4034, %v4036
        %v4038 = vrot.slane %v3962, 7
        %v4039 = vsel %vm1997, %v4036, %v4038
        %v4040 = vrot.slane %v3963, 7
        %v4041 = vsel %vm1997, %v4038, %v4040
        %v4042 = vrot.slane %v3964, 7
        %v4043 = vsel %vm1997, %v4040, %v4042
        %v4044 = vrot.slane %v3965, 7
        %v4045 = vsel %vm1997, %v4042, %v4044
        %v4046 = vrot.slane %v3966, 7
        %v4047 = vsel %vm1997, %v4044, %v4046
        %v4048 = vrot.slane %v3967, 7
        %v4049 = vsel %vm1997, %v4046, %v4048
        %v4050 = vrot.slane %v3968, 7
        %v4051 = vsel %vm1997, %v4048, %v4050
        %v4052 = vrot.slane %v3969, 7
        %v4053 = vsel %vm1997, %v4050, %v4052
        %v4054 = vrot.slane %v3970, 7
        %v4055 = vsel %vm1997, %v4052, %v4054
        %v4056 = vrot.slane %v3971, 7
        %v4057 = vsel %vm1997, %v4054, %v4056
        %v4058 = vrot.slane %v3972, 7
        %v4059 = vsel %vm1997, %v4056, %v4058
        %v4060 = vrot.slane %v3973, 7
        %v4061 = vsel %vm1997, %v4058, %v4060
        %v4062 = vrot.slane %v3974, 7
        %v4063 = vsel %vm1997, %v4060, %v4062
        %v4064 = vrot.slane %v3975, 7
        %v4065 = vsel %vm1997, %v4062, %v4064
        %v4066 = vrot.slane %v3976, 7
        %v4067 = vsel %vm1997, %v4064, %v4066
        %v4068 = vrot.slane %v3977, 7
        %v4069 = vsel %vm1997, %v4066, %v4068
        %v4070 = vrot.slane %v3978, 7
        %v4071 = vsel %vm1997, %v4068, %v4070
        %v4072 = vsel %vm1997, %v4070, %v3983
        %v4103 = vsel %vm1997, %v3983, %v1998
        %v4104 = vsel %vm992, %v4103, 0.0
        %v4105 = vsel %vm994, %v4015, 0.0
        %v4106 = vsel %vm995, %v4017, 0.0
        %v4107 = vsel %vm996, %v4019, 0.0
        %v4108 = vsel %vm997, %v4021, 0.0
        %v4109 = vsel %vm998, %v4023, 0.0
        %v4110 = vsel %vm999, %v4025, 0.0
        %v4111 = vsel %vm1000, %v4027, 0.0
        %v4112 = vsel %vm1001, %v4029, 0.0
        %v4113 = vsel %vm1002, %v4031, 0.0
        %v4114 = vsel %vm1003, %v4033, 0.0
        %v4115 = vsel %vm1004, %v4035, 0.0
        %v4116 = vsel %vm1005, %v4037, 0.0
        %v4117 = vsel %vm1006, %v4039, 0.0
        %v4118 = vsel %vm1007, %v4041, 0.0
        %v4119 = vsel %vm1008, %v4043, 0.0
        %v4120 = vsel %vm1009, %v4045, 0.0
        %v4121 = vsel %vm1010, %v4047, 0.0
        %v4122 = vsel %vm1011, %v4049, 0.0
        %v4123 = vsel %vm1012, %v4051, 0.0
        %v4124 = vsel %vm1013, %v4053, 0.0
        %v4125 = vsel %vm1014, %v4055, 0.0
        %v4126 = vsel %vm1015, %v4057, 0.0
        %v4127 = vsel %vm1016, %v4059, 0.0
        %v4128 = vsel %vm1017, %v4061, 0.0
        %v4129 = vsel %vm1018, %v4063, 0.0
        %v4130 = vsel %vm1019, %v4065, 0.0
        %v4131 = vsel %vm1020, %v4067, 0.0
        %v4132 = vsel %vm1021, %v4069, 0.0
        %v4133 = vsel %vm1022, %v4071, 0.0
        %v4134 = vsel %vm1023, %v4072, 0.0
        %v4135 = vpack.c.bf16 %v4104, %v4104
        %v4136 = vpack.c.bf16 %v4105, %v4105
        %v4137 = vpack.c.bf16 %v4106, %v4106
        %v4138 = vpack.c.bf16 %v4107, %v4107
        %v4139 = vpack.c.bf16 %v4108, %v4108
        %v4140 = vpack.c.bf16 %v4109, %v4109
        %v4141 = vpack.c.bf16 %v4110, %v4110
        %v4142 = vpack.c.bf16 %v4111, %v4111
        %v4143 = vpack.c.bf16 %v4112, %v4112
        %v4144 = vpack.c.bf16 %v4113, %v4113
        %v4145 = vpack.c.bf16 %v4114, %v4114
        %v4146 = vpack.c.bf16 %v4115, %v4115
        %v4147 = vpack.c.bf16 %v4116, %v4116
        %v4148 = vpack.c.bf16 %v4117, %v4117
        %v4149 = vpack.c.bf16 %v4118, %v4118
        %v4150 = vpack.c.bf16 %v4119, %v4119
        %v4151 = vpack.c.bf16 %v4120, %v4120
        %v4152 = vpack.c.bf16 %v4121, %v4121
        %v4153 = vpack.c.bf16 %v4122, %v4122
        %v4154 = vpack.c.bf16 %v4123, %v4123
        %v4155 = vpack.c.bf16 %v4124, %v4124
        %v4156 = vpack.c.bf16 %v4125, %v4125
        %v4157 = vpack.c.bf16 %v4126, %v4126
        %v4158 = vpack.c.bf16 %v4127, %v4127
        %v4159 = vpack.c.bf16 %v4128, %v4128
        %v4160 = vpack.c.bf16 %v4129, %v4129
        %v4161 = vpack.c.bf16 %v4130, %v4130
        %v4162 = vpack.c.bf16 %v4131, %v4131
        %v4163 = vpack.c.bf16 %v4132, %v4132
        %v4164 = vpack.c.bf16 %v4133, %v4133
        %v4165 = vpack.c.bf16 %v4134, %v4134
        %v4166 = vpack.c.bf16 %v3950, %v3950
        %v4167 = vpack.c.bf16 %v3951, %v3951
        %v4168 = vpack.c.bf16 %v3952, %v3952
        %v4169 = vpack.c.bf16 %v3953, %v3953
        %v4170 = vpack.c.bf16 %v3954, %v3954
        %v4171 = vpack.c.bf16 %v3955, %v3955
        %v4172 = vpack.c.bf16 %v3956, %v3956
        %v4173 = vpack.c.bf16 %v3957, %v3957
        %v4174 = vpack.c.bf16 %v3958, %v3958
        %v4175 = vpack.c.bf16 %v3959, %v3959
        %v4176 = vpack.c.bf16 %v3960, %v3960
        %v4177 = vpack.c.bf16 %v3961, %v3961
        %v4178 = vpack.c.bf16 %v3962, %v3962
        %v4179 = vpack.c.bf16 %v3963, %v3963
        %v4180 = vpack.c.bf16 %v3964, %v3964
        %v4181 = vpack.c.bf16 %v3965, %v3965
        %v4182 = vpack.c.bf16 %v3966, %v3966
        %v4183 = vpack.c.bf16 %v3967, %v3967
        %v4184 = vpack.c.bf16 %v3968, %v3968
        %v4185 = vpack.c.bf16 %v3969, %v3969
        %v4186 = vpack.c.bf16 %v3970, %v3970
        %v4187 = vpack.c.bf16 %v3971, %v3971
        %v4188 = vpack.c.bf16 %v3972, %v3972
        %v4189 = vpack.c.bf16 %v3973, %v3973
        %v4190 = vpack.c.bf16 %v3974, %v3974
        %v4191 = vpack.c.bf16 %v3975, %v3975
        %v4192 = vpack.c.bf16 %v3976, %v3976
        %v4193 = vpack.c.bf16 %v3977, %v3977
        %v4194 = vpack.c.bf16 %v3978, %v3978
        %v4195 = vpack.c.bf16 %v3979, %v3979
        %v4196 = vrot.slane %v3950, 1
        %v4197 = vsel %vm2187, %v2188, %v4196
        %v4198 = vrot.slane %v3951, 1
        %v4199 = vsel %vm2187, %v4196, %v4198
        %v4200 = vrot.slane %v3952, 1
        %v4201 = vsel %vm2187, %v4198, %v4200
        %v4202 = vrot.slane %v3953, 1
        %v4203 = vsel %vm2187, %v4200, %v4202
        %v4204 = vrot.slane %v3954, 1
        %v4205 = vsel %vm2187, %v4202, %v4204
        %v4206 = vrot.slane %v3955, 1
        %v4207 = vsel %vm2187, %v4204, %v4206
        %v4208 = vrot.slane %v3956, 1
        %v4209 = vsel %vm2187, %v4206, %v4208
        %v4210 = vrot.slane %v3957, 1
        %v4211 = vsel %vm2187, %v4208, %v4210
        %v4212 = vrot.slane %v3958, 1
        %v4213 = vsel %vm2187, %v4210, %v4212
        %v4214 = vrot.slane %v3959, 1
        %v4215 = vsel %vm2187, %v4212, %v4214
        %v4216 = vrot.slane %v3960, 1
        %v4217 = vsel %vm2187, %v4214, %v4216
        %v4218 = vrot.slane %v3961, 1
        %v4219 = vsel %vm2187, %v4216, %v4218
        %v4220 = vrot.slane %v3962, 1
        %v4221 = vsel %vm2187, %v4218, %v4220
        %v4222 = vrot.slane %v3963, 1
        %v4223 = vsel %vm2187, %v4220, %v4222
        %v4224 = vrot.slane %v3964, 1
        %v4225 = vsel %vm2187, %v4222, %v4224
        %v4226 = vrot.slane %v3965, 1
        %v4227 = vsel %vm2187, %v4224, %v4226
        %v4228 = vrot.slane %v3966, 1
        %v4229 = vsel %vm2187, %v4226, %v4228
        %v4230 = vrot.slane %v3967, 1
        %v4231 = vsel %vm2187, %v4228, %v4230
        %v4232 = vrot.slane %v3968, 1
        %v4233 = vsel %vm2187, %v4230, %v4232
        %v4234 = vrot.slane %v3969, 1
        %v4235 = vsel %vm2187, %v4232, %v4234
        %v4236 = vrot.slane %v3970, 1
        %v4237 = vsel %vm2187, %v4234, %v4236
        %v4238 = vrot.slane %v3971, 1
        %v4239 = vsel %vm2187, %v4236, %v4238
        %v4240 = vrot.slane %v3972, 1
        %v4241 = vsel %vm2187, %v4238, %v4240
        %v4242 = vrot.slane %v3973, 1
        %v4243 = vsel %vm2187, %v4240, %v4242
        %v4244 = vrot.slane %v3974, 1
        %v4245 = vsel %vm2187, %v4242, %v4244
        %v4246 = vrot.slane %v3975, 1
        %v4247 = vsel %vm2187, %v4244, %v4246
        %v4248 = vrot.slane %v3976, 1
        %v4249 = vsel %vm2187, %v4246, %v4248
        %v4250 = vrot.slane %v3977, 1
        %v4251 = vsel %vm2187, %v4248, %v4250
        %v4252 = vrot.slane %v3978, 1
        %v4253 = vsel %vm2187, %v4250, %v4252
        %v4254 = vrot.slane %v3979, 1
        %v4255 = vsel %vm2187, %v4252, %v4254
        %v4287 = vsel %vm2187, %v4254, %v2188
        %v4288 = vsel %vm1025, %v4197, 0.0
        %v4289 = vsel %vm1026, %v4199, 0.0
        %v4290 = vsel %vm1027, %v4201, 0.0
        %v4291 = vsel %vm1028, %v4203, 0.0
        %v4292 = vsel %vm1029, %v4205, 0.0
        %v4293 = vsel %vm1030, %v4207, 0.0
        %v4294 = vsel %vm1031, %v4209, 0.0
        %v4295 = vsel %vm1032, %v4211, 0.0
        %v4296 = vsel %vm1033, %v4213, 0.0
        %v4297 = vsel %vm1034, %v4215, 0.0
        %v4298 = vsel %vm1035, %v4217, 0.0
        %v4299 = vsel %vm1036, %v4219, 0.0
        %v4300 = vsel %vm1037, %v4221, 0.0
        %v4301 = vsel %vm1038, %v4223, 0.0
        %v4302 = vsel %vm1039, %v4225, 0.0
        %v4303 = vsel %vm1040, %v4227, 0.0
        %v4304 = vsel %vm1041, %v4229, 0.0
        %v4305 = vsel %vm1042, %v4231, 0.0
        %v4306 = vsel %vm1043, %v4233, 0.0
        %v4307 = vsel %vm1044, %v4235, 0.0
        %v4308 = vsel %vm1045, %v4237, 0.0
        %v4309 = vsel %vm1046, %v4239, 0.0
        %v4310 = vsel %vm1047, %v4241, 0.0
        %v4311 = vsel %vm1048, %v4243, 0.0
        %v4312 = vsel %vm1049, %v4245, 0.0
        %v4313 = vsel %vm1050, %v4247, 0.0
        %v4314 = vsel %vm1051, %v4249, 0.0
        %v4315 = vsel %vm1052, %v4251, 0.0
        %v4316 = vsel %vm1053, %v4253, 0.0
        %v4317 = vsel %vm1054, %v4255, 0.0
        %v4318 = vsel %vm1055, %v4287, 0.0
        %v4319 = vpack.c.bf16 %v4288, %v4288
        %v4320 = vpack.c.bf16 %v4289, %v4289
        %v4321 = vpack.c.bf16 %v4290, %v4290
        %v4322 = vpack.c.bf16 %v4291, %v4291
        %v4323 = vpack.c.bf16 %v4292, %v4292
        %v4324 = vpack.c.bf16 %v4293, %v4293
        %v4325 = vpack.c.bf16 %v4294, %v4294
        %v4326 = vpack.c.bf16 %v4295, %v4295
        %v4327 = vpack.c.bf16 %v4296, %v4296
        %v4328 = vpack.c.bf16 %v4297, %v4297
        %v4329 = vpack.c.bf16 %v4298, %v4298
        %v4330 = vpack.c.bf16 %v4299, %v4299
        %v4331 = vpack.c.bf16 %v4300, %v4300
        %v4332 = vpack.c.bf16 %v4301, %v4301
        %v4333 = vpack.c.bf16 %v4302, %v4302
        %v4334 = vpack.c.bf16 %v4303, %v4303
        %v4335 = vpack.c.bf16 %v4304, %v4304
        %v4336 = vpack.c.bf16 %v4305, %v4305
        %v4337 = vpack.c.bf16 %v4306, %v4306
        %v4338 = vpack.c.bf16 %v4307, %v4307
        %v4339 = vpack.c.bf16 %v4308, %v4308
        %v4340 = vpack.c.bf16 %v4309, %v4309
        %v4341 = vpack.c.bf16 %v4310, %v4310
        %v4342 = vpack.c.bf16 %v4311, %v4311
        %v4343 = vpack.c.bf16 %v4312, %v4312
        %v4344 = vpack.c.bf16 %v4313, %v4313
        %v4345 = vpack.c.bf16 %v4314, %v4314
        %v4346 = vpack.c.bf16 %v4315, %v4315
        %v4347 = vpack.c.bf16 %v4316, %v4316
        %v4348 = vpack.c.bf16 %v4317, %v4317
        %v4349 = vpack.c.bf16 %v4318, %v4318
        %v4351 = vrot.slane %v3981, 7
        %v4354 = vrot.slane %v3980, 7
        %v4355 = vsel %vm1997, %v3983, %v4354
        %v4356 = vsel %vm1997, %v4354, %v4351
        %v4360 = vsel %vm1997, %v4351, %v4014
        %v4361 = vsel %vm992, %v4360, 0.0
        %v4362 = vsel %vm993, %v4017, 0.0
        %v4363 = vsel %vm994, %v4019, 0.0
        %v4364 = vsel %vm995, %v4021, 0.0
        %v4365 = vsel %vm996, %v4023, 0.0
        %v4366 = vsel %vm997, %v4025, 0.0
        %v4367 = vsel %vm998, %v4027, 0.0
        %v4368 = vsel %vm999, %v4029, 0.0
        %v4369 = vsel %vm1000, %v4031, 0.0
        %v4370 = vsel %vm1001, %v4033, 0.0
        %v4371 = vsel %vm1002, %v4035, 0.0
        %v4372 = vsel %vm1003, %v4037, 0.0
        %v4373 = vsel %vm1004, %v4039, 0.0
        %v4374 = vsel %vm1005, %v4041, 0.0
        %v4375 = vsel %vm1006, %v4043, 0.0
        %v4376 = vsel %vm1007, %v4045, 0.0
        %v4377 = vsel %vm1008, %v4047, 0.0
        %v4378 = vsel %vm1009, %v4049, 0.0
        %v4379 = vsel %vm1010, %v4051, 0.0
        %v4380 = vsel %vm1011, %v4053, 0.0
        %v4381 = vsel %vm1012, %v4055, 0.0
        %v4382 = vsel %vm1013, %v4057, 0.0
        %v4383 = vsel %vm1014, %v4059, 0.0
        %v4384 = vsel %vm1015, %v4061, 0.0
        %v4385 = vsel %vm1016, %v4063, 0.0
        %v4386 = vsel %vm1017, %v4065, 0.0
        %v4387 = vsel %vm1018, %v4067, 0.0
        %v4388 = vsel %vm1019, %v4069, 0.0
        %v4389 = vsel %vm1020, %v4071, 0.0
        %v4390 = vsel %vm1021, %v4072, 0.0
        %v4391 = vsel %vm1022, %v4355, 0.0
        %v4392 = vsel %vm1023, %v4356, 0.0
        %v4393 = vpack.c.bf16 %v4361, %v4361
        %v4394 = vpack.c.bf16 %v4362, %v4362
        %v4395 = vpack.c.bf16 %v4363, %v4363
        %v4396 = vpack.c.bf16 %v4364, %v4364
        %v4397 = vpack.c.bf16 %v4365, %v4365
        %v4398 = vpack.c.bf16 %v4366, %v4366
        %v4399 = vpack.c.bf16 %v4367, %v4367
        %v4400 = vpack.c.bf16 %v4368, %v4368
        %v4401 = vpack.c.bf16 %v4369, %v4369
        %v4402 = vpack.c.bf16 %v4370, %v4370
        %v4403 = vpack.c.bf16 %v4371, %v4371
        %v4404 = vpack.c.bf16 %v4372, %v4372
        %v4405 = vpack.c.bf16 %v4373, %v4373
        %v4406 = vpack.c.bf16 %v4374, %v4374
        %v4407 = vpack.c.bf16 %v4375, %v4375
        %v4408 = vpack.c.bf16 %v4376, %v4376
        %v4409 = vpack.c.bf16 %v4377, %v4377
        %v4410 = vpack.c.bf16 %v4378, %v4378
        %v4411 = vpack.c.bf16 %v4379, %v4379
        %v4412 = vpack.c.bf16 %v4380, %v4380
        %v4413 = vpack.c.bf16 %v4381, %v4381
        %v4414 = vpack.c.bf16 %v4382, %v4382
        %v4415 = vpack.c.bf16 %v4383, %v4383
        %v4416 = vpack.c.bf16 %v4384, %v4384
        %v4417 = vpack.c.bf16 %v4385, %v4385
        %v4418 = vpack.c.bf16 %v4386, %v4386
        %v4419 = vpack.c.bf16 %v4387, %v4387
        %v4420 = vpack.c.bf16 %v4388, %v4388
        %v4421 = vpack.c.bf16 %v4389, %v4389
        %v4422 = vpack.c.bf16 %v4390, %v4390
        %v4423 = vpack.c.bf16 %v4391, %v4391
        %v4424 = vpack.c.bf16 %v4392, %v4392
        %v4425 = vpack.c.bf16 %v3980, %v3980
        %v4426 = vpack.c.bf16 %v3981, %v3981
        %v4458 = vunpack.c.l.b16 %v4135
        %v4459 = vunpack.c.l.b16 %v4136
        %v4460 = vunpack.c.l.b16 %v4137
        %v4461 = vunpack.c.l.b16 %v4138
        %v4462 = vunpack.c.l.b16 %v4139
        %v4463 = vunpack.c.l.b16 %v4140
        %v4464 = vunpack.c.l.b16 %v4141
        %v4465 = vunpack.c.l.b16 %v4142
        %v4466 = vunpack.c.l.b16 %v4143
        %v4467 = vunpack.c.l.b16 %v4144
        %v4468 = vunpack.c.l.b16 %v4145
        %v4469 = vunpack.c.l.b16 %v4146
        %v4470 = vunpack.c.l.b16 %v4147
        %v4471 = vunpack.c.l.b16 %v4148
        %v4472 = vunpack.c.l.b16 %v4149
        %v4473 = vunpack.c.l.b16 %v4150
        %v4474 = vunpack.c.l.b16 %v4151
        %v4475 = vunpack.c.l.b16 %v4152
        %v4476 = vunpack.c.l.b16 %v4153
        %v4477 = vunpack.c.l.b16 %v4154
        %v4478 = vunpack.c.l.b16 %v4155
        %v4479 = vunpack.c.l.b16 %v4156
        %v4480 = vunpack.c.l.b16 %v4157
        %v4481 = vunpack.c.l.b16 %v4158
        %v4482 = vunpack.c.l.b16 %v4159
        %v4483 = vunpack.c.l.b16 %v4160
        %v4484 = vunpack.c.l.b16 %v4161
        %v4485 = vunpack.c.l.b16 %v4162
        %v4486 = vunpack.c.l.b16 %v4163
        %v4487 = vunpack.c.l.b16 %v4164
        %v4488 = vunpack.c.l.b16 %v4165
        %v4489 = vpack.c.b16 %v2458, %v4458
        %v4490 = vpack.c.b16 %v4460, %v4459
        %v4491 = vpack.c.b16 %v4462, %v4461
        %v4492 = vpack.c.b16 %v4464, %v4463
        %v4493 = vpack.c.b16 %v4466, %v4465
        %v4494 = vpack.c.b16 %v4468, %v4467
        %v4495 = vpack.c.b16 %v4470, %v4469
        %v4496 = vpack.c.b16 %v4472, %v4471
        %v4497 = vpack.c.b16 %v4474, %v4473
        %v4498 = vpack.c.b16 %v4476, %v4475
        %v4499 = vpack.c.b16 %v4478, %v4477
        %v4500 = vpack.c.b16 %v4480, %v4479
        %v4501 = vpack.c.b16 %v4482, %v4481
        %v4502 = vpack.c.b16 %v4484, %v4483
        %v4503 = vpack.c.b16 %v4486, %v4485
        %v4504 = vpack.c.b16 %v4488, %v4487
        %v4535 = vunpack.c.l.b16 %v4166
        %v4536 = vunpack.c.l.b16 %v4167
        %v4537 = vunpack.c.l.b16 %v4168
        %v4538 = vunpack.c.l.b16 %v4169
        %v4539 = vunpack.c.l.b16 %v4170
        %v4540 = vunpack.c.l.b16 %v4171
        %v4541 = vunpack.c.l.b16 %v4172
        %v4542 = vunpack.c.l.b16 %v4173
        %v4543 = vunpack.c.l.b16 %v4174
        %v4544 = vunpack.c.l.b16 %v4175
        %v4545 = vunpack.c.l.b16 %v4176
        %v4546 = vunpack.c.l.b16 %v4177
        %v4547 = vunpack.c.l.b16 %v4178
        %v4548 = vunpack.c.l.b16 %v4179
        %v4549 = vunpack.c.l.b16 %v4180
        %v4550 = vunpack.c.l.b16 %v4181
        %v4551 = vunpack.c.l.b16 %v4182
        %v4552 = vunpack.c.l.b16 %v4183
        %v4553 = vunpack.c.l.b16 %v4184
        %v4554 = vunpack.c.l.b16 %v4185
        %v4555 = vunpack.c.l.b16 %v4186
        %v4556 = vunpack.c.l.b16 %v4187
        %v4557 = vunpack.c.l.b16 %v4188
        %v4558 = vunpack.c.l.b16 %v4189
        %v4559 = vunpack.c.l.b16 %v4190
        %v4560 = vunpack.c.l.b16 %v4191
        %v4561 = vunpack.c.l.b16 %v4192
        %v4562 = vunpack.c.l.b16 %v4193
        %v4563 = vunpack.c.l.b16 %v4194
        %v4564 = vunpack.c.l.b16 %v4195
        %v4565 = vpack.c.b16 %v4536, %v4535
        %v4566 = vpack.c.b16 %v4538, %v4537
        %v4567 = vpack.c.b16 %v4540, %v4539
        %v4568 = vpack.c.b16 %v4542, %v4541
        %v4569 = vpack.c.b16 %v4544, %v4543
        %v4570 = vpack.c.b16 %v4546, %v4545
        %v4571 = vpack.c.b16 %v4548, %v4547
        %v4572 = vpack.c.b16 %v4550, %v4549
        %v4573 = vpack.c.b16 %v4552, %v4551
        %v4574 = vpack.c.b16 %v4554, %v4553
        %v4575 = vpack.c.b16 %v4556, %v4555
        %v4576 = vpack.c.b16 %v4558, %v4557
        %v4577 = vpack.c.b16 %v4560, %v4559
        %v4578 = vpack.c.b16 %v4562, %v4561
        %v4579 = vpack.c.b16 %v4564, %v4563
        %4580 = vrot.lane.b32.xlu0 %v4565, 32
        %v4581 = vpop.permute.xlu0 %4580
        %4582 = vrot.lane.b32.xlu0 %v4566, 32
        %v4583 = vpop.permute.xlu0 %4582
        %4584 = vrot.lane.b32.xlu0 %v4567, 32
        %v4585 = vpop.permute.xlu0 %4584
        %4586 = vrot.lane.b32.xlu0 %v4568, 32
        %v4587 = vpop.permute.xlu0 %4586
        %4588 = vrot.lane.b32.xlu0 %v4569, 32
        %v4589 = vpop.permute.xlu0 %4588
        %4590 = vrot.lane.b32.xlu0 %v4570, 32
        %v4591 = vpop.permute.xlu0 %4590
        %4592 = vrot.lane.b32.xlu0 %v4571, 32
        %v4593 = vpop.permute.xlu0 %4592
        %4594 = vrot.lane.b32.xlu0 %v4572, 32
        %v4595 = vpop.permute.xlu0 %4594
        %4596 = vrot.lane.b32.xlu0 %v4573, 32
        %v4597 = vpop.permute.xlu0 %4596
        %4598 = vrot.lane.b32.xlu0 %v4574, 32
        %v4599 = vpop.permute.xlu0 %4598
        %4600 = vrot.lane.b32.xlu0 %v4575, 32
        %v4601 = vpop.permute.xlu0 %4600
        %4602 = vrot.lane.b32.xlu0 %v4576, 32
        %v4603 = vpop.permute.xlu0 %4602
        %4604 = vrot.lane.b32.xlu0 %v4577, 32
        %v4605 = vpop.permute.xlu0 %4604
        %4606 = vrot.lane.b32.xlu0 %v4578, 32
        %v4607 = vpop.permute.xlu0 %4606
        %4608 = vrot.lane.b32.xlu0 %v4579, 32
        %v4609 = vpop.permute.xlu0 %4608
        %v4641 = vunpack.c.l.b16 %v4319
        %v4642 = vunpack.c.l.b16 %v4320
        %v4643 = vunpack.c.l.b16 %v4321
        %v4644 = vunpack.c.l.b16 %v4322
        %v4645 = vunpack.c.l.b16 %v4323
        %v4646 = vunpack.c.l.b16 %v4324
        %v4647 = vunpack.c.l.b16 %v4325
        %v4648 = vunpack.c.l.b16 %v4326
        %v4649 = vunpack.c.l.b16 %v4327
        %v4650 = vunpack.c.l.b16 %v4328
        %v4651 = vunpack.c.l.b16 %v4329
        %v4652 = vunpack.c.l.b16 %v4330
        %v4653 = vunpack.c.l.b16 %v4331
        %v4654 = vunpack.c.l.b16 %v4332
        %v4655 = vunpack.c.l.b16 %v4333
        %v4656 = vunpack.c.l.b16 %v4334
        %v4657 = vunpack.c.l.b16 %v4335
        %v4658 = vunpack.c.l.b16 %v4336
        %v4659 = vunpack.c.l.b16 %v4337
        %v4660 = vunpack.c.l.b16 %v4338
        %v4661 = vunpack.c.l.b16 %v4339
        %v4662 = vunpack.c.l.b16 %v4340
        %v4663 = vunpack.c.l.b16 %v4341
        %v4664 = vunpack.c.l.b16 %v4342
        %v4665 = vunpack.c.l.b16 %v4343
        %v4666 = vunpack.c.l.b16 %v4344
        %v4667 = vunpack.c.l.b16 %v4345
        %v4668 = vunpack.c.l.b16 %v4346
        %v4669 = vunpack.c.l.b16 %v4347
        %v4670 = vunpack.c.l.b16 %v4348
        %v4671 = vunpack.c.l.b16 %v4349
        %v4672 = vpack.c.b16 %v4641, %v2647
        %v4673 = vpack.c.b16 %v4643, %v4642
        %v4674 = vpack.c.b16 %v4645, %v4644
        %v4675 = vpack.c.b16 %v4647, %v4646
        %v4676 = vpack.c.b16 %v4649, %v4648
        %v4677 = vpack.c.b16 %v4651, %v4650
        %v4678 = vpack.c.b16 %v4653, %v4652
        %v4679 = vpack.c.b16 %v4655, %v4654
        %v4680 = vpack.c.b16 %v4657, %v4656
        %v4681 = vpack.c.b16 %v4659, %v4658
        %v4682 = vpack.c.b16 %v4661, %v4660
        %v4683 = vpack.c.b16 %v4663, %v4662
        %v4684 = vpack.c.b16 %v4665, %v4664
        %v4685 = vpack.c.b16 %v4667, %v4666
        %v4686 = vpack.c.b16 %v4669, %v4668
        %v4687 = vpack.c.b16 %v4671, %v4670
        %4688 = vrot.lane.b32.xlu0 %v4672, 64
        %v4689 = vpop.permute.xlu0 %4688
        %4690 = vrot.lane.b32.xlu0 %v4673, 64
        %v4691 = vpop.permute.xlu0 %4690
        %4692 = vrot.lane.b32.xlu0 %v4674, 64
        %v4693 = vpop.permute.xlu0 %4692
        %4694 = vrot.lane.b32.xlu0 %v4675, 64
        %v4695 = vpop.permute.xlu0 %4694
        %4696 = vrot.lane.b32.xlu0 %v4676, 64
        %v4697 = vpop.permute.xlu0 %4696
        %4698 = vrot.lane.b32.xlu0 %v4677, 64
        %v4699 = vpop.permute.xlu0 %4698
        %4700 = vrot.lane.b32.xlu0 %v4678, 64
        %v4701 = vpop.permute.xlu0 %4700
        %4702 = vrot.lane.b32.xlu0 %v4679, 64
        %v4703 = vpop.permute.xlu0 %4702
        %4704 = vrot.lane.b32.xlu0 %v4680, 64
        %v4705 = vpop.permute.xlu0 %4704
        %4706 = vrot.lane.b32.xlu0 %v4681, 64
        %v4707 = vpop.permute.xlu0 %4706
        %4708 = vrot.lane.b32.xlu0 %v4682, 64
        %v4709 = vpop.permute.xlu0 %4708
        %4710 = vrot.lane.b32.xlu0 %v4683, 64
        %v4711 = vpop.permute.xlu0 %4710
        %4712 = vrot.lane.b32.xlu0 %v4684, 64
        %v4713 = vpop.permute.xlu0 %4712
        %4714 = vrot.lane.b32.xlu0 %v4685, 64
        %v4715 = vpop.permute.xlu0 %4714
        %4716 = vrot.lane.b32.xlu0 %v4686, 64
        %v4717 = vpop.permute.xlu0 %4716
        %4718 = vrot.lane.b32.xlu0 %v4687, 64
        %v4719 = vpop.permute.xlu0 %4718
        %v4752 = vunpack.c.l.b16 %v4393
        %v4753 = vunpack.c.l.b16 %v4394
        %v4754 = vunpack.c.l.b16 %v4395
        %v4755 = vunpack.c.l.b16 %v4396
        %v4756 = vunpack.c.l.b16 %v4397
        %v4757 = vunpack.c.l.b16 %v4398
        %v4758 = vunpack.c.l.b16 %v4399
        %v4759 = vunpack.c.l.b16 %v4400
        %v4760 = vunpack.c.l.b16 %v4401
        %v4761 = vunpack.c.l.b16 %v4402
        %v4762 = vunpack.c.l.b16 %v4403
        %v4763 = vunpack.c.l.b16 %v4404
        %v4764 = vunpack.c.l.b16 %v4405
        %v4765 = vunpack.c.l.b16 %v4406
        %v4766 = vunpack.c.l.b16 %v4407
        %v4767 = vunpack.c.l.b16 %v4408
        %v4768 = vunpack.c.l.b16 %v4409
        %v4769 = vunpack.c.l.b16 %v4410
        %v4770 = vunpack.c.l.b16 %v4411
        %v4771 = vunpack.c.l.b16 %v4412
        %v4772 = vunpack.c.l.b16 %v4413
        %v4773 = vunpack.c.l.b16 %v4414
        %v4774 = vunpack.c.l.b16 %v4415
        %v4775 = vunpack.c.l.b16 %v4416
        %v4776 = vunpack.c.l.b16 %v4417
        %v4777 = vunpack.c.l.b16 %v4418
        %v4778 = vunpack.c.l.b16 %v4419
        %v4779 = vunpack.c.l.b16 %v4420
        %v4780 = vunpack.c.l.b16 %v4421
        %v4781 = vunpack.c.l.b16 %v4422
        %v4782 = vunpack.c.l.b16 %v4423
        %v4783 = vunpack.c.l.b16 %v4424
        %v4784 = vpack.c.b16 %v4753, %v4752
        %v4785 = vpack.c.b16 %v4755, %v4754
        %v4786 = vpack.c.b16 %v4757, %v4756
        %v4787 = vpack.c.b16 %v4759, %v4758
        %v4788 = vpack.c.b16 %v4761, %v4760
        %v4789 = vpack.c.b16 %v4763, %v4762
        %v4790 = vpack.c.b16 %v4765, %v4764
        %v4791 = vpack.c.b16 %v4767, %v4766
        %v4792 = vpack.c.b16 %v4769, %v4768
        %v4793 = vpack.c.b16 %v4771, %v4770
        %v4794 = vpack.c.b16 %v4773, %v4772
        %v4795 = vpack.c.b16 %v4775, %v4774
        %v4796 = vpack.c.b16 %v4777, %v4776
        %v4797 = vpack.c.b16 %v4779, %v4778
        %v4798 = vpack.c.b16 %v4781, %v4780
        %v4799 = vpack.c.b16 %v4783, %v4782
        %4800 = vrot.lane.b32.xlu0 %v4784, 96
        %v4801 = vpop.permute.xlu0 %4800
        %4802 = vrot.lane.b32.xlu0 %v4785, 96
        %v4803 = vpop.permute.xlu0 %4802
        %4804 = vrot.lane.b32.xlu0 %v4786, 96
        %v4805 = vpop.permute.xlu0 %4804
        %4806 = vrot.lane.b32.xlu0 %v4787, 96
        %v4807 = vpop.permute.xlu0 %4806
        %4808 = vrot.lane.b32.xlu0 %v4788, 96
        %v4809 = vpop.permute.xlu0 %4808
        %4810 = vrot.lane.b32.xlu0 %v4789, 96
        %v4811 = vpop.permute.xlu0 %4810
        %4812 = vrot.lane.b32.xlu0 %v4790, 96
        %v4813 = vpop.permute.xlu0 %4812
        %4814 = vrot.lane.b32.xlu0 %v4791, 96
        %v4815 = vpop.permute.xlu0 %4814
        %4816 = vrot.lane.b32.xlu0 %v4792, 96
        %v4817 = vpop.permute.xlu0 %4816
        %4818 = vrot.lane.b32.xlu0 %v4793, 96
        %v4819 = vpop.permute.xlu0 %4818
        %4820 = vrot.lane.b32.xlu0 %v4794, 96
        %v4821 = vpop.permute.xlu0 %4820
        %4822 = vrot.lane.b32.xlu0 %v4795, 96
        %v4823 = vpop.permute.xlu0 %4822
        %4824 = vrot.lane.b32.xlu0 %v4796, 96
        %v4825 = vpop.permute.xlu0 %4824
        %4826 = vrot.lane.b32.xlu0 %v4797, 96
        %v4827 = vpop.permute.xlu0 %4826
        %4828 = vrot.lane.b32.xlu0 %v4798, 96
        %v4829 = vpop.permute.xlu0 %4828
        %4830 = vrot.lane.b32.xlu0 %v4799, 96
        %v4831 = vpop.permute.xlu0 %4830
        %v4834 = vunpack.c.l.b16 %v4425
        %v4835 = vunpack.c.l.b16 %v4426
        %v4836 = vpack.c.b16 %v4835, %v4834
        %v4854 = vsel %vm2860, %v4489, %v2584
        %v4857 = vsel %vm2860, %v4490, %v4581
        %v4860 = vsel %vm2860, %v4491, %v4583
        %v4863 = vsel %vm2860, %v4492, %v4585
        %v4866 = vsel %vm2860, %v4493, %v4587
        %v4869 = vsel %vm2860, %v4494, %v4589
        %v4872 = vsel %vm2860, %v4495, %v4591
        %v4875 = vsel %vm2860, %v4496, %v4593
        %v4878 = vsel %vm2860, %v4497, %v4595
        %v4881 = vsel %vm2860, %v4498, %v4597
        %v4884 = vsel %vm2860, %v4499, %v4599
        %v4887 = vsel %vm2860, %v4500, %v4601
        %v4890 = vsel %vm2860, %v4501, %v4603
        %v4893 = vsel %vm2860, %v4502, %v4605
        %v4896 = vsel %vm2860, %v4503, %v4607
        %v4899 = vsel %vm2860, %v4504, %v4609
        %v4901 = vsel %vm2909, %v4854, %v4689
        %v4903 = vsel %vm2909, %v4857, %v4691
        %v4905 = vsel %vm2909, %v4860, %v4693
        %v4907 = vsel %vm2909, %v4863, %v4695
        %v4909 = vsel %vm2909, %v4866, %v4697
        %v4911 = vsel %vm2909, %v4869, %v4699
        %v4913 = vsel %vm2909, %v4872, %v4701
        %v4915 = vsel %vm2909, %v4875, %v4703
        %v4917 = vsel %vm2909, %v4878, %v4705
        %v4919 = vsel %vm2909, %v4881, %v4707
        %v4921 = vsel %vm2909, %v4884, %v4709
        %v4923 = vsel %vm2909, %v4887, %v4711
        %v4925 = vsel %vm2909, %v4890, %v4713
        %v4927 = vsel %vm2909, %v4893, %v4715
        %v4929 = vsel %vm2909, %v4896, %v4717
        %v4931 = vsel %vm2909, %v4899, %v4719
        %v4933 = vsel %vm2942, %v4901, %v4801
        %v4936 = vsel %vm2942, %v4903, %v4803
        %v4939 = vsel %vm2942, %v4905, %v4805
        %v4942 = vsel %vm2942, %v4907, %v4807
        %v4945 = vsel %vm2942, %v4909, %v4809
        %v4948 = vsel %vm2942, %v4911, %v4811
        %v4951 = vsel %vm2942, %v4913, %v4813
        %v4954 = vsel %vm2942, %v4915, %v4815
        %v4957 = vsel %vm2942, %v4917, %v4817
        %v4960 = vsel %vm2942, %v4919, %v4819
        %v4963 = vsel %vm2942, %v4921, %v4821
        %v4966 = vsel %vm2942, %v4923, %v4823
        %v4969 = vsel %vm2942, %v4925, %v4825
        %v4972 = vsel %vm2942, %v4927, %v4827
        %v4975 = vsel %vm2942, %v4929, %v4829
        %v4978 = vsel %vm2942, %v4931, %v4831
        %s4980 = scalar_lea.vmem %s7, 128
        %v4981 = vld [vmem:[%s4980] sm:$0xf]
        %v4982 = vld [vmem:[%s4980 + $0x4] sm:$0xf]
        %v4983 = vld [vmem:[%s4980 + $0x8] sm:$0xf]
        %v4984 = vld [vmem:[%s4980 + $0xc] sm:$0xf]
        %v4985 = vld [vmem:[%s4980 + $0x10] sm:$0xf]
        %v4986 = vld [vmem:[%s4980 + $0x14] sm:$0xf]
        %v4987 = vld [vmem:[%s4980 + $0x18] sm:$0xf]
        %v4988 = vld [vmem:[%s4980 + $0x1c] sm:$0xf]
        %v4989 = vld [vmem:[%s4980 + $0x20] sm:$0xf]
        %v4990 = vld [vmem:[%s4980 + $0x24] sm:$0xf]
        %v4991 = vld [vmem:[%s4980 + $0x28] sm:$0xf]
        %v4992 = vld [vmem:[%s4980 + $0x2c] sm:$0xf]
        %v4993 = vld [vmem:[%s4980 + $0x30] sm:$0xf]
        %v4994 = vld [vmem:[%s4980 + $0x34] sm:$0xf]
        %v4995 = vld [vmem:[%s4980 + $0x38] sm:$0xf]
        %v4996 = vld [vmem:[%s4980 + $0x3c] sm:$0xf]
        %v4997 = vld [vmem:[%s4980 + $0x40] sm:$0xf]
        %v4998 = vld [vmem:[%s4980 + $0x44] sm:$0xf]
        %v4999 = vld [vmem:[%s4980 + $0x48] sm:$0xf]
        %v5000 = vld [vmem:[%s4980 + $0x4c] sm:$0xf]
        %v5001 = vld [vmem:[%s4980 + $0x50] sm:$0xf]
        %v5002 = vld [vmem:[%s4980 + $0x54] sm:$0xf]
        %v5003 = vld [vmem:[%s4980 + $0x58] sm:$0xf]
        %v5004 = vld [vmem:[%s4980 + $0x5c] sm:$0xf]
        %v5005 = vld [vmem:[%s4980 + $0x60] sm:$0xf]
        %v5006 = vld [vmem:[%s4980 + $0x64] sm:$0xf]
        %v5007 = vld [vmem:[%s4980 + $0x68] sm:$0xf]
        %v5008 = vld [vmem:[%s4980 + $0x6c] sm:$0xf]
        %v5009 = vld [vmem:[%s4980 + $0x70] sm:$0xf]
        %v5010 = vld [vmem:[%s4980 + $0x74] sm:$0xf]
        %v5011 = vld [vmem:[%s4980 + $0x78] sm:$0xf]
        %v5012 = vld [vmem:[%s4980 + $0x7c] sm:$0xf]
        %v5045 = vunpack.c.l.b16 %v4981
        %v5046 = vunpack.c.l.b16 %v4982
        %v5047 = vunpack.c.l.b16 %v4983
        %v5048 = vunpack.c.l.b16 %v4984
        %v5049 = vunpack.c.l.b16 %v4985
        %v5050 = vunpack.c.l.b16 %v4986
        %v5051 = vunpack.c.l.b16 %v4987
        %v5052 = vunpack.c.l.b16 %v4988
        %v5053 = vunpack.c.l.b16 %v4989
        %v5054 = vunpack.c.l.b16 %v4990
        %v5055 = vunpack.c.l.b16 %v4991
        %v5056 = vunpack.c.l.b16 %v4992
        %v5057 = vunpack.c.l.b16 %v4993
        %v5058 = vunpack.c.l.b16 %v4994
        %v5059 = vunpack.c.l.b16 %v4995
        %v5060 = vunpack.c.l.b16 %v4996
        %v5061 = vunpack.c.l.b16 %v4997
        %v5062 = vunpack.c.l.b16 %v4998
        %v5063 = vunpack.c.l.b16 %v4999
        %v5064 = vunpack.c.l.b16 %v5000
        %v5065 = vunpack.c.l.b16 %v5001
        %v5066 = vunpack.c.l.b16 %v5002
        %v5067 = vunpack.c.l.b16 %v5003
        %v5068 = vunpack.c.l.b16 %v5004
        %v5069 = vunpack.c.l.b16 %v5005
        %v5070 = vunpack.c.l.b16 %v5006
        %v5071 = vunpack.c.l.b16 %v5007
        %v5072 = vunpack.c.l.b16 %v5008
        %v5073 = vunpack.c.l.b16 %v5009
        %v5074 = vunpack.c.l.b16 %v5010
        %v5075 = vunpack.c.l.b16 %v5011
        %v5076 = vunpack.c.l.b16 %v5012
        %v5077 = vpack.c.b16 %v5046, %v5045
        %v5078 = vpack.c.b16 %v5048, %v5047
        %v5079 = vpack.c.b16 %v5050, %v5049
        %v5080 = vpack.c.b16 %v5052, %v5051
        %v5081 = vpack.c.b16 %v5054, %v5053
        %v5082 = vpack.c.b16 %v5056, %v5055
        %v5083 = vpack.c.b16 %v5058, %v5057
        %v5084 = vpack.c.b16 %v5060, %v5059
        %v5085 = vpack.c.b16 %v5062, %v5061
        %v5086 = vpack.c.b16 %v5064, %v5063
        %v5087 = vpack.c.b16 %v5066, %v5065
        %v5088 = vpack.c.b16 %v5068, %v5067
        %v5089 = vpack.c.b16 %v5070, %v5069
        %v5090 = vpack.c.b16 %v5072, %v5071
        %v5091 = vpack.c.b16 %v5074, %v5073
        %v5092 = vpack.c.b16 %v5076, %v5075
        %5109 = vmatpush.bf16.msra.mxu0 %v5084
        %5110 = vmatpush.bf16.msra.mxu0 %v5083
        %5111 = vmatpush.bf16.msra.mxu0 %v5082
        %5112 = vmatpush.bf16.msra.mxu0 %v5081
        %5113 = vmatpush.bf16.msra.mxu0 %v5080
        %5114 = vmatpush.bf16.msra.mxu0 %v5079
        %5115 = vmatpush.bf16.msra.mxu0 %v5078
        %5116 = vmatpush.bf16.msra.mxu0 %v5077
        %5117 = vmatmul.bf16.gmra.mxu0 %v4933
        %v5118 = vpop.f32.mrf.mxu0
        %v5119 = vadd.f32 0.0, %v5118
        %v5120 = vpop.f32.mrf.mxu0
        %v5121 = vadd.f32 0.0, %v5120
        %5122 = vmatmul.bf16.gmra.mxu0 %v4936
        %v5123 = vpop.f32.mrf.mxu0
        %v5124 = vadd.f32 0.0, %v5123
        %v5125 = vpop.f32.mrf.mxu0
        %v5126 = vadd.f32 0.0, %v5125
        %5127 = vmatmul.bf16.gmra.mxu0 %v4939
        %v5128 = vpop.f32.mrf.mxu0
        %v5129 = vadd.f32 0.0, %v5128
        %v5130 = vpop.f32.mrf.mxu0
        %v5131 = vadd.f32 0.0, %v5130
        %5132 = vmatmul.bf16.gmra.mxu0 %v4942
        %v5133 = vpop.f32.mrf.mxu0
        %v5134 = vadd.f32 0.0, %v5133
        %v5135 = vpop.f32.mrf.mxu0
        %v5136 = vadd.f32 0.0, %v5135
        %5137 = vmatmul.bf16.gmra.mxu0 %v4945
        %v5138 = vpop.f32.mrf.mxu0
        %v5139 = vadd.f32 0.0, %v5138
        %v5140 = vpop.f32.mrf.mxu0
        %v5141 = vadd.f32 0.0, %v5140
        %5142 = vmatmul.bf16.gmra.mxu0 %v4948
        %v5143 = vpop.f32.mrf.mxu0
        %v5144 = vadd.f32 0.0, %v5143
        %v5145 = vpop.f32.mrf.mxu0
        %v5146 = vadd.f32 0.0, %v5145
        %5147 = vmatmul.bf16.gmra.mxu0 %v4951
        %v5148 = vpop.f32.mrf.mxu0
        %v5149 = vadd.f32 0.0, %v5148
        %v5150 = vpop.f32.mrf.mxu0
        %v5151 = vadd.f32 0.0, %v5150
        %5152 = vmatmul.bf16.gmra.mxu0 %v4954
        %v5153 = vpop.f32.mrf.mxu0
        %v5154 = vadd.f32 0.0, %v5153
        %v5155 = vpop.f32.mrf.mxu0
        %v5156 = vadd.f32 0.0, %v5155
        %5157 = vmatmul.bf16.gmra.mxu0 %v4957
        %v5158 = vpop.f32.mrf.mxu0
        %v5159 = vadd.f32 0.0, %v5158
        %v5160 = vpop.f32.mrf.mxu0
        %v5161 = vadd.f32 0.0, %v5160
        %5162 = vmatmul.bf16.gmra.mxu0 %v4960
        %v5163 = vpop.f32.mrf.mxu0
        %v5164 = vadd.f32 0.0, %v5163
        %v5165 = vpop.f32.mrf.mxu0
        %v5166 = vadd.f32 0.0, %v5165
        %5167 = vmatmul.bf16.gmra.mxu0 %v4963
        %v5168 = vpop.f32.mrf.mxu0
        %v5169 = vadd.f32 0.0, %v5168
        %v5170 = vpop.f32.mrf.mxu0
        %v5171 = vadd.f32 0.0, %v5170
        %5172 = vmatmul.bf16.gmra.mxu0 %v4966
        %v5173 = vpop.f32.mrf.mxu0
        %v5174 = vadd.f32 0.0, %v5173
        %v5175 = vpop.f32.mrf.mxu0
        %v5176 = vadd.f32 0.0, %v5175
        %5177 = vmatmul.bf16.gmra.mxu0 %v4969
        %v5178 = vpop.f32.mrf.mxu0
        %v5179 = vadd.f32 0.0, %v5178
        %v5180 = vpop.f32.mrf.mxu0
        %v5181 = vadd.f32 0.0, %v5180
        %5182 = vmatmul.bf16.gmra.mxu0 %v4972
        %v5183 = vpop.f32.mrf.mxu0
        %v5184 = vadd.f32 0.0, %v5183
        %v5185 = vpop.f32.mrf.mxu0
        %v5186 = vadd.f32 0.0, %v5185
        %5187 = vmatmul.bf16.gmra.mxu0 %v4975
        %v5188 = vpop.f32.mrf.mxu0
        %v5189 = vadd.f32 0.0, %v5188
        %v5190 = vpop.f32.mrf.mxu0
        %v5191 = vadd.f32 0.0, %v5190
        %5192 = vmatmul.bf16.gmra.mxu0 %v4978
        %v5193 = vpop.f32.mrf.mxu0
        %v5194 = vadd.f32 0.0, %v5193
        %v5195 = vpop.f32.mrf.mxu0
        %v5196 = vadd.f32 0.0, %v5195
        %5197 = vdwg.mxu0
        %5198 = vmatpush.bf16.msra.mxu0 %v5092
        %5199 = vmatpush.bf16.msra.mxu0 %v5091
        %5200 = vmatpush.bf16.msra.mxu0 %v5090
        %5201 = vmatpush.bf16.msra.mxu0 %v5089
        %5202 = vmatpush.bf16.msra.mxu0 %v5088
        %5203 = vmatpush.bf16.msra.mxu0 %v5087
        %5204 = vmatpush.bf16.msra.mxu0 %v5086
        %5205 = vmatpush.bf16.msra.mxu0 %v5085
        %5206 = vmatmul.bf16.gmra.mxu0 %v4565
        %v5207 = vpop.f32.mrf.mxu0
        %v5208 = vadd.f32 %v5119, %v5207
        %v5209 = vpop.f32.mrf.mxu0
        %v5210 = vadd.f32 %v5121, %v5209
        %5211 = vmatmul.bf16.gmra.mxu0 %v4566
        %v5212 = vpop.f32.mrf.mxu0
        %v5213 = vadd.f32 %v5124, %v5212
        %v5214 = vpop.f32.mrf.mxu0
        %v5215 = vadd.f32 %v5126, %v5214
        %5216 = vmatmul.bf16.gmra.mxu0 %v4567
        %v5217 = vpop.f32.mrf.mxu0
        %v5218 = vadd.f32 %v5129, %v5217
        %v5219 = vpop.f32.mrf.mxu0
        %v5220 = vadd.f32 %v5131, %v5219
        %5221 = vmatmul.bf16.gmra.mxu0 %v4568
        %v5222 = vpop.f32.mrf.mxu0
        %v5223 = vadd.f32 %v5134, %v5222
        %v5224 = vpop.f32.mrf.mxu0
        %v5225 = vadd.f32 %v5136, %v5224
        %5226 = vmatmul.bf16.gmra.mxu0 %v4569
        %v5227 = vpop.f32.mrf.mxu0
        %v5228 = vadd.f32 %v5139, %v5227
        %v5229 = vpop.f32.mrf.mxu0
        %v5230 = vadd.f32 %v5141, %v5229
        %5231 = vmatmul.bf16.gmra.mxu0 %v4570
        %v5232 = vpop.f32.mrf.mxu0
        %v5233 = vadd.f32 %v5144, %v5232
        %v5234 = vpop.f32.mrf.mxu0
        %v5235 = vadd.f32 %v5146, %v5234
        %5236 = vmatmul.bf16.gmra.mxu0 %v4571
        %v5237 = vpop.f32.mrf.mxu0
        %v5238 = vadd.f32 %v5149, %v5237
        %v5239 = vpop.f32.mrf.mxu0
        %v5240 = vadd.f32 %v5151, %v5239
        %5241 = vmatmul.bf16.gmra.mxu0 %v4572
        %v5242 = vpop.f32.mrf.mxu0
        %v5243 = vadd.f32 %v5154, %v5242
        %v5244 = vpop.f32.mrf.mxu0
        %v5245 = vadd.f32 %v5156, %v5244
        %5246 = vmatmul.bf16.gmra.mxu0 %v4573
        %v5247 = vpop.f32.mrf.mxu0
        %v5248 = vadd.f32 %v5159, %v5247
        %v5249 = vpop.f32.mrf.mxu0
        %v5250 = vadd.f32 %v5161, %v5249
        %5251 = vmatmul.bf16.gmra.mxu0 %v4574
        %v5252 = vpop.f32.mrf.mxu0
        %v5253 = vadd.f32 %v5164, %v5252
        %v5254 = vpop.f32.mrf.mxu0
        %v5255 = vadd.f32 %v5166, %v5254
        %5256 = vmatmul.bf16.gmra.mxu0 %v4575
        %v5257 = vpop.f32.mrf.mxu0
        %v5258 = vadd.f32 %v5169, %v5257
        %v5259 = vpop.f32.mrf.mxu0
        %v5260 = vadd.f32 %v5171, %v5259
        %5261 = vmatmul.bf16.gmra.mxu0 %v4576
        %v5262 = vpop.f32.mrf.mxu0
        %v5263 = vadd.f32 %v5174, %v5262
        %v5264 = vpop.f32.mrf.mxu0
        %v5265 = vadd.f32 %v5176, %v5264
        %5266 = vmatmul.bf16.gmra.mxu0 %v4577
        %v5267 = vpop.f32.mrf.mxu0
        %v5268 = vadd.f32 %v5179, %v5267
        %v5269 = vpop.f32.mrf.mxu0
        %v5270 = vadd.f32 %v5181, %v5269
        %5271 = vmatmul.bf16.gmra.mxu0 %v4578
        %v5272 = vpop.f32.mrf.mxu0
        %v5273 = vadd.f32 %v5184, %v5272
        %v5274 = vpop.f32.mrf.mxu0
        %v5275 = vadd.f32 %v5186, %v5274
        %5276 = vmatmul.bf16.gmra.mxu0 %v4579
        %v5277 = vpop.f32.mrf.mxu0
        %v5278 = vadd.f32 %v5189, %v5277
        %v5279 = vpop.f32.mrf.mxu0
        %v5280 = vadd.f32 %v5191, %v5279
        %5281 = vmatmul.bf16.gmra.mxu0 %v4836
        %v5282 = vpop.f32.mrf.mxu0
        %v5283 = vadd.f32 %v5194, %v5282
        %v5284 = vpop.f32.mrf.mxu0
        %v5285 = vadd.f32 %v5196, %v5284
        %5286 = vdwg.mxu0
        %s5287 = scalar_lea.vmem %s8, 1
        %v5288 = vld [vmem:[%s5287] sm:$0x1]
        %v5290 = vperm.slane %v5288, 0
        %v5292 = vmul.f32 %v5208, %v5290
        %v5293 = vmul.f32 %v5210, %v5290
        %v5294 = vmul.f32 %v5213, %v5290
        %v5295 = vmul.f32 %v5215, %v5290
        %v5296 = vmul.f32 %v5218, %v5290
        %v5297 = vmul.f32 %v5220, %v5290
        %v5298 = vmul.f32 %v5223, %v5290
        %v5299 = vmul.f32 %v5225, %v5290
        %v5300 = vmul.f32 %v5228, %v5290
        %v5301 = vmul.f32 %v5230, %v5290
        %v5302 = vmul.f32 %v5233, %v5290
        %v5303 = vmul.f32 %v5235, %v5290
        %v5304 = vmul.f32 %v5238, %v5290
        %v5305 = vmul.f32 %v5240, %v5290
        %v5306 = vmul.f32 %v5243, %v5290
        %v5307 = vmul.f32 %v5245, %v5290
        %v5308 = vmul.f32 %v5248, %v5290
        %v5309 = vmul.f32 %v5250, %v5290
        %v5310 = vmul.f32 %v5253, %v5290
        %v5311 = vmul.f32 %v5255, %v5290
        %v5312 = vmul.f32 %v5258, %v5290
        %v5313 = vmul.f32 %v5260, %v5290
        %v5314 = vmul.f32 %v5263, %v5290
        %v5315 = vmul.f32 %v5265, %v5290
        %v5316 = vmul.f32 %v5268, %v5290
        %v5317 = vmul.f32 %v5270, %v5290
        %v5318 = vmul.f32 %v5273, %v5290
        %v5319 = vmul.f32 %v5275, %v5290
        %v5320 = vmul.f32 %v5278, %v5290
        %v5321 = vmul.f32 %v5280, %v5290
        %v5322 = vmul.f32 %v5283, %v5290
        %v5323 = vmul.f32 %v5285, %v5290
        %s5324 = scalar_lea.vmem %s9, 1
        %v5325 = vld [vmem:[%s5324] sm:$0x1]
        %v5327 = vperm.slane %v5325, 0
        %v5329 = vadd.f32 %v5292, %v5327
        %v5330 = vadd.f32 %v5293, %v5327
        %v5331 = vadd.f32 %v5294, %v5327
        %v5332 = vadd.f32 %v5295, %v5327
        %v5333 = vadd.f32 %v5296, %v5327
        %v5334 = vadd.f32 %v5297, %v5327
        %v5335 = vadd.f32 %v5298, %v5327
        %v5336 = vadd.f32 %v5299, %v5327
        %v5337 = vadd.f32 %v5300, %v5327
        %v5338 = vadd.f32 %v5301, %v5327
        %v5339 = vadd.f32 %v5302, %v5327
        %v5340 = vadd.f32 %v5303, %v5327
        %v5341 = vadd.f32 %v5304, %v5327
        %v5342 = vadd.f32 %v5305, %v5327
        %v5343 = vadd.f32 %v5306, %v5327
        %v5344 = vadd.f32 %v5307, %v5327
        %v5345 = vadd.f32 %v5308, %v5327
        %v5346 = vadd.f32 %v5309, %v5327
        %v5347 = vadd.f32 %v5310, %v5327
        %v5348 = vadd.f32 %v5311, %v5327
        %v5349 = vadd.f32 %v5312, %v5327
        %v5350 = vadd.f32 %v5313, %v5327
        %v5351 = vadd.f32 %v5314, %v5327
        %v5352 = vadd.f32 %v5315, %v5327
        %v5353 = vadd.f32 %v5316, %v5327
        %v5354 = vadd.f32 %v5317, %v5327
        %v5355 = vadd.f32 %v5318, %v5327
        %v5356 = vadd.f32 %v5319, %v5327
        %v5357 = vadd.f32 %v5320, %v5327
        %v5358 = vadd.f32 %v5321, %v5327
        %v5359 = vadd.f32 %v5322, %v5327
        %v5360 = vadd.f32 %v5323, %v5327
        %v5361 = vmax.f32 %v5329, 0.0
        %v5362 = vmax.f32 %v5330, 0.0
        %v5363 = vmax.f32 %v5331, 0.0
        %v5364 = vmax.f32 %v5332, 0.0
        %v5365 = vmax.f32 %v5333, 0.0
        %v5366 = vmax.f32 %v5334, 0.0
        %v5367 = vmax.f32 %v5335, 0.0
        %v5368 = vmax.f32 %v5336, 0.0
        %v5369 = vmax.f32 %v5337, 0.0
        %v5370 = vmax.f32 %v5338, 0.0
        %v5371 = vmax.f32 %v5339, 0.0
        %v5372 = vmax.f32 %v5340, 0.0
        %v5373 = vmax.f32 %v5341, 0.0
        %v5374 = vmax.f32 %v5342, 0.0
        %v5375 = vmax.f32 %v5343, 0.0
        %v5376 = vmax.f32 %v5344, 0.0
        %v5377 = vmax.f32 %v5345, 0.0
        %v5378 = vmax.f32 %v5346, 0.0
        %v5379 = vmax.f32 %v5347, 0.0
        %v5380 = vmax.f32 %v5348, 0.0
        %v5381 = vmax.f32 %v5349, 0.0
        %v5382 = vmax.f32 %v5350, 0.0
        %v5383 = vmax.f32 %v5351, 0.0
        %v5384 = vmax.f32 %v5352, 0.0
        %v5385 = vmax.f32 %v5353, 0.0
        %v5386 = vmax.f32 %v5354, 0.0
        %v5387 = vmax.f32 %v5355, 0.0
        %v5388 = vmax.f32 %v5356, 0.0
        %v5389 = vmax.f32 %v5357, 0.0
        %v5390 = vmax.f32 %v5358, 0.0
        %v5391 = vmax.f32 %v5359, 0.0
        %v5392 = vmax.f32 %v5360, 0.0
        %v5393 = vpack.c.bf16 %v5362, %v5361
        %v5394 = vpack.c.bf16 %v5364, %v5363
        %v5395 = vpack.c.bf16 %v5366, %v5365
        %v5396 = vpack.c.bf16 %v5368, %v5367
        %v5397 = vpack.c.bf16 %v5370, %v5369
        %v5398 = vpack.c.bf16 %v5372, %v5371
        %v5399 = vpack.c.bf16 %v5374, %v5373
        %v5400 = vpack.c.bf16 %v5376, %v5375
        %v5401 = vpack.c.bf16 %v5378, %v5377
        %v5402 = vpack.c.bf16 %v5380, %v5379
        %v5403 = vpack.c.bf16 %v5382, %v5381
        %v5404 = vpack.c.bf16 %v5384, %v5383
        %v5405 = vpack.c.bf16 %v5386, %v5385
        %v5406 = vpack.c.bf16 %v5388, %v5387
        %v5407 = vpack.c.bf16 %v5390, %v5389
        %v5408 = vpack.c.bf16 %v5392, %v5391
        %s5409 = scalar_lea.vmem %s10, 64
        %v5410 = vld [vmem:[%s5409] sm:$0xf]
        %v5411 = vld [vmem:[%s5409 + $0x4] sm:$0xf]
        %v5412 = vld [vmem:[%s5409 + $0x8] sm:$0xf]
        %v5413 = vld [vmem:[%s5409 + $0xc] sm:$0xf]
        %v5414 = vld [vmem:[%s5409 + $0x10] sm:$0xf]
        %v5415 = vld [vmem:[%s5409 + $0x14] sm:$0xf]
        %v5416 = vld [vmem:[%s5409 + $0x18] sm:$0xf]
        %v5417 = vld [vmem:[%s5409 + $0x1c] sm:$0xf]
        %v5418 = vld [vmem:[%s5409 + $0x20] sm:$0xf]
        %v5419 = vld [vmem:[%s5409 + $0x24] sm:$0xf]
        %v5420 = vld [vmem:[%s5409 + $0x28] sm:$0xf]
        %v5421 = vld [vmem:[%s5409 + $0x2c] sm:$0xf]
        %v5422 = vld [vmem:[%s5409 + $0x30] sm:$0xf]
        %v5423 = vld [vmem:[%s5409 + $0x34] sm:$0xf]
        %v5424 = vld [vmem:[%s5409 + $0x38] sm:$0xf]
        %v5425 = vld [vmem:[%s5409 + $0x3c] sm:$0xf]
        %v5442 = vunpack.c.l.b16 %v5410
        %v5443 = vunpack.c.l.b16 %v5411
        %v5444 = vunpack.c.l.b16 %v5412
        %v5445 = vunpack.c.l.b16 %v5413
        %v5446 = vunpack.c.l.b16 %v5414
        %v5447 = vunpack.c.l.b16 %v5415
        %v5448 = vunpack.c.l.b16 %v5416
        %v5449 = vunpack.c.l.b16 %v5417
        %v5450 = vunpack.c.l.b16 %v5418
        %v5451 = vunpack.c.l.b16 %v5419
        %v5452 = vunpack.c.l.b16 %v5420
        %v5453 = vunpack.c.l.b16 %v5421
        %v5454 = vunpack.c.l.b16 %v5422
        %v5455 = vunpack.c.l.b16 %v5423
        %v5456 = vunpack.c.l.b16 %v5424
        %v5457 = vunpack.c.l.b16 %v5425
        %v5458 = vpack.c.b16 %v5443, %v5442
        %v5459 = vpack.c.b16 %v5445, %v5444
        %v5460 = vpack.c.b16 %v5447, %v5446
        %v5461 = vpack.c.b16 %v5449, %v5448
        %v5462 = vpack.c.b16 %v5451, %v5450
        %v5463 = vpack.c.b16 %v5453, %v5452
        %v5464 = vpack.c.b16 %v5455, %v5454
        %v5465 = vpack.c.b16 %v5457, %v5456
        %5474 = vmatpush.bf16.msra.mxu0 %v5465
        %5475 = vmatpush.bf16.msra.mxu0 %v5464
        %5476 = vmatpush.bf16.msra.mxu0 %v5463
        %5477 = vmatpush.bf16.msra.mxu0 %v5462
        %5478 = vmatpush.bf16.msra.mxu0 %v5461
        %5479 = vmatpush.bf16.msra.mxu0 %v5460
        %5480 = vmatpush.bf16.msra.mxu0 %v5459
        %5481 = vmatpush.bf16.msra.mxu0 %v5458
        %5482 = vmatmul.bf16.gmra.mxu0 %v5393
        %v5483 = vpop.f32.mrf.mxu0
        %v5484 = vadd.f32 0.0, %v5483
        %v5485 = vpop.f32.mrf.mxu0
        %v5486 = vadd.f32 0.0, %v5485
        %5487 = vmatmul.bf16.gmra.mxu0 %v5394
        %v5488 = vpop.f32.mrf.mxu0
        %v5489 = vadd.f32 0.0, %v5488
        %v5490 = vpop.f32.mrf.mxu0
        %v5491 = vadd.f32 0.0, %v5490
        %5492 = vmatmul.bf16.gmra.mxu0 %v5395
        %v5493 = vpop.f32.mrf.mxu0
        %v5494 = vadd.f32 0.0, %v5493
        %v5495 = vpop.f32.mrf.mxu0
        %v5496 = vadd.f32 0.0, %v5495
        %5497 = vmatmul.bf16.gmra.mxu0 %v5396
        %v5498 = vpop.f32.mrf.mxu0
        %v5499 = vadd.f32 0.0, %v5498
        %v5500 = vpop.f32.mrf.mxu0
        %v5501 = vadd.f32 0.0, %v5500
        %5502 = vmatmul.bf16.gmra.mxu0 %v5397
        %v5503 = vpop.f32.mrf.mxu0
        %v5504 = vadd.f32 0.0, %v5503
        %v5505 = vpop.f32.mrf.mxu0
        %v5506 = vadd.f32 0.0, %v5505
        %5507 = vmatmul.bf16.gmra.mxu0 %v5398
        %v5508 = vpop.f32.mrf.mxu0
        %v5509 = vadd.f32 0.0, %v5508
        %v5510 = vpop.f32.mrf.mxu0
        %v5511 = vadd.f32 0.0, %v5510
        %5512 = vmatmul.bf16.gmra.mxu0 %v5399
        %v5513 = vpop.f32.mrf.mxu0
        %v5514 = vadd.f32 0.0, %v5513
        %v5515 = vpop.f32.mrf.mxu0
        %v5516 = vadd.f32 0.0, %v5515
        %5517 = vmatmul.bf16.gmra.mxu0 %v5400
        %v5518 = vpop.f32.mrf.mxu0
        %v5519 = vadd.f32 0.0, %v5518
        %v5520 = vpop.f32.mrf.mxu0
        %v5521 = vadd.f32 0.0, %v5520
        %5522 = vmatmul.bf16.gmra.mxu0 %v5401
        %v5523 = vpop.f32.mrf.mxu0
        %v5524 = vadd.f32 0.0, %v5523
        %v5525 = vpop.f32.mrf.mxu0
        %v5526 = vadd.f32 0.0, %v5525
        %5527 = vmatmul.bf16.gmra.mxu0 %v5402
        %v5528 = vpop.f32.mrf.mxu0
        %v5529 = vadd.f32 0.0, %v5528
        %v5530 = vpop.f32.mrf.mxu0
        %v5531 = vadd.f32 0.0, %v5530
        %5532 = vmatmul.bf16.gmra.mxu0 %v5403
        %v5533 = vpop.f32.mrf.mxu0
        %v5534 = vadd.f32 0.0, %v5533
        %v5535 = vpop.f32.mrf.mxu0
        %v5536 = vadd.f32 0.0, %v5535
        %5537 = vmatmul.bf16.gmra.mxu0 %v5404
        %v5538 = vpop.f32.mrf.mxu0
        %v5539 = vadd.f32 0.0, %v5538
        %v5540 = vpop.f32.mrf.mxu0
        %v5541 = vadd.f32 0.0, %v5540
        %5542 = vmatmul.bf16.gmra.mxu0 %v5405
        %v5543 = vpop.f32.mrf.mxu0
        %v5544 = vadd.f32 0.0, %v5543
        %v5545 = vpop.f32.mrf.mxu0
        %v5546 = vadd.f32 0.0, %v5545
        %5547 = vmatmul.bf16.gmra.mxu0 %v5406
        %v5548 = vpop.f32.mrf.mxu0
        %v5549 = vadd.f32 0.0, %v5548
        %v5550 = vpop.f32.mrf.mxu0
        %v5551 = vadd.f32 0.0, %v5550
        %5552 = vmatmul.bf16.gmra.mxu0 %v5407
        %v5553 = vpop.f32.mrf.mxu0
        %v5554 = vadd.f32 0.0, %v5553
        %v5555 = vpop.f32.mrf.mxu0
        %v5556 = vadd.f32 0.0, %v5555
        %5557 = vmatmul.bf16.gmra.mxu0 %v5408
        %v5558 = vpop.f32.mrf.mxu0
        %v5559 = vadd.f32 0.0, %v5558
        %v5560 = vpop.f32.mrf.mxu0
        %v5561 = vadd.f32 0.0, %v5560
        %5562 = vdwg.mxu0
        %s5563 = scalar_lea.vmem %s11, 1
        %v5564 = vld [vmem:[%s5563] sm:$0x1]
        %v5566 = vperm.slane %v5564, 0
        %v5568 = vmul.f32 %v5484, %v5566
        %v5569 = vmul.f32 %v5486, %v5566
        %v5570 = vmul.f32 %v5489, %v5566
        %v5571 = vmul.f32 %v5491, %v5566
        %v5572 = vmul.f32 %v5494, %v5566
        %v5573 = vmul.f32 %v5496, %v5566
        %v5574 = vmul.f32 %v5499, %v5566
        %v5575 = vmul.f32 %v5501, %v5566
        %v5576 = vmul.f32 %v5504, %v5566
        %v5577 = vmul.f32 %v5506, %v5566
        %v5578 = vmul.f32 %v5509, %v5566
        %v5579 = vmul.f32 %v5511, %v5566
        %v5580 = vmul.f32 %v5514, %v5566
        %v5581 = vmul.f32 %v5516, %v5566
        %v5582 = vmul.f32 %v5519, %v5566
        %v5583 = vmul.f32 %v5521, %v5566
        %v5584 = vmul.f32 %v5524, %v5566
        %v5585 = vmul.f32 %v5526, %v5566
        %v5586 = vmul.f32 %v5529, %v5566
        %v5587 = vmul.f32 %v5531, %v5566
        %v5588 = vmul.f32 %v5534, %v5566
        %v5589 = vmul.f32 %v5536, %v5566
        %v5590 = vmul.f32 %v5539, %v5566
        %v5591 = vmul.f32 %v5541, %v5566
        %v5592 = vmul.f32 %v5544, %v5566
        %v5593 = vmul.f32 %v5546, %v5566
        %v5594 = vmul.f32 %v5549, %v5566
        %v5595 = vmul.f32 %v5551, %v5566
        %v5596 = vmul.f32 %v5554, %v5566
        %v5597 = vmul.f32 %v5556, %v5566
        %v5598 = vmul.f32 %v5559, %v5566
        %v5599 = vmul.f32 %v5561, %v5566
        %v5600 = vadd.f32 %v3642, %v5568
        %v5601 = vadd.f32 %v3643, %v5569
        %v5602 = vadd.f32 %v3644, %v5570
        %v5603 = vadd.f32 %v3645, %v5571
        %v5604 = vadd.f32 %v3646, %v5572
        %v5605 = vadd.f32 %v3647, %v5573
        %v5606 = vadd.f32 %v3648, %v5574
        %v5607 = vadd.f32 %v3649, %v5575
        %v5608 = vadd.f32 %v3650, %v5576
        %v5609 = vadd.f32 %v3651, %v5577
        %v5610 = vadd.f32 %v3652, %v5578
        %v5611 = vadd.f32 %v3653, %v5579
        %v5612 = vadd.f32 %v3654, %v5580
        %v5613 = vadd.f32 %v3655, %v5581
        %v5614 = vadd.f32 %v3656, %v5582
        %v5615 = vadd.f32 %v3657, %v5583
        %v5616 = vadd.f32 %v3658, %v5584
        %v5617 = vadd.f32 %v3659, %v5585
        %v5618 = vadd.f32 %v3660, %v5586
        %v5619 = vadd.f32 %v3661, %v5587
        %v5620 = vadd.f32 %v3662, %v5588
        %v5621 = vadd.f32 %v3663, %v5589
        %v5622 = vadd.f32 %v3664, %v5590
        %v5623 = vadd.f32 %v3665, %v5591
        %v5624 = vadd.f32 %v3666, %v5592
        %v5625 = vadd.f32 %v3667, %v5593
        %v5626 = vadd.f32 %v3668, %v5594
        %v5627 = vadd.f32 %v3669, %v5595
        %v5628 = vadd.f32 %v3670, %v5596
        %v5629 = vadd.f32 %v3671, %v5597
        %v5630 = vadd.f32 %v3672, %v5598
        %v5631 = vadd.f32 %v3673, %v5599
        %s5632 = scalar_lea.vmem %s12, 1
        %v5633 = vld [vmem:[%s5632] sm:$0x1]
        %v5635 = vperm.slane %v5633, 0
        %v5637 = vadd.f32 %v5600, %v5635
        %v5638 = vadd.f32 %v5601, %v5635
        %v5639 = vadd.f32 %v5602, %v5635
        %v5640 = vadd.f32 %v5603, %v5635
        %v5641 = vadd.f32 %v5604, %v5635
        %v5642 = vadd.f32 %v5605, %v5635
        %v5643 = vadd.f32 %v5606, %v5635
        %v5644 = vadd.f32 %v5607, %v5635
        %v5645 = vadd.f32 %v5608, %v5635
        %v5646 = vadd.f32 %v5609, %v5635
        %v5647 = vadd.f32 %v5610, %v5635
        %v5648 = vadd.f32 %v5611, %v5635
        %v5649 = vadd.f32 %v5612, %v5635
        %v5650 = vadd.f32 %v5613, %v5635
        %v5651 = vadd.f32 %v5614, %v5635
        %v5652 = vadd.f32 %v5615, %v5635
        %v5653 = vadd.f32 %v5616, %v5635
        %v5654 = vadd.f32 %v5617, %v5635
        %v5655 = vadd.f32 %v5618, %v5635
        %v5656 = vadd.f32 %v5619, %v5635
        %v5657 = vadd.f32 %v5620, %v5635
        %v5658 = vadd.f32 %v5621, %v5635
        %v5659 = vadd.f32 %v5622, %v5635
        %v5660 = vadd.f32 %v5623, %v5635
        %v5661 = vadd.f32 %v5624, %v5635
        %v5662 = vadd.f32 %v5625, %v5635
        %v5663 = vadd.f32 %v5626, %v5635
        %v5664 = vadd.f32 %v5627, %v5635
        %v5665 = vadd.f32 %v5628, %v5635
        %v5666 = vadd.f32 %v5629, %v5635
        %v5667 = vadd.f32 %v5630, %v5635
        %v5668 = vadd.f32 %v5631, %v5635
        %v5669 = vmax.f32 %v5637, 0.0
        %v5670 = vmax.f32 %v5638, 0.0
        %v5671 = vmax.f32 %v5639, 0.0
        %v5672 = vmax.f32 %v5640, 0.0
        %v5673 = vmax.f32 %v5641, 0.0
        %v5674 = vmax.f32 %v5642, 0.0
        %v5675 = vmax.f32 %v5643, 0.0
        %v5676 = vmax.f32 %v5644, 0.0
        %v5677 = vmax.f32 %v5645, 0.0
        %v5678 = vmax.f32 %v5646, 0.0
        %v5679 = vmax.f32 %v5647, 0.0
        %v5680 = vmax.f32 %v5648, 0.0
        %v5681 = vmax.f32 %v5649, 0.0
        %v5682 = vmax.f32 %v5650, 0.0
        %v5683 = vmax.f32 %v5651, 0.0
        %v5684 = vmax.f32 %v5652, 0.0
        %v5685 = vmax.f32 %v5653, 0.0
        %v5686 = vmax.f32 %v5654, 0.0
        %v5687 = vmax.f32 %v5655, 0.0
        %v5688 = vmax.f32 %v5656, 0.0
        %v5689 = vmax.f32 %v5657, 0.0
        %v5690 = vmax.f32 %v5658, 0.0
        %v5691 = vmax.f32 %v5659, 0.0
        %v5692 = vmax.f32 %v5660, 0.0
        %v5693 = vmax.f32 %v5661, 0.0
        %v5694 = vmax.f32 %v5662, 0.0
        %v5695 = vmax.f32 %v5663, 0.0
        %v5696 = vmax.f32 %v5664, 0.0
        %v5697 = vmax.f32 %v5665, 0.0
        %v5698 = vmax.f32 %v5666, 0.0
        %v5699 = vmax.f32 %v5667, 0.0
        %v5700 = vmax.f32 %v5668, 0.0
        %v5701 = vpack.c.bf16 %v5670, %v5669
        %v5702 = vpack.c.bf16 %v5672, %v5671
        %v5703 = vpack.c.bf16 %v5674, %v5673
        %v5704 = vpack.c.bf16 %v5676, %v5675
        %v5705 = vpack.c.bf16 %v5678, %v5677
        %v5706 = vpack.c.bf16 %v5680, %v5679
        %v5707 = vpack.c.bf16 %v5682, %v5681
        %v5708 = vpack.c.bf16 %v5684, %v5683
        %v5709 = vpack.c.bf16 %v5686, %v5685
        %v5710 = vpack.c.bf16 %v5688, %v5687
        %v5711 = vpack.c.bf16 %v5690, %v5689
        %v5712 = vpack.c.bf16 %v5692, %v5691
        %v5713 = vpack.c.bf16 %v5694, %v5693
        %v5714 = vpack.c.bf16 %v5696, %v5695
        %v5715 = vpack.c.bf16 %v5698, %v5697
        %v5716 = vpack.c.bf16 %v5700, %v5699
        %s5717 = scalar_lea.vmem %s4, 128
        %v5718 = vld [vmem:[%s5717] sm:$0xf]
        %v5719 = vld [vmem:[%s5717 + $0x4] sm:$0xf]
        %v5720 = vld [vmem:[%s5717 + $0x8] sm:$0xf]
        %v5721 = vld [vmem:[%s5717 + $0xc] sm:$0xf]
        %v5722 = vld [vmem:[%s5717 + $0x10] sm:$0xf]
        %v5723 = vld [vmem:[%s5717 + $0x14] sm:$0xf]
        %v5724 = vld [vmem:[%s5717 + $0x18] sm:$0xf]
        %v5725 = vld [vmem:[%s5717 + $0x1c] sm:$0xf]
        %v5726 = vld [vmem:[%s5717 + $0x20] sm:$0xf]
        %v5727 = vld [vmem:[%s5717 + $0x24] sm:$0xf]
        %v5728 = vld [vmem:[%s5717 + $0x28] sm:$0xf]
        %v5729 = vld [vmem:[%s5717 + $0x2c] sm:$0xf]
        %v5730 = vld [vmem:[%s5717 + $0x30] sm:$0xf]
        %v5731 = vld [vmem:[%s5717 + $0x34] sm:$0xf]
        %v5732 = vld [vmem:[%s5717 + $0x38] sm:$0xf]
        %v5733 = vld [vmem:[%s5717 + $0x3c] sm:$0xf]
        %v5750 = vunpack.c.l.b16 %v5718
        %v5751 = vunpack.c.l.b16 %v5719
        %v5752 = vunpack.c.l.b16 %v5720
        %v5753 = vunpack.c.l.b16 %v5721
        %v5754 = vunpack.c.l.b16 %v5722
        %v5755 = vunpack.c.l.b16 %v5723
        %v5756 = vunpack.c.l.b16 %v5724
        %v5757 = vunpack.c.l.b16 %v5725
        %v5758 = vunpack.c.l.b16 %v5726
        %v5759 = vunpack.c.l.b16 %v5727
        %v5760 = vunpack.c.l.b16 %v5728
        %v5761 = vunpack.c.l.b16 %v5729
        %v5762 = vunpack.c.l.b16 %v5730
        %v5763 = vunpack.c.l.b16 %v5731
        %v5764 = vunpack.c.l.b16 %v5732
        %v5765 = vunpack.c.l.b16 %v5733
        %v5766 = vpack.c.b16 %v5751, %v5750
        %v5767 = vpack.c.b16 %v5753, %v5752
        %v5768 = vpack.c.b16 %v5755, %v5754
        %v5769 = vpack.c.b16 %v5757, %v5756
        %v5770 = vpack.c.b16 %v5759, %v5758
        %v5771 = vpack.c.b16 %v5761, %v5760
        %v5772 = vpack.c.b16 %v5763, %v5762
        %v5773 = vpack.c.b16 %v5765, %v5764
        %5782 = vmatpush.bf16.msra.mxu0 %v5773
        %5783 = vmatpush.bf16.msra.mxu0 %v5772
        %5784 = vmatpush.bf16.msra.mxu0 %v5771
        %5785 = vmatpush.bf16.msra.mxu0 %v5770
        %5786 = vmatpush.bf16.msra.mxu0 %v5769
        %5787 = vmatpush.bf16.msra.mxu0 %v5768
        %5788 = vmatpush.bf16.msra.mxu0 %v5767
        %5789 = vmatpush.bf16.msra.mxu0 %v5766
        %5790 = vmatmul.bf16.gmra.mxu0 %v5701
        %v5791 = vpop.f32.mrf.mxu0
        %v5792 = vadd.f32 0.0, %v5791
        %v5793 = vpop.f32.mrf.mxu0
        %v5794 = vadd.f32 0.0, %v5793
        %5795 = vmatmul.bf16.gmra.mxu0 %v5702
        %v5796 = vpop.f32.mrf.mxu0
        %v5797 = vadd.f32 0.0, %v5796
        %v5798 = vpop.f32.mrf.mxu0
        %v5799 = vadd.f32 0.0, %v5798
        %5800 = vmatmul.bf16.gmra.mxu0 %v5703
        %v5801 = vpop.f32.mrf.mxu0
        %v5802 = vadd.f32 0.0, %v5801
        %v5803 = vpop.f32.mrf.mxu0
        %v5804 = vadd.f32 0.0, %v5803
        %5805 = vmatmul.bf16.gmra.mxu0 %v5704
        %v5806 = vpop.f32.mrf.mxu0
        %v5807 = vadd.f32 0.0, %v5806
        %v5808 = vpop.f32.mrf.mxu0
        %v5809 = vadd.f32 0.0, %v5808
        %5810 = vmatmul.bf16.gmra.mxu0 %v5705
        %v5811 = vpop.f32.mrf.mxu0
        %v5812 = vadd.f32 0.0, %v5811
        %v5813 = vpop.f32.mrf.mxu0
        %v5814 = vadd.f32 0.0, %v5813
        %5815 = vmatmul.bf16.gmra.mxu0 %v5706
        %v5816 = vpop.f32.mrf.mxu0
        %v5817 = vadd.f32 0.0, %v5816
        %v5818 = vpop.f32.mrf.mxu0
        %v5819 = vadd.f32 0.0, %v5818
        %5820 = vmatmul.bf16.gmra.mxu0 %v5707
        %v5821 = vpop.f32.mrf.mxu0
        %v5822 = vadd.f32 0.0, %v5821
        %v5823 = vpop.f32.mrf.mxu0
        %v5824 = vadd.f32 0.0, %v5823
        %5825 = vmatmul.bf16.gmra.mxu0 %v5708
        %v5826 = vpop.f32.mrf.mxu0
        %v5827 = vadd.f32 0.0, %v5826
        %v5828 = vpop.f32.mrf.mxu0
        %v5829 = vadd.f32 0.0, %v5828
        %5830 = vmatmul.bf16.gmra.mxu0 %v5709
        %v5831 = vpop.f32.mrf.mxu0
        %v5832 = vadd.f32 0.0, %v5831
        %v5833 = vpop.f32.mrf.mxu0
        %v5834 = vadd.f32 0.0, %v5833
        %5835 = vmatmul.bf16.gmra.mxu0 %v5710
        %v5836 = vpop.f32.mrf.mxu0
        %v5837 = vadd.f32 0.0, %v5836
        %v5838 = vpop.f32.mrf.mxu0
        %v5839 = vadd.f32 0.0, %v5838
        %5840 = vmatmul.bf16.gmra.mxu0 %v5711
        %v5841 = vpop.f32.mrf.mxu0
        %v5842 = vadd.f32 0.0, %v5841
        %v5843 = vpop.f32.mrf.mxu0
        %v5844 = vadd.f32 0.0, %v5843
        %5845 = vmatmul.bf16.gmra.mxu0 %v5712
        %v5846 = vpop.f32.mrf.mxu0
        %v5847 = vadd.f32 0.0, %v5846
        %v5848 = vpop.f32.mrf.mxu0
        %v5849 = vadd.f32 0.0, %v5848
        %5850 = vmatmul.bf16.gmra.mxu0 %v5713
        %v5851 = vpop.f32.mrf.mxu0
        %v5852 = vadd.f32 0.0, %v5851
        %v5853 = vpop.f32.mrf.mxu0
        %v5854 = vadd.f32 0.0, %v5853
        %5855 = vmatmul.bf16.gmra.mxu0 %v5714
        %v5856 = vpop.f32.mrf.mxu0
        %v5857 = vadd.f32 0.0, %v5856
        %v5858 = vpop.f32.mrf.mxu0
        %v5859 = vadd.f32 0.0, %v5858
        %5860 = vmatmul.bf16.gmra.mxu0 %v5715
        %v5861 = vpop.f32.mrf.mxu0
        %v5862 = vadd.f32 0.0, %v5861
        %v5863 = vpop.f32.mrf.mxu0
        %v5864 = vadd.f32 0.0, %v5863
        %5865 = vmatmul.bf16.gmra.mxu0 %v5716
        %v5866 = vpop.f32.mrf.mxu0
        %v5867 = vadd.f32 0.0, %v5866
        %v5868 = vpop.f32.mrf.mxu0
        %v5869 = vadd.f32 0.0, %v5868
        %5870 = vdwg.mxu0
        %s5871 = scalar_lea.vmem %s5, 2
        %v5872 = vld [vmem:[%s5871] sm:$0x1]
        %v5874 = vperm.slane %v5872, 0
        %v5876 = vmul.f32 %v5792, %v5874
        %v5877 = vmul.f32 %v5794, %v5874
        %v5878 = vmul.f32 %v5797, %v5874
        %v5879 = vmul.f32 %v5799, %v5874
        %v5880 = vmul.f32 %v5802, %v5874
        %v5881 = vmul.f32 %v5804, %v5874
        %v5882 = vmul.f32 %v5807, %v5874
        %v5883 = vmul.f32 %v5809, %v5874
        %v5884 = vmul.f32 %v5812, %v5874
        %v5885 = vmul.f32 %v5814, %v5874
        %v5886 = vmul.f32 %v5817, %v5874
        %v5887 = vmul.f32 %v5819, %v5874
        %v5888 = vmul.f32 %v5822, %v5874
        %v5889 = vmul.f32 %v5824, %v5874
        %v5890 = vmul.f32 %v5827, %v5874
        %v5891 = vmul.f32 %v5829, %v5874
        %v5892 = vmul.f32 %v5832, %v5874
        %v5893 = vmul.f32 %v5834, %v5874
        %v5894 = vmul.f32 %v5837, %v5874
        %v5895 = vmul.f32 %v5839, %v5874
        %v5896 = vmul.f32 %v5842, %v5874
        %v5897 = vmul.f32 %v5844, %v5874
        %v5898 = vmul.f32 %v5847, %v5874
        %v5899 = vmul.f32 %v5849, %v5874
        %v5900 = vmul.f32 %v5852, %v5874
        %v5901 = vmul.f32 %v5854, %v5874
        %v5902 = vmul.f32 %v5857, %v5874
        %v5903 = vmul.f32 %v5859, %v5874
        %v5904 = vmul.f32 %v5862, %v5874
        %v5905 = vmul.f32 %v5864, %v5874
        %v5906 = vmul.f32 %v5867, %v5874
        %v5907 = vmul.f32 %v5869, %v5874
        %s5908 = scalar_lea.vmem %s6, 2
        %v5909 = vld [vmem:[%s5908] sm:$0x1]
        %v5911 = vperm.slane %v5909, 0
        %v5913 = vadd.f32 %v5876, %v5911
        %v5914 = vadd.f32 %v5877, %v5911
        %v5915 = vadd.f32 %v5878, %v5911
        %v5916 = vadd.f32 %v5879, %v5911
        %v5917 = vadd.f32 %v5880, %v5911
        %v5918 = vadd.f32 %v5881, %v5911
        %v5919 = vadd.f32 %v5882, %v5911
        %v5920 = vadd.f32 %v5883, %v5911
        %v5921 = vadd.f32 %v5884, %v5911
        %v5922 = vadd.f32 %v5885, %v5911
        %v5923 = vadd.f32 %v5886, %v5911
        %v5924 = vadd.f32 %v5887, %v5911
        %v5925 = vadd.f32 %v5888, %v5911
        %v5926 = vadd.f32 %v5889, %v5911
        %v5927 = vadd.f32 %v5890, %v5911
        %v5928 = vadd.f32 %v5891, %v5911
        %v5929 = vadd.f32 %v5892, %v5911
        %v5930 = vadd.f32 %v5893, %v5911
        %v5931 = vadd.f32 %v5894, %v5911
        %v5932 = vadd.f32 %v5895, %v5911
        %v5933 = vadd.f32 %v5896, %v5911
        %v5934 = vadd.f32 %v5897, %v5911
        %v5935 = vadd.f32 %v5898, %v5911
        %v5936 = vadd.f32 %v5899, %v5911
        %v5937 = vadd.f32 %v5900, %v5911
        %v5938 = vadd.f32 %v5901, %v5911
        %v5939 = vadd.f32 %v5902, %v5911
        %v5940 = vadd.f32 %v5903, %v5911
        %v5941 = vadd.f32 %v5904, %v5911
        %v5942 = vadd.f32 %v5905, %v5911
        %v5943 = vadd.f32 %v5906, %v5911
        %v5944 = vadd.f32 %v5907, %v5911
        %v5945 = vmax.f32 %v5913, 0.0
        %v5946 = vmax.f32 %v5914, 0.0
        %v5947 = vmax.f32 %v5915, 0.0
        %v5948 = vmax.f32 %v5916, 0.0
        %v5949 = vmax.f32 %v5917, 0.0
        %v5950 = vmax.f32 %v5918, 0.0
        %v5951 = vmax.f32 %v5919, 0.0
        %v5952 = vmax.f32 %v5920, 0.0
        %v5953 = vmax.f32 %v5921, 0.0
        %v5954 = vmax.f32 %v5922, 0.0
        %v5955 = vmax.f32 %v5923, 0.0
        %v5956 = vmax.f32 %v5924, 0.0
        %v5957 = vmax.f32 %v5925, 0.0
        %v5958 = vmax.f32 %v5926, 0.0
        %v5959 = vmax.f32 %v5927, 0.0
        %v5960 = vmax.f32 %v5928, 0.0
        %v5961 = vmax.f32 %v5929, 0.0
        %v5962 = vmax.f32 %v5930, 0.0
        %v5963 = vmax.f32 %v5931, 0.0
        %v5964 = vmax.f32 %v5932, 0.0
        %v5965 = vmax.f32 %v5933, 0.0
        %v5966 = vmax.f32 %v5934, 0.0
        %v5967 = vmax.f32 %v5935, 0.0
        %v5968 = vmax.f32 %v5936, 0.0
        %v5969 = vmax.f32 %v5937, 0.0
        %v5970 = vmax.f32 %v5938, 0.0
        %v5971 = vmax.f32 %v5939, 0.0
        %v5972 = vmax.f32 %v5940, 0.0
        %v5973 = vmax.f32 %v5941, 0.0
        %v5974 = vmax.f32 %v5942, 0.0
        %v5975 = vmax.f32 %v5943, 0.0
        %v5976 = vmax.f32 %v5944, 0.0
        %v5978 = vrot.slane %v5974, 7
        %v6009 = vrot.slane %v5945, 7
        %v6010 = vsel %vm1997, %v1998, %v6009
        %v6011 = vrot.slane %v5946, 7
        %v6012 = vsel %vm1997, %v6009, %v6011
        %v6013 = vrot.slane %v5947, 7
        %v6014 = vsel %vm1997, %v6011, %v6013
        %v6015 = vrot.slane %v5948, 7
        %v6016 = vsel %vm1997, %v6013, %v6015
        %v6017 = vrot.slane %v5949, 7
        %v6018 = vsel %vm1997, %v6015, %v6017
        %v6019 = vrot.slane %v5950, 7
        %v6020 = vsel %vm1997, %v6017, %v6019
        %v6021 = vrot.slane %v5951, 7
        %v6022 = vsel %vm1997, %v6019, %v6021
        %v6023 = vrot.slane %v5952, 7
        %v6024 = vsel %vm1997, %v6021, %v6023
        %v6025 = vrot.slane %v5953, 7
        %v6026 = vsel %vm1997, %v6023, %v6025
        %v6027 = vrot.slane %v5954, 7
        %v6028 = vsel %vm1997, %v6025, %v6027
        %v6029 = vrot.slane %v5955, 7
        %v6030 = vsel %vm1997, %v6027, %v6029
        %v6031 = vrot.slane %v5956, 7
        %v6032 = vsel %vm1997, %v6029, %v6031
        %v6033 = vrot.slane %v5957, 7
        %v6034 = vsel %vm1997, %v6031, %v6033
        %v6035 = vrot.slane %v5958, 7
        %v6036 = vsel %vm1997, %v6033, %v6035
        %v6037 = vrot.slane %v5959, 7
        %v6038 = vsel %vm1997, %v6035, %v6037
        %v6039 = vrot.slane %v5960, 7
        %v6040 = vsel %vm1997, %v6037, %v6039
        %v6041 = vrot.slane %v5961, 7
        %v6042 = vsel %vm1997, %v6039, %v6041
        %v6043 = vrot.slane %v5962, 7
        %v6044 = vsel %vm1997, %v6041, %v6043
        %v6045 = vrot.slane %v5963, 7
        %v6046 = vsel %vm1997, %v6043, %v6045
        %v6047 = vrot.slane %v5964, 7
        %v6048 = vsel %vm1997, %v6045, %v6047
        %v6049 = vrot.slane %v5965, 7
        %v6050 = vsel %vm1997, %v6047, %v6049
        %v6051 = vrot.slane %v5966, 7
        %v6052 = vsel %vm1997, %v6049, %v6051
        %v6053 = vrot.slane %v5967, 7
        %v6054 = vsel %vm1997, %v6051, %v6053
        %v6055 = vrot.slane %v5968, 7
        %v6056 = vsel %vm1997, %v6053, %v6055
        %v6057 = vrot.slane %v5969, 7
        %v6058 = vsel %vm1997, %v6055, %v6057
        %v6059 = vrot.slane %v5970, 7
        %v6060 = vsel %vm1997, %v6057, %v6059
        %v6061 = vrot.slane %v5971, 7
        %v6062 = vsel %vm1997, %v6059, %v6061
        %v6063 = vrot.slane %v5972, 7
        %v6064 = vsel %vm1997, %v6061, %v6063
        %v6065 = vrot.slane %v5973, 7
        %v6066 = vsel %vm1997, %v6063, %v6065
        %v6067 = vsel %vm1997, %v6065, %v5978
        %v6098 = vsel %vm1997, %v5978, %v1998
        %v6099 = vsel %vm992, %v6098, 0.0
        %v6100 = vsel %vm994, %v6010, 0.0
        %v6101 = vsel %vm995, %v6012, 0.0
        %v6102 = vsel %vm996, %v6014, 0.0
        %v6103 = vsel %vm997, %v6016, 0.0
        %v6104 = vsel %vm998, %v6018, 0.0
        %v6105 = vsel %vm999, %v6020, 0.0
        %v6106 = vsel %vm1000, %v6022, 0.0
        %v6107 = vsel %vm1001, %v6024, 0.0
        %v6108 = vsel %vm1002, %v6026, 0.0
        %v6109 = vsel %vm1003, %v6028, 0.0
        %v6110 = vsel %vm1004, %v6030, 0.0
        %v6111 = vsel %vm1005, %v6032, 0.0
        %v6112 = vsel %vm1006, %v6034, 0.0
        %v6113 = vsel %vm1007, %v6036, 0.0
        %v6114 = vsel %vm1008, %v6038, 0.0
        %v6115 = vsel %vm1009, %v6040, 0.0
        %v6116 = vsel %vm1010, %v6042, 0.0
        %v6117 = vsel %vm1011, %v6044, 0.0
        %v6118 = vsel %vm1012, %v6046, 0.0
        %v6119 = vsel %vm1013, %v6048, 0.0
        %v6120 = vsel %vm1014, %v6050, 0.0
        %v6121 = vsel %vm1015, %v6052, 0.0
        %v6122 = vsel %vm1016, %v6054, 0.0
        %v6123 = vsel %vm1017, %v6056, 0.0
        %v6124 = vsel %vm1018, %v6058, 0.0
        %v6125 = vsel %vm1019, %v6060, 0.0
        %v6126 = vsel %vm1020, %v6062, 0.0
        %v6127 = vsel %vm1021, %v6064, 0.0
        %v6128 = vsel %vm1022, %v6066, 0.0
        %v6129 = vsel %vm1023, %v6067, 0.0
        %v6130 = vpack.c.bf16 %v6099, %v6099
        %v6131 = vpack.c.bf16 %v6100, %v6100
        %v6132 = vpack.c.bf16 %v6101, %v6101
        %v6133 = vpack.c.bf16 %v6102, %v6102
        %v6134 = vpack.c.bf16 %v6103, %v6103
        %v6135 = vpack.c.bf16 %v6104, %v6104
        %v6136 = vpack.c.bf16 %v6105, %v6105
        %v6137 = vpack.c.bf16 %v6106, %v6106
        %v6138 = vpack.c.bf16 %v6107, %v6107
        %v6139 = vpack.c.bf16 %v6108, %v6108
        %v6140 = vpack.c.bf16 %v6109, %v6109
        %v6141 = vpack.c.bf16 %v6110, %v6110
        %v6142 = vpack.c.bf16 %v6111, %v6111
        %v6143 = vpack.c.bf16 %v6112, %v6112
        %v6144 = vpack.c.bf16 %v6113, %v6113
        %v6145 = vpack.c.bf16 %v6114, %v6114
        %v6146 = vpack.c.bf16 %v6115, %v6115
        %v6147 = vpack.c.bf16 %v6116, %v6116
        %v6148 = vpack.c.bf16 %v6117, %v6117
        %v6149 = vpack.c.bf16 %v6118, %v6118
        %v6150 = vpack.c.bf16 %v6119, %v6119
        %v6151 = vpack.c.bf16 %v6120, %v6120
        %v6152 = vpack.c.bf16 %v6121, %v6121
        %v6153 = vpack.c.bf16 %v6122, %v6122
        %v6154 = vpack.c.bf16 %v6123, %v6123
        %v6155 = vpack.c.bf16 %v6124, %v6124
        %v6156 = vpack.c.bf16 %v6125, %v6125
        %v6157 = vpack.c.bf16 %v6126, %v6126
        %v6158 = vpack.c.bf16 %v6127, %v6127
        %v6159 = vpack.c.bf16 %v6128, %v6128
        %v6160 = vpack.c.bf16 %v6129, %v6129
        %v6161 = vpack.c.bf16 %v5945, %v5945
        %v6162 = vpack.c.bf16 %v5946, %v5946
        %v6163 = vpack.c.bf16 %v5947, %v5947
        %v6164 = vpack.c.bf16 %v5948, %v5948
        %v6165 = vpack.c.bf16 %v5949, %v5949
        %v6166 = vpack.c.bf16 %v5950, %v5950
        %v6167 = vpack.c.bf16 %v5951, %v5951
        %v6168 = vpack.c.bf16 %v5952, %v5952
        %v6169 = vpack.c.bf16 %v5953, %v5953
        %v6170 = vpack.c.bf16 %v5954, %v5954
        %v6171 = vpack.c.bf16 %v5955, %v5955
        %v6172 = vpack.c.bf16 %v5956, %v5956
        %v6173 = vpack.c.bf16 %v5957, %v5957
        %v6174 = vpack.c.bf16 %v5958, %v5958
        %v6175 = vpack.c.bf16 %v5959, %v5959
        %v6176 = vpack.c.bf16 %v5960, %v5960
        %v6177 = vpack.c.bf16 %v5961, %v5961
        %v6178 = vpack.c.bf16 %v5962, %v5962
        %v6179 = vpack.c.bf16 %v5963, %v5963
        %v6180 = vpack.c.bf16 %v5964, %v5964
        %v6181 = vpack.c.bf16 %v5965, %v5965
        %v6182 = vpack.c.bf16 %v5966, %v5966
        %v6183 = vpack.c.bf16 %v5967, %v5967
        %v6184 = vpack.c.bf16 %v5968, %v5968
        %v6185 = vpack.c.bf16 %v5969, %v5969
        %v6186 = vpack.c.bf16 %v5970, %v5970
        %v6187 = vpack.c.bf16 %v5971, %v5971
        %v6188 = vpack.c.bf16 %v5972, %v5972
        %v6189 = vpack.c.bf16 %v5973, %v5973
        %v6190 = vpack.c.bf16 %v5974, %v5974
        %v6191 = vrot.slane %v5945, 1
        %v6192 = vsel %vm2187, %v2188, %v6191
        %v6193 = vrot.slane %v5946, 1
        %v6194 = vsel %vm2187, %v6191, %v6193
        %v6195 = vrot.slane %v5947, 1
        %v6196 = vsel %vm2187, %v6193, %v6195
        %v6197 = vrot.slane %v5948, 1
        %v6198 = vsel %vm2187, %v6195, %v6197
        %v6199 = vrot.slane %v5949, 1
        %v6200 = vsel %vm2187, %v6197, %v6199
        %v6201 = vrot.slane %v5950, 1
        %v6202 = vsel %vm2187, %v6199, %v6201
        %v6203 = vrot.slane %v5951, 1
        %v6204 = vsel %vm2187, %v6201, %v6203
        %v6205 = vrot.slane %v5952, 1
        %v6206 = vsel %vm2187, %v6203, %v6205
        %v6207 = vrot.slane %v5953, 1
        %v6208 = vsel %vm2187, %v6205, %v6207
        %v6209 = vrot.slane %v5954, 1
        %v6210 = vsel %vm2187, %v6207, %v6209
        %v6211 = vrot.slane %v5955, 1
        %v6212 = vsel %vm2187, %v6209, %v6211
        %v6213 = vrot.slane %v5956, 1
        %v6214 = vsel %vm2187, %v6211, %v6213
        %v6215 = vrot.slane %v5957, 1
        %v6216 = vsel %vm2187, %v6213, %v6215
        %v6217 = vrot.slane %v5958, 1
        %v6218 = vsel %vm2187, %v6215, %v6217
        %v6219 = vrot.slane %v5959, 1
        %v6220 = vsel %vm2187, %v6217, %v6219
        %v6221 = vrot.slane %v5960, 1
        %v6222 = vsel %vm2187, %v6219, %v6221
        %v6223 = vrot.slane %v5961, 1
        %v6224 = vsel %vm2187, %v6221, %v6223
        %v6225 = vrot.slane %v5962, 1
        %v6226 = vsel %vm2187, %v6223, %v6225
        %v6227 = vrot.slane %v5963, 1
        %v6228 = vsel %vm2187, %v6225, %v6227
        %v6229 = vrot.slane %v5964, 1
        %v6230 = vsel %vm2187, %v6227, %v6229
        %v6231 = vrot.slane %v5965, 1
        %v6232 = vsel %vm2187, %v6229, %v6231
        %v6233 = vrot.slane %v5966, 1
        %v6234 = vsel %vm2187, %v6231, %v6233
        %v6235 = vrot.slane %v5967, 1
        %v6236 = vsel %vm2187, %v6233, %v6235
        %v6237 = vrot.slane %v5968, 1
        %v6238 = vsel %vm2187, %v6235, %v6237
        %v6239 = vrot.slane %v5969, 1
        %v6240 = vsel %vm2187, %v6237, %v6239
        %v6241 = vrot.slane %v5970, 1
        %v6242 = vsel %vm2187, %v6239, %v6241
        %v6243 = vrot.slane %v5971, 1
        %v6244 = vsel %vm2187, %v6241, %v6243
        %v6245 = vrot.slane %v5972, 1
        %v6246 = vsel %vm2187, %v6243, %v6245
        %v6247 = vrot.slane %v5973, 1
        %v6248 = vsel %vm2187, %v6245, %v6247
        %v6249 = vrot.slane %v5974, 1
        %v6250 = vsel %vm2187, %v6247, %v6249
        %v6282 = vsel %vm2187, %v6249, %v2188
        %v6283 = vsel %vm1025, %v6192, 0.0
        %v6284 = vsel %vm1026, %v6194, 0.0
        %v6285 = vsel %vm1027, %v6196, 0.0
        %v6286 = vsel %vm1028, %v6198, 0.0
        %v6287 = vsel %vm1029, %v6200, 0.0
        %v6288 = vsel %vm1030, %v6202, 0.0
        %v6289 = vsel %vm1031, %v6204, 0.0
        %v6290 = vsel %vm1032, %v6206, 0.0
        %v6291 = vsel %vm1033, %v6208, 0.0
        %v6292 = vsel %vm1034, %v6210, 0.0
        %v6293 = vsel %vm1035, %v6212, 0.0
        %v6294 = vsel %vm1036, %v6214, 0.0
        %v6295 = vsel %vm1037, %v6216, 0.0
        %v6296 = vsel %vm1038, %v6218, 0.0
        %v6297 = vsel %vm1039, %v6220, 0.0
        %v6298 = vsel %vm1040, %v6222, 0.0
        %v6299 = vsel %vm1041, %v6224, 0.0
        %v6300 = vsel %vm1042, %v6226, 0.0
        %v6301 = vsel %vm1043, %v6228, 0.0
        %v6302 = vsel %vm1044, %v6230, 0.0
        %v6303 = vsel %vm1045, %v6232, 0.0
        %v6304 = vsel %vm1046, %v6234, 0.0
        %v6305 = vsel %vm1047, %v6236, 0.0
        %v6306 = vsel %vm1048, %v6238, 0.0
        %v6307 = vsel %vm1049, %v6240, 0.0
        %v6308 = vsel %vm1050, %v6242, 0.0
        %v6309 = vsel %vm1051, %v6244, 0.0
        %v6310 = vsel %vm1052, %v6246, 0.0
        %v6311 = vsel %vm1053, %v6248, 0.0
        %v6312 = vsel %vm1054, %v6250, 0.0
        %v6313 = vsel %vm1055, %v6282, 0.0
        %v6314 = vpack.c.bf16 %v6283, %v6283
        %v6315 = vpack.c.bf16 %v6284, %v6284
        %v6316 = vpack.c.bf16 %v6285, %v6285
        %v6317 = vpack.c.bf16 %v6286, %v6286
        %v6318 = vpack.c.bf16 %v6287, %v6287
        %v6319 = vpack.c.bf16 %v6288, %v6288
        %v6320 = vpack.c.bf16 %v6289, %v6289
        %v6321 = vpack.c.bf16 %v6290, %v6290
        %v6322 = vpack.c.bf16 %v6291, %v6291
        %v6323 = vpack.c.bf16 %v6292, %v6292
        %v6324 = vpack.c.bf16 %v6293, %v6293
        %v6325 = vpack.c.bf16 %v6294, %v6294
        %v6326 = vpack.c.bf16 %v6295, %v6295
        %v6327 = vpack.c.bf16 %v6296, %v6296
        %v6328 = vpack.c.bf16 %v6297, %v6297
        %v6329 = vpack.c.bf16 %v6298, %v6298
        %v6330 = vpack.c.bf16 %v6299, %v6299
        %v6331 = vpack.c.bf16 %v6300, %v6300
        %v6332 = vpack.c.bf16 %v6301, %v6301
        %v6333 = vpack.c.bf16 %v6302, %v6302
        %v6334 = vpack.c.bf16 %v6303, %v6303
        %v6335 = vpack.c.bf16 %v6304, %v6304
        %v6336 = vpack.c.bf16 %v6305, %v6305
        %v6337 = vpack.c.bf16 %v6306, %v6306
        %v6338 = vpack.c.bf16 %v6307, %v6307
        %v6339 = vpack.c.bf16 %v6308, %v6308
        %v6340 = vpack.c.bf16 %v6309, %v6309
        %v6341 = vpack.c.bf16 %v6310, %v6310
        %v6342 = vpack.c.bf16 %v6311, %v6311
        %v6343 = vpack.c.bf16 %v6312, %v6312
        %v6344 = vpack.c.bf16 %v6313, %v6313
        %v6346 = vrot.slane %v5976, 7
        %v6349 = vrot.slane %v5975, 7
        %v6350 = vsel %vm1997, %v5978, %v6349
        %v6351 = vsel %vm1997, %v6349, %v6346
        %v6355 = vsel %vm1997, %v6346, %v6009
        %v6356 = vsel %vm992, %v6355, 0.0
        %v6357 = vsel %vm993, %v6012, 0.0
        %v6358 = vsel %vm994, %v6014, 0.0
        %v6359 = vsel %vm995, %v6016, 0.0
        %v6360 = vsel %vm996, %v6018, 0.0
        %v6361 = vsel %vm997, %v6020, 0.0
        %v6362 = vsel %vm998, %v6022, 0.0
        %v6363 = vsel %vm999, %v6024, 0.0
        %v6364 = vsel %vm1000, %v6026, 0.0
        %v6365 = vsel %vm1001, %v6028, 0.0
        %v6366 = vsel %vm1002, %v6030, 0.0
        %v6367 = vsel %vm1003, %v6032, 0.0
        %v6368 = vsel %vm1004, %v6034, 0.0
        %v6369 = vsel %vm1005, %v6036, 0.0
        %v6370 = vsel %vm1006, %v6038, 0.0
        %v6371 = vsel %vm1007, %v6040, 0.0
        %v6372 = vsel %vm1008, %v6042, 0.0
        %v6373 = vsel %vm1009, %v6044, 0.0
        %v6374 = vsel %vm1010, %v6046, 0.0
        %v6375 = vsel %vm1011, %v6048, 0.0
        %v6376 = vsel %vm1012, %v6050, 0.0
        %v6377 = vsel %vm1013, %v6052, 0.0
        %v6378 = vsel %vm1014, %v6054, 0.0
        %v6379 = vsel %vm1015, %v6056, 0.0
        %v6380 = vsel %vm1016, %v6058, 0.0
        %v6381 = vsel %vm1017, %v6060, 0.0
        %v6382 = vsel %vm1018, %v6062, 0.0
        %v6383 = vsel %vm1019, %v6064, 0.0
        %v6384 = vsel %vm1020, %v6066, 0.0
        %v6385 = vsel %vm1021, %v6067, 0.0
        %v6386 = vsel %vm1022, %v6350, 0.0
        %v6387 = vsel %vm1023, %v6351, 0.0
        %v6388 = vpack.c.bf16 %v6356, %v6356
        %v6389 = vpack.c.bf16 %v6357, %v6357
        %v6390 = vpack.c.bf16 %v6358, %v6358
        %v6391 = vpack.c.bf16 %v6359, %v6359
        %v6392 = vpack.c.bf16 %v6360, %v6360
        %v6393 = vpack.c.bf16 %v6361, %v6361
        %v6394 = vpack.c.bf16 %v6362, %v6362
        %v6395 = vpack.c.bf16 %v6363, %v6363
        %v6396 = vpack.c.bf16 %v6364, %v6364
        %v6397 = vpack.c.bf16 %v6365, %v6365
        %v6398 = vpack.c.bf16 %v6366, %v6366
        %v6399 = vpack.c.bf16 %v6367, %v6367
        %v6400 = vpack.c.bf16 %v6368, %v6368
        %v6401 = vpack.c.bf16 %v6369, %v6369
        %v6402 = vpack.c.bf16 %v6370, %v6370
        %v6403 = vpack.c.bf16 %v6371, %v6371
        %v6404 = vpack.c.bf16 %v6372, %v6372
        %v6405 = vpack.c.bf16 %v6373, %v6373
        %v6406 = vpack.c.bf16 %v6374, %v6374
        %v6407 = vpack.c.bf16 %v6375, %v6375
        %v6408 = vpack.c.bf16 %v6376, %v6376
        %v6409 = vpack.c.bf16 %v6377, %v6377
        %v6410 = vpack.c.bf16 %v6378, %v6378
        %v6411 = vpack.c.bf16 %v6379, %v6379
        %v6412 = vpack.c.bf16 %v6380, %v6380
        %v6413 = vpack.c.bf16 %v6381, %v6381
        %v6414 = vpack.c.bf16 %v6382, %v6382
        %v6415 = vpack.c.bf16 %v6383, %v6383
        %v6416 = vpack.c.bf16 %v6384, %v6384
        %v6417 = vpack.c.bf16 %v6385, %v6385
        %v6418 = vpack.c.bf16 %v6386, %v6386
        %v6419 = vpack.c.bf16 %v6387, %v6387
        %v6420 = vpack.c.bf16 %v5975, %v5975
        %v6421 = vpack.c.bf16 %v5976, %v5976
        %v6453 = vunpack.c.l.b16 %v6130
        %v6454 = vunpack.c.l.b16 %v6131
        %v6455 = vunpack.c.l.b16 %v6132
        %v6456 = vunpack.c.l.b16 %v6133
        %v6457 = vunpack.c.l.b16 %v6134
        %v6458 = vunpack.c.l.b16 %v6135
        %v6459 = vunpack.c.l.b16 %v6136
        %v6460 = vunpack.c.l.b16 %v6137
        %v6461 = vunpack.c.l.b16 %v6138
        %v6462 = vunpack.c.l.b16 %v6139
        %v6463 = vunpack.c.l.b16 %v6140
        %v6464 = vunpack.c.l.b16 %v6141
        %v6465 = vunpack.c.l.b16 %v6142
        %v6466 = vunpack.c.l.b16 %v6143
        %v6467 = vunpack.c.l.b16 %v6144
        %v6468 = vunpack.c.l.b16 %v6145
        %v6469 = vunpack.c.l.b16 %v6146
        %v6470 = vunpack.c.l.b16 %v6147
        %v6471 = vunpack.c.l.b16 %v6148
        %v6472 = vunpack.c.l.b16 %v6149
        %v6473 = vunpack.c.l.b16 %v6150
        %v6474 = vunpack.c.l.b16 %v6151
        %v6475 = vunpack.c.l.b16 %v6152
        %v6476 = vunpack.c.l.b16 %v6153
        %v6477 = vunpack.c.l.b16 %v6154
        %v6478 = vunpack.c.l.b16 %v6155
        %v6479 = vunpack.c.l.b16 %v6156
        %v6480 = vunpack.c.l.b16 %v6157
        %v6481 = vunpack.c.l.b16 %v6158
        %v6482 = vunpack.c.l.b16 %v6159
        %v6483 = vunpack.c.l.b16 %v6160
        %v6484 = vpack.c.b16 %v2458, %v6453
        %v6485 = vpack.c.b16 %v6455, %v6454
        %v6486 = vpack.c.b16 %v6457, %v6456
        %v6487 = vpack.c.b16 %v6459, %v6458
        %v6488 = vpack.c.b16 %v6461, %v6460
        %v6489 = vpack.c.b16 %v6463, %v6462
        %v6490 = vpack.c.b16 %v6465, %v6464
        %v6491 = vpack.c.b16 %v6467, %v6466
        %v6492 = vpack.c.b16 %v6469, %v6468
        %v6493 = vpack.c.b16 %v6471, %v6470
        %v6494 = vpack.c.b16 %v6473, %v6472
        %v6495 = vpack.c.b16 %v6475, %v6474
        %v6496 = vpack.c.b16 %v6477, %v6476
        %v6497 = vpack.c.b16 %v6479, %v6478
        %v6498 = vpack.c.b16 %v6481, %v6480
        %v6499 = vpack.c.b16 %v6483, %v6482
        %v6530 = vunpack.c.l.b16 %v6161
        %v6531 = vunpack.c.l.b16 %v6162
        %v6532 = vunpack.c.l.b16 %v6163
        %v6533 = vunpack.c.l.b16 %v6164
        %v6534 = vunpack.c.l.b16 %v6165
        %v6535 = vunpack.c.l.b16 %v6166
        %v6536 = vunpack.c.l.b16 %v6167
        %v6537 = vunpack.c.l.b16 %v6168
        %v6538 = vunpack.c.l.b16 %v6169
        %v6539 = vunpack.c.l.b16 %v6170
        %v6540 = vunpack.c.l.b16 %v6171
        %v6541 = vunpack.c.l.b16 %v6172
        %v6542 = vunpack.c.l.b16 %v6173
        %v6543 = vunpack.c.l.b16 %v6174
        %v6544 = vunpack.c.l.b16 %v6175
        %v6545 = vunpack.c.l.b16 %v6176
        %v6546 = vunpack.c.l.b16 %v6177
        %v6547 = vunpack.c.l.b16 %v6178
        %v6548 = vunpack.c.l.b16 %v6179
        %v6549 = vunpack.c.l.b16 %v6180
        %v6550 = vunpack.c.l.b16 %v6181
        %v6551 = vunpack.c.l.b16 %v6182
        %v6552 = vunpack.c.l.b16 %v6183
        %v6553 = vunpack.c.l.b16 %v6184
        %v6554 = vunpack.c.l.b16 %v6185
        %v6555 = vunpack.c.l.b16 %v6186
        %v6556 = vunpack.c.l.b16 %v6187
        %v6557 = vunpack.c.l.b16 %v6188
        %v6558 = vunpack.c.l.b16 %v6189
        %v6559 = vunpack.c.l.b16 %v6190
        %v6560 = vpack.c.b16 %v6531, %v6530
        %v6561 = vpack.c.b16 %v6533, %v6532
        %v6562 = vpack.c.b16 %v6535, %v6534
        %v6563 = vpack.c.b16 %v6537, %v6536
        %v6564 = vpack.c.b16 %v6539, %v6538
        %v6565 = vpack.c.b16 %v6541, %v6540
        %v6566 = vpack.c.b16 %v6543, %v6542
        %v6567 = vpack.c.b16 %v6545, %v6544
        %v6568 = vpack.c.b16 %v6547, %v6546
        %v6569 = vpack.c.b16 %v6549, %v6548
        %v6570 = vpack.c.b16 %v6551, %v6550
        %v6571 = vpack.c.b16 %v6553, %v6552
        %v6572 = vpack.c.b16 %v6555, %v6554
        %v6573 = vpack.c.b16 %v6557, %v6556
        %v6574 = vpack.c.b16 %v6559, %v6558
        %6575 = vrot.lane.b32.xlu0 %v6560, 32
        %v6576 = vpop.permute.xlu0 %6575
        %6577 = vrot.lane.b32.xlu0 %v6561, 32
        %v6578 = vpop.permute.xlu0 %6577
        %6579 = vrot.lane.b32.xlu0 %v6562, 32
        %v6580 = vpop.permute.xlu0 %6579
        %6581 = vrot.lane.b32.xlu0 %v6563, 32
        %v6582 = vpop.permute.xlu0 %6581
        %6583 = vrot.lane.b32.xlu0 %v6564, 32
        %v6584 = vpop.permute.xlu0 %6583
        %6585 = vrot.lane.b32.xlu0 %v6565, 32
        %v6586 = vpop.permute.xlu0 %6585
        %6587 = vrot.lane.b32.xlu0 %v6566, 32
        %v6588 = vpop.permute.xlu0 %6587
        %6589 = vrot.lane.b32.xlu0 %v6567, 32
        %v6590 = vpop.permute.xlu0 %6589
        %6591 = vrot.lane.b32.xlu0 %v6568, 32
        %v6592 = vpop.permute.xlu0 %6591
        %6593 = vrot.lane.b32.xlu0 %v6569, 32
        %v6594 = vpop.permute.xlu0 %6593
        %6595 = vrot.lane.b32.xlu0 %v6570, 32
        %v6596 = vpop.permute.xlu0 %6595
        %6597 = vrot.lane.b32.xlu0 %v6571, 32
        %v6598 = vpop.permute.xlu0 %6597
        %6599 = vrot.lane.b32.xlu0 %v6572, 32
        %v6600 = vpop.permute.xlu0 %6599
        %6601 = vrot.lane.b32.xlu0 %v6573, 32
        %v6602 = vpop.permute.xlu0 %6601
        %6603 = vrot.lane.b32.xlu0 %v6574, 32
        %v6604 = vpop.permute.xlu0 %6603
        %v6636 = vunpack.c.l.b16 %v6314
        %v6637 = vunpack.c.l.b16 %v6315
        %v6638 = vunpack.c.l.b16 %v6316
        %v6639 = vunpack.c.l.b16 %v6317
        %v6640 = vunpack.c.l.b16 %v6318
        %v6641 = vunpack.c.l.b16 %v6319
        %v6642 = vunpack.c.l.b16 %v6320
        %v6643 = vunpack.c.l.b16 %v6321
        %v6644 = vunpack.c.l.b16 %v6322
        %v6645 = vunpack.c.l.b16 %v6323
        %v6646 = vunpack.c.l.b16 %v6324
        %v6647 = vunpack.c.l.b16 %v6325
        %v6648 = vunpack.c.l.b16 %v6326
        %v6649 = vunpack.c.l.b16 %v6327
        %v6650 = vunpack.c.l.b16 %v6328
        %v6651 = vunpack.c.l.b16 %v6329
        %v6652 = vunpack.c.l.b16 %v6330
        %v6653 = vunpack.c.l.b16 %v6331
        %v6654 = vunpack.c.l.b16 %v6332
        %v6655 = vunpack.c.l.b16 %v6333
        %v6656 = vunpack.c.l.b16 %v6334
        %v6657 = vunpack.c.l.b16 %v6335
        %v6658 = vunpack.c.l.b16 %v6336
        %v6659 = vunpack.c.l.b16 %v6337
        %v6660 = vunpack.c.l.b16 %v6338
        %v6661 = vunpack.c.l.b16 %v6339
        %v6662 = vunpack.c.l.b16 %v6340
        %v6663 = vunpack.c.l.b16 %v6341
        %v6664 = vunpack.c.l.b16 %v6342
        %v6665 = vunpack.c.l.b16 %v6343
        %v6666 = vunpack.c.l.b16 %v6344
        %v6667 = vpack.c.b16 %v6636, %v2647
        %v6668 = vpack.c.b16 %v6638, %v6637
        %v6669 = vpack.c.b16 %v6640, %v6639
        %v6670 = vpack.c.b16 %v6642, %v6641
        %v6671 = vpack.c.b16 %v6644, %v6643
        %v6672 = vpack.c.b16 %v6646, %v6645
        %v6673 = vpack.c.b16 %v6648, %v6647
        %v6674 = vpack.c.b16 %v6650, %v6649
        %v6675 = vpack.c.b16 %v6652, %v6651
        %v6676 = vpack.c.b16 %v6654, %v6653
        %v6677 = vpack.c.b16 %v6656, %v6655
        %v6678 = vpack.c.b16 %v6658, %v6657
        %v6679 = vpack.c.b16 %v6660, %v6659
        %v6680 = vpack.c.b16 %v6662, %v6661
        %v6681 = vpack.c.b16 %v6664, %v6663
        %v6682 = vpack.c.b16 %v6666, %v6665
        %6683 = vrot.lane.b32.xlu0 %v6667, 64
        %v6684 = vpop.permute.xlu0 %6683
        %6685 = vrot.lane.b32.xlu0 %v6668, 64
        %v6686 = vpop.permute.xlu0 %6685
        %6687 = vrot.lane.b32.xlu0 %v6669, 64
        %v6688 = vpop.permute.xlu0 %6687
        %6689 = vrot.lane.b32.xlu0 %v6670, 64
        %v6690 = vpop.permute.xlu0 %6689
        %6691 = vrot.lane.b32.xlu0 %v6671, 64
        %v6692 = vpop.permute.xlu0 %6691
        %6693 = vrot.lane.b32.xlu0 %v6672, 64
        %v6694 = vpop.permute.xlu0 %6693
        %6695 = vrot.lane.b32.xlu0 %v6673, 64
        %v6696 = vpop.permute.xlu0 %6695
        %6697 = vrot.lane.b32.xlu0 %v6674, 64
        %v6698 = vpop.permute.xlu0 %6697
        %6699 = vrot.lane.b32.xlu0 %v6675, 64
        %v6700 = vpop.permute.xlu0 %6699
        %6701 = vrot.lane.b32.xlu0 %v6676, 64
        %v6702 = vpop.permute.xlu0 %6701
        %6703 = vrot.lane.b32.xlu0 %v6677, 64
        %v6704 = vpop.permute.xlu0 %6703
        %6705 = vrot.lane.b32.xlu0 %v6678, 64
        %v6706 = vpop.permute.xlu0 %6705
        %6707 = vrot.lane.b32.xlu0 %v6679, 64
        %v6708 = vpop.permute.xlu0 %6707
        %6709 = vrot.lane.b32.xlu0 %v6680, 64
        %v6710 = vpop.permute.xlu0 %6709
        %6711 = vrot.lane.b32.xlu0 %v6681, 64
        %v6712 = vpop.permute.xlu0 %6711
        %6713 = vrot.lane.b32.xlu0 %v6682, 64
        %v6714 = vpop.permute.xlu0 %6713
        %v6747 = vunpack.c.l.b16 %v6388
        %v6748 = vunpack.c.l.b16 %v6389
        %v6749 = vunpack.c.l.b16 %v6390
        %v6750 = vunpack.c.l.b16 %v6391
        %v6751 = vunpack.c.l.b16 %v6392
        %v6752 = vunpack.c.l.b16 %v6393
        %v6753 = vunpack.c.l.b16 %v6394
        %v6754 = vunpack.c.l.b16 %v6395
        %v6755 = vunpack.c.l.b16 %v6396
        %v6756 = vunpack.c.l.b16 %v6397
        %v6757 = vunpack.c.l.b16 %v6398
        %v6758 = vunpack.c.l.b16 %v6399
        %v6759 = vunpack.c.l.b16 %v6400
        %v6760 = vunpack.c.l.b16 %v6401
        %v6761 = vunpack.c.l.b16 %v6402
        %v6762 = vunpack.c.l.b16 %v6403
        %v6763 = vunpack.c.l.b16 %v6404
        %v6764 = vunpack.c.l.b16 %v6405
        %v6765 = vunpack.c.l.b16 %v6406
        %v6766 = vunpack.c.l.b16 %v6407
        %v6767 = vunpack.c.l.b16 %v6408
        %v6768 = vunpack.c.l.b16 %v6409
        %v6769 = vunpack.c.l.b16 %v6410
        %v6770 = vunpack.c.l.b16 %v6411
        %v6771 = vunpack.c.l.b16 %v6412
        %v6772 = vunpack.c.l.b16 %v6413
        %v6773 = vunpack.c.l.b16 %v6414
        %v6774 = vunpack.c.l.b16 %v6415
        %v6775 = vunpack.c.l.b16 %v6416
        %v6776 = vunpack.c.l.b16 %v6417
        %v6777 = vunpack.c.l.b16 %v6418
        %v6778 = vunpack.c.l.b16 %v6419
        %v6779 = vpack.c.b16 %v6748, %v6747
        %v6780 = vpack.c.b16 %v6750, %v6749
        %v6781 = vpack.c.b16 %v6752, %v6751
        %v6782 = vpack.c.b16 %v6754, %v6753
        %v6783 = vpack.c.b16 %v6756, %v6755
        %v6784 = vpack.c.b16 %v6758, %v6757
        %v6785 = vpack.c.b16 %v6760, %v6759
        %v6786 = vpack.c.b16 %v6762, %v6761
        %v6787 = vpack.c.b16 %v6764, %v6763
        %v6788 = vpack.c.b16 %v6766, %v6765
        %v6789 = vpack.c.b16 %v6768, %v6767
        %v6790 = vpack.c.b16 %v6770, %v6769
        %v6791 = vpack.c.b16 %v6772, %v6771
        %v6792 = vpack.c.b16 %v6774, %v6773
        %v6793 = vpack.c.b16 %v6776, %v6775
        %v6794 = vpack.c.b16 %v6778, %v6777
        %6795 = vrot.lane.b32.xlu0 %v6779, 96
        %v6796 = vpop.permute.xlu0 %6795
        %6797 = vrot.lane.b32.xlu0 %v6780, 96
        %v6798 = vpop.permute.xlu0 %6797
        %6799 = vrot.lane.b32.xlu0 %v6781, 96
        %v6800 = vpop.permute.xlu0 %6799
        %6801 = vrot.lane.b32.xlu0 %v6782, 96
        %v6802 = vpop.permute.xlu0 %6801
        %6803 = vrot.lane.b32.xlu0 %v6783, 96
        %v6804 = vpop.permute.xlu0 %6803
        %6805 = vrot.lane.b32.xlu0 %v6784, 96
        %v6806 = vpop.permute.xlu0 %6805
        %6807 = vrot.lane.b32.xlu0 %v6785, 96
        %v6808 = vpop.permute.xlu0 %6807
        %6809 = vrot.lane.b32.xlu0 %v6786, 96
        %v6810 = vpop.permute.xlu0 %6809
        %6811 = vrot.lane.b32.xlu0 %v6787, 96
        %v6812 = vpop.permute.xlu0 %6811
        %6813 = vrot.lane.b32.xlu0 %v6788, 96
        %v6814 = vpop.permute.xlu0 %6813
        %6815 = vrot.lane.b32.xlu0 %v6789, 96
        %v6816 = vpop.permute.xlu0 %6815
        %6817 = vrot.lane.b32.xlu0 %v6790, 96
        %v6818 = vpop.permute.xlu0 %6817
        %6819 = vrot.lane.b32.xlu0 %v6791, 96
        %v6820 = vpop.permute.xlu0 %6819
        %6821 = vrot.lane.b32.xlu0 %v6792, 96
        %v6822 = vpop.permute.xlu0 %6821
        %6823 = vrot.lane.b32.xlu0 %v6793, 96
        %v6824 = vpop.permute.xlu0 %6823
        %6825 = vrot.lane.b32.xlu0 %v6794, 96
        %v6826 = vpop.permute.xlu0 %6825
        %v6829 = vunpack.c.l.b16 %v6420
        %v6830 = vunpack.c.l.b16 %v6421
        %v6831 = vpack.c.b16 %v6830, %v6829
        %v6849 = vsel %vm2860, %v6484, %v2584
        %v6852 = vsel %vm2860, %v6485, %v6576
        %v6855 = vsel %vm2860, %v6486, %v6578
        %v6858 = vsel %vm2860, %v6487, %v6580
        %v6861 = vsel %vm2860, %v6488, %v6582
        %v6864 = vsel %vm2860, %v6489, %v6584
        %v6867 = vsel %vm2860, %v6490, %v6586
        %v6870 = vsel %vm2860, %v6491, %v6588
        %v6873 = vsel %vm2860, %v6492, %v6590
        %v6876 = vsel %vm2860, %v6493, %v6592
        %v6879 = vsel %vm2860, %v6494, %v6594
        %v6882 = vsel %vm2860, %v6495, %v6596
        %v6885 = vsel %vm2860, %v6496, %v6598
        %v6888 = vsel %vm2860, %v6497, %v6600
        %v6891 = vsel %vm2860, %v6498, %v6602
        %v6894 = vsel %vm2860, %v6499, %v6604
        %v6896 = vsel %vm2909, %v6849, %v6684
        %v6898 = vsel %vm2909, %v6852, %v6686
        %v6900 = vsel %vm2909, %v6855, %v6688
        %v6902 = vsel %vm2909, %v6858, %v6690
        %v6904 = vsel %vm2909, %v6861, %v6692
        %v6906 = vsel %vm2909, %v6864, %v6694
        %v6908 = vsel %vm2909, %v6867, %v6696
        %v6910 = vsel %vm2909, %v6870, %v6698
        %v6912 = vsel %vm2909, %v6873, %v6700
        %v6914 = vsel %vm2909, %v6876, %v6702
        %v6916 = vsel %vm2909, %v6879, %v6704
        %v6918 = vsel %vm2909, %v6882, %v6706
        %v6920 = vsel %vm2909, %v6885, %v6708
        %v6922 = vsel %vm2909, %v6888, %v6710
        %v6924 = vsel %vm2909, %v6891, %v6712
        %v6926 = vsel %vm2909, %v6894, %v6714
        %v6928 = vsel %vm2942, %v6896, %v6796
        %v6931 = vsel %vm2942, %v6898, %v6798
        %v6934 = vsel %vm2942, %v6900, %v6800
        %v6937 = vsel %vm2942, %v6902, %v6802
        %v6940 = vsel %vm2942, %v6904, %v6804
        %v6943 = vsel %vm2942, %v6906, %v6806
        %v6946 = vsel %vm2942, %v6908, %v6808
        %v6949 = vsel %vm2942, %v6910, %v6810
        %v6952 = vsel %vm2942, %v6912, %v6812
        %v6955 = vsel %vm2942, %v6914, %v6814
        %v6958 = vsel %vm2942, %v6916, %v6816
        %v6961 = vsel %vm2942, %v6918, %v6818
        %v6964 = vsel %vm2942, %v6920, %v6820
        %v6967 = vsel %vm2942, %v6922, %v6822
        %v6970 = vsel %vm2942, %v6924, %v6824
        %v6973 = vsel %vm2942, %v6926, %v6826
        %s6975 = scalar_lea.vmem %s7, 256
        %v6976 = vld [vmem:[%s6975] sm:$0xf]
        %v6977 = vld [vmem:[%s6975 + $0x4] sm:$0xf]
        %v6978 = vld [vmem:[%s6975 + $0x8] sm:$0xf]
        %v6979 = vld [vmem:[%s6975 + $0xc] sm:$0xf]
        %v6980 = vld [vmem:[%s6975 + $0x10] sm:$0xf]
        %v6981 = vld [vmem:[%s6975 + $0x14] sm:$0xf]
        %v6982 = vld [vmem:[%s6975 + $0x18] sm:$0xf]
        %v6983 = vld [vmem:[%s6975 + $0x1c] sm:$0xf]
        %v6984 = vld [vmem:[%s6975 + $0x20] sm:$0xf]
        %v6985 = vld [vmem:[%s6975 + $0x24] sm:$0xf]
        %v6986 = vld [vmem:[%s6975 + $0x28] sm:$0xf]
        %v6987 = vld [vmem:[%s6975 + $0x2c] sm:$0xf]
        %v6988 = vld [vmem:[%s6975 + $0x30] sm:$0xf]
        %v6989 = vld [vmem:[%s6975 + $0x34] sm:$0xf]
        %v6990 = vld [vmem:[%s6975 + $0x38] sm:$0xf]
        %v6991 = vld [vmem:[%s6975 + $0x3c] sm:$0xf]
        %v6992 = vld [vmem:[%s6975 + $0x40] sm:$0xf]
        %v6993 = vld [vmem:[%s6975 + $0x44] sm:$0xf]
        %v6994 = vld [vmem:[%s6975 + $0x48] sm:$0xf]
        %v6995 = vld [vmem:[%s6975 + $0x4c] sm:$0xf]
        %v6996 = vld [vmem:[%s6975 + $0x50] sm:$0xf]
        %v6997 = vld [vmem:[%s6975 + $0x54] sm:$0xf]
        %v6998 = vld [vmem:[%s6975 + $0x58] sm:$0xf]
        %v6999 = vld [vmem:[%s6975 + $0x5c] sm:$0xf]
        %v7000 = vld [vmem:[%s6975 + $0x60] sm:$0xf]
        %v7001 = vld [vmem:[%s6975 + $0x64] sm:$0xf]
        %v7002 = vld [vmem:[%s6975 + $0x68] sm:$0xf]
        %v7003 = vld [vmem:[%s6975 + $0x6c] sm:$0xf]
        %v7004 = vld [vmem:[%s6975 + $0x70] sm:$0xf]
        %v7005 = vld [vmem:[%s6975 + $0x74] sm:$0xf]
        %v7006 = vld [vmem:[%s6975 + $0x78] sm:$0xf]
        %v7007 = vld [vmem:[%s6975 + $0x7c] sm:$0xf]
        %v7040 = vunpack.c.l.b16 %v6976
        %v7041 = vunpack.c.l.b16 %v6977
        %v7042 = vunpack.c.l.b16 %v6978
        %v7043 = vunpack.c.l.b16 %v6979
        %v7044 = vunpack.c.l.b16 %v6980
        %v7045 = vunpack.c.l.b16 %v6981
        %v7046 = vunpack.c.l.b16 %v6982
        %v7047 = vunpack.c.l.b16 %v6983
        %v7048 = vunpack.c.l.b16 %v6984
        %v7049 = vunpack.c.l.b16 %v6985
        %v7050 = vunpack.c.l.b16 %v6986
        %v7051 = vunpack.c.l.b16 %v6987
        %v7052 = vunpack.c.l.b16 %v6988
        %v7053 = vunpack.c.l.b16 %v6989
        %v7054 = vunpack.c.l.b16 %v6990
        %v7055 = vunpack.c.l.b16 %v6991
        %v7056 = vunpack.c.l.b16 %v6992
        %v7057 = vunpack.c.l.b16 %v6993
        %v7058 = vunpack.c.l.b16 %v6994
        %v7059 = vunpack.c.l.b16 %v6995
        %v7060 = vunpack.c.l.b16 %v6996
        %v7061 = vunpack.c.l.b16 %v6997
        %v7062 = vunpack.c.l.b16 %v6998
        %v7063 = vunpack.c.l.b16 %v6999
        %v7064 = vunpack.c.l.b16 %v7000
        %v7065 = vunpack.c.l.b16 %v7001
        %v7066 = vunpack.c.l.b16 %v7002
        %v7067 = vunpack.c.l.b16 %v7003
        %v7068 = vunpack.c.l.b16 %v7004
        %v7069 = vunpack.c.l.b16 %v7005
        %v7070 = vunpack.c.l.b16 %v7006
        %v7071 = vunpack.c.l.b16 %v7007
        %v7072 = vpack.c.b16 %v7041, %v7040
        %v7073 = vpack.c.b16 %v7043, %v7042
        %v7074 = vpack.c.b16 %v7045, %v7044
        %v7075 = vpack.c.b16 %v7047, %v7046
        %v7076 = vpack.c.b16 %v7049, %v7048
        %v7077 = vpack.c.b16 %v7051, %v7050
        %v7078 = vpack.c.b16 %v7053, %v7052
        %v7079 = vpack.c.b16 %v7055, %v7054
        %v7080 = vpack.c.b16 %v7057, %v7056
        %v7081 = vpack.c.b16 %v7059, %v7058
        %v7082 = vpack.c.b16 %v7061, %v7060
        %v7083 = vpack.c.b16 %v7063, %v7062
        %v7084 = vpack.c.b16 %v7065, %v7064
        %v7085 = vpack.c.b16 %v7067, %v7066
        %v7086 = vpack.c.b16 %v7069, %v7068
        %v7087 = vpack.c.b16 %v7071, %v7070
        %7104 = vmatpush.bf16.msra.mxu0 %v7079
        %7105 = vmatpush.bf16.msra.mxu0 %v7078
        %7106 = vmatpush.bf16.msra.mxu0 %v7077
        %7107 = vmatpush.bf16.msra.mxu0 %v7076
        %7108 = vmatpush.bf16.msra.mxu0 %v7075
        %7109 = vmatpush.bf16.msra.mxu0 %v7074
        %7110 = vmatpush.bf16.msra.mxu0 %v7073
        %7111 = vmatpush.bf16.msra.mxu0 %v7072
        %7112 = vmatmul.bf16.gmra.mxu0 %v6928
        %v7113 = vpop.f32.mrf.mxu0
        %v7114 = vadd.f32 0.0, %v7113
        %v7115 = vpop.f32.mrf.mxu0
        %v7116 = vadd.f32 0.0, %v7115
        %7117 = vmatmul.bf16.gmra.mxu0 %v6931
        %v7118 = vpop.f32.mrf.mxu0
        %v7119 = vadd.f32 0.0, %v7118
        %v7120 = vpop.f32.mrf.mxu0
        %v7121 = vadd.f32 0.0, %v7120
        %7122 = vmatmul.bf16.gmra.mxu0 %v6934
        %v7123 = vpop.f32.mrf.mxu0
        %v7124 = vadd.f32 0.0, %v7123
        %v7125 = vpop.f32.mrf.mxu0
        %v7126 = vadd.f32 0.0, %v7125
        %7127 = vmatmul.bf16.gmra.mxu0 %v6937
        %v7128 = vpop.f32.mrf.mxu0
        %v7129 = vadd.f32 0.0, %v7128
        %v7130 = vpop.f32.mrf.mxu0
        %v7131 = vadd.f32 0.0, %v7130
        %7132 = vmatmul.bf16.gmra.mxu0 %v6940
        %v7133 = vpop.f32.mrf.mxu0
        %v7134 = vadd.f32 0.0, %v7133
        %v7135 = vpop.f32.mrf.mxu0
        %v7136 = vadd.f32 0.0, %v7135
        %7137 = vmatmul.bf16.gmra.mxu0 %v6943
        %v7138 = vpop.f32.mrf.mxu0
        %v7139 = vadd.f32 0.0, %v7138
        %v7140 = vpop.f32.mrf.mxu0
        %v7141 = vadd.f32 0.0, %v7140
        %7142 = vmatmul.bf16.gmra.mxu0 %v6946
        %v7143 = vpop.f32.mrf.mxu0
        %v7144 = vadd.f32 0.0, %v7143
        %v7145 = vpop.f32.mrf.mxu0
        %v7146 = vadd.f32 0.0, %v7145
        %7147 = vmatmul.bf16.gmra.mxu0 %v6949
        %v7148 = vpop.f32.mrf.mxu0
        %v7149 = vadd.f32 0.0, %v7148
        %v7150 = vpop.f32.mrf.mxu0
        %v7151 = vadd.f32 0.0, %v7150
        %7152 = vmatmul.bf16.gmra.mxu0 %v6952
        %v7153 = vpop.f32.mrf.mxu0
        %v7154 = vadd.f32 0.0, %v7153
        %v7155 = vpop.f32.mrf.mxu0
        %v7156 = vadd.f32 0.0, %v7155
        %7157 = vmatmul.bf16.gmra.mxu0 %v6955
        %v7158 = vpop.f32.mrf.mxu0
        %v7159 = vadd.f32 0.0, %v7158
        %v7160 = vpop.f32.mrf.mxu0
        %v7161 = vadd.f32 0.0, %v7160
        %7162 = vmatmul.bf16.gmra.mxu0 %v6958
        %v7163 = vpop.f32.mrf.mxu0
        %v7164 = vadd.f32 0.0, %v7163
        %v7165 = vpop.f32.mrf.mxu0
        %v7166 = vadd.f32 0.0, %v7165
        %7167 = vmatmul.bf16.gmra.mxu0 %v6961
        %v7168 = vpop.f32.mrf.mxu0
        %v7169 = vadd.f32 0.0, %v7168
        %v7170 = vpop.f32.mrf.mxu0
        %v7171 = vadd.f32 0.0, %v7170
        %7172 = vmatmul.bf16.gmra.mxu0 %v6964
        %v7173 = vpop.f32.mrf.mxu0
        %v7174 = vadd.f32 0.0, %v7173
        %v7175 = vpop.f32.mrf.mxu0
        %v7176 = vadd.f32 0.0, %v7175
        %7177 = vmatmul.bf16.gmra.mxu0 %v6967
        %v7178 = vpop.f32.mrf.mxu0
        %v7179 = vadd.f32 0.0, %v7178
        %v7180 = vpop.f32.mrf.mxu0
        %v7181 = vadd.f32 0.0, %v7180
        %7182 = vmatmul.bf16.gmra.mxu0 %v6970
        %v7183 = vpop.f32.mrf.mxu0
        %v7184 = vadd.f32 0.0, %v7183
        %v7185 = vpop.f32.mrf.mxu0
        %v7186 = vadd.f32 0.0, %v7185
        %7187 = vmatmul.bf16.gmra.mxu0 %v6973
        %v7188 = vpop.f32.mrf.mxu0
        %v7189 = vadd.f32 0.0, %v7188
        %v7190 = vpop.f32.mrf.mxu0
        %v7191 = vadd.f32 0.0, %v7190
        %7192 = vdwg.mxu0
        %7193 = vmatpush.bf16.msra.mxu0 %v7087
        %7194 = vmatpush.bf16.msra.mxu0 %v7086
        %7195 = vmatpush.bf16.msra.mxu0 %v7085
        %7196 = vmatpush.bf16.msra.mxu0 %v7084
        %7197 = vmatpush.bf16.msra.mxu0 %v7083
        %7198 = vmatpush.bf16.msra.mxu0 %v7082
        %7199 = vmatpush.bf16.msra.mxu0 %v7081
        %7200 = vmatpush.bf16.msra.mxu0 %v7080
        %7201 = vmatmul.bf16.gmra.mxu0 %v6560
        %v7202 = vpop.f32.mrf.mxu0
        %v7203 = vadd.f32 %v7114, %v7202
        %v7204 = vpop.f32.mrf.mxu0
        %v7205 = vadd.f32 %v7116, %v7204
        %7206 = vmatmul.bf16.gmra.mxu0 %v6561
        %v7207 = vpop.f32.mrf.mxu0
        %v7208 = vadd.f32 %v7119, %v7207
        %v7209 = vpop.f32.mrf.mxu0
        %v7210 = vadd.f32 %v7121, %v7209
        %7211 = vmatmul.bf16.gmra.mxu0 %v6562
        %v7212 = vpop.f32.mrf.mxu0
        %v7213 = vadd.f32 %v7124, %v7212
        %v7214 = vpop.f32.mrf.mxu0
        %v7215 = vadd.f32 %v7126, %v7214
        %7216 = vmatmul.bf16.gmra.mxu0 %v6563
        %v7217 = vpop.f32.mrf.mxu0
        %v7218 = vadd.f32 %v7129, %v7217
        %v7219 = vpop.f32.mrf.mxu0
        %v7220 = vadd.f32 %v7131, %v7219
        %7221 = vmatmul.bf16.gmra.mxu0 %v6564
        %v7222 = vpop.f32.mrf.mxu0
        %v7223 = vadd.f32 %v7134, %v7222
        %v7224 = vpop.f32.mrf.mxu0
        %v7225 = vadd.f32 %v7136, %v7224
        %7226 = vmatmul.bf16.gmra.mxu0 %v6565
        %v7227 = vpop.f32.mrf.mxu0
        %v7228 = vadd.f32 %v7139, %v7227
        %v7229 = vpop.f32.mrf.mxu0
        %v7230 = vadd.f32 %v7141, %v7229
        %7231 = vmatmul.bf16.gmra.mxu0 %v6566
        %v7232 = vpop.f32.mrf.mxu0
        %v7233 = vadd.f32 %v7144, %v7232
        %v7234 = vpop.f32.mrf.mxu0
        %v7235 = vadd.f32 %v7146, %v7234
        %7236 = vmatmul.bf16.gmra.mxu0 %v6567
        %v7237 = vpop.f32.mrf.mxu0
        %v7238 = vadd.f32 %v7149, %v7237
        %v7239 = vpop.f32.mrf.mxu0
        %v7240 = vadd.f32 %v7151, %v7239
        %7241 = vmatmul.bf16.gmra.mxu0 %v6568
        %v7242 = vpop.f32.mrf.mxu0
        %v7243 = vadd.f32 %v7154, %v7242
        %v7244 = vpop.f32.mrf.mxu0
        %v7245 = vadd.f32 %v7156, %v7244
        %7246 = vmatmul.bf16.gmra.mxu0 %v6569
        %v7247 = vpop.f32.mrf.mxu0
        %v7248 = vadd.f32 %v7159, %v7247
        %v7249 = vpop.f32.mrf.mxu0
        %v7250 = vadd.f32 %v7161, %v7249
        %7251 = vmatmul.bf16.gmra.mxu0 %v6570
        %v7252 = vpop.f32.mrf.mxu0
        %v7253 = vadd.f32 %v7164, %v7252
        %v7254 = vpop.f32.mrf.mxu0
        %v7255 = vadd.f32 %v7166, %v7254
        %7256 = vmatmul.bf16.gmra.mxu0 %v6571
        %v7257 = vpop.f32.mrf.mxu0
        %v7258 = vadd.f32 %v7169, %v7257
        %v7259 = vpop.f32.mrf.mxu0
        %v7260 = vadd.f32 %v7171, %v7259
        %7261 = vmatmul.bf16.gmra.mxu0 %v6572
        %v7262 = vpop.f32.mrf.mxu0
        %v7263 = vadd.f32 %v7174, %v7262
        %v7264 = vpop.f32.mrf.mxu0
        %v7265 = vadd.f32 %v7176, %v7264
        %7266 = vmatmul.bf16.gmra.mxu0 %v6573
        %v7267 = vpop.f32.mrf.mxu0
        %v7268 = vadd.f32 %v7179, %v7267
        %v7269 = vpop.f32.mrf.mxu0
        %v7270 = vadd.f32 %v7181, %v7269
        %7271 = vmatmul.bf16.gmra.mxu0 %v6574
        %v7272 = vpop.f32.mrf.mxu0
        %v7273 = vadd.f32 %v7184, %v7272
        %v7274 = vpop.f32.mrf.mxu0
        %v7275 = vadd.f32 %v7186, %v7274
        %7276 = vmatmul.bf16.gmra.mxu0 %v6831
        %v7277 = vpop.f32.mrf.mxu0
        %v7278 = vadd.f32 %v7189, %v7277
        %v7279 = vpop.f32.mrf.mxu0
        %v7280 = vadd.f32 %v7191, %v7279
        %7281 = vdwg.mxu0
        %s7282 = scalar_lea.vmem %s8, 2
        %v7283 = vld [vmem:[%s7282] sm:$0x1]
        %v7285 = vperm.slane %v7283, 0
        %v7287 = vmul.f32 %v7203, %v7285
        %v7288 = vmul.f32 %v7205, %v7285
        %v7289 = vmul.f32 %v7208, %v7285
        %v7290 = vmul.f32 %v7210, %v7285
        %v7291 = vmul.f32 %v7213, %v7285
        %v7292 = vmul.f32 %v7215, %v7285
        %v7293 = vmul.f32 %v7218, %v7285
        %v7294 = vmul.f32 %v7220, %v7285
        %v7295 = vmul.f32 %v7223, %v7285
        %v7296 = vmul.f32 %v7225, %v7285
        %v7297 = vmul.f32 %v7228, %v7285
        %v7298 = vmul.f32 %v7230, %v7285
        %v7299 = vmul.f32 %v7233, %v7285
        %v7300 = vmul.f32 %v7235, %v7285
        %v7301 = vmul.f32 %v7238, %v7285
        %v7302 = vmul.f32 %v7240, %v7285
        %v7303 = vmul.f32 %v7243, %v7285
        %v7304 = vmul.f32 %v7245, %v7285
        %v7305 = vmul.f32 %v7248, %v7285
        %v7306 = vmul.f32 %v7250, %v7285
        %v7307 = vmul.f32 %v7253, %v7285
        %v7308 = vmul.f32 %v7255, %v7285
        %v7309 = vmul.f32 %v7258, %v7285
        %v7310 = vmul.f32 %v7260, %v7285
        %v7311 = vmul.f32 %v7263, %v7285
        %v7312 = vmul.f32 %v7265, %v7285
        %v7313 = vmul.f32 %v7268, %v7285
        %v7314 = vmul.f32 %v7270, %v7285
        %v7315 = vmul.f32 %v7273, %v7285
        %v7316 = vmul.f32 %v7275, %v7285
        %v7317 = vmul.f32 %v7278, %v7285
        %v7318 = vmul.f32 %v7280, %v7285
        %s7319 = scalar_lea.vmem %s9, 2
        %v7320 = vld [vmem:[%s7319] sm:$0x1]
        %v7322 = vperm.slane %v7320, 0
        %v7324 = vadd.f32 %v7287, %v7322
        %v7325 = vadd.f32 %v7288, %v7322
        %v7326 = vadd.f32 %v7289, %v7322
        %v7327 = vadd.f32 %v7290, %v7322
        %v7328 = vadd.f32 %v7291, %v7322
        %v7329 = vadd.f32 %v7292, %v7322
        %v7330 = vadd.f32 %v7293, %v7322
        %v7331 = vadd.f32 %v7294, %v7322
        %v7332 = vadd.f32 %v7295, %v7322
        %v7333 = vadd.f32 %v7296, %v7322
        %v7334 = vadd.f32 %v7297, %v7322
        %v7335 = vadd.f32 %v7298, %v7322
        %v7336 = vadd.f32 %v7299, %v7322
        %v7337 = vadd.f32 %v7300, %v7322
        %v7338 = vadd.f32 %v7301, %v7322
        %v7339 = vadd.f32 %v7302, %v7322
        %v7340 = vadd.f32 %v7303, %v7322
        %v7341 = vadd.f32 %v7304, %v7322
        %v7342 = vadd.f32 %v7305, %v7322
        %v7343 = vadd.f32 %v7306, %v7322
        %v7344 = vadd.f32 %v7307, %v7322
        %v7345 = vadd.f32 %v7308, %v7322
        %v7346 = vadd.f32 %v7309, %v7322
        %v7347 = vadd.f32 %v7310, %v7322
        %v7348 = vadd.f32 %v7311, %v7322
        %v7349 = vadd.f32 %v7312, %v7322
        %v7350 = vadd.f32 %v7313, %v7322
        %v7351 = vadd.f32 %v7314, %v7322
        %v7352 = vadd.f32 %v7315, %v7322
        %v7353 = vadd.f32 %v7316, %v7322
        %v7354 = vadd.f32 %v7317, %v7322
        %v7355 = vadd.f32 %v7318, %v7322
        %v7356 = vmax.f32 %v7324, 0.0
        %v7357 = vmax.f32 %v7325, 0.0
        %v7358 = vmax.f32 %v7326, 0.0
        %v7359 = vmax.f32 %v7327, 0.0
        %v7360 = vmax.f32 %v7328, 0.0
        %v7361 = vmax.f32 %v7329, 0.0
        %v7362 = vmax.f32 %v7330, 0.0
        %v7363 = vmax.f32 %v7331, 0.0
        %v7364 = vmax.f32 %v7332, 0.0
        %v7365 = vmax.f32 %v7333, 0.0
        %v7366 = vmax.f32 %v7334, 0.0
        %v7367 = vmax.f32 %v7335, 0.0
        %v7368 = vmax.f32 %v7336, 0.0
        %v7369 = vmax.f32 %v7337, 0.0
        %v7370 = vmax.f32 %v7338, 0.0
        %v7371 = vmax.f32 %v7339, 0.0
        %v7372 = vmax.f32 %v7340, 0.0
        %v7373 = vmax.f32 %v7341, 0.0
        %v7374 = vmax.f32 %v7342, 0.0
        %v7375 = vmax.f32 %v7343, 0.0
        %v7376 = vmax.f32 %v7344, 0.0
        %v7377 = vmax.f32 %v7345, 0.0
        %v7378 = vmax.f32 %v7346, 0.0
        %v7379 = vmax.f32 %v7347, 0.0
        %v7380 = vmax.f32 %v7348, 0.0
        %v7381 = vmax.f32 %v7349, 0.0
        %v7382 = vmax.f32 %v7350, 0.0
        %v7383 = vmax.f32 %v7351, 0.0
        %v7384 = vmax.f32 %v7352, 0.0
        %v7385 = vmax.f32 %v7353, 0.0
        %v7386 = vmax.f32 %v7354, 0.0
        %v7387 = vmax.f32 %v7355, 0.0
        %v7388 = vpack.c.bf16 %v7357, %v7356
        %v7389 = vpack.c.bf16 %v7359, %v7358
        %v7390 = vpack.c.bf16 %v7361, %v7360
        %v7391 = vpack.c.bf16 %v7363, %v7362
        %v7392 = vpack.c.bf16 %v7365, %v7364
        %v7393 = vpack.c.bf16 %v7367, %v7366
        %v7394 = vpack.c.bf16 %v7369, %v7368
        %v7395 = vpack.c.bf16 %v7371, %v7370
        %v7396 = vpack.c.bf16 %v7373, %v7372
        %v7397 = vpack.c.bf16 %v7375, %v7374
        %v7398 = vpack.c.bf16 %v7377, %v7376
        %v7399 = vpack.c.bf16 %v7379, %v7378
        %v7400 = vpack.c.bf16 %v7381, %v7380
        %v7401 = vpack.c.bf16 %v7383, %v7382
        %v7402 = vpack.c.bf16 %v7385, %v7384
        %v7403 = vpack.c.bf16 %v7387, %v7386
        %s7404 = scalar_lea.vmem %s10, 128
        %v7405 = vld [vmem:[%s7404] sm:$0xf]
        %v7406 = vld [vmem:[%s7404 + $0x4] sm:$0xf]
        %v7407 = vld [vmem:[%s7404 + $0x8] sm:$0xf]
        %v7408 = vld [vmem:[%s7404 + $0xc] sm:$0xf]
        %v7409 = vld [vmem:[%s7404 + $0x10] sm:$0xf]
        %v7410 = vld [vmem:[%s7404 + $0x14] sm:$0xf]
        %v7411 = vld [vmem:[%s7404 + $0x18] sm:$0xf]
        %v7412 = vld [vmem:[%s7404 + $0x1c] sm:$0xf]
        %v7413 = vld [vmem:[%s7404 + $0x20] sm:$0xf]
        %v7414 = vld [vmem:[%s7404 + $0x24] sm:$0xf]
        %v7415 = vld [vmem:[%s7404 + $0x28] sm:$0xf]
        %v7416 = vld [vmem:[%s7404 + $0x2c] sm:$0xf]
        %v7417 = vld [vmem:[%s7404 + $0x30] sm:$0xf]
        %v7418 = vld [vmem:[%s7404 + $0x34] sm:$0xf]
        %v7419 = vld [vmem:[%s7404 + $0x38] sm:$0xf]
        %v7420 = vld [vmem:[%s7404 + $0x3c] sm:$0xf]
        %v7437 = vunpack.c.l.b16 %v7405
        %v7438 = vunpack.c.l.b16 %v7406
        %v7439 = vunpack.c.l.b16 %v7407
        %v7440 = vunpack.c.l.b16 %v7408
        %v7441 = vunpack.c.l.b16 %v7409
        %v7442 = vunpack.c.l.b16 %v7410
        %v7443 = vunpack.c.l.b16 %v7411
        %v7444 = vunpack.c.l.b16 %v7412
        %v7445 = vunpack.c.l.b16 %v7413
        %v7446 = vunpack.c.l.b16 %v7414
        %v7447 = vunpack.c.l.b16 %v7415
        %v7448 = vunpack.c.l.b16 %v7416
        %v7449 = vunpack.c.l.b16 %v7417
        %v7450 = vunpack.c.l.b16 %v7418
        %v7451 = vunpack.c.l.b16 %v7419
        %v7452 = vunpack.c.l.b16 %v7420
        %v7453 = vpack.c.b16 %v7438, %v7437
        %v7454 = vpack.c.b16 %v7440, %v7439
        %v7455 = vpack.c.b16 %v7442, %v7441
        %v7456 = vpack.c.b16 %v7444, %v7443
        %v7457 = vpack.c.b16 %v7446, %v7445
        %v7458 = vpack.c.b16 %v7448, %v7447
        %v7459 = vpack.c.b16 %v7450, %v7449
        %v7460 = vpack.c.b16 %v7452, %v7451
        %7469 = vmatpush.bf16.msra.mxu0 %v7460
        %7470 = vmatpush.bf16.msra.mxu0 %v7459
        %7471 = vmatpush.bf16.msra.mxu0 %v7458
        %7472 = vmatpush.bf16.msra.mxu0 %v7457
        %7473 = vmatpush.bf16.msra.mxu0 %v7456
        %7474 = vmatpush.bf16.msra.mxu0 %v7455
        %7475 = vmatpush.bf16.msra.mxu0 %v7454
        %7476 = vmatpush.bf16.msra.mxu0 %v7453
        %7477 = vmatmul.bf16.gmra.mxu0 %v7388
        %v7478 = vpop.f32.mrf.mxu0
        %v7479 = vadd.f32 0.0, %v7478
        %v7480 = vpop.f32.mrf.mxu0
        %v7481 = vadd.f32 0.0, %v7480
        %7482 = vmatmul.bf16.gmra.mxu0 %v7389
        %v7483 = vpop.f32.mrf.mxu0
        %v7484 = vadd.f32 0.0, %v7483
        %v7485 = vpop.f32.mrf.mxu0
        %v7486 = vadd.f32 0.0, %v7485
        %7487 = vmatmul.bf16.gmra.mxu0 %v7390
        %v7488 = vpop.f32.mrf.mxu0
        %v7489 = vadd.f32 0.0, %v7488
        %v7490 = vpop.f32.mrf.mxu0
        %v7491 = vadd.f32 0.0, %v7490
        %7492 = vmatmul.bf16.gmra.mxu0 %v7391
        %v7493 = vpop.f32.mrf.mxu0
        %v7494 = vadd.f32 0.0, %v7493
        %v7495 = vpop.f32.mrf.mxu0
        %v7496 = vadd.f32 0.0, %v7495
        %7497 = vmatmul.bf16.gmra.mxu0 %v7392
        %v7498 = vpop.f32.mrf.mxu0
        %v7499 = vadd.f32 0.0, %v7498
        %v7500 = vpop.f32.mrf.mxu0
        %v7501 = vadd.f32 0.0, %v7500
        %7502 = vmatmul.bf16.gmra.mxu0 %v7393
        %v7503 = vpop.f32.mrf.mxu0
        %v7504 = vadd.f32 0.0, %v7503
        %v7505 = vpop.f32.mrf.mxu0
        %v7506 = vadd.f32 0.0, %v7505
        %7507 = vmatmul.bf16.gmra.mxu0 %v7394
        %v7508 = vpop.f32.mrf.mxu0
        %v7509 = vadd.f32 0.0, %v7508
        %v7510 = vpop.f32.mrf.mxu0
        %v7511 = vadd.f32 0.0, %v7510
        %7512 = vmatmul.bf16.gmra.mxu0 %v7395
        %v7513 = vpop.f32.mrf.mxu0
        %v7514 = vadd.f32 0.0, %v7513
        %v7515 = vpop.f32.mrf.mxu0
        %v7516 = vadd.f32 0.0, %v7515
        %7517 = vmatmul.bf16.gmra.mxu0 %v7396
        %v7518 = vpop.f32.mrf.mxu0
        %v7519 = vadd.f32 0.0, %v7518
        %v7520 = vpop.f32.mrf.mxu0
        %v7521 = vadd.f32 0.0, %v7520
        %7522 = vmatmul.bf16.gmra.mxu0 %v7397
        %v7523 = vpop.f32.mrf.mxu0
        %v7524 = vadd.f32 0.0, %v7523
        %v7525 = vpop.f32.mrf.mxu0
        %v7526 = vadd.f32 0.0, %v7525
        %7527 = vmatmul.bf16.gmra.mxu0 %v7398
        %v7528 = vpop.f32.mrf.mxu0
        %v7529 = vadd.f32 0.0, %v7528
        %v7530 = vpop.f32.mrf.mxu0
        %v7531 = vadd.f32 0.0, %v7530
        %7532 = vmatmul.bf16.gmra.mxu0 %v7399
        %v7533 = vpop.f32.mrf.mxu0
        %v7534 = vadd.f32 0.0, %v7533
        %v7535 = vpop.f32.mrf.mxu0
        %v7536 = vadd.f32 0.0, %v7535
        %7537 = vmatmul.bf16.gmra.mxu0 %v7400
        %v7538 = vpop.f32.mrf.mxu0
        %v7539 = vadd.f32 0.0, %v7538
        %v7540 = vpop.f32.mrf.mxu0
        %v7541 = vadd.f32 0.0, %v7540
        %7542 = vmatmul.bf16.gmra.mxu0 %v7401
        %v7543 = vpop.f32.mrf.mxu0
        %v7544 = vadd.f32 0.0, %v7543
        %v7545 = vpop.f32.mrf.mxu0
        %v7546 = vadd.f32 0.0, %v7545
        %7547 = vmatmul.bf16.gmra.mxu0 %v7402
        %v7548 = vpop.f32.mrf.mxu0
        %v7549 = vadd.f32 0.0, %v7548
        %v7550 = vpop.f32.mrf.mxu0
        %v7551 = vadd.f32 0.0, %v7550
        %7552 = vmatmul.bf16.gmra.mxu0 %v7403
        %v7553 = vpop.f32.mrf.mxu0
        %v7554 = vadd.f32 0.0, %v7553
        %v7555 = vpop.f32.mrf.mxu0
        %v7556 = vadd.f32 0.0, %v7555
        %7557 = vdwg.mxu0
        %s7558 = scalar_lea.vmem %s11, 2
        %v7559 = vld [vmem:[%s7558] sm:$0x1]
        %v7561 = vperm.slane %v7559, 0
        %v7563 = vmul.f32 %v7479, %v7561
        %v7564 = vmul.f32 %v7481, %v7561
        %v7565 = vmul.f32 %v7484, %v7561
        %v7566 = vmul.f32 %v7486, %v7561
        %v7567 = vmul.f32 %v7489, %v7561
        %v7568 = vmul.f32 %v7491, %v7561
        %v7569 = vmul.f32 %v7494, %v7561
        %v7570 = vmul.f32 %v7496, %v7561
        %v7571 = vmul.f32 %v7499, %v7561
        %v7572 = vmul.f32 %v7501, %v7561
        %v7573 = vmul.f32 %v7504, %v7561
        %v7574 = vmul.f32 %v7506, %v7561
        %v7575 = vmul.f32 %v7509, %v7561
        %v7576 = vmul.f32 %v7511, %v7561
        %v7577 = vmul.f32 %v7514, %v7561
        %v7578 = vmul.f32 %v7516, %v7561
        %v7579 = vmul.f32 %v7519, %v7561
        %v7580 = vmul.f32 %v7521, %v7561
        %v7581 = vmul.f32 %v7524, %v7561
        %v7582 = vmul.f32 %v7526, %v7561
        %v7583 = vmul.f32 %v7529, %v7561
        %v7584 = vmul.f32 %v7531, %v7561
        %v7585 = vmul.f32 %v7534, %v7561
        %v7586 = vmul.f32 %v7536, %v7561
        %v7587 = vmul.f32 %v7539, %v7561
        %v7588 = vmul.f32 %v7541, %v7561
        %v7589 = vmul.f32 %v7544, %v7561
        %v7590 = vmul.f32 %v7546, %v7561
        %v7591 = vmul.f32 %v7549, %v7561
        %v7592 = vmul.f32 %v7551, %v7561
        %v7593 = vmul.f32 %v7554, %v7561
        %v7594 = vmul.f32 %v7556, %v7561
        %v7595 = vadd.f32 %v5637, %v7563
        %v7596 = vadd.f32 %v5638, %v7564
        %v7597 = vadd.f32 %v5639, %v7565
        %v7598 = vadd.f32 %v5640, %v7566
        %v7599 = vadd.f32 %v5641, %v7567
        %v7600 = vadd.f32 %v5642, %v7568
        %v7601 = vadd.f32 %v5643, %v7569
        %v7602 = vadd.f32 %v5644, %v7570
        %v7603 = vadd.f32 %v5645, %v7571
        %v7604 = vadd.f32 %v5646, %v7572
        %v7605 = vadd.f32 %v5647, %v7573
        %v7606 = vadd.f32 %v5648, %v7574
        %v7607 = vadd.f32 %v5649, %v7575
        %v7608 = vadd.f32 %v5650, %v7576
        %v7609 = vadd.f32 %v5651, %v7577
        %v7610 = vadd.f32 %v5652, %v7578
        %v7611 = vadd.f32 %v5653, %v7579
        %v7612 = vadd.f32 %v5654, %v7580
        %v7613 = vadd.f32 %v5655, %v7581
        %v7614 = vadd.f32 %v5656, %v7582
        %v7615 = vadd.f32 %v5657, %v7583
        %v7616 = vadd.f32 %v5658, %v7584
        %v7617 = vadd.f32 %v5659, %v7585
        %v7618 = vadd.f32 %v5660, %v7586
        %v7619 = vadd.f32 %v5661, %v7587
        %v7620 = vadd.f32 %v5662, %v7588
        %v7621 = vadd.f32 %v5663, %v7589
        %v7622 = vadd.f32 %v5664, %v7590
        %v7623 = vadd.f32 %v5665, %v7591
        %v7624 = vadd.f32 %v5666, %v7592
        %v7625 = vadd.f32 %v5667, %v7593
        %v7626 = vadd.f32 %v5668, %v7594
        %s7627 = scalar_lea.vmem %s12, 2
        %v7628 = vld [vmem:[%s7627] sm:$0x1]
        %v7630 = vperm.slane %v7628, 0
        %v7632 = vadd.f32 %v7595, %v7630
        %v7633 = vadd.f32 %v7596, %v7630
        %v7634 = vadd.f32 %v7597, %v7630
        %v7635 = vadd.f32 %v7598, %v7630
        %v7636 = vadd.f32 %v7599, %v7630
        %v7637 = vadd.f32 %v7600, %v7630
        %v7638 = vadd.f32 %v7601, %v7630
        %v7639 = vadd.f32 %v7602, %v7630
        %v7640 = vadd.f32 %v7603, %v7630
        %v7641 = vadd.f32 %v7604, %v7630
        %v7642 = vadd.f32 %v7605, %v7630
        %v7643 = vadd.f32 %v7606, %v7630
        %v7644 = vadd.f32 %v7607, %v7630
        %v7645 = vadd.f32 %v7608, %v7630
        %v7646 = vadd.f32 %v7609, %v7630
        %v7647 = vadd.f32 %v7610, %v7630
        %v7648 = vadd.f32 %v7611, %v7630
        %v7649 = vadd.f32 %v7612, %v7630
        %v7650 = vadd.f32 %v7613, %v7630
        %v7651 = vadd.f32 %v7614, %v7630
        %v7652 = vadd.f32 %v7615, %v7630
        %v7653 = vadd.f32 %v7616, %v7630
        %v7654 = vadd.f32 %v7617, %v7630
        %v7655 = vadd.f32 %v7618, %v7630
        %v7656 = vadd.f32 %v7619, %v7630
        %v7657 = vadd.f32 %v7620, %v7630
        %v7658 = vadd.f32 %v7621, %v7630
        %v7659 = vadd.f32 %v7622, %v7630
        %v7660 = vadd.f32 %v7623, %v7630
        %v7661 = vadd.f32 %v7624, %v7630
        %v7662 = vadd.f32 %v7625, %v7630
        %v7663 = vadd.f32 %v7626, %v7630
        %v7664 = vmax.f32 %v7632, 0.0
        %v7665 = vmax.f32 %v7633, 0.0
        %v7666 = vmax.f32 %v7634, 0.0
        %v7667 = vmax.f32 %v7635, 0.0
        %v7668 = vmax.f32 %v7636, 0.0
        %v7669 = vmax.f32 %v7637, 0.0
        %v7670 = vmax.f32 %v7638, 0.0
        %v7671 = vmax.f32 %v7639, 0.0
        %v7672 = vmax.f32 %v7640, 0.0
        %v7673 = vmax.f32 %v7641, 0.0
        %v7674 = vmax.f32 %v7642, 0.0
        %v7675 = vmax.f32 %v7643, 0.0
        %v7676 = vmax.f32 %v7644, 0.0
        %v7677 = vmax.f32 %v7645, 0.0
        %v7678 = vmax.f32 %v7646, 0.0
        %v7679 = vmax.f32 %v7647, 0.0
        %v7680 = vmax.f32 %v7648, 0.0
        %v7681 = vmax.f32 %v7649, 0.0
        %v7682 = vmax.f32 %v7650, 0.0
        %v7683 = vmax.f32 %v7651, 0.0
        %v7684 = vmax.f32 %v7652, 0.0
        %v7685 = vmax.f32 %v7653, 0.0
        %v7686 = vmax.f32 %v7654, 0.0
        %v7687 = vmax.f32 %v7655, 0.0
        %v7688 = vmax.f32 %v7656, 0.0
        %v7689 = vmax.f32 %v7657, 0.0
        %v7690 = vmax.f32 %v7658, 0.0
        %v7691 = vmax.f32 %v7659, 0.0
        %v7692 = vmax.f32 %v7660, 0.0
        %v7693 = vmax.f32 %v7661, 0.0
        %v7694 = vmax.f32 %v7662, 0.0
        %v7695 = vmax.f32 %v7663, 0.0
        %v7696 = vpack.c.bf16 %v7665, %v7664
        %v7697 = vpack.c.bf16 %v7667, %v7666
        %v7698 = vpack.c.bf16 %v7669, %v7668
        %v7699 = vpack.c.bf16 %v7671, %v7670
        %v7700 = vpack.c.bf16 %v7673, %v7672
        %v7701 = vpack.c.bf16 %v7675, %v7674
        %v7702 = vpack.c.bf16 %v7677, %v7676
        %v7703 = vpack.c.bf16 %v7679, %v7678
        %v7704 = vpack.c.bf16 %v7681, %v7680
        %v7705 = vpack.c.bf16 %v7683, %v7682
        %v7706 = vpack.c.bf16 %v7685, %v7684
        %v7707 = vpack.c.bf16 %v7687, %v7686
        %v7708 = vpack.c.bf16 %v7689, %v7688
        %v7709 = vpack.c.bf16 %v7691, %v7690
        %v7710 = vpack.c.bf16 %v7693, %v7692
        %v7711 = vpack.c.bf16 %v7695, %v7694
        %v7712 = vld [vmem:[%s13] sm:$0xff]
        %v7713 = vld [vmem:[%s13 + $0x8] sm:$0xff]
        %v7714 = vld [vmem:[%s13 + $0x10] sm:$0xf]
        %v7715 = vld [vmem:[%s13 + $0x14] sm:$0xff]
        %v7716 = vld [vmem:[%s13 + $0x1c] sm:$0xff]
        %v7717 = vld [vmem:[%s13 + $0x24] sm:$0xf]
        %v7718 = vld [vmem:[%s13 + $0x28] sm:$0xff]
        %v7719 = vld [vmem:[%s13 + $0x30] sm:$0xff]
        %v7720 = vld [vmem:[%s13 + $0x38] sm:$0xf]
        %v7721 = vld [vmem:[%s13 + $0x3c] sm:$0xff]
        %v7722 = vld [vmem:[%s13 + $0x44] sm:$0xff]
        %v7723 = vld [vmem:[%s13 + $0x4c] sm:$0xf]
        %v7724 = vld [vmem:[%s13 + $0x50] sm:$0xff]
        %v7725 = vld [vmem:[%s13 + $0x58] sm:$0xff]
        %v7726 = vld [vmem:[%s13 + $0x60] sm:$0xf]
        %v7727 = vld [vmem:[%s13 + $0x64] sm:$0xff]
        %v7728 = vld [vmem:[%s13 + $0x6c] sm:$0xff]
        %v7729 = vld [vmem:[%s13 + $0x74] sm:$0xf]
        %v7730 = vld [vmem:[%s13 + $0x78] sm:$0xff]
        %v7731 = vld [vmem:[%s13 + $0x80] sm:$0xff]
        %v7732 = vld [vmem:[%s13 + $0x88] sm:$0xf]
        %v7733 = vld [vmem:[%s13 + $0x8c] sm:$0xff]
        %v7734 = vld [vmem:[%s13 + $0x94] sm:$0xff]
        %v7735 = vld [vmem:[%s13 + $0x9c] sm:$0xf]
        %v7736 = vld [vmem:[%s13 + $0xa0] sm:$0xff]
        %v7737 = vld [vmem:[%s13 + $0xa8] sm:$0xff]
        %v7738 = vld [vmem:[%s13 + $0xb0] sm:$0xf]
        %v7739 = vld [vmem:[%s13 + $0xb4] sm:$0xff]
        %v7740 = vld [vmem:[%s13 + $0xbc] sm:$0xff]
        %v7741 = vld [vmem:[%s13 + $0xc4] sm:$0xf]
        %v7742 = vld [vmem:[%s13 + $0xc8] sm:$0xff]
        %v7743 = vld [vmem:[%s13 + $0xd0] sm:$0xff]
        %v7744 = vld [vmem:[%s13 + $0xd8] sm:$0xf]
        %v7745 = vld [vmem:[%s13 + $0xdc] sm:$0xff]
        %v7746 = vld [vmem:[%s13 + $0xe4] sm:$0xff]
        %v7747 = vld [vmem:[%s13 + $0xec] sm:$0xf]
        %v7748 = vld [vmem:[%s13 + $0xf0] sm:$0xff]
        %v7749 = vld [vmem:[%s13 + $0xf8] sm:$0xff]
        %v7750 = vld [vmem:[%s13 + $0x100] sm:$0xf]
        %v7751 = vld [vmem:[%s13 + $0x104] sm:$0xff]
        %v7752 = vld [vmem:[%s13 + $0x10c] sm:$0xff]
        %v7753 = vld [vmem:[%s13 + $0x114] sm:$0xf]
        %v7754 = vld [vmem:[%s13 + $0x118] sm:$0xff]
        %v7755 = vld [vmem:[%s13 + $0x120] sm:$0xff]
        %v7756 = vld [vmem:[%s13 + $0x128] sm:$0xf]
        %v7757 = vld [vmem:[%s13 + $0x12c] sm:$0xff]
        %v7758 = vld [vmem:[%s13 + $0x134] sm:$0xff]
        %v7759 = vld [vmem:[%s13 + $0x13c] sm:$0xf]
        %v7808 = vunpack.c.l.b16 %v7712
        %v7809 = vunpack.c.h.b16 %v7712
        %v7810 = vunpack.c.l.b16 %v7713
        %v7811 = vunpack.c.h.b16 %v7713
        %v7812 = vunpack.c.l.b16 %v7714
        %v7813 = vunpack.c.l.b16 %v7715
        %v7814 = vunpack.c.h.b16 %v7715
        %v7815 = vunpack.c.l.b16 %v7716
        %v7816 = vunpack.c.h.b16 %v7716
        %v7817 = vunpack.c.l.b16 %v7717
        %v7818 = vunpack.c.l.b16 %v7718
        %v7819 = vunpack.c.h.b16 %v7718
        %v7820 = vunpack.c.l.b16 %v7719
        %v7821 = vunpack.c.h.b16 %v7719
        %v7822 = vunpack.c.l.b16 %v7720
        %v7823 = vunpack.c.l.b16 %v7721
        %v7824 = vunpack.c.h.b16 %v7721
        %v7825 = vunpack.c.l.b16 %v7722
        %v7826 = vunpack.c.h.b16 %v7722
        %v7827 = vunpack.c.l.b16 %v7723
        %v7828 = vunpack.c.l.b16 %v7724
        %v7829 = vunpack.c.h.b16 %v7724
        %v7830 = vunpack.c.l.b16 %v7725
        %v7831 = vunpack.c.h.b16 %v7725
        %v7832 = vunpack.c.l.b16 %v7726
        %v7833 = vunpack.c.l.b16 %v7727
        %v7834 = vunpack.c.h.b16 %v7727
        %v7835 = vunpack.c.l.b16 %v7728
        %v7836 = vunpack.c.h.b16 %v7728
        %v7837 = vunpack.c.l.b16 %v7729
        %v7838 = vunpack.c.l.b16 %v7730
        %v7839 = vunpack.c.h.b16 %v7730
        %v7840 = vunpack.c.l.b16 %v7731
        %v7841 = vunpack.c.h.b16 %v7731
        %v7842 = vunpack.c.l.b16 %v7732
        %v7843 = vunpack.c.l.b16 %v7733
        %v7844 = vunpack.c.h.b16 %v7733
        %v7845 = vunpack.c.l.b16 %v7734
        %v7846 = vunpack.c.h.b16 %v7734
        %v7847 = vunpack.c.l.b16 %v7735
        %v7848 = vunpack.c.l.b16 %v7736
        %v7849 = vunpack.c.h.b16 %v7736
        %v7850 = vunpack.c.l.b16 %v7737
        %v7851 = vunpack.c.h.b16 %v7737
        %v7852 = vunpack.c.l.b16 %v7738
        %v7853 = vunpack.c.l.b16 %v7739
        %v7854 = vunpack.c.h.b16 %v7739
        %v7855 = vunpack.c.l.b16 %v7740
        %v7856 = vunpack.c.h.b16 %v7740
        %v7857 = vunpack.c.l.b16 %v7741
        %v7858 = vunpack.c.l.b16 %v7742
        %v7859 = vunpack.c.h.b16 %v7742
        %v7860 = vunpack.c.l.b16 %v7743
        %v7861 = vunpack.c.h.b16 %v7743
        %v7862 = vunpack.c.l.b16 %v7744
        %v7863 = vunpack.c.l.b16 %v7745
        %v7864 = vunpack.c.h.b16 %v7745
        %v7865 = vunpack.c.l.b16 %v7746
        %v7866 = vunpack.c.h.b16 %v7746
        %v7867 = vunpack.c.l.b16 %v7747
        %v7868 = vunpack.c.l.b16 %v7748
        %v7869 = vunpack.c.h.b16 %v7748
        %v7870 = vunpack.c.l.b16 %v7749
        %v7871 = vunpack.c.h.b16 %v7749
        %v7872 = vunpack.c.l.b16 %v7750
        %v7873 = vunpack.c.l.b16 %v7751
        %v7874 = vunpack.c.h.b16 %v7751
        %v7875 = vunpack.c.l.b16 %v7752
        %v7876 = vunpack.c.h.b16 %v7752
        %v7877 = vunpack.c.l.b16 %v7753
        %v7878 = vunpack.c.l.b16 %v7754
        %v7879 = vunpack.c.h.b16 %v7754
        %v7880 = vunpack.c.l.b16 %v7755
        %v7881 = vunpack.c.h.b16 %v7755
        %v7882 = vunpack.c.l.b16 %v7756
        %v7883 = vunpack.c.l.b16 %v7757
        %v7884 = vunpack.c.h.b16 %v7757
        %v7885 = vunpack.c.l.b16 %v7758
        %v7886 = vunpack.c.h.b16 %v7758
        %v7887 = vunpack.c.l.b16 %v7759
        %v7888 = vpack.c.b16 %v7813, %v7808
        %v7889 = vpack.c.b16 %v7814, %v7809
        %v7890 = vpack.c.b16 %v7815, %v7810
        %v7891 = vpack.c.b16 %v7816, %v7811
        %v7892 = vpack.c.b16 %v7817, %v7812
        %v7893 = vpack.c.b16 %v7823, %v7818
        %v7894 = vpack.c.b16 %v7824, %v7819
        %v7895 = vpack.c.b16 %v7825, %v7820
        %v7896 = vpack.c.b16 %v7826, %v7821
        %v7897 = vpack.c.b16 %v7827, %v7822
        %v7898 = vpack.c.b16 %v7833, %v7828
        %v7899 = vpack.c.b16 %v7834, %v7829
        %v7900 = vpack.c.b16 %v7835, %v7830
        %v7901 = vpack.c.b16 %v7836, %v7831
        %v7902 = vpack.c.b16 %v7837, %v7832
        %v7903 = vpack.c.b16 %v7843, %v7838
        %v7904 = vpack.c.b16 %v7844, %v7839
        %v7905 = vpack.c.b16 %v7845, %v7840
        %v7906 = vpack.c.b16 %v7846, %v7841
        %v7907 = vpack.c.b16 %v7847, %v7842
        %v7908 = vpack.c.b16 %v7853, %v7848
        %v7909 = vpack.c.b16 %v7854, %v7849
        %v7910 = vpack.c.b16 %v7855, %v7850
        %v7911 = vpack.c.b16 %v7856, %v7851
        %v7912 = vpack.c.b16 %v7857, %v7852
        %v7913 = vpack.c.b16 %v7863, %v7858
        %v7914 = vpack.c.b16 %v7864, %v7859
        %v7915 = vpack.c.b16 %v7865, %v7860
        %v7916 = vpack.c.b16 %v7866, %v7861
        %v7917 = vpack.c.b16 %v7867, %v7862
        %v7918 = vpack.c.b16 %v7873, %v7868
        %v7919 = vpack.c.b16 %v7874, %v7869
        %v7920 = vpack.c.b16 %v7875, %v7870
        %v7921 = vpack.c.b16 %v7876, %v7871
        %v7922 = vpack.c.b16 %v7877, %v7872
        %v7923 = vpack.c.b16 %v7883, %v7878
        %v7924 = vpack.c.b16 %v7884, %v7879
        %v7925 = vpack.c.b16 %v7885, %v7880
        %v7926 = vpack.c.b16 %v7886, %v7881
        %v7927 = vpack.c.b16 %v7887, %v7882
        %7968 = vmatpush.bf16.msra.mxu0 %v7923
        %7969 = vmatpush.bf16.msra.mxu0 %v7918
        %7970 = vmatpush.bf16.msra.mxu0 %v7913
        %7971 = vmatpush.bf16.msra.mxu0 %v7908
        %7972 = vmatpush.bf16.msra.mxu0 %v7903
        %7973 = vmatpush.bf16.msra.mxu0 %v7898
        %7974 = vmatpush.bf16.msra.mxu0 %v7893
        %7975 = vmatpush.bf16.msra.mxu0 %v7888
        %7976 = vmatmul.bf16.gmra.mxu0 %v7696
        %v7977 = vpop.f32.mrf.mxu0
        %v7978 = vadd.f32 0.0, %v7977
        %v7979 = vpop.f32.mrf.mxu0
        %v7980 = vadd.f32 0.0, %v7979
        %7981 = vmatmul.bf16.gmra.mxu0 %v7697
        %v7982 = vpop.f32.mrf.mxu0
        %v7983 = vadd.f32 0.0, %v7982
        %v7984 = vpop.f32.mrf.mxu0
        %v7985 = vadd.f32 0.0, %v7984
        %7986 = vmatmul.bf16.gmra.mxu0 %v7698
        %v7987 = vpop.f32.mrf.mxu0
        %v7988 = vadd.f32 0.0, %v7987
        %v7989 = vpop.f32.mrf.mxu0
        %v7990 = vadd.f32 0.0, %v7989
        %7991 = vmatmul.bf16.gmra.mxu0 %v7699
        %v7992 = vpop.f32.mrf.mxu0
        %v7993 = vadd.f32 0.0, %v7992
        %v7994 = vpop.f32.mrf.mxu0
        %v7995 = vadd.f32 0.0, %v7994
        %7996 = vmatmul.bf16.gmra.mxu0 %v7700
        %v7997 = vpop.f32.mrf.mxu0
        %v7998 = vadd.f32 0.0, %v7997
        %v7999 = vpop.f32.mrf.mxu0
        %v8000 = vadd.f32 0.0, %v7999
        %8001 = vmatmul.bf16.gmra.mxu0 %v7701
        %v8002 = vpop.f32.mrf.mxu0
        %v8003 = vadd.f32 0.0, %v8002
        %v8004 = vpop.f32.mrf.mxu0
        %v8005 = vadd.f32 0.0, %v8004
        %8006 = vmatmul.bf16.gmra.mxu0 %v7702
        %v8007 = vpop.f32.mrf.mxu0
        %v8008 = vadd.f32 0.0, %v8007
        %v8009 = vpop.f32.mrf.mxu0
        %v8010 = vadd.f32 0.0, %v8009
        %8011 = vmatmul.bf16.gmra.mxu0 %v7703
        %v8012 = vpop.f32.mrf.mxu0
        %v8013 = vadd.f32 0.0, %v8012
        %v8014 = vpop.f32.mrf.mxu0
        %v8015 = vadd.f32 0.0, %v8014
        %8016 = vmatmul.bf16.gmra.mxu0 %v7704
        %v8017 = vpop.f32.mrf.mxu0
        %v8018 = vadd.f32 0.0, %v8017
        %v8019 = vpop.f32.mrf.mxu0
        %v8020 = vadd.f32 0.0, %v8019
        %8021 = vmatmul.bf16.gmra.mxu0 %v7705
        %v8022 = vpop.f32.mrf.mxu0
        %v8023 = vadd.f32 0.0, %v8022
        %v8024 = vpop.f32.mrf.mxu0
        %v8025 = vadd.f32 0.0, %v8024
        %8026 = vmatmul.bf16.gmra.mxu0 %v7706
        %v8027 = vpop.f32.mrf.mxu0
        %v8028 = vadd.f32 0.0, %v8027
        %v8029 = vpop.f32.mrf.mxu0
        %v8030 = vadd.f32 0.0, %v8029
        %8031 = vmatmul.bf16.gmra.mxu0 %v7707
        %v8032 = vpop.f32.mrf.mxu0
        %v8033 = vadd.f32 0.0, %v8032
        %v8034 = vpop.f32.mrf.mxu0
        %v8035 = vadd.f32 0.0, %v8034
        %8036 = vmatmul.bf16.gmra.mxu0 %v7708
        %v8037 = vpop.f32.mrf.mxu0
        %v8038 = vadd.f32 0.0, %v8037
        %v8039 = vpop.f32.mrf.mxu0
        %v8040 = vadd.f32 0.0, %v8039
        %8041 = vmatmul.bf16.gmra.mxu0 %v7709
        %v8042 = vpop.f32.mrf.mxu0
        %v8043 = vadd.f32 0.0, %v8042
        %v8044 = vpop.f32.mrf.mxu0
        %v8045 = vadd.f32 0.0, %v8044
        %8046 = vmatmul.bf16.gmra.mxu0 %v7710
        %v8047 = vpop.f32.mrf.mxu0
        %v8048 = vadd.f32 0.0, %v8047
        %v8049 = vpop.f32.mrf.mxu0
        %v8050 = vadd.f32 0.0, %v8049
        %8051 = vmatmul.bf16.gmra.mxu0 %v7711
        %v8052 = vpop.f32.mrf.mxu0
        %v8053 = vadd.f32 0.0, %v8052
        %v8054 = vpop.f32.mrf.mxu0
        %v8055 = vadd.f32 0.0, %v8054
        %8056 = vdwg.mxu0
        %8057 = vmatpush.bf16.msra.mxu0 %v7924
        %8058 = vmatpush.bf16.msra.mxu0 %v7919
        %8059 = vmatpush.bf16.msra.mxu0 %v7914
        %8060 = vmatpush.bf16.msra.mxu0 %v7909
        %8061 = vmatpush.bf16.msra.mxu0 %v7904
        %8062 = vmatpush.bf16.msra.mxu0 %v7899
        %8063 = vmatpush.bf16.msra.mxu0 %v7894
        %8064 = vmatpush.bf16.msra.mxu0 %v7889
        %8065 = vmatmul.bf16.gmra.mxu0 %v7696
        %v8066 = vpop.f32.mrf.mxu0
        %v8067 = vadd.f32 0.0, %v8066
        %v8068 = vpop.f32.mrf.mxu0
        %v8069 = vadd.f32 0.0, %v8068
        %8070 = vmatmul.bf16.gmra.mxu0 %v7697
        %v8071 = vpop.f32.mrf.mxu0
        %v8072 = vadd.f32 0.0, %v8071
        %v8073 = vpop.f32.mrf.mxu0
        %v8074 = vadd.f32 0.0, %v8073
        %8075 = vmatmul.bf16.gmra.mxu0 %v7698
        %v8076 = vpop.f32.mrf.mxu0
        %v8077 = vadd.f32 0.0, %v8076
        %v8078 = vpop.f32.mrf.mxu0
        %v8079 = vadd.f32 0.0, %v8078
        %8080 = vmatmul.bf16.gmra.mxu0 %v7699
        %v8081 = vpop.f32.mrf.mxu0
        %v8082 = vadd.f32 0.0, %v8081
        %v8083 = vpop.f32.mrf.mxu0
        %v8084 = vadd.f32 0.0, %v8083
        %8085 = vmatmul.bf16.gmra.mxu0 %v7700
        %v8086 = vpop.f32.mrf.mxu0
        %v8087 = vadd.f32 0.0, %v8086
        %v8088 = vpop.f32.mrf.mxu0
        %v8089 = vadd.f32 0.0, %v8088
        %8090 = vmatmul.bf16.gmra.mxu0 %v7701
        %v8091 = vpop.f32.mrf.mxu0
        %v8092 = vadd.f32 0.0, %v8091
        %v8093 = vpop.f32.mrf.mxu0
        %v8094 = vadd.f32 0.0, %v8093
        %8095 = vmatmul.bf16.gmra.mxu0 %v7702
        %v8096 = vpop.f32.mrf.mxu0
        %v8097 = vadd.f32 0.0, %v8096
        %v8098 = vpop.f32.mrf.mxu0
        %v8099 = vadd.f32 0.0, %v8098
        %8100 = vmatmul.bf16.gmra.mxu0 %v7703
        %v8101 = vpop.f32.mrf.mxu0
        %v8102 = vadd.f32 0.0, %v8101
        %v8103 = vpop.f32.mrf.mxu0
        %v8104 = vadd.f32 0.0, %v8103
        %8105 = vmatmul.bf16.gmra.mxu0 %v7704
        %v8106 = vpop.f32.mrf.mxu0
        %v8107 = vadd.f32 0.0, %v8106
        %v8108 = vpop.f32.mrf.mxu0
        %v8109 = vadd.f32 0.0, %v8108
        %8110 = vmatmul.bf16.gmra.mxu0 %v7705
        %v8111 = vpop.f32.mrf.mxu0
        %v8112 = vadd.f32 0.0, %v8111
        %v8113 = vpop.f32.mrf.mxu0
        %v8114 = vadd.f32 0.0, %v8113
        %8115 = vmatmul.bf16.gmra.mxu0 %v7706
        %v8116 = vpop.f32.mrf.mxu0
        %v8117 = vadd.f32 0.0, %v8116
        %v8118 = vpop.f32.mrf.mxu0
        %v8119 = vadd.f32 0.0, %v8118
        %8120 = vmatmul.bf16.gmra.mxu0 %v7707
        %v8121 = vpop.f32.mrf.mxu0
        %v8122 = vadd.f32 0.0, %v8121
        %v8123 = vpop.f32.mrf.mxu0
        %v8124 = vadd.f32 0.0, %v8123
        %8125 = vmatmul.bf16.gmra.mxu0 %v7708
        %v8126 = vpop.f32.mrf.mxu0
        %v8127 = vadd.f32 0.0, %v8126
        %v8128 = vpop.f32.mrf.mxu0
        %v8129 = vadd.f32 0.0, %v8128
        %8130 = vmatmul.bf16.gmra.mxu0 %v7709
        %v8131 = vpop.f32.mrf.mxu0
        %v8132 = vadd.f32 0.0, %v8131
        %v8133 = vpop.f32.mrf.mxu0
        %v8134 = vadd.f32 0.0, %v8133
        %8135 = vmatmul.bf16.gmra.mxu0 %v7710
        %v8136 = vpop.f32.mrf.mxu0
        %v8137 = vadd.f32 0.0, %v8136
        %v8138 = vpop.f32.mrf.mxu0
        %v8139 = vadd.f32 0.0, %v8138
        %8140 = vmatmul.bf16.gmra.mxu0 %v7711
        %v8141 = vpop.f32.mrf.mxu0
        %v8142 = vadd.f32 0.0, %v8141
        %v8143 = vpop.f32.mrf.mxu0
        %v8144 = vadd.f32 0.0, %v8143
        %8145 = vdwg.mxu0
        %8146 = vmatpush.bf16.msra.mxu0 %v7925
        %8147 = vmatpush.bf16.msra.mxu0 %v7920
        %8148 = vmatpush.bf16.msra.mxu0 %v7915
        %8149 = vmatpush.bf16.msra.mxu0 %v7910
        %8150 = vmatpush.bf16.msra.mxu0 %v7905
        %8151 = vmatpush.bf16.msra.mxu0 %v7900
        %8152 = vmatpush.bf16.msra.mxu0 %v7895
        %8153 = vmatpush.bf16.msra.mxu0 %v7890
        %8154 = vmatmul.bf16.gmra.mxu0 %v7696
        %v8155 = vpop.f32.mrf.mxu0
        %v8156 = vadd.f32 0.0, %v8155
        %v8157 = vpop.f32.mrf.mxu0
        %v8158 = vadd.f32 0.0, %v8157
        %8159 = vmatmul.bf16.gmra.mxu0 %v7697
        %v8160 = vpop.f32.mrf.mxu0
        %v8161 = vadd.f32 0.0, %v8160
        %v8162 = vpop.f32.mrf.mxu0
        %v8163 = vadd.f32 0.0, %v8162
        %8164 = vmatmul.bf16.gmra.mxu0 %v7698
        %v8165 = vpop.f32.mrf.mxu0
        %v8166 = vadd.f32 0.0, %v8165
        %v8167 = vpop.f32.mrf.mxu0
        %v8168 = vadd.f32 0.0, %v8167
        %8169 = vmatmul.bf16.gmra.mxu0 %v7699
        %v8170 = vpop.f32.mrf.mxu0
        %v8171 = vadd.f32 0.0, %v8170
        %v8172 = vpop.f32.mrf.mxu0
        %v8173 = vadd.f32 0.0, %v8172
        %8174 = vmatmul.bf16.gmra.mxu0 %v7700
        %v8175 = vpop.f32.mrf.mxu0
        %v8176 = vadd.f32 0.0, %v8175
        %v8177 = vpop.f32.mrf.mxu0
        %v8178 = vadd.f32 0.0, %v8177
        %8179 = vmatmul.bf16.gmra.mxu0 %v7701
        %v8180 = vpop.f32.mrf.mxu0
        %v8181 = vadd.f32 0.0, %v8180
        %v8182 = vpop.f32.mrf.mxu0
        %v8183 = vadd.f32 0.0, %v8182
        %8184 = vmatmul.bf16.gmra.mxu0 %v7702
        %v8185 = vpop.f32.mrf.mxu0
        %v8186 = vadd.f32 0.0, %v8185
        %v8187 = vpop.f32.mrf.mxu0
        %v8188 = vadd.f32 0.0, %v8187
        %8189 = vmatmul.bf16.gmra.mxu0 %v7703
        %v8190 = vpop.f32.mrf.mxu0
        %v8191 = vadd.f32 0.0, %v8190
        %v8192 = vpop.f32.mrf.mxu0
        %v8193 = vadd.f32 0.0, %v8192
        %8194 = vmatmul.bf16.gmra.mxu0 %v7704
        %v8195 = vpop.f32.mrf.mxu0
        %v8196 = vadd.f32 0.0, %v8195
        %v8197 = vpop.f32.mrf.mxu0
        %v8198 = vadd.f32 0.0, %v8197
        %8199 = vmatmul.bf16.gmra.mxu0 %v7705
        %v8200 = vpop.f32.mrf.mxu0
        %v8201 = vadd.f32 0.0, %v8200
        %v8202 = vpop.f32.mrf.mxu0
        %v8203 = vadd.f32 0.0, %v8202
        %8204 = vmatmul.bf16.gmra.mxu0 %v7706
        %v8205 = vpop.f32.mrf.mxu0
        %v8206 = vadd.f32 0.0, %v8205
        %v8207 = vpop.f32.mrf.mxu0
        %v8208 = vadd.f32 0.0, %v8207
        %8209 = vmatmul.bf16.gmra.mxu0 %v7707
        %v8210 = vpop.f32.mrf.mxu0
        %v8211 = vadd.f32 0.0, %v8210
        %v8212 = vpop.f32.mrf.mxu0
        %v8213 = vadd.f32 0.0, %v8212
        %8214 = vmatmul.bf16.gmra.mxu0 %v7708
        %v8215 = vpop.f32.mrf.mxu0
        %v8216 = vadd.f32 0.0, %v8215
        %v8217 = vpop.f32.mrf.mxu0
        %v8218 = vadd.f32 0.0, %v8217
        %8219 = vmatmul.bf16.gmra.mxu0 %v7709
        %v8220 = vpop.f32.mrf.mxu0
        %v8221 = vadd.f32 0.0, %v8220
        %v8222 = vpop.f32.mrf.mxu0
        %v8223 = vadd.f32 0.0, %v8222
        %8224 = vmatmul.bf16.gmra.mxu0 %v7710
        %v8225 = vpop.f32.mrf.mxu0
        %v8226 = vadd.f32 0.0, %v8225
        %v8227 = vpop.f32.mrf.mxu0
        %v8228 = vadd.f32 0.0, %v8227
        %8229 = vmatmul.bf16.gmra.mxu0 %v7711
        %v8230 = vpop.f32.mrf.mxu0
        %v8231 = vadd.f32 0.0, %v8230
        %v8232 = vpop.f32.mrf.mxu0
        %v8233 = vadd.f32 0.0, %v8232
        %8234 = vdwg.mxu0
        %8235 = vmatpush.bf16.msra.mxu0 %v7926
        %8236 = vmatpush.bf16.msra.mxu0 %v7921
        %8237 = vmatpush.bf16.msra.mxu0 %v7916
        %8238 = vmatpush.bf16.msra.mxu0 %v7911
        %8239 = vmatpush.bf16.msra.mxu0 %v7906
        %8240 = vmatpush.bf16.msra.mxu0 %v7901
        %8241 = vmatpush.bf16.msra.mxu0 %v7896
        %8242 = vmatpush.bf16.msra.mxu0 %v7891
        %8243 = vmatmul.bf16.gmra.mxu0 %v7696
        %v8244 = vpop.f32.mrf.mxu0
        %v8245 = vadd.f32 0.0, %v8244
        %v8246 = vpop.f32.mrf.mxu0
        %v8247 = vadd.f32 0.0, %v8246
        %8248 = vmatmul.bf16.gmra.mxu0 %v7697
        %v8249 = vpop.f32.mrf.mxu0
        %v8250 = vadd.f32 0.0, %v8249
        %v8251 = vpop.f32.mrf.mxu0
        %v8252 = vadd.f32 0.0, %v8251
        %8253 = vmatmul.bf16.gmra.mxu0 %v7698
        %v8254 = vpop.f32.mrf.mxu0
        %v8255 = vadd.f32 0.0, %v8254
        %v8256 = vpop.f32.mrf.mxu0
        %v8257 = vadd.f32 0.0, %v8256
        %8258 = vmatmul.bf16.gmra.mxu0 %v7699
        %v8259 = vpop.f32.mrf.mxu0
        %v8260 = vadd.f32 0.0, %v8259
        %v8261 = vpop.f32.mrf.mxu0
        %v8262 = vadd.f32 0.0, %v8261
        %8263 = vmatmul.bf16.gmra.mxu0 %v7700
        %v8264 = vpop.f32.mrf.mxu0
        %v8265 = vadd.f32 0.0, %v8264
        %v8266 = vpop.f32.mrf.mxu0
        %v8267 = vadd.f32 0.0, %v8266
        %8268 = vmatmul.bf16.gmra.mxu0 %v7701
        %v8269 = vpop.f32.mrf.mxu0
        %v8270 = vadd.f32 0.0, %v8269
        %v8271 = vpop.f32.mrf.mxu0
        %v8272 = vadd.f32 0.0, %v8271
        %8273 = vmatmul.bf16.gmra.mxu0 %v7702
        %v8274 = vpop.f32.mrf.mxu0
        %v8275 = vadd.f32 0.0, %v8274
        %v8276 = vpop.f32.mrf.mxu0
        %v8277 = vadd.f32 0.0, %v8276
        %8278 = vmatmul.bf16.gmra.mxu0 %v7703
        %v8279 = vpop.f32.mrf.mxu0
        %v8280 = vadd.f32 0.0, %v8279
        %v8281 = vpop.f32.mrf.mxu0
        %v8282 = vadd.f32 0.0, %v8281
        %8283 = vmatmul.bf16.gmra.mxu0 %v7704
        %v8284 = vpop.f32.mrf.mxu0
        %v8285 = vadd.f32 0.0, %v8284
        %v8286 = vpop.f32.mrf.mxu0
        %v8287 = vadd.f32 0.0, %v8286
        %8288 = vmatmul.bf16.gmra.mxu0 %v7705
        %v8289 = vpop.f32.mrf.mxu0
        %v8290 = vadd.f32 0.0, %v8289
        %v8291 = vpop.f32.mrf.mxu0
        %v8292 = vadd.f32 0.0, %v8291
        %8293 = vmatmul.bf16.gmra.mxu0 %v7706
        %v8294 = vpop.f32.mrf.mxu0
        %v8295 = vadd.f32 0.0, %v8294
        %v8296 = vpop.f32.mrf.mxu0
        %v8297 = vadd.f32 0.0, %v8296
        %8298 = vmatmul.bf16.gmra.mxu0 %v7707
        %v8299 = vpop.f32.mrf.mxu0
        %v8300 = vadd.f32 0.0, %v8299
        %v8301 = vpop.f32.mrf.mxu0
        %v8302 = vadd.f32 0.0, %v8301
        %8303 = vmatmul.bf16.gmra.mxu0 %v7708
        %v8304 = vpop.f32.mrf.mxu0
        %v8305 = vadd.f32 0.0, %v8304
        %v8306 = vpop.f32.mrf.mxu0
        %v8307 = vadd.f32 0.0, %v8306
        %8308 = vmatmul.bf16.gmra.mxu0 %v7709
        %v8309 = vpop.f32.mrf.mxu0
        %v8310 = vadd.f32 0.0, %v8309
        %v8311 = vpop.f32.mrf.mxu0
        %v8312 = vadd.f32 0.0, %v8311
        %8313 = vmatmul.bf16.gmra.mxu0 %v7710
        %v8314 = vpop.f32.mrf.mxu0
        %v8315 = vadd.f32 0.0, %v8314
        %v8316 = vpop.f32.mrf.mxu0
        %v8317 = vadd.f32 0.0, %v8316
        %8318 = vmatmul.bf16.gmra.mxu0 %v7711
        %v8319 = vpop.f32.mrf.mxu0
        %v8320 = vadd.f32 0.0, %v8319
        %v8321 = vpop.f32.mrf.mxu0
        %v8322 = vadd.f32 0.0, %v8321
        %8323 = vdwg.mxu0
        %8324 = vmatpush.bf16.msra.mxu0 %v7927
        %8325 = vmatpush.bf16.msra.mxu0 %v7922
        %8326 = vmatpush.bf16.msra.mxu0 %v7917
        %8327 = vmatpush.bf16.msra.mxu0 %v7912
        %8328 = vmatpush.bf16.msra.mxu0 %v7907
        %8329 = vmatpush.bf16.msra.mxu0 %v7902
        %8330 = vmatpush.bf16.msra.mxu0 %v7897
        %8331 = vmatpush.bf16.msra.mxu0 %v7892
        %8332 = vmatmul.bf16.gmra.mxu0 %v7696
        %v8333 = vpop.f32.mrf.mxu0
        %v8334 = vadd.f32 0.0, %v8333
        %v8335 = vpop.f32.mrf.mxu0
        %v8336 = vadd.f32 0.0, %v8335
        %8337 = vmatmul.bf16.gmra.mxu0 %v7697
        %v8338 = vpop.f32.mrf.mxu0
        %v8339 = vadd.f32 0.0, %v8338
        %v8340 = vpop.f32.mrf.mxu0
        %v8341 = vadd.f32 0.0, %v8340
        %8342 = vmatmul.bf16.gmra.mxu0 %v7698
        %v8343 = vpop.f32.mrf.mxu0
        %v8344 = vadd.f32 0.0, %v8343
        %v8345 = vpop.f32.mrf.mxu0
        %v8346 = vadd.f32 0.0, %v8345
        %8347 = vmatmul.bf16.gmra.mxu0 %v7699
        %v8348 = vpop.f32.mrf.mxu0
        %v8349 = vadd.f32 0.0, %v8348
        %v8350 = vpop.f32.mrf.mxu0
        %v8351 = vadd.f32 0.0, %v8350
        %8352 = vmatmul.bf16.gmra.mxu0 %v7700
        %v8353 = vpop.f32.mrf.mxu0
        %v8354 = vadd.f32 0.0, %v8353
        %v8355 = vpop.f32.mrf.mxu0
        %v8356 = vadd.f32 0.0, %v8355
        %8357 = vmatmul.bf16.gmra.mxu0 %v7701
        %v8358 = vpop.f32.mrf.mxu0
        %v8359 = vadd.f32 0.0, %v8358
        %v8360 = vpop.f32.mrf.mxu0
        %v8361 = vadd.f32 0.0, %v8360
        %8362 = vmatmul.bf16.gmra.mxu0 %v7702
        %v8363 = vpop.f32.mrf.mxu0
        %v8364 = vadd.f32 0.0, %v8363
        %v8365 = vpop.f32.mrf.mxu0
        %v8366 = vadd.f32 0.0, %v8365
        %8367 = vmatmul.bf16.gmra.mxu0 %v7703
        %v8368 = vpop.f32.mrf.mxu0
        %v8369 = vadd.f32 0.0, %v8368
        %v8370 = vpop.f32.mrf.mxu0
        %v8371 = vadd.f32 0.0, %v8370
        %8372 = vmatmul.bf16.gmra.mxu0 %v7704
        %v8373 = vpop.f32.mrf.mxu0
        %v8374 = vadd.f32 0.0, %v8373
        %v8375 = vpop.f32.mrf.mxu0
        %v8376 = vadd.f32 0.0, %v8375
        %8377 = vmatmul.bf16.gmra.mxu0 %v7705
        %v8378 = vpop.f32.mrf.mxu0
        %v8379 = vadd.f32 0.0, %v8378
        %v8380 = vpop.f32.mrf.mxu0
        %v8381 = vadd.f32 0.0, %v8380
        %8382 = vmatmul.bf16.gmra.mxu0 %v7706
        %v8383 = vpop.f32.mrf.mxu0
        %v8384 = vadd.f32 0.0, %v8383
        %v8385 = vpop.f32.mrf.mxu0
        %v8386 = vadd.f32 0.0, %v8385
        %8387 = vmatmul.bf16.gmra.mxu0 %v7707
        %v8388 = vpop.f32.mrf.mxu0
        %v8389 = vadd.f32 0.0, %v8388
        %v8390 = vpop.f32.mrf.mxu0
        %v8391 = vadd.f32 0.0, %v8390
        %8392 = vmatmul.bf16.gmra.mxu0 %v7708
        %v8393 = vpop.f32.mrf.mxu0
        %v8394 = vadd.f32 0.0, %v8393
        %v8395 = vpop.f32.mrf.mxu0
        %v8396 = vadd.f32 0.0, %v8395
        %8397 = vmatmul.bf16.gmra.mxu0 %v7709
        %v8398 = vpop.f32.mrf.mxu0
        %v8399 = vadd.f32 0.0, %v8398
        %v8400 = vpop.f32.mrf.mxu0
        %v8401 = vadd.f32 0.0, %v8400
        %8402 = vmatmul.bf16.gmra.mxu0 %v7710
        %v8403 = vpop.f32.mrf.mxu0
        %v8404 = vadd.f32 0.0, %v8403
        %v8405 = vpop.f32.mrf.mxu0
        %v8406 = vadd.f32 0.0, %v8405
        %8407 = vmatmul.bf16.gmra.mxu0 %v7711
        %v8408 = vpop.f32.mrf.mxu0
        %v8409 = vadd.f32 0.0, %v8408
        %v8410 = vpop.f32.mrf.mxu0
        %v8411 = vadd.f32 0.0, %v8410
        %8412 = vdwg.mxu0
        %v8413 = vld [vmem:[%s14] sm:$0x1f]
        %v8415 = vperm.slane %v8413, 0
        %v8416 = vperm.slane %v8413, 1
        %v8417 = vperm.slane %v8413, 2
        %v8418 = vperm.slane %v8413, 3
        %v8419 = vperm.slane %v8413, 4
        %v8425 = vmul.f32 %v7978, %v8415
        %v8426 = vmul.f32 %v8067, %v8416
        %v8427 = vmul.f32 %v8156, %v8417
        %v8428 = vmul.f32 %v8245, %v8418
        %v8429 = vmul.f32 %v8334, %v8419
        %v8430 = vmul.f32 %v7980, %v8415
        %v8431 = vmul.f32 %v8069, %v8416
        %v8432 = vmul.f32 %v8158, %v8417
        %v8433 = vmul.f32 %v8247, %v8418
        %v8434 = vmul.f32 %v8336, %v8419
        %v8435 = vmul.f32 %v7983, %v8415
        %v8436 = vmul.f32 %v8072, %v8416
        %v8437 = vmul.f32 %v8161, %v8417
        %v8438 = vmul.f32 %v8250, %v8418
        %v8439 = vmul.f32 %v8339, %v8419
        %v8440 = vmul.f32 %v7985, %v8415
        %v8441 = vmul.f32 %v8074, %v8416
        %v8442 = vmul.f32 %v8163, %v8417
        %v8443 = vmul.f32 %v8252, %v8418
        %v8444 = vmul.f32 %v8341, %v8419
        %v8445 = vmul.f32 %v7988, %v8415
        %v8446 = vmul.f32 %v8077, %v8416
        %v8447 = vmul.f32 %v8166, %v8417
        %v8448 = vmul.f32 %v8255, %v8418
        %v8449 = vmul.f32 %v8344, %v8419
        %v8450 = vmul.f32 %v7990, %v8415
        %v8451 = vmul.f32 %v8079, %v8416
        %v8452 = vmul.f32 %v8168, %v8417
        %v8453 = vmul.f32 %v8257, %v8418
        %v8454 = vmul.f32 %v8346, %v8419
        %v8455 = vmul.f32 %v7993, %v8415
        %v8456 = vmul.f32 %v8082, %v8416
        %v8457 = vmul.f32 %v8171, %v8417
        %v8458 = vmul.f32 %v8260, %v8418
        %v8459 = vmul.f32 %v8349, %v8419
        %v8460 = vmul.f32 %v7995, %v8415
        %v8461 = vmul.f32 %v8084, %v8416
        %v8462 = vmul.f32 %v8173, %v8417
        %v8463 = vmul.f32 %v8262, %v8418
        %v8464 = vmul.f32 %v8351, %v8419
        %v8465 = vmul.f32 %v7998, %v8415
        %v8466 = vmul.f32 %v8087, %v8416
        %v8467 = vmul.f32 %v8176, %v8417
        %v8468 = vmul.f32 %v8265, %v8418
        %v8469 = vmul.f32 %v8354, %v8419
        %v8470 = vmul.f32 %v8000, %v8415
        %v8471 = vmul.f32 %v8089, %v8416
        %v8472 = vmul.f32 %v8178, %v8417
        %v8473 = vmul.f32 %v8267, %v8418
        %v8474 = vmul.f32 %v8356, %v8419
        %v8475 = vmul.f32 %v8003, %v8415
        %v8476 = vmul.f32 %v8092, %v8416
        %v8477 = vmul.f32 %v8181, %v8417
        %v8478 = vmul.f32 %v8270, %v8418
        %v8479 = vmul.f32 %v8359, %v8419
        %v8480 = vmul.f32 %v8005, %v8415
        %v8481 = vmul.f32 %v8094, %v8416
        %v8482 = vmul.f32 %v8183, %v8417
        %v8483 = vmul.f32 %v8272, %v8418
        %v8484 = vmul.f32 %v8361, %v8419
        %v8485 = vmul.f32 %v8008, %v8415
        %v8486 = vmul.f32 %v8097, %v8416
        %v8487 = vmul.f32 %v8186, %v8417
        %v8488 = vmul.f32 %v8275, %v8418
        %v8489 = vmul.f32 %v8364, %v8419
        %v8490 = vmul.f32 %v8010, %v8415
        %v8491 = vmul.f32 %v8099, %v8416
        %v8492 = vmul.f32 %v8188, %v8417
        %v8493 = vmul.f32 %v8277, %v8418
        %v8494 = vmul.f32 %v8366, %v8419
        %v8495 = vmul.f32 %v8013, %v8415
        %v8496 = vmul.f32 %v8102, %v8416
        %v8497 = vmul.f32 %v8191, %v8417
        %v8498 = vmul.f32 %v8280, %v8418
        %v8499 = vmul.f32 %v8369, %v8419
        %v8500 = vmul.f32 %v8015, %v8415
        %v8501 = vmul.f32 %v8104, %v8416
        %v8502 = vmul.f32 %v8193, %v8417
        %v8503 = vmul.f32 %v8282, %v8418
        %v8504 = vmul.f32 %v8371, %v8419
        %v8505 = vmul.f32 %v8018, %v8415
        %v8506 = vmul.f32 %v8107, %v8416
        %v8507 = vmul.f32 %v8196, %v8417
        %v8508 = vmul.f32 %v8285, %v8418
        %v8509 = vmul.f32 %v8374, %v8419
        %v8510 = vmul.f32 %v8020, %v8415
        %v8511 = vmul.f32 %v8109, %v8416
        %v8512 = vmul.f32 %v8198, %v8417
        %v8513 = vmul.f32 %v8287, %v8418
        %v8514 = vmul.f32 %v8376, %v8419
        %v8515 = vmul.f32 %v8023, %v8415
        %v8516 = vmul.f32 %v8112, %v8416
        %v8517 = vmul.f32 %v8201, %v8417
        %v8518 = vmul.f32 %v8290, %v8418
        %v8519 = vmul.f32 %v8379, %v8419
        %v8520 = vmul.f32 %v8025, %v8415
        %v8521 = vmul.f32 %v8114, %v8416
        %v8522 = vmul.f32 %v8203, %v8417
        %v8523 = vmul.f32 %v8292, %v8418
        %v8524 = vmul.f32 %v8381, %v8419
        %v8525 = vmul.f32 %v8028, %v8415
        %v8526 = vmul.f32 %v8117, %v8416
        %v8527 = vmul.f32 %v8206, %v8417
        %v8528 = vmul.f32 %v8295, %v8418
        %v8529 = vmul.f32 %v8384, %v8419
        %v8530 = vmul.f32 %v8030, %v8415
        %v8531 = vmul.f32 %v8119, %v8416
        %v8532 = vmul.f32 %v8208, %v8417
        %v8533 = vmul.f32 %v8297, %v8418
        %v8534 = vmul.f32 %v8386, %v8419
        %v8535 = vmul.f32 %v8033, %v8415
        %v8536 = vmul.f32 %v8122, %v8416
        %v8537 = vmul.f32 %v8211, %v8417
        %v8538 = vmul.f32 %v8300, %v8418
        %v8539 = vmul.f32 %v8389, %v8419
        %v8540 = vmul.f32 %v8035, %v8415
        %v8541 = vmul.f32 %v8124, %v8416
        %v8542 = vmul.f32 %v8213, %v8417
        %v8543 = vmul.f32 %v8302, %v8418
        %v8544 = vmul.f32 %v8391, %v8419
        %v8545 = vmul.f32 %v8038, %v8415
        %v8546 = vmul.f32 %v8127, %v8416
        %v8547 = vmul.f32 %v8216, %v8417
        %v8548 = vmul.f32 %v8305, %v8418
        %v8549 = vmul.f32 %v8394, %v8419
        %v8550 = vmul.f32 %v8040, %v8415
        %v8551 = vmul.f32 %v8129, %v8416
        %v8552 = vmul.f32 %v8218, %v8417
        %v8553 = vmul.f32 %v8307, %v8418
        %v8554 = vmul.f32 %v8396, %v8419
        %v8555 = vmul.f32 %v8043, %v8415
        %v8556 = vmul.f32 %v8132, %v8416
        %v8557 = vmul.f32 %v8221, %v8417
        %v8558 = vmul.f32 %v8310, %v8418
        %v8559 = vmul.f32 %v8399, %v8419
        %v8560 = vmul.f32 %v8045, %v8415
        %v8561 = vmul.f32 %v8134, %v8416
        %v8562 = vmul.f32 %v8223, %v8417
        %v8563 = vmul.f32 %v8312, %v8418
        %v8564 = vmul.f32 %v8401, %v8419
        %v8565 = vmul.f32 %v8048, %v8415
        %v8566 = vmul.f32 %v8137, %v8416
        %v8567 = vmul.f32 %v8226, %v8417
        %v8568 = vmul.f32 %v8315, %v8418
        %v8569 = vmul.f32 %v8404, %v8419
        %v8570 = vmul.f32 %v8050, %v8415
        %v8571 = vmul.f32 %v8139, %v8416
        %v8572 = vmul.f32 %v8228, %v8417
        %v8573 = vmul.f32 %v8317, %v8418
        %v8574 = vmul.f32 %v8406, %v8419
        %v8575 = vmul.f32 %v8053, %v8415
        %v8576 = vmul.f32 %v8142, %v8416
        %v8577 = vmul.f32 %v8231, %v8417
        %v8578 = vmul.f32 %v8320, %v8418
        %v8579 = vmul.f32 %v8409, %v8419
        %v8580 = vmul.f32 %v8055, %v8415
        %v8581 = vmul.f32 %v8144, %v8416
        %v8582 = vmul.f32 %v8233, %v8417
        %v8583 = vmul.f32 %v8322, %v8418
        %v8584 = vmul.f32 %v8411, %v8419
        %v8585 = vld [vmem:[%s15] sm:$0x1f]
        %v8587 = vperm.slane %v8585, 0
        %v8588 = vperm.slane %v8585, 1
        %v8589 = vperm.slane %v8585, 2
        %v8590 = vperm.slane %v8585, 3
        %v8591 = vperm.slane %v8585, 4
        %v8597 = vadd.f32 %v8425, %v8587
        %v8598 = vadd.f32 %v8426, %v8588
        %v8599 = vadd.f32 %v8427, %v8589
        %v8600 = vadd.f32 %v8428, %v8590
        %v8601 = vadd.f32 %v8429, %v8591
        %v8602 = vadd.f32 %v8430, %v8587
        %v8603 = vadd.f32 %v8431, %v8588
        %v8604 = vadd.f32 %v8432, %v8589
        %v8605 = vadd.f32 %v8433, %v8590
        %v8606 = vadd.f32 %v8434, %v8591
        %v8607 = vadd.f32 %v8435, %v8587
        %v8608 = vadd.f32 %v8436, %v8588
        %v8609 = vadd.f32 %v8437, %v8589
        %v8610 = vadd.f32 %v8438, %v8590
        %v8611 = vadd.f32 %v8439, %v8591
        %v8612 = vadd.f32 %v8440, %v8587
        %v8613 = vadd.f32 %v8441, %v8588
        %v8614 = vadd.f32 %v8442, %v8589
        %v8615 = vadd.f32 %v8443, %v8590
        %v8616 = vadd.f32 %v8444, %v8591
        %v8617 = vadd.f32 %v8445, %v8587
        %v8618 = vadd.f32 %v8446, %v8588
        %v8619 = vadd.f32 %v8447, %v8589
        %v8620 = vadd.f32 %v8448, %v8590
        %v8621 = vadd.f32 %v8449, %v8591
        %v8622 = vadd.f32 %v8450, %v8587
        %v8623 = vadd.f32 %v8451, %v8588
        %v8624 = vadd.f32 %v8452, %v8589
        %v8625 = vadd.f32 %v8453, %v8590
        %v8626 = vadd.f32 %v8454, %v8591
        %v8627 = vadd.f32 %v8455, %v8587
        %v8628 = vadd.f32 %v8456, %v8588
        %v8629 = vadd.f32 %v8457, %v8589
        %v8630 = vadd.f32 %v8458, %v8590
        %v8631 = vadd.f32 %v8459, %v8591
        %v8632 = vadd.f32 %v8460, %v8587
        %v8633 = vadd.f32 %v8461, %v8588
        %v8634 = vadd.f32 %v8462, %v8589
        %v8635 = vadd.f32 %v8463, %v8590
        %v8636 = vadd.f32 %v8464, %v8591
        %v8637 = vadd.f32 %v8465, %v8587
        %v8638 = vadd.f32 %v8466, %v8588
        %v8639 = vadd.f32 %v8467, %v8589
        %v8640 = vadd.f32 %v8468, %v8590
        %v8641 = vadd.f32 %v8469, %v8591
        %v8642 = vadd.f32 %v8470, %v8587
        %v8643 = vadd.f32 %v8471, %v8588
        %v8644 = vadd.f32 %v8472, %v8589
        %v8645 = vadd.f32 %v8473, %v8590
        %v8646 = vadd.f32 %v8474, %v8591
        %v8647 = vadd.f32 %v8475, %v8587
        %v8648 = vadd.f32 %v8476, %v8588
        %v8649 = vadd.f32 %v8477, %v8589
        %v8650 = vadd.f32 %v8478, %v8590
        %v8651 = vadd.f32 %v8479, %v8591
        %v8652 = vadd.f32 %v8480, %v8587
        %v8653 = vadd.f32 %v8481, %v8588
        %v8654 = vadd.f32 %v8482, %v8589
        %v8655 = vadd.f32 %v8483, %v8590
        %v8656 = vadd.f32 %v8484, %v8591
        %v8657 = vadd.f32 %v8485, %v8587
        %v8658 = vadd.f32 %v8486, %v8588
        %v8659 = vadd.f32 %v8487, %v8589
        %v8660 = vadd.f32 %v8488, %v8590
        %v8661 = vadd.f32 %v8489, %v8591
        %v8662 = vadd.f32 %v8490, %v8587
        %v8663 = vadd.f32 %v8491, %v8588
        %v8664 = vadd.f32 %v8492, %v8589
        %v8665 = vadd.f32 %v8493, %v8590
        %v8666 = vadd.f32 %v8494, %v8591
        %v8667 = vadd.f32 %v8495, %v8587
        %v8668 = vadd.f32 %v8496, %v8588
        %v8669 = vadd.f32 %v8497, %v8589
        %v8670 = vadd.f32 %v8498, %v8590
        %v8671 = vadd.f32 %v8499, %v8591
        %v8672 = vadd.f32 %v8500, %v8587
        %v8673 = vadd.f32 %v8501, %v8588
        %v8674 = vadd.f32 %v8502, %v8589
        %v8675 = vadd.f32 %v8503, %v8590
        %v8676 = vadd.f32 %v8504, %v8591
        %v8677 = vadd.f32 %v8505, %v8587
        %v8678 = vadd.f32 %v8506, %v8588
        %v8679 = vadd.f32 %v8507, %v8589
        %v8680 = vadd.f32 %v8508, %v8590
        %v8681 = vadd.f32 %v8509, %v8591
        %v8682 = vadd.f32 %v8510, %v8587
        %v8683 = vadd.f32 %v8511, %v8588
        %v8684 = vadd.f32 %v8512, %v8589
        %v8685 = vadd.f32 %v8513, %v8590
        %v8686 = vadd.f32 %v8514, %v8591
        %v8687 = vadd.f32 %v8515, %v8587
        %v8688 = vadd.f32 %v8516, %v8588
        %v8689 = vadd.f32 %v8517, %v8589
        %v8690 = vadd.f32 %v8518, %v8590
        %v8691 = vadd.f32 %v8519, %v8591
        %v8692 = vadd.f32 %v8520, %v8587
        %v8693 = vadd.f32 %v8521, %v8588
        %v8694 = vadd.f32 %v8522, %v8589
        %v8695 = vadd.f32 %v8523, %v8590
        %v8696 = vadd.f32 %v8524, %v8591
        %v8697 = vadd.f32 %v8525, %v8587
        %v8698 = vadd.f32 %v8526, %v8588
        %v8699 = vadd.f32 %v8527, %v8589
        %v8700 = vadd.f32 %v8528, %v8590
        %v8701 = vadd.f32 %v8529, %v8591
        %v8702 = vadd.f32 %v8530, %v8587
        %v8703 = vadd.f32 %v8531, %v8588
        %v8704 = vadd.f32 %v8532, %v8589
        %v8705 = vadd.f32 %v8533, %v8590
        %v8706 = vadd.f32 %v8534, %v8591
        %v8707 = vadd.f32 %v8535, %v8587
        %v8708 = vadd.f32 %v8536, %v8588
        %v8709 = vadd.f32 %v8537, %v8589
        %v8710 = vadd.f32 %v8538, %v8590
        %v8711 = vadd.f32 %v8539, %v8591
        %v8712 = vadd.f32 %v8540, %v8587
        %v8713 = vadd.f32 %v8541, %v8588
        %v8714 = vadd.f32 %v8542, %v8589
        %v8715 = vadd.f32 %v8543, %v8590
        %v8716 = vadd.f32 %v8544, %v8591
        %v8717 = vadd.f32 %v8545, %v8587
        %v8718 = vadd.f32 %v8546, %v8588
        %v8719 = vadd.f32 %v8547, %v8589
        %v8720 = vadd.f32 %v8548, %v8590
        %v8721 = vadd.f32 %v8549, %v8591
        %v8722 = vadd.f32 %v8550, %v8587
        %v8723 = vadd.f32 %v8551, %v8588
        %v8724 = vadd.f32 %v8552, %v8589
        %v8725 = vadd.f32 %v8553, %v8590
        %v8726 = vadd.f32 %v8554, %v8591
        %v8727 = vadd.f32 %v8555, %v8587
        %v8728 = vadd.f32 %v8556, %v8588
        %v8729 = vadd.f32 %v8557, %v8589
        %v8730 = vadd.f32 %v8558, %v8590
        %v8731 = vadd.f32 %v8559, %v8591
        %v8732 = vadd.f32 %v8560, %v8587
        %v8733 = vadd.f32 %v8561, %v8588
        %v8734 = vadd.f32 %v8562, %v8589
        %v8735 = vadd.f32 %v8563, %v8590
        %v8736 = vadd.f32 %v8564, %v8591
        %v8737 = vadd.f32 %v8565, %v8587
        %v8738 = vadd.f32 %v8566, %v8588
        %v8739 = vadd.f32 %v8567, %v8589
        %v8740 = vadd.f32 %v8568, %v8590
        %v8741 = vadd.f32 %v8569, %v8591
        %v8742 = vadd.f32 %v8570, %v8587
        %v8743 = vadd.f32 %v8571, %v8588
        %v8744 = vadd.f32 %v8572, %v8589
        %v8745 = vadd.f32 %v8573, %v8590
        %v8746 = vadd.f32 %v8574, %v8591
        %v8747 = vadd.f32 %v8575, %v8587
        %v8748 = vadd.f32 %v8576, %v8588
        %v8749 = vadd.f32 %v8577, %v8589
        %v8750 = vadd.f32 %v8578, %v8590
        %v8751 = vadd.f32 %v8579, %v8591
        %v8752 = vadd.f32 %v8580, %v8587
        %v8753 = vadd.f32 %v8581, %v8588
        %v8754 = vadd.f32 %v8582, %v8589
        %v8755 = vadd.f32 %v8583, %v8590
        %v8756 = vadd.f32 %v8584, %v8591
        %v8757 = vmax.f32 %v8597, 0.0
        %v8758 = vmax.f32 %v8598, 0.0
        %v8759 = vmax.f32 %v8599, 0.0
        %v8760 = vmax.f32 %v8600, 0.0
        %v8761 = vmax.f32 %v8601, 0.0
        %v8762 = vmax.f32 %v8602, 0.0
        %v8763 = vmax.f32 %v8603, 0.0
        %v8764 = vmax.f32 %v8604, 0.0
        %v8765 = vmax.f32 %v8605, 0.0
        %v8766 = vmax.f32 %v8606, 0.0
        %v8767 = vmax.f32 %v8607, 0.0
        %v8768 = vmax.f32 %v8608, 0.0
        %v8769 = vmax.f32 %v8609, 0.0
        %v8770 = vmax.f32 %v8610, 0.0
        %v8771 = vmax.f32 %v8611, 0.0
        %v8772 = vmax.f32 %v8612, 0.0
        %v8773 = vmax.f32 %v8613, 0.0
        %v8774 = vmax.f32 %v8614, 0.0
        %v8775 = vmax.f32 %v8615, 0.0
        %v8776 = vmax.f32 %v8616, 0.0
        %v8777 = vmax.f32 %v8617, 0.0
        %v8778 = vmax.f32 %v8618, 0.0
        %v8779 = vmax.f32 %v8619, 0.0
        %v8780 = vmax.f32 %v8620, 0.0
        %v8781 = vmax.f32 %v8621, 0.0
        %v8782 = vmax.f32 %v8622, 0.0
        %v8783 = vmax.f32 %v8623, 0.0
        %v8784 = vmax.f32 %v8624, 0.0
        %v8785 = vmax.f32 %v8625, 0.0
        %v8786 = vmax.f32 %v8626, 0.0
        %v8787 = vmax.f32 %v8627, 0.0
        %v8788 = vmax.f32 %v8628, 0.0
        %v8789 = vmax.f32 %v8629, 0.0
        %v8790 = vmax.f32 %v8630, 0.0
        %v8791 = vmax.f32 %v8631, 0.0
        %v8792 = vmax.f32 %v8632, 0.0
        %v8793 = vmax.f32 %v8633, 0.0
        %v8794 = vmax.f32 %v8634, 0.0
        %v8795 = vmax.f32 %v8635, 0.0
        %v8796 = vmax.f32 %v8636, 0.0
        %v8797 = vmax.f32 %v8637, 0.0
        %v8798 = vmax.f32 %v8638, 0.0
        %v8799 = vmax.f32 %v8639, 0.0
        %v8800 = vmax.f32 %v8640, 0.0
        %v8801 = vmax.f32 %v8641, 0.0
        %v8802 = vmax.f32 %v8642, 0.0
        %v8803 = vmax.f32 %v8643, 0.0
        %v8804 = vmax.f32 %v8644, 0.0
        %v8805 = vmax.f32 %v8645, 0.0
        %v8806 = vmax.f32 %v8646, 0.0
        %v8807 = vmax.f32 %v8647, 0.0
        %v8808 = vmax.f32 %v8648, 0.0
        %v8809 = vmax.f32 %v8649, 0.0
        %v8810 = vmax.f32 %v8650, 0.0
        %v8811 = vmax.f32 %v8651, 0.0
        %v8812 = vmax.f32 %v8652, 0.0
        %v8813 = vmax.f32 %v8653, 0.0
        %v8814 = vmax.f32 %v8654, 0.0
        %v8815 = vmax.f32 %v8655, 0.0
        %v8816 = vmax.f32 %v8656, 0.0
        %v8817 = vmax.f32 %v8657, 0.0
        %v8818 = vmax.f32 %v8658, 0.0
        %v8819 = vmax.f32 %v8659, 0.0
        %v8820 = vmax.f32 %v8660, 0.0
        %v8821 = vmax.f32 %v8661, 0.0
        %v8822 = vmax.f32 %v8662, 0.0
        %v8823 = vmax.f32 %v8663, 0.0
        %v8824 = vmax.f32 %v8664, 0.0
        %v8825 = vmax.f32 %v8665, 0.0
        %v8826 = vmax.f32 %v8666, 0.0
        %v8827 = vmax.f32 %v8667, 0.0
        %v8828 = vmax.f32 %v8668, 0.0
        %v8829 = vmax.f32 %v8669, 0.0
        %v8830 = vmax.f32 %v8670, 0.0
        %v8831 = vmax.f32 %v8671, 0.0
        %v8832 = vmax.f32 %v8672, 0.0
        %v8833 = vmax.f32 %v8673, 0.0
        %v8834 = vmax.f32 %v8674, 0.0
        %v8835 = vmax.f32 %v8675, 0.0
        %v8836 = vmax.f32 %v8676, 0.0
        %v8837 = vmax.f32 %v8677, 0.0
        %v8838 = vmax.f32 %v8678, 0.0
        %v8839 = vmax.f32 %v8679, 0.0
        %v8840 = vmax.f32 %v8680, 0.0
        %v8841 = vmax.f32 %v8681, 0.0
        %v8842 = vmax.f32 %v8682, 0.0
        %v8843 = vmax.f32 %v8683, 0.0
        %v8844 = vmax.f32 %v8684, 0.0
        %v8845 = vmax.f32 %v8685, 0.0
        %v8846 = vmax.f32 %v8686, 0.0
        %v8847 = vmax.f32 %v8687, 0.0
        %v8848 = vmax.f32 %v8688, 0.0
        %v8849 = vmax.f32 %v8689, 0.0
        %v8850 = vmax.f32 %v8690, 0.0
        %v8851 = vmax.f32 %v8691, 0.0
        %v8852 = vmax.f32 %v8692, 0.0
        %v8853 = vmax.f32 %v8693, 0.0
        %v8854 = vmax.f32 %v8694, 0.0
        %v8855 = vmax.f32 %v8695, 0.0
        %v8856 = vmax.f32 %v8696, 0.0
        %v8857 = vmax.f32 %v8697, 0.0
        %v8858 = vmax.f32 %v8698, 0.0
        %v8859 = vmax.f32 %v8699, 0.0
        %v8860 = vmax.f32 %v8700, 0.0
        %v8861 = vmax.f32 %v8701, 0.0
        %v8862 = vmax.f32 %v8702, 0.0
        %v8863 = vmax.f32 %v8703, 0.0
        %v8864 = vmax.f32 %v8704, 0.0
        %v8865 = vmax.f32 %v8705, 0.0
        %v8866 = vmax.f32 %v8706, 0.0
        %v8867 = vmax.f32 %v8707, 0.0
        %v8868 = vmax.f32 %v8708, 0.0
        %v8869 = vmax.f32 %v8709, 0.0
        %v8870 = vmax.f32 %v8710, 0.0
        %v8871 = vmax.f32 %v8711, 0.0
        %v8872 = vmax.f32 %v8712, 0.0
        %v8873 = vmax.f32 %v8713, 0.0
        %v8874 = vmax.f32 %v8714, 0.0
        %v8875 = vmax.f32 %v8715, 0.0
        %v8876 = vmax.f32 %v8716, 0.0
        %v8877 = vmax.f32 %v8717, 0.0
        %v8878 = vmax.f32 %v8718, 0.0
        %v8879 = vmax.f32 %v8719, 0.0
        %v8880 = vmax.f32 %v8720, 0.0
        %v8881 = vmax.f32 %v8721, 0.0
        %v8882 = vmax.f32 %v8722, 0.0
        %v8883 = vmax.f32 %v8723, 0.0
        %v8884 = vmax.f32 %v8724, 0.0
        %v8885 = vmax.f32 %v8725, 0.0
        %v8886 = vmax.f32 %v8726, 0.0
        %v8887 = vmax.f32 %v8727, 0.0
        %v8888 = vmax.f32 %v8728, 0.0
        %v8889 = vmax.f32 %v8729, 0.0
        %v8890 = vmax.f32 %v8730, 0.0
        %v8891 = vmax.f32 %v8731, 0.0
        %v8892 = vmax.f32 %v8732, 0.0
        %v8893 = vmax.f32 %v8733, 0.0
        %v8894 = vmax.f32 %v8734, 0.0
        %v8895 = vmax.f32 %v8735, 0.0
        %v8896 = vmax.f32 %v8736, 0.0
        %v8897 = vmax.f32 %v8737, 0.0
        %v8898 = vmax.f32 %v8738, 0.0
        %v8899 = vmax.f32 %v8739, 0.0
        %v8900 = vmax.f32 %v8740, 0.0
        %v8901 = vmax.f32 %v8741, 0.0
        %v8902 = vmax.f32 %v8742, 0.0
        %v8903 = vmax.f32 %v8743, 0.0
        %v8904 = vmax.f32 %v8744, 0.0
        %v8905 = vmax.f32 %v8745, 0.0
        %v8906 = vmax.f32 %v8746, 0.0
        %v8907 = vmax.f32 %v8747, 0.0
        %v8908 = vmax.f32 %v8748, 0.0
        %v8909 = vmax.f32 %v8749, 0.0
        %v8910 = vmax.f32 %v8750, 0.0
        %v8911 = vmax.f32 %v8751, 0.0
        %v8912 = vmax.f32 %v8752, 0.0
        %v8913 = vmax.f32 %v8753, 0.0
        %v8914 = vmax.f32 %v8754, 0.0
        %v8915 = vmax.f32 %v8755, 0.0
        %v8916 = vmax.f32 %v8756, 0.0
        %v8917 = vpack.c.bf16 %v8762, %v8757
        %v8918 = vpack.c.bf16 %v8763, %v8758
        %v8919 = vpack.c.bf16 %v8764, %v8759
        %v8920 = vpack.c.bf16 %v8765, %v8760
        %v8921 = vpack.c.bf16 %v8766, %v8761
        %v8922 = vpack.c.bf16 %v8772, %v8767
        %v8923 = vpack.c.bf16 %v8773, %v8768
        %v8924 = vpack.c.bf16 %v8774, %v8769
        %v8925 = vpack.c.bf16 %v8775, %v8770
        %v8926 = vpack.c.bf16 %v8776, %v8771
        %v8927 = vpack.c.bf16 %v8782, %v8777
        %v8928 = vpack.c.bf16 %v8783, %v8778
        %v8929 = vpack.c.bf16 %v8784, %v8779
        %v8930 = vpack.c.bf16 %v8785, %v8780
        %v8931 = vpack.c.bf16 %v8786, %v8781
        %v8932 = vpack.c.bf16 %v8792, %v8787
        %v8933 = vpack.c.bf16 %v8793, %v8788
        %v8934 = vpack.c.bf16 %v8794, %v8789
        %v8935 = vpack.c.bf16 %v8795, %v8790
        %v8936 = vpack.c.bf16 %v8796, %v8791
        %v8937 = vpack.c.bf16 %v8802, %v8797
        %v8938 = vpack.c.bf16 %v8803, %v8798
        %v8939 = vpack.c.bf16 %v8804, %v8799
        %v8940 = vpack.c.bf16 %v8805, %v8800
        %v8941 = vpack.c.bf16 %v8806, %v8801
        %v8942 = vpack.c.bf16 %v8812, %v8807
        %v8943 = vpack.c.bf16 %v8813, %v8808
        %v8944 = vpack.c.bf16 %v8814, %v8809
        %v8945 = vpack.c.bf16 %v8815, %v8810
        %v8946 = vpack.c.bf16 %v8816, %v8811
        %v8947 = vpack.c.bf16 %v8822, %v8817
        %v8948 = vpack.c.bf16 %v8823, %v8818
        %v8949 = vpack.c.bf16 %v8824, %v8819
        %v8950 = vpack.c.bf16 %v8825, %v8820
        %v8951 = vpack.c.bf16 %v8826, %v8821
        %v8952 = vpack.c.bf16 %v8832, %v8827
        %v8953 = vpack.c.bf16 %v8833, %v8828
        %v8954 = vpack.c.bf16 %v8834, %v8829
        %v8955 = vpack.c.bf16 %v8835, %v8830
        %v8956 = vpack.c.bf16 %v8836, %v8831
        %v8957 = vpack.c.bf16 %v8842, %v8837
        %v8958 = vpack.c.bf16 %v8843, %v8838
        %v8959 = vpack.c.bf16 %v8844, %v8839
        %v8960 = vpack.c.bf16 %v8845, %v8840
        %v8961 = vpack.c.bf16 %v8846, %v8841
        %v8962 = vpack.c.bf16 %v8852, %v8847
        %v8963 = vpack.c.bf16 %v8853, %v8848
        %v8964 = vpack.c.bf16 %v8854, %v8849
        %v8965 = vpack.c.bf16 %v8855, %v8850
        %v8966 = vpack.c.bf16 %v8856, %v8851
        %v8967 = vpack.c.bf16 %v8862, %v8857
        %v8968 = vpack.c.bf16 %v8863, %v8858
        %v8969 = vpack.c.bf16 %v8864, %v8859
        %v8970 = vpack.c.bf16 %v8865, %v8860
        %v8971 = vpack.c.bf16 %v8866, %v8861
        %v8972 = vpack.c.bf16 %v8872, %v8867
        %v8973 = vpack.c.bf16 %v8873, %v8868
        %v8974 = vpack.c.bf16 %v8874, %v8869
        %v8975 = vpack.c.bf16 %v8875, %v8870
        %v8976 = vpack.c.bf16 %v8876, %v8871
        %v8977 = vpack.c.bf16 %v8882, %v8877
        %v8978 = vpack.c.bf16 %v8883, %v8878
        %v8979 = vpack.c.bf16 %v8884, %v8879
        %v8980 = vpack.c.bf16 %v8885, %v8880
        %v8981 = vpack.c.bf16 %v8886, %v8881
        %v8982 = vpack.c.bf16 %v8892, %v8887
        %v8983 = vpack.c.bf16 %v8893, %v8888
        %v8984 = vpack.c.bf16 %v8894, %v8889
        %v8985 = vpack.c.bf16 %v8895, %v8890
        %v8986 = vpack.c.bf16 %v8896, %v8891
        %v8987 = vpack.c.bf16 %v8902, %v8897
        %v8988 = vpack.c.bf16 %v8903, %v8898
        %v8989 = vpack.c.bf16 %v8904, %v8899
        %v8990 = vpack.c.bf16 %v8905, %v8900
        %v8991 = vpack.c.bf16 %v8906, %v8901
        %v8992 = vpack.c.bf16 %v8912, %v8907
        %v8993 = vpack.c.bf16 %v8913, %v8908
        %v8994 = vpack.c.bf16 %v8914, %v8909
        %v8995 = vpack.c.bf16 %v8915, %v8910
        %v8996 = vpack.c.bf16 %v8916, %v8911
        %v8997 = vld [vmem:[%s16] sm:$0xff]
        %v8998 = vld [vmem:[%s16 + $0x8] sm:$0xf]
        %v8999 = vld [vmem:[%s16 + $0xc] sm:$0xff]
        %v9000 = vld [vmem:[%s16 + $0x14] sm:$0xf]
        %v9001 = vld [vmem:[%s16 + $0x18] sm:$0xff]
        %v9002 = vld [vmem:[%s16 + $0x20] sm:$0xf]
        %v9003 = vld [vmem:[%s16 + $0x24] sm:$0xff]
        %v9004 = vld [vmem:[%s16 + $0x2c] sm:$0xf]
        %v9005 = vld [vmem:[%s16 + $0x30] sm:$0xff]
        %v9006 = vld [vmem:[%s16 + $0x38] sm:$0xf]
        %v9007 = vld [vmem:[%s16 + $0x3c] sm:$0xff]
        %v9008 = vld [vmem:[%s16 + $0x44] sm:$0xf]
        %v9009 = vld [vmem:[%s16 + $0x48] sm:$0xff]
        %v9010 = vld [vmem:[%s16 + $0x50] sm:$0xf]
        %v9011 = vld [vmem:[%s16 + $0x54] sm:$0xff]
        %v9012 = vld [vmem:[%s16 + $0x5c] sm:$0xf]
        %v9013 = vld [vmem:[%s16 + $0x60] sm:$0xff]
        %v9014 = vld [vmem:[%s16 + $0x68] sm:$0xf]
        %v9015 = vld [vmem:[%s16 + $0x6c] sm:$0xff]
        %v9016 = vld [vmem:[%s16 + $0x74] sm:$0xf]
        %v9017 = vld [vmem:[%s16 + $0x78] sm:$0xff]
        %v9018 = vld [vmem:[%s16 + $0x80] sm:$0xf]
        %v9019 = vld [vmem:[%s16 + $0x84] sm:$0xff]
        %v9020 = vld [vmem:[%s16 + $0x8c] sm:$0xf]
        %v9021 = vld [vmem:[%s16 + $0x90] sm:$0xff]
        %v9022 = vld [vmem:[%s16 + $0x98] sm:$0xf]
        %v9023 = vld [vmem:[%s16 + $0x9c] sm:$0xff]
        %v9024 = vld [vmem:[%s16 + $0xa4] sm:$0xf]
        %v9025 = vld [vmem:[%s16 + $0xa8] sm:$0xff]
        %v9026 = vld [vmem:[%s16 + $0xb0] sm:$0xf]
        %v9027 = vld [vmem:[%s16 + $0xb4] sm:$0xff]
        %v9028 = vld [vmem:[%s16 + $0xbc] sm:$0xf]
        %v9029 = vld [vmem:[%s16 + $0xc0] sm:$0xff]
        %v9030 = vld [vmem:[%s16 + $0xc8] sm:$0xf]
        %v9031 = vld [vmem:[%s16 + $0xcc] sm:$0xff]
        %v9032 = vld [vmem:[%s16 + $0xd4] sm:$0xf]
        %v9033 = vld [vmem:[%s16 + $0xd8] sm:$0xff]
        %v9034 = vld [vmem:[%s16 + $0xe0] sm:$0xf]
        %v9035 = vld [vmem:[%s16 + $0xe4] sm:$0xff]
        %v9036 = vld [vmem:[%s16 + $0xec] sm:$0xf]
        %v9037 = vld [vmem:[%s16 + $0xf0] sm:$0xff]
        %v9038 = vld [vmem:[%s16 + $0xf8] sm:$0xf]
        %v9039 = vld [vmem:[%s16 + $0xfc] sm:$0xff]
        %v9040 = vld [vmem:[%s16 + $0x104] sm:$0xf]
        %v9041 = vld [vmem:[%s16 + $0x108] sm:$0xff]
        %v9042 = vld [vmem:[%s16 + $0x110] sm:$0xf]
        %v9043 = vld [vmem:[%s16 + $0x114] sm:$0xff]
        %v9044 = vld [vmem:[%s16 + $0x11c] sm:$0xf]
        %v9045 = vld [vmem:[%s16 + $0x120] sm:$0xff]
        %v9046 = vld [vmem:[%s16 + $0x128] sm:$0xf]
        %v9047 = vld [vmem:[%s16 + $0x12c] sm:$0xff]
        %v9048 = vld [vmem:[%s16 + $0x134] sm:$0xf]
        %v9049 = vld [vmem:[%s16 + $0x138] sm:$0xff]
        %v9050 = vld [vmem:[%s16 + $0x140] sm:$0xf]
        %v9051 = vld [vmem:[%s16 + $0x144] sm:$0xff]
        %v9052 = vld [vmem:[%s16 + $0x14c] sm:$0xf]
        %v9053 = vld [vmem:[%s16 + $0x150] sm:$0xff]
        %v9054 = vld [vmem:[%s16 + $0x158] sm:$0xf]
        %v9055 = vld [vmem:[%s16 + $0x15c] sm:$0xff]
        %v9056 = vld [vmem:[%s16 + $0x164] sm:$0xf]
        %v9057 = vld [vmem:[%s16 + $0x168] sm:$0xff]
        %v9058 = vld [vmem:[%s16 + $0x170] sm:$0xf]
        %v9059 = vld [vmem:[%s16 + $0x174] sm:$0xff]
        %v9060 = vld [vmem:[%s16 + $0x17c] sm:$0xf]
        %v9061 = vld [vmem:[%s16 + $0x180] sm:$0xff]
        %v9062 = vld [vmem:[%s16 + $0x188] sm:$0xf]
        %v9063 = vld [vmem:[%s16 + $0x18c] sm:$0xff]
        %v9064 = vld [vmem:[%s16 + $0x194] sm:$0xf]
        %v9065 = vld [vmem:[%s16 + $0x198] sm:$0xff]
        %v9066 = vld [vmem:[%s16 + $0x1a0] sm:$0xf]
        %v9067 = vld [vmem:[%s16 + $0x1a4] sm:$0xff]
        %v9068 = vld [vmem:[%s16 + $0x1ac] sm:$0xf]
        %v9069 = vld [vmem:[%s16 + $0x1b0] sm:$0xff]
        %v9070 = vld [vmem:[%s16 + $0x1b8] sm:$0xf]
        %v9071 = vld [vmem:[%s16 + $0x1bc] sm:$0xff]
        %v9072 = vld [vmem:[%s16 + $0x1c4] sm:$0xf]
        %v9073 = vld [vmem:[%s16 + $0x1c8] sm:$0xff]
        %v9074 = vld [vmem:[%s16 + $0x1d0] sm:$0xf]
        %v9075 = vld [vmem:[%s16 + $0x1d4] sm:$0xff]
        %v9076 = vld [vmem:[%s16 + $0x1dc] sm:$0xf]
        %v9077 = vld [vmem:[%s16 + $0x1e0] sm:$0xff]
        %v9078 = vld [vmem:[%s16 + $0x1e8] sm:$0xf]
        %v9079 = vld [vmem:[%s16 + $0x1ec] sm:$0xff]
        %v9080 = vld [vmem:[%s16 + $0x1f4] sm:$0xf]
        %v9081 = vld [vmem:[%s16 + $0x1f8] sm:$0xff]
        %v9082 = vld [vmem:[%s16 + $0x200] sm:$0xf]
        %v9083 = vld [vmem:[%s16 + $0x204] sm:$0xff]
        %v9084 = vld [vmem:[%s16 + $0x20c] sm:$0xf]
        %v9085 = vld [vmem:[%s16 + $0x210] sm:$0xff]
        %v9086 = vld [vmem:[%s16 + $0x218] sm:$0xf]
        %v9087 = vld [vmem:[%s16 + $0x21c] sm:$0xff]
        %v9088 = vld [vmem:[%s16 + $0x224] sm:$0xf]
        %v9089 = vld [vmem:[%s16 + $0x228] sm:$0xff]
        %v9090 = vld [vmem:[%s16 + $0x230] sm:$0xf]
        %v9091 = vld [vmem:[%s16 + $0x234] sm:$0xff]
        %v9092 = vld [vmem:[%s16 + $0x23c] sm:$0xf]
        %v9093 = vld [vmem:[%s16 + $0x240] sm:$0xff]
        %v9094 = vld [vmem:[%s16 + $0x248] sm:$0xf]
        %v9095 = vld [vmem:[%s16 + $0x24c] sm:$0xff]
        %v9096 = vld [vmem:[%s16 + $0x254] sm:$0xf]
        %v9097 = vld [vmem:[%s16 + $0x258] sm:$0xff]
        %v9098 = vld [vmem:[%s16 + $0x260] sm:$0xf]
        %v9099 = vld [vmem:[%s16 + $0x264] sm:$0xff]
        %v9100 = vld [vmem:[%s16 + $0x26c] sm:$0xf]
        %v9101 = vld [vmem:[%s16 + $0x270] sm:$0xff]
        %v9102 = vld [vmem:[%s16 + $0x278] sm:$0xf]
        %v9103 = vld [vmem:[%s16 + $0x27c] sm:$0xff]
        %v9104 = vld [vmem:[%s16 + $0x284] sm:$0xf]
        %v9105 = vld [vmem:[%s16 + $0x288] sm:$0xff]
        %v9106 = vld [vmem:[%s16 + $0x290] sm:$0xf]
        %v9107 = vld [vmem:[%s16 + $0x294] sm:$0xff]
        %v9108 = vld [vmem:[%s16 + $0x29c] sm:$0xf]
        %v9109 = vld [vmem:[%s16 + $0x2a0] sm:$0xff]
        %v9110 = vld [vmem:[%s16 + $0x2a8] sm:$0xf]
        %v9111 = vld [vmem:[%s16 + $0x2ac] sm:$0xff]
        %v9112 = vld [vmem:[%s16 + $0x2b4] sm:$0xf]
        %v9113 = vld [vmem:[%s16 + $0x2b8] sm:$0xff]
        %v9114 = vld [vmem:[%s16 + $0x2c0] sm:$0xf]
        %v9115 = vld [vmem:[%s16 + $0x2c4] sm:$0xff]
        %v9116 = vld [vmem:[%s16 + $0x2cc] sm:$0xf]
        %v9117 = vld [vmem:[%s16 + $0x2d0] sm:$0xff]
        %v9118 = vld [vmem:[%s16 + $0x2d8] sm:$0xf]
        %v9119 = vld [vmem:[%s16 + $0x2dc] sm:$0xff]
        %v9120 = vld [vmem:[%s16 + $0x2e4] sm:$0xf]
        %v9121 = vld [vmem:[%s16 + $0x2e8] sm:$0xff]
        %v9122 = vld [vmem:[%s16 + $0x2f0] sm:$0xf]
        %v9123 = vld [vmem:[%s16 + $0x2f4] sm:$0xff]
        %v9124 = vld [vmem:[%s16 + $0x2fc] sm:$0xf]
        %v9125 = vld [vmem:[%s16 + $0x300] sm:$0xff]
        %v9126 = vld [vmem:[%s16 + $0x308] sm:$0xf]
        %v9127 = vld [vmem:[%s16 + $0x30c] sm:$0xff]
        %v9128 = vld [vmem:[%s16 + $0x314] sm:$0xf]
        %v9129 = vld [vmem:[%s16 + $0x318] sm:$0xff]
        %v9130 = vld [vmem:[%s16 + $0x320] sm:$0xf]
        %v9131 = vld [vmem:[%s16 + $0x324] sm:$0xff]
        %v9132 = vld [vmem:[%s16 + $0x32c] sm:$0xf]
        %v9133 = vld [vmem:[%s16 + $0x330] sm:$0xff]
        %v9134 = vld [vmem:[%s16 + $0x338] sm:$0xf]
        %v9135 = vld [vmem:[%s16 + $0x33c] sm:$0xff]
        %v9136 = vld [vmem:[%s16 + $0x344] sm:$0xf]
        %v9137 = vld [vmem:[%s16 + $0x348] sm:$0xff]
        %v9138 = vld [vmem:[%s16 + $0x350] sm:$0xf]
        %v9139 = vld [vmem:[%s16 + $0x354] sm:$0xff]
        %v9140 = vld [vmem:[%s16 + $0x35c] sm:$0xf]
        %v9141 = vld [vmem:[%s16 + $0x360] sm:$0xff]
        %v9142 = vld [vmem:[%s16 + $0x368] sm:$0xf]
        %v9143 = vld [vmem:[%s16 + $0x36c] sm:$0xff]
        %v9144 = vld [vmem:[%s16 + $0x374] sm:$0xf]
        %v9145 = vld [vmem:[%s16 + $0x378] sm:$0xff]
        %v9146 = vld [vmem:[%s16 + $0x380] sm:$0xf]
        %v9147 = vld [vmem:[%s16 + $0x384] sm:$0xff]
        %v9148 = vld [vmem:[%s16 + $0x38c] sm:$0xf]
        %v9149 = vld [vmem:[%s16 + $0x390] sm:$0xff]
        %v9150 = vld [vmem:[%s16 + $0x398] sm:$0xf]
        %v9151 = vld [vmem:[%s16 + $0x39c] sm:$0xff]
        %v9152 = vld [vmem:[%s16 + $0x3a4] sm:$0xf]
        %v9153 = vld [vmem:[%s16 + $0x3a8] sm:$0xff]
        %v9154 = vld [vmem:[%s16 + $0x3b0] sm:$0xf]
        %v9155 = vld [vmem:[%s16 + $0x3b4] sm:$0xff]
        %v9156 = vld [vmem:[%s16 + $0x3bc] sm:$0xf]
        %v9157 = vld [vmem:[%s17] sm:$0x7]
        %v9159 = vperm.slane %v9157, 0
        %v9160 = vperm.slane %v9157, 1
        %v9161 = vperm.slane %v9157, 2
        %v9325 = vunpack.c.l.b16 %v8997
        %v9326 = vunpack.c.h.b16 %v8997
        %v9327 = vunpack.c.l.b16 %v8998
        %v9328 = vunpack.c.l.b16 %v8999
        %v9329 = vunpack.c.h.b16 %v8999
        %v9330 = vunpack.c.l.b16 %v9000
        %v9331 = vunpack.c.l.b16 %v9001
        %v9332 = vunpack.c.h.b16 %v9001
        %v9333 = vunpack.c.l.b16 %v9002
        %v9334 = vunpack.c.l.b16 %v9003
        %v9335 = vunpack.c.h.b16 %v9003
        %v9336 = vunpack.c.l.b16 %v9004
        %v9337 = vunpack.c.l.b16 %v9005
        %v9338 = vunpack.c.h.b16 %v9005
        %v9339 = vunpack.c.l.b16 %v9006
        %v9340 = vunpack.c.l.b16 %v9007
        %v9341 = vunpack.c.h.b16 %v9007
        %v9342 = vunpack.c.l.b16 %v9008
        %v9343 = vunpack.c.l.b16 %v9009
        %v9344 = vunpack.c.h.b16 %v9009
        %v9345 = vunpack.c.l.b16 %v9010
        %v9346 = vunpack.c.l.b16 %v9011
        %v9347 = vunpack.c.h.b16 %v9011
        %v9348 = vunpack.c.l.b16 %v9012
        %v9349 = vunpack.c.l.b16 %v9013
        %v9350 = vunpack.c.h.b16 %v9013
        %v9351 = vunpack.c.l.b16 %v9014
        %v9352 = vunpack.c.l.b16 %v9015
        %v9353 = vunpack.c.h.b16 %v9015
        %v9354 = vunpack.c.l.b16 %v9016
        %v9355 = vunpack.c.l.b16 %v9017
        %v9356 = vunpack.c.h.b16 %v9017
        %v9357 = vunpack.c.l.b16 %v9018
        %v9358 = vunpack.c.l.b16 %v9019
        %v9359 = vunpack.c.h.b16 %v9019
        %v9360 = vunpack.c.l.b16 %v9020
        %v9361 = vunpack.c.l.b16 %v9021
        %v9362 = vunpack.c.h.b16 %v9021
        %v9363 = vunpack.c.l.b16 %v9022
        %v9364 = vunpack.c.l.b16 %v9023
        %v9365 = vunpack.c.h.b16 %v9023
        %v9366 = vunpack.c.l.b16 %v9024
        %v9367 = vunpack.c.l.b16 %v9025
        %v9368 = vunpack.c.h.b16 %v9025
        %v9369 = vunpack.c.l.b16 %v9026
        %v9370 = vunpack.c.l.b16 %v9027
        %v9371 = vunpack.c.h.b16 %v9027
        %v9372 = vunpack.c.l.b16 %v9028
        %v9373 = vunpack.c.l.b16 %v9029
        %v9374 = vunpack.c.h.b16 %v9029
        %v9375 = vunpack.c.l.b16 %v9030
        %v9376 = vunpack.c.l.b16 %v9031
        %v9377 = vunpack.c.h.b16 %v9031
        %v9378 = vunpack.c.l.b16 %v9032
        %v9379 = vunpack.c.l.b16 %v9033
        %v9380 = vunpack.c.h.b16 %v9033
        %v9381 = vunpack.c.l.b16 %v9034
        %v9382 = vunpack.c.l.b16 %v9035
        %v9383 = vunpack.c.h.b16 %v9035
        %v9384 = vunpack.c.l.b16 %v9036
        %v9385 = vunpack.c.l.b16 %v9037
        %v9386 = vunpack.c.h.b16 %v9037
        %v9387 = vunpack.c.l.b16 %v9038
        %v9388 = vunpack.c.l.b16 %v9039
        %v9389 = vunpack.c.h.b16 %v9039
        %v9390 = vunpack.c.l.b16 %v9040
        %v9391 = vunpack.c.l.b16 %v9041
        %v9392 = vunpack.c.h.b16 %v9041
        %v9393 = vunpack.c.l.b16 %v9042
        %v9394 = vunpack.c.l.b16 %v9043
        %v9395 = vunpack.c.h.b16 %v9043
        %v9396 = vunpack.c.l.b16 %v9044
        %v9397 = vunpack.c.l.b16 %v9045
        %v9398 = vunpack.c.h.b16 %v9045
        %v9399 = vunpack.c.l.b16 %v9046
        %v9400 = vunpack.c.l.b16 %v9047
        %v9401 = vunpack.c.h.b16 %v9047
        %v9402 = vunpack.c.l.b16 %v9048
        %v9403 = vunpack.c.l.b16 %v9049
        %v9404 = vunpack.c.h.b16 %v9049
        %v9405 = vunpack.c.l.b16 %v9050
        %v9406 = vunpack.c.l.b16 %v9051
        %v9407 = vunpack.c.h.b16 %v9051
        %v9408 = vunpack.c.l.b16 %v9052
        %v9409 = vunpack.c.l.b16 %v9053
        %v9410 = vunpack.c.h.b16 %v9053
        %v9411 = vunpack.c.l.b16 %v9054
        %v9412 = vunpack.c.l.b16 %v9055
        %v9413 = vunpack.c.h.b16 %v9055
        %v9414 = vunpack.c.l.b16 %v9056
        %v9415 = vunpack.c.l.b16 %v9057
        %v9416 = vunpack.c.h.b16 %v9057
        %v9417 = vunpack.c.l.b16 %v9058
        %v9418 = vunpack.c.l.b16 %v9059
        %v9419 = vunpack.c.h.b16 %v9059
        %v9420 = vunpack.c.l.b16 %v9060
        %v9421 = vunpack.c.l.b16 %v9061
        %v9422 = vunpack.c.h.b16 %v9061
        %v9423 = vunpack.c.l.b16 %v9062
        %v9424 = vunpack.c.l.b16 %v9063
        %v9425 = vunpack.c.h.b16 %v9063
        %v9426 = vunpack.c.l.b16 %v9064
        %v9427 = vunpack.c.l.b16 %v9065
        %v9428 = vunpack.c.h.b16 %v9065
        %v9429 = vunpack.c.l.b16 %v9066
        %v9430 = vunpack.c.l.b16 %v9067
        %v9431 = vunpack.c.h.b16 %v9067
        %v9432 = vunpack.c.l.b16 %v9068
        %v9433 = vunpack.c.l.b16 %v9069
        %v9434 = vunpack.c.h.b16 %v9069
        %v9435 = vunpack.c.l.b16 %v9070
        %v9436 = vunpack.c.l.b16 %v9071
        %v9437 = vunpack.c.h.b16 %v9071
        %v9438 = vunpack.c.l.b16 %v9072
        %v9439 = vunpack.c.l.b16 %v9073
        %v9440 = vunpack.c.h.b16 %v9073
        %v9441 = vunpack.c.l.b16 %v9074
        %v9442 = vunpack.c.l.b16 %v9075
        %v9443 = vunpack.c.h.b16 %v9075
        %v9444 = vunpack.c.l.b16 %v9076
        %v9445 = vunpack.c.l.b16 %v9077
        %v9446 = vunpack.c.h.b16 %v9077
        %v9447 = vunpack.c.l.b16 %v9078
        %v9448 = vunpack.c.l.b16 %v9079
        %v9449 = vunpack.c.h.b16 %v9079
        %v9450 = vunpack.c.l.b16 %v9080
        %v9451 = vunpack.c.l.b16 %v9081
        %v9452 = vunpack.c.h.b16 %v9081
        %v9453 = vunpack.c.l.b16 %v9082
        %v9454 = vunpack.c.l.b16 %v9083
        %v9455 = vunpack.c.h.b16 %v9083
        %v9456 = vunpack.c.l.b16 %v9084
        %v9457 = vunpack.c.l.b16 %v9085
        %v9458 = vunpack.c.h.b16 %v9085
        %v9459 = vunpack.c.l.b16 %v9086
        %v9460 = vunpack.c.l.b16 %v9087
        %v9461 = vunpack.c.h.b16 %v9087
        %v9462 = vunpack.c.l.b16 %v9088
        %v9463 = vunpack.c.l.b16 %v9089
        %v9464 = vunpack.c.h.b16 %v9089
        %v9465 = vunpack.c.l.b16 %v9090
        %v9466 = vunpack.c.l.b16 %v9091
        %v9467 = vunpack.c.h.b16 %v9091
        %v9468 = vunpack.c.l.b16 %v9092
        %v9469 = vunpack.c.l.b16 %v9093
        %v9470 = vunpack.c.h.b16 %v9093
        %v9471 = vunpack.c.l.b16 %v9094
        %v9472 = vunpack.c.l.b16 %v9095
        %v9473 = vunpack.c.h.b16 %v9095
        %v9474 = vunpack.c.l.b16 %v9096
        %v9475 = vunpack.c.l.b16 %v9097
        %v9476 = vunpack.c.h.b16 %v9097
        %v9477 = vunpack.c.l.b16 %v9098
        %v9478 = vunpack.c.l.b16 %v9099
        %v9479 = vunpack.c.h.b16 %v9099
        %v9480 = vunpack.c.l.b16 %v9100
        %v9481 = vunpack.c.l.b16 %v9101
        %v9482 = vunpack.c.h.b16 %v9101
        %v9483 = vunpack.c.l.b16 %v9102
        %v9484 = vunpack.c.l.b16 %v9103
        %v9485 = vunpack.c.h.b16 %v9103
        %v9486 = vunpack.c.l.b16 %v9104
        %v9487 = vunpack.c.l.b16 %v9105
        %v9488 = vunpack.c.h.b16 %v9105
        %v9489 = vunpack.c.l.b16 %v9106
        %v9490 = vunpack.c.l.b16 %v9107
        %v9491 = vunpack.c.h.b16 %v9107
        %v9492 = vunpack.c.l.b16 %v9108
        %v9493 = vunpack.c.l.b16 %v9109
        %v9494 = vunpack.c.h.b16 %v9109
        %v9495 = vunpack.c.l.b16 %v9110
        %v9496 = vunpack.c.l.b16 %v9111
        %v9497 = vunpack.c.h.b16 %v9111
        %v9498 = vunpack.c.l.b16 %v9112
        %v9499 = vunpack.c.l.b16 %v9113
        %v9500 = vunpack.c.h.b16 %v9113
        %v9501 = vunpack.c.l.b16 %v9114
        %v9502 = vunpack.c.l.b16 %v9115
        %v9503 = vunpack.c.h.b16 %v9115
        %v9504 = vunpack.c.l.b16 %v9116
        %v9505 = vunpack.c.l.b16 %v9117
        %v9506 = vunpack.c.h.b16 %v9117
        %v9507 = vunpack.c.l.b16 %v9118
        %v9508 = vunpack.c.l.b16 %v9119
        %v9509 = vunpack.c.h.b16 %v9119
        %v9510 = vunpack.c.l.b16 %v9120
        %v9511 = vunpack.c.l.b16 %v9121
        %v9512 = vunpack.c.h.b16 %v9121
        %v9513 = vunpack.c.l.b16 %v9122
        %v9514 = vunpack.c.l.b16 %v9123
        %v9515 = vunpack.c.h.b16 %v9123
        %v9516 = vunpack.c.l.b16 %v9124
        %v9517 = vunpack.c.l.b16 %v9125
        %v9518 = vunpack.c.h.b16 %v9125
        %v9519 = vunpack.c.l.b16 %v9126
        %v9520 = vunpack.c.l.b16 %v9127
        %v9521 = vunpack.c.h.b16 %v9127
        %v9522 = vunpack.c.l.b16 %v9128
        %v9523 = vunpack.c.l.b16 %v9129
        %v9524 = vunpack.c.h.b16 %v9129
        %v9525 = vunpack.c.l.b16 %v9130
        %v9526 = vunpack.c.l.b16 %v9131
        %v9527 = vunpack.c.h.b16 %v9131
        %v9528 = vunpack.c.l.b16 %v9132
        %v9529 = vunpack.c.l.b16 %v9133
        %v9530 = vunpack.c.h.b16 %v9133
        %v9531 = vunpack.c.l.b16 %v9134
        %v9532 = vunpack.c.l.b16 %v9135
        %v9533 = vunpack.c.h.b16 %v9135
        %v9534 = vunpack.c.l.b16 %v9136
        %v9535 = vunpack.c.l.b16 %v9137
        %v9536 = vunpack.c.h.b16 %v9137
        %v9537 = vunpack.c.l.b16 %v9138
        %v9538 = vunpack.c.l.b16 %v9139
        %v9539 = vunpack.c.h.b16 %v9139
        %v9540 = vunpack.c.l.b16 %v9140
        %v9541 = vunpack.c.l.b16 %v9141
        %v9542 = vunpack.c.h.b16 %v9141
        %v9543 = vunpack.c.l.b16 %v9142
        %v9544 = vunpack.c.l.b16 %v9143
        %v9545 = vunpack.c.h.b16 %v9143
        %v9546 = vunpack.c.l.b16 %v9144
        %v9547 = vunpack.c.l.b16 %v9145
        %v9548 = vunpack.c.h.b16 %v9145
        %v9549 = vunpack.c.l.b16 %v9146
        %v9550 = vunpack.c.l.b16 %v9147
        %v9551 = vunpack.c.h.b16 %v9147
        %v9552 = vunpack.c.l.b16 %v9148
        %v9553 = vunpack.c.l.b16 %v9149
        %v9554 = vunpack.c.h.b16 %v9149
        %v9555 = vunpack.c.l.b16 %v9150
        %v9556 = vunpack.c.l.b16 %v9151
        %v9557 = vunpack.c.h.b16 %v9151
        %v9558 = vunpack.c.l.b16 %v9152
        %v9559 = vunpack.c.l.b16 %v9153
        %v9560 = vunpack.c.h.b16 %v9153
        %v9561 = vunpack.c.l.b16 %v9154
        %v9562 = vunpack.c.l.b16 %v9155
        %v9563 = vunpack.c.h.b16 %v9155
        %v9564 = vunpack.c.l.b16 %v9156
        %v9565 = vpack.c.b16 %v9328, %v9325
        %v9566 = vpack.c.b16 %v9329, %v9326
        %v9567 = vpack.c.b16 %v9330, %v9327
        %v9568 = vpack.c.b16 %v9334, %v9331
        %v9569 = vpack.c.b16 %v9335, %v9332
        %v9570 = vpack.c.b16 %v9336, %v9333
        %v9571 = vpack.c.b16 %v9340, %v9337
        %v9572 = vpack.c.b16 %v9341, %v9338
        %v9573 = vpack.c.b16 %v9342, %v9339
        %v9574 = vpack.c.b16 %v9346, %v9343
        %v9575 = vpack.c.b16 %v9347, %v9344
        %v9576 = vpack.c.b16 %v9348, %v9345
        %v9577 = vpack.c.b16 %v9352, %v9349
        %v9578 = vpack.c.b16 %v9353, %v9350
        %v9579 = vpack.c.b16 %v9354, %v9351
        %v9580 = vpack.c.b16 %v9358, %v9355
        %v9581 = vpack.c.b16 %v9359, %v9356
        %v9582 = vpack.c.b16 %v9360, %v9357
        %v9583 = vpack.c.b16 %v9364, %v9361
        %v9584 = vpack.c.b16 %v9365, %v9362
        %v9585 = vpack.c.b16 %v9366, %v9363
        %v9586 = vpack.c.b16 %v9370, %v9367
        %v9587 = vpack.c.b16 %v9371, %v9368
        %v9588 = vpack.c.b16 %v9372, %v9369
        %v9589 = vpack.c.b16 %v9376, %v9373
        %v9590 = vpack.c.b16 %v9377, %v9374
        %v9591 = vpack.c.b16 %v9378, %v9375
        %v9592 = vpack.c.b16 %v9382, %v9379
        %v9593 = vpack.c.b16 %v9383, %v9380
        %v9594 = vpack.c.b16 %v9384, %v9381
        %v9595 = vpack.c.b16 %v9388, %v9385
        %v9596 = vpack.c.b16 %v9389, %v9386
        %v9597 = vpack.c.b16 %v9390, %v9387
        %v9598 = vpack.c.b16 %v9394, %v9391
        %v9599 = vpack.c.b16 %v9395, %v9392
        %v9600 = vpack.c.b16 %v9396, %v9393
        %v9601 = vpack.c.b16 %v9400, %v9397
        %v9602 = vpack.c.b16 %v9401, %v9398
        %v9603 = vpack.c.b16 %v9402, %v9399
        %v9604 = vpack.c.b16 %v9406, %v9403
        %v9605 = vpack.c.b16 %v9407, %v9404
        %v9606 = vpack.c.b16 %v9408, %v9405
        %v9607 = vpack.c.b16 %v9412, %v9409
        %v9608 = vpack.c.b16 %v9413, %v9410
        %v9609 = vpack.c.b16 %v9414, %v9411
        %v9610 = vpack.c.b16 %v9418, %v9415
        %v9611 = vpack.c.b16 %v9419, %v9416
        %v9612 = vpack.c.b16 %v9420, %v9417
        %v9613 = vpack.c.b16 %v9424, %v9421
        %v9614 = vpack.c.b16 %v9425, %v9422
        %v9615 = vpack.c.b16 %v9426, %v9423
        %v9616 = vpack.c.b16 %v9430, %v9427
        %v9617 = vpack.c.b16 %v9431, %v9428
        %v9618 = vpack.c.b16 %v9432, %v9429
        %v9619 = vpack.c.b16 %v9436, %v9433
        %v9620 = vpack.c.b16 %v9437, %v9434
        %v9621 = vpack.c.b16 %v9438, %v9435
        %v9622 = vpack.c.b16 %v9442, %v9439
        %v9623 = vpack.c.b16 %v9443, %v9440
        %v9624 = vpack.c.b16 %v9444, %v9441
        %v9625 = vpack.c.b16 %v9448, %v9445
        %v9626 = vpack.c.b16 %v9449, %v9446
        %v9627 = vpack.c.b16 %v9450, %v9447
        %v9628 = vpack.c.b16 %v9454, %v9451
        %v9629 = vpack.c.b16 %v9455, %v9452
        %v9630 = vpack.c.b16 %v9456, %v9453
        %v9631 = vpack.c.b16 %v9460, %v9457
        %v9632 = vpack.c.b16 %v9461, %v9458
        %v9633 = vpack.c.b16 %v9462, %v9459
        %v9634 = vpack.c.b16 %v9466, %v9463
        %v9635 = vpack.c.b16 %v9467, %v9464
        %v9636 = vpack.c.b16 %v9468, %v9465
        %v9637 = vpack.c.b16 %v9472, %v9469
        %v9638 = vpack.c.b16 %v9473, %v9470
        %v9639 = vpack.c.b16 %v9474, %v9471
        %v9640 = vpack.c.b16 %v9478, %v9475
        %v9641 = vpack.c.b16 %v9479, %v9476
        %v9642 = vpack.c.b16 %v9480, %v9477
        %v9643 = vpack.c.b16 %v9484, %v9481
        %v9644 = vpack.c.b16 %v9485, %v9482
        %v9645 = vpack.c.b16 %v9486, %v9483
        %v9646 = vpack.c.b16 %v9490, %v9487
        %v9647 = vpack.c.b16 %v9491, %v9488
        %v9648 = vpack.c.b16 %v9492, %v9489
        %v9649 = vpack.c.b16 %v9496, %v9493
        %v9650 = vpack.c.b16 %v9497, %v9494
        %v9651 = vpack.c.b16 %v9498, %v9495
        %v9652 = vpack.c.b16 %v9502, %v9499
        %v9653 = vpack.c.b16 %v9503, %v9500
        %v9654 = vpack.c.b16 %v9504, %v9501
        %v9655 = vpack.c.b16 %v9508, %v9505
        %v9656 = vpack.c.b16 %v9509, %v9506
        %v9657 = vpack.c.b16 %v9510, %v9507
        %v9658 = vpack.c.b16 %v9514, %v9511
        %v9659 = vpack.c.b16 %v9515, %v9512
        %v9660 = vpack.c.b16 %v9516, %v9513
        %v9661 = vpack.c.b16 %v9520, %v9517
        %v9662 = vpack.c.b16 %v9521, %v9518
        %v9663 = vpack.c.b16 %v9522, %v9519
        %v9664 = vpack.c.b16 %v9526, %v9523
        %v9665 = vpack.c.b16 %v9527, %v9524
        %v9666 = vpack.c.b16 %v9528, %v9525
        %v9667 = vpack.c.b16 %v9532, %v9529
        %v9668 = vpack.c.b16 %v9533, %v9530
        %v9669 = vpack.c.b16 %v9534, %v9531
        %v9670 = vpack.c.b16 %v9538, %v9535
        %v9671 = vpack.c.b16 %v9539, %v9536
        %v9672 = vpack.c.b16 %v9540, %v9537
        %v9673 = vpack.c.b16 %v9544, %v9541
        %v9674 = vpack.c.b16 %v9545, %v9542
        %v9675 = vpack.c.b16 %v9546, %v9543
        %v9676 = vpack.c.b16 %v9550, %v9547
        %v9677 = vpack.c.b16 %v9551, %v9548
        %v9678 = vpack.c.b16 %v9552, %v9549
        %v9679 = vpack.c.b16 %v9556, %v9553
        %v9680 = vpack.c.b16 %v9557, %v9554
        %v9681 = vpack.c.b16 %v9558, %v9555
        %v9682 = vpack.c.b16 %v9562, %v9559
        %v9683 = vpack.c.b16 %v9563, %v9560
        %v9684 = vpack.c.b16 %v9564, %v9561
        %9805 = vmatpush.bf16.msra.mxu0 %v9586
        %9806 = vmatpush.bf16.msra.mxu0 %v9583
        %9807 = vmatpush.bf16.msra.mxu0 %v9580
        %9808 = vmatpush.bf16.msra.mxu0 %v9577
        %9809 = vmatpush.bf16.msra.mxu0 %v9574
        %9810 = vmatpush.bf16.msra.mxu0 %v9571
        %9811 = vmatpush.bf16.msra.mxu0 %v9568
        %9812 = vmatpush.bf16.msra.mxu0 %v9565
        %9813 = vmatmul.bf16.gmra.mxu0 %v8917
        %v9814 = vpop.f32.mrf.mxu0
        %v9815 = vadd.f32 %v9159, %v9814
        %v9816 = vpop.f32.mrf.mxu0
        %v9817 = vadd.f32 %v9159, %v9816
        %9818 = vmatmul.bf16.gmra.mxu0 %v8922
        %v9819 = vpop.f32.mrf.mxu0
        %v9820 = vadd.f32 %v9159, %v9819
        %v9821 = vpop.f32.mrf.mxu0
        %v9822 = vadd.f32 %v9159, %v9821
        %9823 = vmatmul.bf16.gmra.mxu0 %v8927
        %v9824 = vpop.f32.mrf.mxu0
        %v9825 = vadd.f32 %v9159, %v9824
        %v9826 = vpop.f32.mrf.mxu0
        %v9827 = vadd.f32 %v9159, %v9826
        %9828 = vmatmul.bf16.gmra.mxu0 %v8932
        %v9829 = vpop.f32.mrf.mxu0
        %v9830 = vadd.f32 %v9159, %v9829
        %v9831 = vpop.f32.mrf.mxu0
        %v9832 = vadd.f32 %v9159, %v9831
        %9833 = vmatmul.bf16.gmra.mxu0 %v8937
        %v9834 = vpop.f32.mrf.mxu0
        %v9835 = vadd.f32 %v9159, %v9834
        %v9836 = vpop.f32.mrf.mxu0
        %v9837 = vadd.f32 %v9159, %v9836
        %9838 = vmatmul.bf16.gmra.mxu0 %v8942
        %v9839 = vpop.f32.mrf.mxu0
        %v9840 = vadd.f32 %v9159, %v9839
        %v9841 = vpop.f32.mrf.mxu0
        %v9842 = vadd.f32 %v9159, %v9841
        %9843 = vmatmul.bf16.gmra.mxu0 %v8947
        %v9844 = vpop.f32.mrf.mxu0
        %v9845 = vadd.f32 %v9159, %v9844
        %v9846 = vpop.f32.mrf.mxu0
        %v9847 = vadd.f32 %v9159, %v9846
        %9848 = vmatmul.bf16.gmra.mxu0 %v8952
        %v9849 = vpop.f32.mrf.mxu0
        %v9850 = vadd.f32 %v9159, %v9849
        %v9851 = vpop.f32.mrf.mxu0
        %v9852 = vadd.f32 %v9159, %v9851
        %9853 = vmatmul.bf16.gmra.mxu0 %v8957
        %v9854 = vpop.f32.mrf.mxu0
        %v9855 = vadd.f32 %v9159, %v9854
        %v9856 = vpop.f32.mrf.mxu0
        %v9857 = vadd.f32 %v9159, %v9856
        %9858 = vmatmul.bf16.gmra.mxu0 %v8962
        %v9859 = vpop.f32.mrf.mxu0
        %v9860 = vadd.f32 %v9159, %v9859
        %v9861 = vpop.f32.mrf.mxu0
        %v9862 = vadd.f32 %v9159, %v9861
        %9863 = vmatmul.bf16.gmra.mxu0 %v8967
        %v9864 = vpop.f32.mrf.mxu0
        %v9865 = vadd.f32 %v9159, %v9864
        %v9866 = vpop.f32.mrf.mxu0
        %v9867 = vadd.f32 %v9159, %v9866
        %9868 = vmatmul.bf16.gmra.mxu0 %v8972
        %v9869 = vpop.f32.mrf.mxu0
        %v9870 = vadd.f32 %v9159, %v9869
        %v9871 = vpop.f32.mrf.mxu0
        %v9872 = vadd.f32 %v9159, %v9871
        %9873 = vmatmul.bf16.gmra.mxu0 %v8977
        %v9874 = vpop.f32.mrf.mxu0
        %v9875 = vadd.f32 %v9159, %v9874
        %v9876 = vpop.f32.mrf.mxu0
        %v9877 = vadd.f32 %v9159, %v9876
        %9878 = vmatmul.bf16.gmra.mxu0 %v8982
        %v9879 = vpop.f32.mrf.mxu0
        %v9880 = vadd.f32 %v9159, %v9879
        %v9881 = vpop.f32.mrf.mxu0
        %v9882 = vadd.f32 %v9159, %v9881
        %9883 = vmatmul.bf16.gmra.mxu0 %v8987
        %v9884 = vpop.f32.mrf.mxu0
        %v9885 = vadd.f32 %v9159, %v9884
        %v9886 = vpop.f32.mrf.mxu0
        %v9887 = vadd.f32 %v9159, %v9886
        %9888 = vmatmul.bf16.gmra.mxu0 %v8992
        %v9889 = vpop.f32.mrf.mxu0
        %v9890 = vadd.f32 %v9159, %v9889
        %v9891 = vpop.f32.mrf.mxu0
        %v9892 = vadd.f32 %v9159, %v9891
        %9893 = vdwg.mxu0
        %9894 = vmatpush.bf16.msra.mxu0 %v9610
        %9895 = vmatpush.bf16.msra.mxu0 %v9607
        %9896 = vmatpush.bf16.msra.mxu0 %v9604
        %9897 = vmatpush.bf16.msra.mxu0 %v9601
        %9898 = vmatpush.bf16.msra.mxu0 %v9598
        %9899 = vmatpush.bf16.msra.mxu0 %v9595
        %9900 = vmatpush.bf16.msra.mxu0 %v9592
        %9901 = vmatpush.bf16.msra.mxu0 %v9589
        %9902 = vmatmul.bf16.gmra.mxu0 %v8918
        %v9903 = vpop.f32.mrf.mxu0
        %v9904 = vadd.f32 %v9815, %v9903
        %v9905 = vpop.f32.mrf.mxu0
        %v9906 = vadd.f32 %v9817, %v9905
        %9907 = vmatmul.bf16.gmra.mxu0 %v8923
        %v9908 = vpop.f32.mrf.mxu0
        %v9909 = vadd.f32 %v9820, %v9908
        %v9910 = vpop.f32.mrf.mxu0
        %v9911 = vadd.f32 %v9822, %v9910
        %9912 = vmatmul.bf16.gmra.mxu0 %v8928
        %v9913 = vpop.f32.mrf.mxu0
        %v9914 = vadd.f32 %v9825, %v9913
        %v9915 = vpop.f32.mrf.mxu0
        %v9916 = vadd.f32 %v9827, %v9915
        %9917 = vmatmul.bf16.gmra.mxu0 %v8933
        %v9918 = vpop.f32.mrf.mxu0
        %v9919 = vadd.f32 %v9830, %v9918
        %v9920 = vpop.f32.mrf.mxu0
        %v9921 = vadd.f32 %v9832, %v9920
        %9922 = vmatmul.bf16.gmra.mxu0 %v8938
        %v9923 = vpop.f32.mrf.mxu0
        %v9924 = vadd.f32 %v9835, %v9923
        %v9925 = vpop.f32.mrf.mxu0
        %v9926 = vadd.f32 %v9837, %v9925
        %9927 = vmatmul.bf16.gmra.mxu0 %v8943
        %v9928 = vpop.f32.mrf.mxu0
        %v9929 = vadd.f32 %v9840, %v9928
        %v9930 = vpop.f32.mrf.mxu0
        %v9931 = vadd.f32 %v9842, %v9930
        %9932 = vmatmul.bf16.gmra.mxu0 %v8948
        %v9933 = vpop.f32.mrf.mxu0
        %v9934 = vadd.f32 %v9845, %v9933
        %v9935 = vpop.f32.mrf.mxu0
        %v9936 = vadd.f32 %v9847, %v9935
        %9937 = vmatmul.bf16.gmra.mxu0 %v8953
        %v9938 = vpop.f32.mrf.mxu0
        %v9939 = vadd.f32 %v9850, %v9938
        %v9940 = vpop.f32.mrf.mxu0
        %v9941 = vadd.f32 %v9852, %v9940
        %9942 = vmatmul.bf16.gmra.mxu0 %v8958
        %v9943 = vpop.f32.mrf.mxu0
        %v9944 = vadd.f32 %v9855, %v9943
        %v9945 = vpop.f32.mrf.mxu0
        %v9946 = vadd.f32 %v9857, %v9945
        %9947 = vmatmul.bf16.gmra.mxu0 %v8963
        %v9948 = vpop.f32.mrf.mxu0
        %v9949 = vadd.f32 %v9860, %v9948
        %v9950 = vpop.f32.mrf.mxu0
        %v9951 = vadd.f32 %v9862, %v9950
        %9952 = vmatmul.bf16.gmra.mxu0 %v8968
        %v9953 = vpop.f32.mrf.mxu0
        %v9954 = vadd.f32 %v9865, %v9953
        %v9955 = vpop.f32.mrf.mxu0
        %v9956 = vadd.f32 %v9867, %v9955
        %9957 = vmatmul.bf16.gmra.mxu0 %v8973
        %v9958 = vpop.f32.mrf.mxu0
        %v9959 = vadd.f32 %v9870, %v9958
        %v9960 = vpop.f32.mrf.mxu0
        %v9961 = vadd.f32 %v9872, %v9960
        %9962 = vmatmul.bf16.gmra.mxu0 %v8978
        %v9963 = vpop.f32.mrf.mxu0
        %v9964 = vadd.f32 %v9875, %v9963
        %v9965 = vpop.f32.mrf.mxu0
        %v9966 = vadd.f32 %v9877, %v9965
        %9967 = vmatmul.bf16.gmra.mxu0 %v8983
        %v9968 = vpop.f32.mrf.mxu0
        %v9969 = vadd.f32 %v9880, %v9968
        %v9970 = vpop.f32.mrf.mxu0
        %v9971 = vadd.f32 %v9882, %v9970
        %9972 = vmatmul.bf16.gmra.mxu0 %v8988
        %v9973 = vpop.f32.mrf.mxu0
        %v9974 = vadd.f32 %v9885, %v9973
        %v9975 = vpop.f32.mrf.mxu0
        %v9976 = vadd.f32 %v9887, %v9975
        %9977 = vmatmul.bf16.gmra.mxu0 %v8993
        %v9978 = vpop.f32.mrf.mxu0
        %v9979 = vadd.f32 %v9890, %v9978
        %v9980 = vpop.f32.mrf.mxu0
        %v9981 = vadd.f32 %v9892, %v9980
        %9982 = vdwg.mxu0
        %9983 = vmatpush.bf16.msra.mxu0 %v9634
        %9984 = vmatpush.bf16.msra.mxu0 %v9631
        %9985 = vmatpush.bf16.msra.mxu0 %v9628
        %9986 = vmatpush.bf16.msra.mxu0 %v9625
        %9987 = vmatpush.bf16.msra.mxu0 %v9622
        %9988 = vmatpush.bf16.msra.mxu0 %v9619
        %9989 = vmatpush.bf16.msra.mxu0 %v9616
        %9990 = vmatpush.bf16.msra.mxu0 %v9613
        %9991 = vmatmul.bf16.gmra.mxu0 %v8919
        %v9992 = vpop.f32.mrf.mxu0
        %v9993 = vadd.f32 %v9904, %v9992
        %v9994 = vpop.f32.mrf.mxu0
        %v9995 = vadd.f32 %v9906, %v9994
        %9996 = vmatmul.bf16.gmra.mxu0 %v8924
        %v9997 = vpop.f32.mrf.mxu0
        %v9998 = vadd.f32 %v9909, %v9997
        %v9999 = vpop.f32.mrf.mxu0
        %v10000 = vadd.f32 %v9911, %v9999
        %10001 = vmatmul.bf16.gmra.mxu0 %v8929
        %v10002 = vpop.f32.mrf.mxu0
        %v10003 = vadd.f32 %v9914, %v10002
        %v10004 = vpop.f32.mrf.mxu0
        %v10005 = vadd.f32 %v9916, %v10004
        %10006 = vmatmul.bf16.gmra.mxu0 %v8934
        %v10007 = vpop.f32.mrf.mxu0
        %v10008 = vadd.f32 %v9919, %v10007
        %v10009 = vpop.f32.mrf.mxu0
        %v10010 = vadd.f32 %v9921, %v10009
        %10011 = vmatmul.bf16.gmra.mxu0 %v8939
        %v10012 = vpop.f32.mrf.mxu0
        %v10013 = vadd.f32 %v9924, %v10012
        %v10014 = vpop.f32.mrf.mxu0
        %v10015 = vadd.f32 %v9926, %v10014
        %10016 = vmatmul.bf16.gmra.mxu0 %v8944
        %v10017 = vpop.f32.mrf.mxu0
        %v10018 = vadd.f32 %v9929, %v10017
        %v10019 = vpop.f32.mrf.mxu0
        %v10020 = vadd.f32 %v9931, %v10019
        %10021 = vmatmul.bf16.gmra.mxu0 %v8949
        %v10022 = vpop.f32.mrf.mxu0
        %v10023 = vadd.f32 %v9934, %v10022
        %v10024 = vpop.f32.mrf.mxu0
        %v10025 = vadd.f32 %v9936, %v10024
        %10026 = vmatmul.bf16.gmra.mxu0 %v8954
        %v10027 = vpop.f32.mrf.mxu0
        %v10028 = vadd.f32 %v9939, %v10027
        %v10029 = vpop.f32.mrf.mxu0
        %v10030 = vadd.f32 %v9941, %v10029
        %10031 = vmatmul.bf16.gmra.mxu0 %v8959
        %v10032 = vpop.f32.mrf.mxu0
        %v10033 = vadd.f32 %v9944, %v10032
        %v10034 = vpop.f32.mrf.mxu0
        %v10035 = vadd.f32 %v9946, %v10034
        %10036 = vmatmul.bf16.gmra.mxu0 %v8964
        %v10037 = vpop.f32.mrf.mxu0
        %v10038 = vadd.f32 %v9949, %v10037
        %v10039 = vpop.f32.mrf.mxu0
        %v10040 = vadd.f32 %v9951, %v10039
        %10041 = vmatmul.bf16.gmra.mxu0 %v8969
        %v10042 = vpop.f32.mrf.mxu0
        %v10043 = vadd.f32 %v9954, %v10042
        %v10044 = vpop.f32.mrf.mxu0
        %v10045 = vadd.f32 %v9956, %v10044
        %10046 = vmatmul.bf16.gmra.mxu0 %v8974
        %v10047 = vpop.f32.mrf.mxu0
        %v10048 = vadd.f32 %v9959, %v10047
        %v10049 = vpop.f32.mrf.mxu0
        %v10050 = vadd.f32 %v9961, %v10049
        %10051 = vmatmul.bf16.gmra.mxu0 %v8979
        %v10052 = vpop.f32.mrf.mxu0
        %v10053 = vadd.f32 %v9964, %v10052
        %v10054 = vpop.f32.mrf.mxu0
        %v10055 = vadd.f32 %v9966, %v10054
        %10056 = vmatmul.bf16.gmra.mxu0 %v8984
        %v10057 = vpop.f32.mrf.mxu0
        %v10058 = vadd.f32 %v9969, %v10057
        %v10059 = vpop.f32.mrf.mxu0
        %v10060 = vadd.f32 %v9971, %v10059
        %10061 = vmatmul.bf16.gmra.mxu0 %v8989
        %v10062 = vpop.f32.mrf.mxu0
        %v10063 = vadd.f32 %v9974, %v10062
        %v10064 = vpop.f32.mrf.mxu0
        %v10065 = vadd.f32 %v9976, %v10064
        %10066 = vmatmul.bf16.gmra.mxu0 %v8994
        %v10067 = vpop.f32.mrf.mxu0
        %v10068 = vadd.f32 %v9979, %v10067
        %v10069 = vpop.f32.mrf.mxu0
        %v10070 = vadd.f32 %v9981, %v10069
        %10071 = vdwg.mxu0
        %10072 = vmatpush.bf16.msra.mxu0 %v9658
        %10073 = vmatpush.bf16.msra.mxu0 %v9655
        %10074 = vmatpush.bf16.msra.mxu0 %v9652
        %10075 = vmatpush.bf16.msra.mxu0 %v9649
        %10076 = vmatpush.bf16.msra.mxu0 %v9646
        %10077 = vmatpush.bf16.msra.mxu0 %v9643
        %10078 = vmatpush.bf16.msra.mxu0 %v9640
        %10079 = vmatpush.bf16.msra.mxu0 %v9637
        %10080 = vmatmul.bf16.gmra.mxu0 %v8920
        %v10081 = vpop.f32.mrf.mxu0
        %v10082 = vadd.f32 %v9993, %v10081
        %v10083 = vpop.f32.mrf.mxu0
        %v10084 = vadd.f32 %v9995, %v10083
        %10085 = vmatmul.bf16.gmra.mxu0 %v8925
        %v10086 = vpop.f32.mrf.mxu0
        %v10087 = vadd.f32 %v9998, %v10086
        %v10088 = vpop.f32.mrf.mxu0
        %v10089 = vadd.f32 %v10000, %v10088
        %10090 = vmatmul.bf16.gmra.mxu0 %v8930
        %v10091 = vpop.f32.mrf.mxu0
        %v10092 = vadd.f32 %v10003, %v10091
        %v10093 = vpop.f32.mrf.mxu0
        %v10094 = vadd.f32 %v10005, %v10093
        %10095 = vmatmul.bf16.gmra.mxu0 %v8935
        %v10096 = vpop.f32.mrf.mxu0
        %v10097 = vadd.f32 %v10008, %v10096
        %v10098 = vpop.f32.mrf.mxu0
        %v10099 = vadd.f32 %v10010, %v10098
        %10100 = vmatmul.bf16.gmra.mxu0 %v8940
        %v10101 = vpop.f32.mrf.mxu0
        %v10102 = vadd.f32 %v10013, %v10101
        %v10103 = vpop.f32.mrf.mxu0
        %v10104 = vadd.f32 %v10015, %v10103
        %10105 = vmatmul.bf16.gmra.mxu0 %v8945
        %v10106 = vpop.f32.mrf.mxu0
        %v10107 = vadd.f32 %v10018, %v10106
        %v10108 = vpop.f32.mrf.mxu0
        %v10109 = vadd.f32 %v10020, %v10108
        %10110 = vmatmul.bf16.gmra.mxu0 %v8950
        %v10111 = vpop.f32.mrf.mxu0
        %v10112 = vadd.f32 %v10023, %v10111
        %v10113 = vpop.f32.mrf.mxu0
        %v10114 = vadd.f32 %v10025, %v10113
        %10115 = vmatmul.bf16.gmra.mxu0 %v8955
        %v10116 = vpop.f32.mrf.mxu0
        %v10117 = vadd.f32 %v10028, %v10116
        %v10118 = vpop.f32.mrf.mxu0
        %v10119 = vadd.f32 %v10030, %v10118
        %10120 = vmatmul.bf16.gmra.mxu0 %v8960
        %v10121 = vpop.f32.mrf.mxu0
        %v10122 = vadd.f32 %v10033, %v10121
        %v10123 = vpop.f32.mrf.mxu0
        %v10124 = vadd.f32 %v10035, %v10123
        %10125 = vmatmul.bf16.gmra.mxu0 %v8965
        %v10126 = vpop.f32.mrf.mxu0
        %v10127 = vadd.f32 %v10038, %v10126
        %v10128 = vpop.f32.mrf.mxu0
        %v10129 = vadd.f32 %v10040, %v10128
        %10130 = vmatmul.bf16.gmra.mxu0 %v8970
        %v10131 = vpop.f32.mrf.mxu0
        %v10132 = vadd.f32 %v10043, %v10131
        %v10133 = vpop.f32.mrf.mxu0
        %v10134 = vadd.f32 %v10045, %v10133
        %10135 = vmatmul.bf16.gmra.mxu0 %v8975
        %v10136 = vpop.f32.mrf.mxu0
        %v10137 = vadd.f32 %v10048, %v10136
        %v10138 = vpop.f32.mrf.mxu0
        %v10139 = vadd.f32 %v10050, %v10138
        %10140 = vmatmul.bf16.gmra.mxu0 %v8980
        %v10141 = vpop.f32.mrf.mxu0
        %v10142 = vadd.f32 %v10053, %v10141
        %v10143 = vpop.f32.mrf.mxu0
        %v10144 = vadd.f32 %v10055, %v10143
        %10145 = vmatmul.bf16.gmra.mxu0 %v8985
        %v10146 = vpop.f32.mrf.mxu0
        %v10147 = vadd.f32 %v10058, %v10146
        %v10148 = vpop.f32.mrf.mxu0
        %v10149 = vadd.f32 %v10060, %v10148
        %10150 = vmatmul.bf16.gmra.mxu0 %v8990
        %v10151 = vpop.f32.mrf.mxu0
        %v10152 = vadd.f32 %v10063, %v10151
        %v10153 = vpop.f32.mrf.mxu0
        %v10154 = vadd.f32 %v10065, %v10153
        %10155 = vmatmul.bf16.gmra.mxu0 %v8995
        %v10156 = vpop.f32.mrf.mxu0
        %v10157 = vadd.f32 %v10068, %v10156
        %v10158 = vpop.f32.mrf.mxu0
        %v10159 = vadd.f32 %v10070, %v10158
        %10160 = vdwg.mxu0
        %10161 = vmatpush.bf16.msra.mxu0 %v9682
        %10162 = vmatpush.bf16.msra.mxu0 %v9679
        %10163 = vmatpush.bf16.msra.mxu0 %v9676
        %10164 = vmatpush.bf16.msra.mxu0 %v9673
        %10165 = vmatpush.bf16.msra.mxu0 %v9670
        %10166 = vmatpush.bf16.msra.mxu0 %v9667
        %10167 = vmatpush.bf16.msra.mxu0 %v9664
        %10168 = vmatpush.bf16.msra.mxu0 %v9661
        %10169 = vmatmul.bf16.gmra.mxu0 %v8921
        %v10170 = vpop.f32.mrf.mxu0
        %v10171 = vadd.f32 %v10082, %v10170
        %v10172 = vpop.f32.mrf.mxu0
        %v10173 = vadd.f32 %v10084, %v10172
        %10174 = vmatmul.bf16.gmra.mxu0 %v8926
        %v10175 = vpop.f32.mrf.mxu0
        %v10176 = vadd.f32 %v10087, %v10175
        %v10177 = vpop.f32.mrf.mxu0
        %v10178 = vadd.f32 %v10089, %v10177
        %10179 = vmatmul.bf16.gmra.mxu0 %v8931
        %v10180 = vpop.f32.mrf.mxu0
        %v10181 = vadd.f32 %v10092, %v10180
        %v10182 = vpop.f32.mrf.mxu0
        %v10183 = vadd.f32 %v10094, %v10182
        %10184 = vmatmul.bf16.gmra.mxu0 %v8936
        %v10185 = vpop.f32.mrf.mxu0
        %v10186 = vadd.f32 %v10097, %v10185
        %v10187 = vpop.f32.mrf.mxu0
        %v10188 = vadd.f32 %v10099, %v10187
        %10189 = vmatmul.bf16.gmra.mxu0 %v8941
        %v10190 = vpop.f32.mrf.mxu0
        %v10191 = vadd.f32 %v10102, %v10190
        %v10192 = vpop.f32.mrf.mxu0
        %v10193 = vadd.f32 %v10104, %v10192
        %10194 = vmatmul.bf16.gmra.mxu0 %v8946
        %v10195 = vpop.f32.mrf.mxu0
        %v10196 = vadd.f32 %v10107, %v10195
        %v10197 = vpop.f32.mrf.mxu0
        %v10198 = vadd.f32 %v10109, %v10197
        %10199 = vmatmul.bf16.gmra.mxu0 %v8951
        %v10200 = vpop.f32.mrf.mxu0
        %v10201 = vadd.f32 %v10112, %v10200
        %v10202 = vpop.f32.mrf.mxu0
        %v10203 = vadd.f32 %v10114, %v10202
        %10204 = vmatmul.bf16.gmra.mxu0 %v8956
        %v10205 = vpop.f32.mrf.mxu0
        %v10206 = vadd.f32 %v10117, %v10205
        %v10207 = vpop.f32.mrf.mxu0
        %v10208 = vadd.f32 %v10119, %v10207
        %10209 = vmatmul.bf16.gmra.mxu0 %v8961
        %v10210 = vpop.f32.mrf.mxu0
        %v10211 = vadd.f32 %v10122, %v10210
        %v10212 = vpop.f32.mrf.mxu0
        %v10213 = vadd.f32 %v10124, %v10212
        %10214 = vmatmul.bf16.gmra.mxu0 %v8966
        %v10215 = vpop.f32.mrf.mxu0
        %v10216 = vadd.f32 %v10127, %v10215
        %v10217 = vpop.f32.mrf.mxu0
        %v10218 = vadd.f32 %v10129, %v10217
        %10219 = vmatmul.bf16.gmra.mxu0 %v8971
        %v10220 = vpop.f32.mrf.mxu0
        %v10221 = vadd.f32 %v10132, %v10220
        %v10222 = vpop.f32.mrf.mxu0
        %v10223 = vadd.f32 %v10134, %v10222
        %10224 = vmatmul.bf16.gmra.mxu0 %v8976
        %v10225 = vpop.f32.mrf.mxu0
        %v10226 = vadd.f32 %v10137, %v10225
        %v10227 = vpop.f32.mrf.mxu0
        %v10228 = vadd.f32 %v10139, %v10227
        %10229 = vmatmul.bf16.gmra.mxu0 %v8981
        %v10230 = vpop.f32.mrf.mxu0
        %v10231 = vadd.f32 %v10142, %v10230
        %v10232 = vpop.f32.mrf.mxu0
        %v10233 = vadd.f32 %v10144, %v10232
        %10234 = vmatmul.bf16.gmra.mxu0 %v8986
        %v10235 = vpop.f32.mrf.mxu0
        %v10236 = vadd.f32 %v10147, %v10235
        %v10237 = vpop.f32.mrf.mxu0
        %v10238 = vadd.f32 %v10149, %v10237
        %10239 = vmatmul.bf16.gmra.mxu0 %v8991
        %v10240 = vpop.f32.mrf.mxu0
        %v10241 = vadd.f32 %v10152, %v10240
        %v10242 = vpop.f32.mrf.mxu0
        %v10243 = vadd.f32 %v10154, %v10242
        %10244 = vmatmul.bf16.gmra.mxu0 %v8996
        %v10245 = vpop.f32.mrf.mxu0
        %v10246 = vadd.f32 %v10157, %v10245
        %v10247 = vpop.f32.mrf.mxu0
        %v10248 = vadd.f32 %v10159, %v10247
        %10249 = vdwg.mxu0
        %10250 = vmatpush.bf16.msra.mxu0 %v9587
        %10251 = vmatpush.bf16.msra.mxu0 %v9584
        %10252 = vmatpush.bf16.msra.mxu0 %v9581
        %10253 = vmatpush.bf16.msra.mxu0 %v9578
        %10254 = vmatpush.bf16.msra.mxu0 %v9575
        %10255 = vmatpush.bf16.msra.mxu0 %v9572
        %10256 = vmatpush.bf16.msra.mxu0 %v9569
        %10257 = vmatpush.bf16.msra.mxu0 %v9566
        %10258 = vmatmul.bf16.gmra.mxu0 %v8917
        %v10259 = vpop.f32.mrf.mxu0
        %v10260 = vadd.f32 %v9160, %v10259
        %v10261 = vpop.f32.mrf.mxu0
        %v10262 = vadd.f32 %v9160, %v10261
        %10263 = vmatmul.bf16.gmra.mxu0 %v8922
        %v10264 = vpop.f32.mrf.mxu0
        %v10265 = vadd.f32 %v9160, %v10264
        %v10266 = vpop.f32.mrf.mxu0
        %v10267 = vadd.f32 %v9160, %v10266
        %10268 = vmatmul.bf16.gmra.mxu0 %v8927
        %v10269 = vpop.f32.mrf.mxu0
        %v10270 = vadd.f32 %v9160, %v10269
        %v10271 = vpop.f32.mrf.mxu0
        %v10272 = vadd.f32 %v9160, %v10271
        %10273 = vmatmul.bf16.gmra.mxu0 %v8932
        %v10274 = vpop.f32.mrf.mxu0
        %v10275 = vadd.f32 %v9160, %v10274
        %v10276 = vpop.f32.mrf.mxu0
        %v10277 = vadd.f32 %v9160, %v10276
        %10278 = vmatmul.bf16.gmra.mxu0 %v8937
        %v10279 = vpop.f32.mrf.mxu0
        %v10280 = vadd.f32 %v9160, %v10279
        %v10281 = vpop.f32.mrf.mxu0
        %v10282 = vadd.f32 %v9160, %v10281
        %10283 = vmatmul.bf16.gmra.mxu0 %v8942
        %v10284 = vpop.f32.mrf.mxu0
        %v10285 = vadd.f32 %v9160, %v10284
        %v10286 = vpop.f32.mrf.mxu0
        %v10287 = vadd.f32 %v9160, %v10286
        %10288 = vmatmul.bf16.gmra.mxu0 %v8947
        %v10289 = vpop.f32.mrf.mxu0
        %v10290 = vadd.f32 %v9160, %v10289
        %v10291 = vpop.f32.mrf.mxu0
        %v10292 = vadd.f32 %v9160, %v10291
        %10293 = vmatmul.bf16.gmra.mxu0 %v8952
        %v10294 = vpop.f32.mrf.mxu0
        %v10295 = vadd.f32 %v9160, %v10294
        %v10296 = vpop.f32.mrf.mxu0
        %v10297 = vadd.f32 %v9160, %v10296
        %10298 = vmatmul.bf16.gmra.mxu0 %v8957
        %v10299 = vpop.f32.mrf.mxu0
        %v10300 = vadd.f32 %v9160, %v10299
        %v10301 = vpop.f32.mrf.mxu0
        %v10302 = vadd.f32 %v9160, %v10301
        %10303 = vmatmul.bf16.gmra.mxu0 %v8962
        %v10304 = vpop.f32.mrf.mxu0
        %v10305 = vadd.f32 %v9160, %v10304
        %v10306 = vpop.f32.mrf.mxu0
        %v10307 = vadd.f32 %v9160, %v10306
        %10308 = vmatmul.bf16.gmra.mxu0 %v8967
        %v10309 = vpop.f32.mrf.mxu0
        %v10310 = vadd.f32 %v9160, %v10309
        %v10311 = vpop.f32.mrf.mxu0
        %v10312 = vadd.f32 %v9160, %v10311
        %10313 = vmatmul.bf16.gmra.mxu0 %v8972
        %v10314 = vpop.f32.mrf.mxu0
        %v10315 = vadd.f32 %v9160, %v10314
        %v10316 = vpop.f32.mrf.mxu0
        %v10317 = vadd.f32 %v9160, %v10316
        %10318 = vmatmul.bf16.gmra.mxu0 %v8977
        %v10319 = vpop.f32.mrf.mxu0
        %v10320 = vadd.f32 %v9160, %v10319
        %v10321 = vpop.f32.mrf.mxu0
        %v10322 = vadd.f32 %v9160, %v10321
        %10323 = vmatmul.bf16.gmra.mxu0 %v8982
        %v10324 = vpop.f32.mrf.mxu0
        %v10325 = vadd.f32 %v9160, %v10324
        %v10326 = vpop.f32.mrf.mxu0
        %v10327 = vadd.f32 %v9160, %v10326
        %10328 = vmatmul.bf16.gmra.mxu0 %v8987
        %v10329 = vpop.f32.mrf.mxu0
        %v10330 = vadd.f32 %v9160, %v10329
        %v10331 = vpop.f32.mrf.mxu0
        %v10332 = vadd.f32 %v9160, %v10331
        %10333 = vmatmul.bf16.gmra.mxu0 %v8992
        %v10334 = vpop.f32.mrf.mxu0
        %v10335 = vadd.f32 %v9160, %v10334
        %v10336 = vpop.f32.mrf.mxu0
        %v10337 = vadd.f32 %v9160, %v10336
        %10338 = vdwg.mxu0
        %10339 = vmatpush.bf16.msra.mxu0 %v9611
        %10340 = vmatpush.bf16.msra.mxu0 %v9608
        %10341 = vmatpush.bf16.msra.mxu0 %v9605
        %10342 = vmatpush.bf16.msra.mxu0 %v9602
        %10343 = vmatpush.bf16.msra.mxu0 %v9599
        %10344 = vmatpush.bf16.msra.mxu0 %v9596
        %10345 = vmatpush.bf16.msra.mxu0 %v9593
        %10346 = vmatpush.bf16.msra.mxu0 %v9590
        %10347 = vmatmul.bf16.gmra.mxu0 %v8918
        %v10348 = vpop.f32.mrf.mxu0
        %v10349 = vadd.f32 %v10260, %v10348
        %v10350 = vpop.f32.mrf.mxu0
        %v10351 = vadd.f32 %v10262, %v10350
        %10352 = vmatmul.bf16.gmra.mxu0 %v8923
        %v10353 = vpop.f32.mrf.mxu0
        %v10354 = vadd.f32 %v10265, %v10353
        %v10355 = vpop.f32.mrf.mxu0
        %v10356 = vadd.f32 %v10267, %v10355
        %10357 = vmatmul.bf16.gmra.mxu0 %v8928
        %v10358 = vpop.f32.mrf.mxu0
        %v10359 = vadd.f32 %v10270, %v10358
        %v10360 = vpop.f32.mrf.mxu0
        %v10361 = vadd.f32 %v10272, %v10360
        %10362 = vmatmul.bf16.gmra.mxu0 %v8933
        %v10363 = vpop.f32.mrf.mxu0
        %v10364 = vadd.f32 %v10275, %v10363
        %v10365 = vpop.f32.mrf.mxu0
        %v10366 = vadd.f32 %v10277, %v10365
        %10367 = vmatmul.bf16.gmra.mxu0 %v8938
        %v10368 = vpop.f32.mrf.mxu0
        %v10369 = vadd.f32 %v10280, %v10368
        %v10370 = vpop.f32.mrf.mxu0
        %v10371 = vadd.f32 %v10282, %v10370
        %10372 = vmatmul.bf16.gmra.mxu0 %v8943
        %v10373 = vpop.f32.mrf.mxu0
        %v10374 = vadd.f32 %v10285, %v10373
        %v10375 = vpop.f32.mrf.mxu0
        %v10376 = vadd.f32 %v10287, %v10375
        %10377 = vmatmul.bf16.gmra.mxu0 %v8948
        %v10378 = vpop.f32.mrf.mxu0
        %v10379 = vadd.f32 %v10290, %v10378
        %v10380 = vpop.f32.mrf.mxu0
        %v10381 = vadd.f32 %v10292, %v10380
        %10382 = vmatmul.bf16.gmra.mxu0 %v8953
        %v10383 = vpop.f32.mrf.mxu0
        %v10384 = vadd.f32 %v10295, %v10383
        %v10385 = vpop.f32.mrf.mxu0
        %v10386 = vadd.f32 %v10297, %v10385
        %10387 = vmatmul.bf16.gmra.mxu0 %v8958
        %v10388 = vpop.f32.mrf.mxu0
        %v10389 = vadd.f32 %v10300, %v10388
        %v10390 = vpop.f32.mrf.mxu0
        %v10391 = vadd.f32 %v10302, %v10390
        %10392 = vmatmul.bf16.gmra.mxu0 %v8963
        %v10393 = vpop.f32.mrf.mxu0
        %v10394 = vadd.f32 %v10305, %v10393
        %v10395 = vpop.f32.mrf.mxu0
        %v10396 = vadd.f32 %v10307, %v10395
        %10397 = vmatmul.bf16.gmra.mxu0 %v8968
        %v10398 = vpop.f32.mrf.mxu0
        %v10399 = vadd.f32 %v10310, %v10398
        %v10400 = vpop.f32.mrf.mxu0
        %v10401 = vadd.f32 %v10312, %v10400
        %10402 = vmatmul.bf16.gmra.mxu0 %v8973
        %v10403 = vpop.f32.mrf.mxu0
        %v10404 = vadd.f32 %v10315, %v10403
        %v10405 = vpop.f32.mrf.mxu0
        %v10406 = vadd.f32 %v10317, %v10405
        %10407 = vmatmul.bf16.gmra.mxu0 %v8978
        %v10408 = vpop.f32.mrf.mxu0
        %v10409 = vadd.f32 %v10320, %v10408
        %v10410 = vpop.f32.mrf.mxu0
        %v10411 = vadd.f32 %v10322, %v10410
        %10412 = vmatmul.bf16.gmra.mxu0 %v8983
        %v10413 = vpop.f32.mrf.mxu0
        %v10414 = vadd.f32 %v10325, %v10413
        %v10415 = vpop.f32.mrf.mxu0
        %v10416 = vadd.f32 %v10327, %v10415
        %10417 = vmatmul.bf16.gmra.mxu0 %v8988
        %v10418 = vpop.f32.mrf.mxu0
        %v10419 = vadd.f32 %v10330, %v10418
        %v10420 = vpop.f32.mrf.mxu0
        %v10421 = vadd.f32 %v10332, %v10420
        %10422 = vmatmul.bf16.gmra.mxu0 %v8993
        %v10423 = vpop.f32.mrf.mxu0
        %v10424 = vadd.f32 %v10335, %v10423
        %v10425 = vpop.f32.mrf.mxu0
        %v10426 = vadd.f32 %v10337, %v10425
        %10427 = vdwg.mxu0
        %10428 = vmatpush.bf16.msra.mxu0 %v9635
        %10429 = vmatpush.bf16.msra.mxu0 %v9632
        %10430 = vmatpush.bf16.msra.mxu0 %v9629
        %10431 = vmatpush.bf16.msra.mxu0 %v9626
        %10432 = vmatpush.bf16.msra.mxu0 %v9623
        %10433 = vmatpush.bf16.msra.mxu0 %v9620
        %10434 = vmatpush.bf16.msra.mxu0 %v9617
        %10435 = vmatpush.bf16.msra.mxu0 %v9614
        %10436 = vmatmul.bf16.gmra.mxu0 %v8919
        %v10437 = vpop.f32.mrf.mxu0
        %v10438 = vadd.f32 %v10349, %v10437
        %v10439 = vpop.f32.mrf.mxu0
        %v10440 = vadd.f32 %v10351, %v10439
        %10441 = vmatmul.bf16.gmra.mxu0 %v8924
        %v10442 = vpop.f32.mrf.mxu0
        %v10443 = vadd.f32 %v10354, %v10442
        %v10444 = vpop.f32.mrf.mxu0
        %v10445 = vadd.f32 %v10356, %v10444
        %10446 = vmatmul.bf16.gmra.mxu0 %v8929
        %v10447 = vpop.f32.mrf.mxu0
        %v10448 = vadd.f32 %v10359, %v10447
        %v10449 = vpop.f32.mrf.mxu0
        %v10450 = vadd.f32 %v10361, %v10449
        %10451 = vmatmul.bf16.gmra.mxu0 %v8934
        %v10452 = vpop.f32.mrf.mxu0
        %v10453 = vadd.f32 %v10364, %v10452
        %v10454 = vpop.f32.mrf.mxu0
        %v10455 = vadd.f32 %v10366, %v10454
        %10456 = vmatmul.bf16.gmra.mxu0 %v8939
        %v10457 = vpop.f32.mrf.mxu0
        %v10458 = vadd.f32 %v10369, %v10457
        %v10459 = vpop.f32.mrf.mxu0
        %v10460 = vadd.f32 %v10371, %v10459
        %10461 = vmatmul.bf16.gmra.mxu0 %v8944
        %v10462 = vpop.f32.mrf.mxu0
        %v10463 = vadd.f32 %v10374, %v10462
        %v10464 = vpop.f32.mrf.mxu0
        %v10465 = vadd.f32 %v10376, %v10464
        %10466 = vmatmul.bf16.gmra.mxu0 %v8949
        %v10467 = vpop.f32.mrf.mxu0
        %v10468 = vadd.f32 %v10379, %v10467
        %v10469 = vpop.f32.mrf.mxu0
        %v10470 = vadd.f32 %v10381, %v10469
        %10471 = vmatmul.bf16.gmra.mxu0 %v8954
        %v10472 = vpop.f32.mrf.mxu0
        %v10473 = vadd.f32 %v10384, %v10472
        %v10474 = vpop.f32.mrf.mxu0
        %v10475 = vadd.f32 %v10386, %v10474
        %10476 = vmatmul.bf16.gmra.mxu0 %v8959
        %v10477 = vpop.f32.mrf.mxu0
        %v10478 = vadd.f32 %v10389, %v10477
        %v10479 = vpop.f32.mrf.mxu0
        %v10480 = vadd.f32 %v10391, %v10479
        %10481 = vmatmul.bf16.gmra.mxu0 %v8964
        %v10482 = vpop.f32.mrf.mxu0
        %v10483 = vadd.f32 %v10394, %v10482
        %v10484 = vpop.f32.mrf.mxu0
        %v10485 = vadd.f32 %v10396, %v10484
        %10486 = vmatmul.bf16.gmra.mxu0 %v8969
        %v10487 = vpop.f32.mrf.mxu0
        %v10488 = vadd.f32 %v10399, %v10487
        %v10489 = vpop.f32.mrf.mxu0
        %v10490 = vadd.f32 %v10401, %v10489
        %10491 = vmatmul.bf16.gmra.mxu0 %v8974
        %v10492 = vpop.f32.mrf.mxu0
        %v10493 = vadd.f32 %v10404, %v10492
        %v10494 = vpop.f32.mrf.mxu0
        %v10495 = vadd.f32 %v10406, %v10494
        %10496 = vmatmul.bf16.gmra.mxu0 %v8979
        %v10497 = vpop.f32.mrf.mxu0
        %v10498 = vadd.f32 %v10409, %v10497
        %v10499 = vpop.f32.mrf.mxu0
        %v10500 = vadd.f32 %v10411, %v10499
        %10501 = vmatmul.bf16.gmra.mxu0 %v8984
        %v10502 = vpop.f32.mrf.mxu0
        %v10503 = vadd.f32 %v10414, %v10502
        %v10504 = vpop.f32.mrf.mxu0
        %v10505 = vadd.f32 %v10416, %v10504
        %10506 = vmatmul.bf16.gmra.mxu0 %v8989
        %v10507 = vpop.f32.mrf.mxu0
        %v10508 = vadd.f32 %v10419, %v10507
        %v10509 = vpop.f32.mrf.mxu0
        %v10510 = vadd.f32 %v10421, %v10509
        %10511 = vmatmul.bf16.gmra.mxu0 %v8994
        %v10512 = vpop.f32.mrf.mxu0
        %v10513 = vadd.f32 %v10424, %v10512
        %v10514 = vpop.f32.mrf.mxu0
        %v10515 = vadd.f32 %v10426, %v10514
        %10516 = vdwg.mxu0
        %10517 = vmatpush.bf16.msra.mxu0 %v9659
        %10518 = vmatpush.bf16.msra.mxu0 %v9656
        %10519 = vmatpush.bf16.msra.mxu0 %v9653
        %10520 = vmatpush.bf16.msra.mxu0 %v9650
        %10521 = vmatpush.bf16.msra.mxu0 %v9647
        %10522 = vmatpush.bf16.msra.mxu0 %v9644
        %10523 = vmatpush.bf16.msra.mxu0 %v9641
        %10524 = vmatpush.bf16.msra.mxu0 %v9638
        %10525 = vmatmul.bf16.gmra.mxu0 %v8920
        %v10526 = vpop.f32.mrf.mxu0
        %v10527 = vadd.f32 %v10438, %v10526
        %v10528 = vpop.f32.mrf.mxu0
        %v10529 = vadd.f32 %v10440, %v10528
        %10530 = vmatmul.bf16.gmra.mxu0 %v8925
        %v10531 = vpop.f32.mrf.mxu0
        %v10532 = vadd.f32 %v10443, %v10531
        %v10533 = vpop.f32.mrf.mxu0
        %v10534 = vadd.f32 %v10445, %v10533
        %10535 = vmatmul.bf16.gmra.mxu0 %v8930
        %v10536 = vpop.f32.mrf.mxu0
        %v10537 = vadd.f32 %v10448, %v10536
        %v10538 = vpop.f32.mrf.mxu0
        %v10539 = vadd.f32 %v10450, %v10538
        %10540 = vmatmul.bf16.gmra.mxu0 %v8935
        %v10541 = vpop.f32.mrf.mxu0
        %v10542 = vadd.f32 %v10453, %v10541
        %v10543 = vpop.f32.mrf.mxu0
        %v10544 = vadd.f32 %v10455, %v10543
        %10545 = vmatmul.bf16.gmra.mxu0 %v8940
        %v10546 = vpop.f32.mrf.mxu0
        %v10547 = vadd.f32 %v10458, %v10546
        %v10548 = vpop.f32.mrf.mxu0
        %v10549 = vadd.f32 %v10460, %v10548
        %10550 = vmatmul.bf16.gmra.mxu0 %v8945
        %v10551 = vpop.f32.mrf.mxu0
        %v10552 = vadd.f32 %v10463, %v10551
        %v10553 = vpop.f32.mrf.mxu0
        %v10554 = vadd.f32 %v10465, %v10553
        %10555 = vmatmul.bf16.gmra.mxu0 %v8950
        %v10556 = vpop.f32.mrf.mxu0
        %v10557 = vadd.f32 %v10468, %v10556
        %v10558 = vpop.f32.mrf.mxu0
        %v10559 = vadd.f32 %v10470, %v10558
        %10560 = vmatmul.bf16.gmra.mxu0 %v8955
        %v10561 = vpop.f32.mrf.mxu0
        %v10562 = vadd.f32 %v10473, %v10561
        %v10563 = vpop.f32.mrf.mxu0
        %v10564 = vadd.f32 %v10475, %v10563
        %10565 = vmatmul.bf16.gmra.mxu0 %v8960
        %v10566 = vpop.f32.mrf.mxu0
        %v10567 = vadd.f32 %v10478, %v10566
        %v10568 = vpop.f32.mrf.mxu0
        %v10569 = vadd.f32 %v10480, %v10568
        %10570 = vmatmul.bf16.gmra.mxu0 %v8965
        %v10571 = vpop.f32.mrf.mxu0
        %v10572 = vadd.f32 %v10483, %v10571
        %v10573 = vpop.f32.mrf.mxu0
        %v10574 = vadd.f32 %v10485, %v10573
        %10575 = vmatmul.bf16.gmra.mxu0 %v8970
        %v10576 = vpop.f32.mrf.mxu0
        %v10577 = vadd.f32 %v10488, %v10576
        %v10578 = vpop.f32.mrf.mxu0
        %v10579 = vadd.f32 %v10490, %v10578
        %10580 = vmatmul.bf16.gmra.mxu0 %v8975
        %v10581 = vpop.f32.mrf.mxu0
        %v10582 = vadd.f32 %v10493, %v10581
        %v10583 = vpop.f32.mrf.mxu0
        %v10584 = vadd.f32 %v10495, %v10583
        %10585 = vmatmul.bf16.gmra.mxu0 %v8980
        %v10586 = vpop.f32.mrf.mxu0
        %v10587 = vadd.f32 %v10498, %v10586
        %v10588 = vpop.f32.mrf.mxu0
        %v10589 = vadd.f32 %v10500, %v10588
        %10590 = vmatmul.bf16.gmra.mxu0 %v8985
        %v10591 = vpop.f32.mrf.mxu0
        %v10592 = vadd.f32 %v10503, %v10591
        %v10593 = vpop.f32.mrf.mxu0
        %v10594 = vadd.f32 %v10505, %v10593
        %10595 = vmatmul.bf16.gmra.mxu0 %v8990
        %v10596 = vpop.f32.mrf.mxu0
        %v10597 = vadd.f32 %v10508, %v10596
        %v10598 = vpop.f32.mrf.mxu0
        %v10599 = vadd.f32 %v10510, %v10598
        %10600 = vmatmul.bf16.gmra.mxu0 %v8995
        %v10601 = vpop.f32.mrf.mxu0
        %v10602 = vadd.f32 %v10513, %v10601
        %v10603 = vpop.f32.mrf.mxu0
        %v10604 = vadd.f32 %v10515, %v10603
        %10605 = vdwg.mxu0
        %10606 = vmatpush.bf16.msra.mxu0 %v9683
        %10607 = vmatpush.bf16.msra.mxu0 %v9680
        %10608 = vmatpush.bf16.msra.mxu0 %v9677
        %10609 = vmatpush.bf16.msra.mxu0 %v9674
        %10610 = vmatpush.bf16.msra.mxu0 %v9671
        %10611 = vmatpush.bf16.msra.mxu0 %v9668
        %10612 = vmatpush.bf16.msra.mxu0 %v9665
        %10613 = vmatpush.bf16.msra.mxu0 %v9662
        %10614 = vmatmul.bf16.gmra.mxu0 %v8921
        %v10615 = vpop.f32.mrf.mxu0
        %v10616 = vadd.f32 %v10527, %v10615
        %v10617 = vpop.f32.mrf.mxu0
        %v10618 = vadd.f32 %v10529, %v10617
        %10619 = vmatmul.bf16.gmra.mxu0 %v8926
        %v10620 = vpop.f32.mrf.mxu0
        %v10621 = vadd.f32 %v10532, %v10620
        %v10622 = vpop.f32.mrf.mxu0
        %v10623 = vadd.f32 %v10534, %v10622
        %10624 = vmatmul.bf16.gmra.mxu0 %v8931
        %v10625 = vpop.f32.mrf.mxu0
        %v10626 = vadd.f32 %v10537, %v10625
        %v10627 = vpop.f32.mrf.mxu0
        %v10628 = vadd.f32 %v10539, %v10627
        %10629 = vmatmul.bf16.gmra.mxu0 %v8936
        %v10630 = vpop.f32.mrf.mxu0
        %v10631 = vadd.f32 %v10542, %v10630
        %v10632 = vpop.f32.mrf.mxu0
        %v10633 = vadd.f32 %v10544, %v10632
        %10634 = vmatmul.bf16.gmra.mxu0 %v8941
        %v10635 = vpop.f32.mrf.mxu0
        %v10636 = vadd.f32 %v10547, %v10635
        %v10637 = vpop.f32.mrf.mxu0
        %v10638 = vadd.f32 %v10549, %v10637
        %10639 = vmatmul.bf16.gmra.mxu0 %v8946
        %v10640 = vpop.f32.mrf.mxu0
        %v10641 = vadd.f32 %v10552, %v10640
        %v10642 = vpop.f32.mrf.mxu0
        %v10643 = vadd.f32 %v10554, %v10642
        %10644 = vmatmul.bf16.gmra.mxu0 %v8951
        %v10645 = vpop.f32.mrf.mxu0
        %v10646 = vadd.f32 %v10557, %v10645
        %v10647 = vpop.f32.mrf.mxu0
        %v10648 = vadd.f32 %v10559, %v10647
        %10649 = vmatmul.bf16.gmra.mxu0 %v8956
        %v10650 = vpop.f32.mrf.mxu0
        %v10651 = vadd.f32 %v10562, %v10650
        %v10652 = vpop.f32.mrf.mxu0
        %v10653 = vadd.f32 %v10564, %v10652
        %10654 = vmatmul.bf16.gmra.mxu0 %v8961
        %v10655 = vpop.f32.mrf.mxu0
        %v10656 = vadd.f32 %v10567, %v10655
        %v10657 = vpop.f32.mrf.mxu0
        %v10658 = vadd.f32 %v10569, %v10657
        %10659 = vmatmul.bf16.gmra.mxu0 %v8966
        %v10660 = vpop.f32.mrf.mxu0
        %v10661 = vadd.f32 %v10572, %v10660
        %v10662 = vpop.f32.mrf.mxu0
        %v10663 = vadd.f32 %v10574, %v10662
        %10664 = vmatmul.bf16.gmra.mxu0 %v8971
        %v10665 = vpop.f32.mrf.mxu0
        %v10666 = vadd.f32 %v10577, %v10665
        %v10667 = vpop.f32.mrf.mxu0
        %v10668 = vadd.f32 %v10579, %v10667
        %10669 = vmatmul.bf16.gmra.mxu0 %v8976
        %v10670 = vpop.f32.mrf.mxu0
        %v10671 = vadd.f32 %v10582, %v10670
        %v10672 = vpop.f32.mrf.mxu0
        %v10673 = vadd.f32 %v10584, %v10672
        %10674 = vmatmul.bf16.gmra.mxu0 %v8981
        %v10675 = vpop.f32.mrf.mxu0
        %v10676 = vadd.f32 %v10587, %v10675
        %v10677 = vpop.f32.mrf.mxu0
        %v10678 = vadd.f32 %v10589, %v10677
        %10679 = vmatmul.bf16.gmra.mxu0 %v8986
        %v10680 = vpop.f32.mrf.mxu0
        %v10681 = vadd.f32 %v10592, %v10680
        %v10682 = vpop.f32.mrf.mxu0
        %v10683 = vadd.f32 %v10594, %v10682
        %10684 = vmatmul.bf16.gmra.mxu0 %v8991
        %v10685 = vpop.f32.mrf.mxu0
        %v10686 = vadd.f32 %v10597, %v10685
        %v10687 = vpop.f32.mrf.mxu0
        %v10688 = vadd.f32 %v10599, %v10687
        %10689 = vmatmul.bf16.gmra.mxu0 %v8996
        %v10690 = vpop.f32.mrf.mxu0
        %v10691 = vadd.f32 %v10602, %v10690
        %v10692 = vpop.f32.mrf.mxu0
        %v10693 = vadd.f32 %v10604, %v10692
        %10694 = vdwg.mxu0
        %10695 = vmatpush.bf16.msra.mxu0 %v9588
        %10696 = vmatpush.bf16.msra.mxu0 %v9585
        %10697 = vmatpush.bf16.msra.mxu0 %v9582
        %10698 = vmatpush.bf16.msra.mxu0 %v9579
        %10699 = vmatpush.bf16.msra.mxu0 %v9576
        %10700 = vmatpush.bf16.msra.mxu0 %v9573
        %10701 = vmatpush.bf16.msra.mxu0 %v9570
        %10702 = vmatpush.bf16.msra.mxu0 %v9567
        %10703 = vmatmul.bf16.gmra.mxu0 %v8917
        %v10704 = vpop.f32.mrf.mxu0
        %v10705 = vadd.f32 %v9161, %v10704
        %v10706 = vpop.f32.mrf.mxu0
        %v10707 = vadd.f32 %v9161, %v10706
        %10708 = vmatmul.bf16.gmra.mxu0 %v8922
        %v10709 = vpop.f32.mrf.mxu0
        %v10710 = vadd.f32 %v9161, %v10709
        %v10711 = vpop.f32.mrf.mxu0
        %v10712 = vadd.f32 %v9161, %v10711
        %10713 = vmatmul.bf16.gmra.mxu0 %v8927
        %v10714 = vpop.f32.mrf.mxu0
        %v10715 = vadd.f32 %v9161, %v10714
        %v10716 = vpop.f32.mrf.mxu0
        %v10717 = vadd.f32 %v9161, %v10716
        %10718 = vmatmul.bf16.gmra.mxu0 %v8932
        %v10719 = vpop.f32.mrf.mxu0
        %v10720 = vadd.f32 %v9161, %v10719
        %v10721 = vpop.f32.mrf.mxu0
        %v10722 = vadd.f32 %v9161, %v10721
        %10723 = vmatmul.bf16.gmra.mxu0 %v8937
        %v10724 = vpop.f32.mrf.mxu0
        %v10725 = vadd.f32 %v9161, %v10724
        %v10726 = vpop.f32.mrf.mxu0
        %v10727 = vadd.f32 %v9161, %v10726
        %10728 = vmatmul.bf16.gmra.mxu0 %v8942
        %v10729 = vpop.f32.mrf.mxu0
        %v10730 = vadd.f32 %v9161, %v10729
        %v10731 = vpop.f32.mrf.mxu0
        %v10732 = vadd.f32 %v9161, %v10731
        %10733 = vmatmul.bf16.gmra.mxu0 %v8947
        %v10734 = vpop.f32.mrf.mxu0
        %v10735 = vadd.f32 %v9161, %v10734
        %v10736 = vpop.f32.mrf.mxu0
        %v10737 = vadd.f32 %v9161, %v10736
        %10738 = vmatmul.bf16.gmra.mxu0 %v8952
        %v10739 = vpop.f32.mrf.mxu0
        %v10740 = vadd.f32 %v9161, %v10739
        %v10741 = vpop.f32.mrf.mxu0
        %v10742 = vadd.f32 %v9161, %v10741
        %10743 = vmatmul.bf16.gmra.mxu0 %v8957
        %v10744 = vpop.f32.mrf.mxu0
        %v10745 = vadd.f32 %v9161, %v10744
        %v10746 = vpop.f32.mrf.mxu0
        %v10747 = vadd.f32 %v9161, %v10746
        %10748 = vmatmul.bf16.gmra.mxu0 %v8962
        %v10749 = vpop.f32.mrf.mxu0
        %v10750 = vadd.f32 %v9161, %v10749
        %v10751 = vpop.f32.mrf.mxu0
        %v10752 = vadd.f32 %v9161, %v10751
        %10753 = vmatmul.bf16.gmra.mxu0 %v8967
        %v10754 = vpop.f32.mrf.mxu0
        %v10755 = vadd.f32 %v9161, %v10754
        %v10756 = vpop.f32.mrf.mxu0
        %v10757 = vadd.f32 %v9161, %v10756
        %10758 = vmatmul.bf16.gmra.mxu0 %v8972
        %v10759 = vpop.f32.mrf.mxu0
        %v10760 = vadd.f32 %v9161, %v10759
        %v10761 = vpop.f32.mrf.mxu0
        %v10762 = vadd.f32 %v9161, %v10761
        %10763 = vmatmul.bf16.gmra.mxu0 %v8977
        %v10764 = vpop.f32.mrf.mxu0
        %v10765 = vadd.f32 %v9161, %v10764
        %v10766 = vpop.f32.mrf.mxu0
        %v10767 = vadd.f32 %v9161, %v10766
        %10768 = vmatmul.bf16.gmra.mxu0 %v8982
        %v10769 = vpop.f32.mrf.mxu0
        %v10770 = vadd.f32 %v9161, %v10769
        %v10771 = vpop.f32.mrf.mxu0
        %v10772 = vadd.f32 %v9161, %v10771
        %10773 = vmatmul.bf16.gmra.mxu0 %v8987
        %v10774 = vpop.f32.mrf.mxu0
        %v10775 = vadd.f32 %v9161, %v10774
        %v10776 = vpop.f32.mrf.mxu0
        %v10777 = vadd.f32 %v9161, %v10776
        %10778 = vmatmul.bf16.gmra.mxu0 %v8992
        %v10779 = vpop.f32.mrf.mxu0
        %v10780 = vadd.f32 %v9161, %v10779
        %v10781 = vpop.f32.mrf.mxu0
        %v10782 = vadd.f32 %v9161, %v10781
        %10783 = vdwg.mxu0
        %10784 = vmatpush.bf16.msra.mxu0 %v9612
        %10785 = vmatpush.bf16.msra.mxu0 %v9609
        %10786 = vmatpush.bf16.msra.mxu0 %v9606
        %10787 = vmatpush.bf16.msra.mxu0 %v9603
        %10788 = vmatpush.bf16.msra.mxu0 %v9600
        %10789 = vmatpush.bf16.msra.mxu0 %v9597
        %10790 = vmatpush.bf16.msra.mxu0 %v9594
        %10791 = vmatpush.bf16.msra.mxu0 %v9591
        %10792 = vmatmul.bf16.gmra.mxu0 %v8918
        %v10793 = vpop.f32.mrf.mxu0
        %v10794 = vadd.f32 %v10705, %v10793
        %v10795 = vpop.f32.mrf.mxu0
        %v10796 = vadd.f32 %v10707, %v10795
        %10797 = vmatmul.bf16.gmra.mxu0 %v8923
        %v10798 = vpop.f32.mrf.mxu0
        %v10799 = vadd.f32 %v10710, %v10798
        %v10800 = vpop.f32.mrf.mxu0
        %v10801 = vadd.f32 %v10712, %v10800
        %10802 = vmatmul.bf16.gmra.mxu0 %v8928
        %v10803 = vpop.f32.mrf.mxu0
        %v10804 = vadd.f32 %v10715, %v10803
        %v10805 = vpop.f32.mrf.mxu0
        %v10806 = vadd.f32 %v10717, %v10805
        %10807 = vmatmul.bf16.gmra.mxu0 %v8933
        %v10808 = vpop.f32.mrf.mxu0
        %v10809 = vadd.f32 %v10720, %v10808
        %v10810 = vpop.f32.mrf.mxu0
        %v10811 = vadd.f32 %v10722, %v10810
        %10812 = vmatmul.bf16.gmra.mxu0 %v8938
        %v10813 = vpop.f32.mrf.mxu0
        %v10814 = vadd.f32 %v10725, %v10813
        %v10815 = vpop.f32.mrf.mxu0
        %v10816 = vadd.f32 %v10727, %v10815
        %10817 = vmatmul.bf16.gmra.mxu0 %v8943
        %v10818 = vpop.f32.mrf.mxu0
        %v10819 = vadd.f32 %v10730, %v10818
        %v10820 = vpop.f32.mrf.mxu0
        %v10821 = vadd.f32 %v10732, %v10820
        %10822 = vmatmul.bf16.gmra.mxu0 %v8948
        %v10823 = vpop.f32.mrf.mxu0
        %v10824 = vadd.f32 %v10735, %v10823
        %v10825 = vpop.f32.mrf.mxu0
        %v10826 = vadd.f32 %v10737, %v10825
        %10827 = vmatmul.bf16.gmra.mxu0 %v8953
        %v10828 = vpop.f32.mrf.mxu0
        %v10829 = vadd.f32 %v10740, %v10828
        %v10830 = vpop.f32.mrf.mxu0
        %v10831 = vadd.f32 %v10742, %v10830
        %10832 = vmatmul.bf16.gmra.mxu0 %v8958
        %v10833 = vpop.f32.mrf.mxu0
        %v10834 = vadd.f32 %v10745, %v10833
        %v10835 = vpop.f32.mrf.mxu0
        %v10836 = vadd.f32 %v10747, %v10835
        %10837 = vmatmul.bf16.gmra.mxu0 %v8963
        %v10838 = vpop.f32.mrf.mxu0
        %v10839 = vadd.f32 %v10750, %v10838
        %v10840 = vpop.f32.mrf.mxu0
        %v10841 = vadd.f32 %v10752, %v10840
        %10842 = vmatmul.bf16.gmra.mxu0 %v8968
        %v10843 = vpop.f32.mrf.mxu0
        %v10844 = vadd.f32 %v10755, %v10843
        %v10845 = vpop.f32.mrf.mxu0
        %v10846 = vadd.f32 %v10757, %v10845
        %10847 = vmatmul.bf16.gmra.mxu0 %v8973
        %v10848 = vpop.f32.mrf.mxu0
        %v10849 = vadd.f32 %v10760, %v10848
        %v10850 = vpop.f32.mrf.mxu0
        %v10851 = vadd.f32 %v10762, %v10850
        %10852 = vmatmul.bf16.gmra.mxu0 %v8978
        %v10853 = vpop.f32.mrf.mxu0
        %v10854 = vadd.f32 %v10765, %v10853
        %v10855 = vpop.f32.mrf.mxu0
        %v10856 = vadd.f32 %v10767, %v10855
        %10857 = vmatmul.bf16.gmra.mxu0 %v8983
        %v10858 = vpop.f32.mrf.mxu0
        %v10859 = vadd.f32 %v10770, %v10858
        %v10860 = vpop.f32.mrf.mxu0
        %v10861 = vadd.f32 %v10772, %v10860
        %10862 = vmatmul.bf16.gmra.mxu0 %v8988
        %v10863 = vpop.f32.mrf.mxu0
        %v10864 = vadd.f32 %v10775, %v10863
        %v10865 = vpop.f32.mrf.mxu0
        %v10866 = vadd.f32 %v10777, %v10865
        %10867 = vmatmul.bf16.gmra.mxu0 %v8993
        %v10868 = vpop.f32.mrf.mxu0
        %v10869 = vadd.f32 %v10780, %v10868
        %v10870 = vpop.f32.mrf.mxu0
        %v10871 = vadd.f32 %v10782, %v10870
        %10872 = vdwg.mxu0
        %10873 = vmatpush.bf16.msra.mxu0 %v9636
        %10874 = vmatpush.bf16.msra.mxu0 %v9633
        %10875 = vmatpush.bf16.msra.mxu0 %v9630
        %10876 = vmatpush.bf16.msra.mxu0 %v9627
        %10877 = vmatpush.bf16.msra.mxu0 %v9624
        %10878 = vmatpush.bf16.msra.mxu0 %v9621
        %10879 = vmatpush.bf16.msra.mxu0 %v9618
        %10880 = vmatpush.bf16.msra.mxu0 %v9615
        %10881 = vmatmul.bf16.gmra.mxu0 %v8919
        %v10882 = vpop.f32.mrf.mxu0
        %v10883 = vadd.f32 %v10794, %v10882
        %v10884 = vpop.f32.mrf.mxu0
        %v10885 = vadd.f32 %v10796, %v10884
        %10886 = vmatmul.bf16.gmra.mxu0 %v8924
        %v10887 = vpop.f32.mrf.mxu0
        %v10888 = vadd.f32 %v10799, %v10887
        %v10889 = vpop.f32.mrf.mxu0
        %v10890 = vadd.f32 %v10801, %v10889
        %10891 = vmatmul.bf16.gmra.mxu0 %v8929
        %v10892 = vpop.f32.mrf.mxu0
        %v10893 = vadd.f32 %v10804, %v10892
        %v10894 = vpop.f32.mrf.mxu0
        %v10895 = vadd.f32 %v10806, %v10894
        %10896 = vmatmul.bf16.gmra.mxu0 %v8934
        %v10897 = vpop.f32.mrf.mxu0
        %v10898 = vadd.f32 %v10809, %v10897
        %v10899 = vpop.f32.mrf.mxu0
        %v10900 = vadd.f32 %v10811, %v10899
        %10901 = vmatmul.bf16.gmra.mxu0 %v8939
        %v10902 = vpop.f32.mrf.mxu0
        %v10903 = vadd.f32 %v10814, %v10902
        %v10904 = vpop.f32.mrf.mxu0
        %v10905 = vadd.f32 %v10816, %v10904
        %10906 = vmatmul.bf16.gmra.mxu0 %v8944
        %v10907 = vpop.f32.mrf.mxu0
        %v10908 = vadd.f32 %v10819, %v10907
        %v10909 = vpop.f32.mrf.mxu0
        %v10910 = vadd.f32 %v10821, %v10909
        %10911 = vmatmul.bf16.gmra.mxu0 %v8949
        %v10912 = vpop.f32.mrf.mxu0
        %v10913 = vadd.f32 %v10824, %v10912
        %v10914 = vpop.f32.mrf.mxu0
        %v10915 = vadd.f32 %v10826, %v10914
        %10916 = vmatmul.bf16.gmra.mxu0 %v8954
        %v10917 = vpop.f32.mrf.mxu0
        %v10918 = vadd.f32 %v10829, %v10917
        %v10919 = vpop.f32.mrf.mxu0
        %v10920 = vadd.f32 %v10831, %v10919
        %10921 = vmatmul.bf16.gmra.mxu0 %v8959
        %v10922 = vpop.f32.mrf.mxu0
        %v10923 = vadd.f32 %v10834, %v10922
        %v10924 = vpop.f32.mrf.mxu0
        %v10925 = vadd.f32 %v10836, %v10924
        %10926 = vmatmul.bf16.gmra.mxu0 %v8964
        %v10927 = vpop.f32.mrf.mxu0
        %v10928 = vadd.f32 %v10839, %v10927
        %v10929 = vpop.f32.mrf.mxu0
        %v10930 = vadd.f32 %v10841, %v10929
        %10931 = vmatmul.bf16.gmra.mxu0 %v8969
        %v10932 = vpop.f32.mrf.mxu0
        %v10933 = vadd.f32 %v10844, %v10932
        %v10934 = vpop.f32.mrf.mxu0
        %v10935 = vadd.f32 %v10846, %v10934
        %10936 = vmatmul.bf16.gmra.mxu0 %v8974
        %v10937 = vpop.f32.mrf.mxu0
        %v10938 = vadd.f32 %v10849, %v10937
        %v10939 = vpop.f32.mrf.mxu0
        %v10940 = vadd.f32 %v10851, %v10939
        %10941 = vmatmul.bf16.gmra.mxu0 %v8979
        %v10942 = vpop.f32.mrf.mxu0
        %v10943 = vadd.f32 %v10854, %v10942
        %v10944 = vpop.f32.mrf.mxu0
        %v10945 = vadd.f32 %v10856, %v10944
        %10946 = vmatmul.bf16.gmra.mxu0 %v8984
        %v10947 = vpop.f32.mrf.mxu0
        %v10948 = vadd.f32 %v10859, %v10947
        %v10949 = vpop.f32.mrf.mxu0
        %v10950 = vadd.f32 %v10861, %v10949
        %10951 = vmatmul.bf16.gmra.mxu0 %v8989
        %v10952 = vpop.f32.mrf.mxu0
        %v10953 = vadd.f32 %v10864, %v10952
        %v10954 = vpop.f32.mrf.mxu0
        %v10955 = vadd.f32 %v10866, %v10954
        %10956 = vmatmul.bf16.gmra.mxu0 %v8994
        %v10957 = vpop.f32.mrf.mxu0
        %v10958 = vadd.f32 %v10869, %v10957
        %v10959 = vpop.f32.mrf.mxu0
        %v10960 = vadd.f32 %v10871, %v10959
        %10961 = vdwg.mxu0
        %10962 = vmatpush.bf16.msra.mxu0 %v9660
        %10963 = vmatpush.bf16.msra.mxu0 %v9657
        %10964 = vmatpush.bf16.msra.mxu0 %v9654
        %10965 = vmatpush.bf16.msra.mxu0 %v9651
        %10966 = vmatpush.bf16.msra.mxu0 %v9648
        %10967 = vmatpush.bf16.msra.mxu0 %v9645
        %10968 = vmatpush.bf16.msra.mxu0 %v9642
        %10969 = vmatpush.bf16.msra.mxu0 %v9639
        %10970 = vmatmul.bf16.gmra.mxu0 %v8920
        %v10971 = vpop.f32.mrf.mxu0
        %v10972 = vadd.f32 %v10883, %v10971
        %v10973 = vpop.f32.mrf.mxu0
        %v10974 = vadd.f32 %v10885, %v10973
        %10975 = vmatmul.bf16.gmra.mxu0 %v8925
        %v10976 = vpop.f32.mrf.mxu0
        %v10977 = vadd.f32 %v10888, %v10976
        %v10978 = vpop.f32.mrf.mxu0
        %v10979 = vadd.f32 %v10890, %v10978
        %10980 = vmatmul.bf16.gmra.mxu0 %v8930
        %v10981 = vpop.f32.mrf.mxu0
        %v10982 = vadd.f32 %v10893, %v10981
        %v10983 = vpop.f32.mrf.mxu0
        %v10984 = vadd.f32 %v10895, %v10983
        %10985 = vmatmul.bf16.gmra.mxu0 %v8935
        %v10986 = vpop.f32.mrf.mxu0
        %v10987 = vadd.f32 %v10898, %v10986
        %v10988 = vpop.f32.mrf.mxu0
        %v10989 = vadd.f32 %v10900, %v10988
        %10990 = vmatmul.bf16.gmra.mxu0 %v8940
        %v10991 = vpop.f32.mrf.mxu0
        %v10992 = vadd.f32 %v10903, %v10991
        %v10993 = vpop.f32.mrf.mxu0
        %v10994 = vadd.f32 %v10905, %v10993
        %10995 = vmatmul.bf16.gmra.mxu0 %v8945
        %v10996 = vpop.f32.mrf.mxu0
        %v10997 = vadd.f32 %v10908, %v10996
        %v10998 = vpop.f32.mrf.mxu0
        %v10999 = vadd.f32 %v10910, %v10998
        %11000 = vmatmul.bf16.gmra.mxu0 %v8950
        %v11001 = vpop.f32.mrf.mxu0
        %v11002 = vadd.f32 %v10913, %v11001
        %v11003 = vpop.f32.mrf.mxu0
        %v11004 = vadd.f32 %v10915, %v11003
        %11005 = vmatmul.bf16.gmra.mxu0 %v8955
        %v11006 = vpop.f32.mrf.mxu0
        %v11007 = vadd.f32 %v10918, %v11006
        %v11008 = vpop.f32.mrf.mxu0
        %v11009 = vadd.f32 %v10920, %v11008
        %11010 = vmatmul.bf16.gmra.mxu0 %v8960
        %v11011 = vpop.f32.mrf.mxu0
        %v11012 = vadd.f32 %v10923, %v11011
        %v11013 = vpop.f32.mrf.mxu0
        %v11014 = vadd.f32 %v10925, %v11013
        %11015 = vmatmul.bf16.gmra.mxu0 %v8965
        %v11016 = vpop.f32.mrf.mxu0
        %v11017 = vadd.f32 %v10928, %v11016
        %v11018 = vpop.f32.mrf.mxu0
        %v11019 = vadd.f32 %v10930, %v11018
        %11020 = vmatmul.bf16.gmra.mxu0 %v8970
        %v11021 = vpop.f32.mrf.mxu0
        %v11022 = vadd.f32 %v10933, %v11021
        %v11023 = vpop.f32.mrf.mxu0
        %v11024 = vadd.f32 %v10935, %v11023
        %11025 = vmatmul.bf16.gmra.mxu0 %v8975
        %v11026 = vpop.f32.mrf.mxu0
        %v11027 = vadd.f32 %v10938, %v11026
        %v11028 = vpop.f32.mrf.mxu0
        %v11029 = vadd.f32 %v10940, %v11028
        %11030 = vmatmul.bf16.gmra.mxu0 %v8980
        %v11031 = vpop.f32.mrf.mxu0
        %v11032 = vadd.f32 %v10943, %v11031
        %v11033 = vpop.f32.mrf.mxu0
        %v11034 = vadd.f32 %v10945, %v11033
        %11035 = vmatmul.bf16.gmra.mxu0 %v8985
        %v11036 = vpop.f32.mrf.mxu0
        %v11037 = vadd.f32 %v10948, %v11036
        %v11038 = vpop.f32.mrf.mxu0
        %v11039 = vadd.f32 %v10950, %v11038
        %11040 = vmatmul.bf16.gmra.mxu0 %v8990
        %v11041 = vpop.f32.mrf.mxu0
        %v11042 = vadd.f32 %v10953, %v11041
        %v11043 = vpop.f32.mrf.mxu0
        %v11044 = vadd.f32 %v10955, %v11043
        %11045 = vmatmul.bf16.gmra.mxu0 %v8995
        %v11046 = vpop.f32.mrf.mxu0
        %v11047 = vadd.f32 %v10958, %v11046
        %v11048 = vpop.f32.mrf.mxu0
        %v11049 = vadd.f32 %v10960, %v11048
        %11050 = vdwg.mxu0
        %11051 = vmatpush.bf16.msra.mxu0 %v9684
        %11052 = vmatpush.bf16.msra.mxu0 %v9681
        %11053 = vmatpush.bf16.msra.mxu0 %v9678
        %11054 = vmatpush.bf16.msra.mxu0 %v9675
        %11055 = vmatpush.bf16.msra.mxu0 %v9672
        %11056 = vmatpush.bf16.msra.mxu0 %v9669
        %11057 = vmatpush.bf16.msra.mxu0 %v9666
        %11058 = vmatpush.bf16.msra.mxu0 %v9663
        %11059 = vmatmul.bf16.gmra.mxu0 %v8921
        %v11060 = vpop.f32.mrf.mxu0
        %v11061 = vadd.f32 %v10972, %v11060
        %v11062 = vpop.f32.mrf.mxu0
        %v11063 = vadd.f32 %v10974, %v11062
        %11064 = vmatmul.bf16.gmra.mxu0 %v8926
        %v11065 = vpop.f32.mrf.mxu0
        %v11066 = vadd.f32 %v10977, %v11065
        %v11067 = vpop.f32.mrf.mxu0
        %v11068 = vadd.f32 %v10979, %v11067
        %11069 = vmatmul.bf16.gmra.mxu0 %v8931
        %v11070 = vpop.f32.mrf.mxu0
        %v11071 = vadd.f32 %v10982, %v11070
        %v11072 = vpop.f32.mrf.mxu0
        %v11073 = vadd.f32 %v10984, %v11072
        %11074 = vmatmul.bf16.gmra.mxu0 %v8936
        %v11075 = vpop.f32.mrf.mxu0
        %v11076 = vadd.f32 %v10987, %v11075
        %v11077 = vpop.f32.mrf.mxu0
        %v11078 = vadd.f32 %v10989, %v11077
        %11079 = vmatmul.bf16.gmra.mxu0 %v8941
        %v11080 = vpop.f32.mrf.mxu0
        %v11081 = vadd.f32 %v10992, %v11080
        %v11082 = vpop.f32.mrf.mxu0
        %v11083 = vadd.f32 %v10994, %v11082
        %11084 = vmatmul.bf16.gmra.mxu0 %v8946
        %v11085 = vpop.f32.mrf.mxu0
        %v11086 = vadd.f32 %v10997, %v11085
        %v11087 = vpop.f32.mrf.mxu0
        %v11088 = vadd.f32 %v10999, %v11087
        %11089 = vmatmul.bf16.gmra.mxu0 %v8951
        %v11090 = vpop.f32.mrf.mxu0
        %v11091 = vadd.f32 %v11002, %v11090
        %v11092 = vpop.f32.mrf.mxu0
        %v11093 = vadd.f32 %v11004, %v11092
        %11094 = vmatmul.bf16.gmra.mxu0 %v8956
        %v11095 = vpop.f32.mrf.mxu0
        %v11096 = vadd.f32 %v11007, %v11095
        %v11097 = vpop.f32.mrf.mxu0
        %v11098 = vadd.f32 %v11009, %v11097
        %11099 = vmatmul.bf16.gmra.mxu0 %v8961
        %v11100 = vpop.f32.mrf.mxu0
        %v11101 = vadd.f32 %v11012, %v11100
        %v11102 = vpop.f32.mrf.mxu0
        %v11103 = vadd.f32 %v11014, %v11102
        %11104 = vmatmul.bf16.gmra.mxu0 %v8966
        %v11105 = vpop.f32.mrf.mxu0
        %v11106 = vadd.f32 %v11017, %v11105
        %v11107 = vpop.f32.mrf.mxu0
        %v11108 = vadd.f32 %v11019, %v11107
        %11109 = vmatmul.bf16.gmra.mxu0 %v8971
        %v11110 = vpop.f32.mrf.mxu0
        %v11111 = vadd.f32 %v11022, %v11110
        %v11112 = vpop.f32.mrf.mxu0
        %v11113 = vadd.f32 %v11024, %v11112
        %11114 = vmatmul.bf16.gmra.mxu0 %v8976
        %v11115 = vpop.f32.mrf.mxu0
        %v11116 = vadd.f32 %v11027, %v11115
        %v11117 = vpop.f32.mrf.mxu0
        %v11118 = vadd.f32 %v11029, %v11117
        %11119 = vmatmul.bf16.gmra.mxu0 %v8981
        %v11120 = vpop.f32.mrf.mxu0
        %v11121 = vadd.f32 %v11032, %v11120
        %v11122 = vpop.f32.mrf.mxu0
        %v11123 = vadd.f32 %v11034, %v11122
        %11124 = vmatmul.bf16.gmra.mxu0 %v8986
        %v11125 = vpop.f32.mrf.mxu0
        %v11126 = vadd.f32 %v11037, %v11125
        %v11127 = vpop.f32.mrf.mxu0
        %v11128 = vadd.f32 %v11039, %v11127
        %11129 = vmatmul.bf16.gmra.mxu0 %v8991
        %v11130 = vpop.f32.mrf.mxu0
        %v11131 = vadd.f32 %v11042, %v11130
        %v11132 = vpop.f32.mrf.mxu0
        %v11133 = vadd.f32 %v11044, %v11132
        %11134 = vmatmul.bf16.gmra.mxu0 %v8996
        %v11135 = vpop.f32.mrf.mxu0
        %v11136 = vadd.f32 %v11047, %v11135
        %v11137 = vpop.f32.mrf.mxu0
        %v11138 = vadd.f32 %v11049, %v11137
        %11139 = vdwg.mxu0
        %11140 = vst [vmem:[%s568] sm:$0xff] %v10171
        %11141 = vst [vmem:[%s568 + $0x8] sm:$0xff] %v10173
        %11142 = vst [vmem:[%s568 + $0x10] sm:$0xff] %v10176
        %11143 = vst [vmem:[%s568 + $0x18] sm:$0xff] %v10178
        %11144 = vst [vmem:[%s568 + $0x20] sm:$0xff] %v10181
        %11145 = vst [vmem:[%s568 + $0x28] sm:$0xff] %v10183
        %11146 = vst [vmem:[%s568 + $0x30] sm:$0xff] %v10186
        %11147 = vst [vmem:[%s568 + $0x38] sm:$0xff] %v10188
        %11148 = vst [vmem:[%s568 + $0x40] sm:$0xff] %v10191
        %11149 = vst [vmem:[%s568 + $0x48] sm:$0xff] %v10193
        %11150 = vst [vmem:[%s568 + $0x50] sm:$0xff] %v10196
        %11151 = vst [vmem:[%s568 + $0x58] sm:$0xff] %v10198
        %11152 = vst [vmem:[%s568 + $0x60] sm:$0xff] %v10201
        %11153 = vst [vmem:[%s568 + $0x68] sm:$0xff] %v10203
        %11154 = vst [vmem:[%s568 + $0x70] sm:$0xff] %v10206
        %11155 = vst [vmem:[%s568 + $0x78] sm:$0xff] %v10208
        %11156 = vst [vmem:[%s568 + $0x80] sm:$0xff] %v10211
        %11157 = vst [vmem:[%s568 + $0x88] sm:$0xff] %v10213
        %11158 = vst [vmem:[%s568 + $0x90] sm:$0xff] %v10216
        %11159 = vst [vmem:[%s568 + $0x98] sm:$0xff] %v10218
        %11160 = vst [vmem:[%s568 + $0xa0] sm:$0xff] %v10221
        %11161 = vst [vmem:[%s568 + $0xa8] sm:$0xff] %v10223
        %11162 = vst [vmem:[%s568 + $0xb0] sm:$0xff] %v10226
        %11163 = vst [vmem:[%s568 + $0xb8] sm:$0xff] %v10228
        %11164 = vst [vmem:[%s568 + $0xc0] sm:$0xff] %v10231
        %11165 = vst [vmem:[%s568 + $0xc8] sm:$0xff] %v10233
        %11166 = vst [vmem:[%s568 + $0xd0] sm:$0xff] %v10236
        %11167 = vst [vmem:[%s568 + $0xd8] sm:$0xff] %v10238
        %11168 = vst [vmem:[%s568 + $0xe0] sm:$0xff] %v10241
        %11169 = vst [vmem:[%s568 + $0xe8] sm:$0xff] %v10243
        %11170 = vst [vmem:[%s568 + $0xf0] sm:$0xff] %v10246
        %11171 = vst [vmem:[%s568 + $0xf8] sm:$0xff] %v10248
        %s11172 = scalar_lea.vmem %s568, 256 [#allocation2]
        %11173 = vst [vmem:[%s11172] sm:$0xff] %v10616
        %11174 = vst [vmem:[%s11172 + $0x8] sm:$0xff] %v10618
        %11175 = vst [vmem:[%s11172 + $0x10] sm:$0xff] %v10621
        %11176 = vst [vmem:[%s11172 + $0x18] sm:$0xff] %v10623
        %11177 = vst [vmem:[%s11172 + $0x20] sm:$0xff] %v10626
        %11178 = vst [vmem:[%s11172 + $0x28] sm:$0xff] %v10628
        %11179 = vst [vmem:[%s11172 + $0x30] sm:$0xff] %v10631
        %11180 = vst [vmem:[%s11172 + $0x38] sm:$0xff] %v10633
        %11181 = vst [vmem:[%s11172 + $0x40] sm:$0xff] %v10636
        %11182 = vst [vmem:[%s11172 + $0x48] sm:$0xff] %v10638
        %11183 = vst [vmem:[%s11172 + $0x50] sm:$0xff] %v10641
        %11184 = vst [vmem:[%s11172 + $0x58] sm:$0xff] %v10643
        %11185 = vst [vmem:[%s11172 + $0x60] sm:$0xff] %v10646
        %11186 = vst [vmem:[%s11172 + $0x68] sm:$0xff] %v10648
        %11187 = vst [vmem:[%s11172 + $0x70] sm:$0xff] %v10651
        %11188 = vst [vmem:[%s11172 + $0x78] sm:$0xff] %v10653
        %11189 = vst [vmem:[%s11172 + $0x80] sm:$0xff] %v10656
        %11190 = vst [vmem:[%s11172 + $0x88] sm:$0xff] %v10658
        %11191 = vst [vmem:[%s11172 + $0x90] sm:$0xff] %v10661
        %11192 = vst [vmem:[%s11172 + $0x98] sm:$0xff] %v10663
        %11193 = vst [vmem:[%s11172 + $0xa0] sm:$0xff] %v10666
        %11194 = vst [vmem:[%s11172 + $0xa8] sm:$0xff] %v10668
        %11195 = vst [vmem:[%s11172 + $0xb0] sm:$0xff] %v10671
        %11196 = vst [vmem:[%s11172 + $0xb8] sm:$0xff] %v10673
        %11197 = vst [vmem:[%s11172 + $0xc0] sm:$0xff] %v10676
        %11198 = vst [vmem:[%s11172 + $0xc8] sm:$0xff] %v10678
        %11199 = vst [vmem:[%s11172 + $0xd0] sm:$0xff] %v10681
        %11200 = vst [vmem:[%s11172 + $0xd8] sm:$0xff] %v10683
        %11201 = vst [vmem:[%s11172 + $0xe0] sm:$0xff] %v10686
        %11202 = vst [vmem:[%s11172 + $0xe8] sm:$0xff] %v10688
        %11203 = vst [vmem:[%s11172 + $0xf0] sm:$0xff] %v10691
        %11204 = vst [vmem:[%s11172 + $0xf8] sm:$0xff] %v10693
        %s11205 = scalar_lea.vmem %s568, 512 [#allocation2]
        %11206 = vst [vmem:[%s11205] sm:$0xff] %v11061
        %11207 = vst [vmem:[%s11205 + $0x8] sm:$0xff] %v11063
        %11208 = vst [vmem:[%s11205 + $0x10] sm:$0xff] %v11066
        %11209 = vst [vmem:[%s11205 + $0x18] sm:$0xff] %v11068
        %11210 = vst [vmem:[%s11205 + $0x20] sm:$0xff] %v11071
        %11211 = vst [vmem:[%s11205 + $0x28] sm:$0xff] %v11073
        %11212 = vst [vmem:[%s11205 + $0x30] sm:$0xff] %v11076
        %11213 = vst [vmem:[%s11205 + $0x38] sm:$0xff] %v11078
        %11214 = vst [vmem:[%s11205 + $0x40] sm:$0xff] %v11081
        %11215 = vst [vmem:[%s11205 + $0x48] sm:$0xff] %v11083
        %11216 = vst [vmem:[%s11205 + $0x50] sm:$0xff] %v11086
        %11217 = vst [vmem:[%s11205 + $0x58] sm:$0xff] %v11088
        %11218 = vst [vmem:[%s11205 + $0x60] sm:$0xff] %v11091
        %11219 = vst [vmem:[%s11205 + $0x68] sm:$0xff] %v11093
        %11220 = vst [vmem:[%s11205 + $0x70] sm:$0xff] %v11096
        %11221 = vst [vmem:[%s11205 + $0x78] sm:$0xff] %v11098
        %11222 = vst [vmem:[%s11205 + $0x80] sm:$0xff] %v11101
        %11223 = vst [vmem:[%s11205 + $0x88] sm:$0xff] %v11103
        %11224 = vst [vmem:[%s11205 + $0x90] sm:$0xff] %v11106
        %11225 = vst [vmem:[%s11205 + $0x98] sm:$0xff] %v11108
        %11226 = vst [vmem:[%s11205 + $0xa0] sm:$0xff] %v11111
        %11227 = vst [vmem:[%s11205 + $0xa8] sm:$0xff] %v11113
        %11228 = vst [vmem:[%s11205 + $0xb0] sm:$0xff] %v11116
        %11229 = vst [vmem:[%s11205 + $0xb8] sm:$0xff] %v11118
        %11230 = vst [vmem:[%s11205 + $0xc0] sm:$0xff] %v11121
        %11231 = vst [vmem:[%s11205 + $0xc8] sm:$0xff] %v11123
        %11232 = vst [vmem:[%s11205 + $0xd0] sm:$0xff] %v11126
        %11233 = vst [vmem:[%s11205 + $0xd8] sm:$0xff] %v11128
        %11234 = vst [vmem:[%s11205 + $0xe0] sm:$0xff] %v11131
        %11235 = vst [vmem:[%s11205 + $0xe8] sm:$0xff] %v11133
        %11236 = vst [vmem:[%s11205 + $0xf0] sm:$0xff] %v11136
        %11237 = vst [vmem:[%s11205 + $0xf8] sm:$0xff] %v11138
        %s11238 = sand.u32 %s423, 1
        %s11239 = scalar_lea.sflag [#allocation3], %s11238
        %s11240 = sand.u32 %s423, 1
        %s11241 = smul.addr %s11240, 768
        %s11242 = scalar_lea.vmem [#allocation2], %s11241
        // Predicated region
        $region93: #{pixelcnn_forward.1} parent=91 // pred_check
          %p11243 = pneg %p433
        $region94: #{pixelcnn_forward.1} parent=91 // pred_check_branch
          %11245 = sbr.rel (%p11243) target = $region96
        $region95: #{pixelcnn_forward.1} parent=91 // pred_region
          %11247 = vsyncadd %s11239, 0
          %s11248 = smul.addr %s32, 96
          %s11249 = smul.addr %s11248, 8
          %s11250 = scalar_lea.hbm %s18, %s11249
          %s11251 = sshll.u32 %s11242, 4
          %s11252 = int_to_ptr.vmem [resolvable:$true] %s11251
          %s11253 = sshll.u32 %s11250, 4
          %s11254 = int_to_ptr.hbm [resolvable:$true] %s11253
          %11259 = dma.vmem_to_hbm [thread:$0]  %s11252, 12288, %s11254, %s11239, 128, 128, 8
        $region96: #{pixelcnn_forward.1} parent=91 // pred_fallthru
          _
      $region92: #{pixelcnn_forward.1} parent=5 // pred_fallthru
        _
      %p11260 = scmp.le.s32.totalorder 2, %s27
      // Predicated region
      $region97: #{pixelcnn_forward.1} parent=5 // pred_check
        %p11261 = pneg %p11260
      $region98: #{pixelcnn_forward.1} parent=5 // pred_check_branch
        %11263 = sbr.rel (%p11261) target = $region100
      $region99: #{pixelcnn_forward.1} parent=5 // pred_region
        %s11264 = ssub.s32 %s27, 2
        // Predicated region
        $region101: #{pixelcnn_forward.1} parent=99 // pred_check
          %p11265 = pneg %p439
        $region102: #{pixelcnn_forward.1} parent=99 // pred_check_branch
          %11267 = sbr.rel (%p11265) target = $region104
        $region103: #{pixelcnn_forward.1} parent=99 // pred_region
          %s11268 = sand.u32 %s424, 1
          %s11269 = scalar_lea.sflag [#allocation3], %s11268
          %s11270 = sand.u32 %s424, 1
          %s11271 = smul.addr %s11270, 768
          %s11272 = scalar_lea.vmem [#allocation2], %s11271
          %11274 = dma.done %s11269, 12288
        $region104: #{pixelcnn_forward.1} parent=99 // pred_fallthru
          _
      $region100: #{pixelcnn_forward.1} parent=5 // pred_fallthru
        _
    $region6: #{pixelcnn_forward.1} parent=1 // loop_footer
      %s31 = sadd.s32 1, %s27
    $region7: #{pixelcnn_forward.1} parent=1 // loop_footer_branch
      %26 = sbr.rel target = $region3
    $region8: #{pixelcnn_forward.1} parent=1 // loop_exit
      _
    %11275 = vsyncpa [#allocation3], 1
    %s11276 = scalar_lea.sflag [#allocation3], 1
    %11277 = vsyncpa %s11276, 1

</llo_original>
